<compile_context>
chip_gen: v7x
topology: tpu7x:2x2x1
jax: 0.10.0
libtpu: 0.0.40
codegen_flags: <defaults>
</compile_context>

<pallas_src>
import math

import jax
import jax.numpy as jnp
from jax import lax
from jax.experimental import pallas as pl
from jax.experimental.pallas import tpu as pltpu


def _gelu_exact(x):
    # PyTorch nn.GELU() default ("none") = exact erf formulation.
    return 0.5 * x * (1.0 + lax.erf(x * (1.0 / math.sqrt(2.0))))


def make_down_kernel(Cin, Cmid, Cout, Hh, Wh, eps=1e-5):
    HW = Hh * Wh

    def kernel(x_ref, t_ref, w1_ref, w2_ref, g1_ref, b1_ref, g2_ref, b2_ref,
               we_ref, be_ref, o_ref, pad1_ref, pad2_ref):
        f32 = jnp.float32
        bf16 = jnp.bfloat16

        # ---- time embedding (tiny, VPU-only; overlaps the MXU work) ---------
        tv = t_ref[...]                                           # (1, emb_dim)
        ts = tv * jax.nn.sigmoid(tv)                              # SiLU
        emb = jnp.sum(we_ref[...] * ts, axis=-1, keepdims=True) + be_ref[...]  # (Cout, 1)

        # ---- zero only the 1-pixel halos of the padded slabs (interior is
        #      fully overwritten every step; safe under "parallel" semantics).
        pad1_ref[:, 0:1, :] = jnp.zeros((Cin, 1, Wh + 2), f32)
        pad1_ref[:, Hh + 1:Hh + 2, :] = jnp.zeros((Cin, 1, Wh + 2), f32)
        pad1_ref[:, :, 0:1] = jnp.zeros((Cin, Hh + 2, 1), f32)
        pad1_ref[:, :, Wh + 1:Wh + 2] = jnp.zeros((Cin, Hh + 2, 1), f32)
        pad2_ref[:, 0:1, :] = jnp.zeros((Cmid, 1, Wh + 2), f32)
        pad2_ref[:, Hh + 1:Hh + 2, :] = jnp.zeros((Cmid, 1, Wh + 2), f32)
        pad2_ref[:, :, 0:1] = jnp.zeros((Cmid, Hh + 2, 1), f32)
        pad2_ref[:, :, Wh + 1:Wh + 2] = jnp.zeros((Cmid, Hh + 2, 1), f32)

        # ---- 1) 2x2 max pool, computed on the loaded NCHW value -------------
        xv = x_ref[...]                                           # (Cin, 2Hh, 2Wh)
        xr = xv.reshape(Cin * Hh, 2, 2 * Wh)
        rows = jnp.maximum(xr[:, 0, :], xr[:, 1, :])              # row-pair max
        cols = rows.reshape(Cin * Hh, Wh, 2)
        pooled = jnp.maximum(cols[:, :, 0], cols[:, :, 1])        # (Cin*Hh, Wh)
        pad1_ref[:, 1:Hh + 1, 1:Wh + 1] = pooled.reshape(Cin, Hh, Wh)

        def conv3x3(pad_ref, c_in, w_ref):
            # im2col: stack the 9 taps along K -> one deep-K MXU matmul.
            taps = []
            for k in range(9):
                dy, dx = divmod(k, 3)
                taps.append(pad_ref[:, dy:dy + Hh, dx:dx + Wh].reshape(c_in, HW))
            col = jnp.concatenate(taps, axis=0).astype(bf16)      # (9*c_in, HW)
            return jnp.dot(w_ref[...], col, preferred_element_type=f32)

        def groupnorm(h, g_ref, b_ref, n):
            # GroupNorm(1, C): one-pass mean/var over all C*H*W (biased var).
            s = jnp.sum(h, keepdims=True)                         # (1, 1)
            ss = jnp.sum(h * h, keepdims=True)                    # (1, 1)
            inv_n = 1.0 / n
            m = s * inv_n
            v = ss * inv_n - m * m
            return (h - m) * lax.rsqrt(v + eps) * g_ref[...] + b_ref[...]

        # ---- 2) conv1 3x3 (pad=1, bias=False) + GroupNorm + exact GELU ------
        a1 = conv3x3(pad1_ref, Cin, w1_ref)                       # (Cmid, HW) f32
        h1 = _gelu_exact(groupnorm(a1, g1_ref, b1_ref, Cmid * HW))
        pad2_ref[:, 1:Hh + 1, 1:Wh + 1] = h1.reshape(Cmid, Hh, Wh)

        # ---- 3) conv2 3x3 + GroupNorm + broadcast time-embedding add --------
        a2 = conv3x3(pad2_ref, Cmid, w2_ref)                      # (Cout, HW) f32
        h2 = groupnorm(a2, g2_ref, b2_ref, Cout * HW)
        o_ref[...] = h2 + emb                                     # lane-dense (Cout, HW)

    return kernel


def down_forward(x_nchw, t, params):
    """Pallas implementation of Down.forward(x, t). Returns NCHW like PyTorch."""
    B, Cin, H, W = x_nchw.shape
    assert H % 2 == 0 and W % 2 == 0, "MaxPool2d(2) requires even H, W"
    Hh, Wh = H // 2, W // 2
    Cmid = params["w1"].shape[0]
    Cout = params["w2"].shape[0]
    emb_dim = params["we"].shape[1]

    # ---- layout plumbing only (no transposes of the activation tensor) -----
    x = x_nchw.astype(jnp.float32)                      # consumed straight from NCHW
    t3 = t.reshape(B, 1, emb_dim).astype(jnp.float32)
    # conv weights (O, I, 3, 3) -> (O, 9*I), K ordered (dy, dx, cin); bf16 MXU operands.
    w1r = jnp.transpose(params["w1"], (0, 2, 3, 1)).reshape(Cmid, 9 * Cin).astype(jnp.bfloat16)
    w2r = jnp.transpose(params["w2"], (0, 2, 3, 1)).reshape(Cout, 9 * Cmid).astype(jnp.bfloat16)
    g1 = params["g1"].reshape(Cmid, 1).astype(jnp.float32)
    b1 = params["b1"].reshape(Cmid, 1).astype(jnp.float32)
    g2 = params["g2"].reshape(Cout, 1).astype(jnp.float32)
    b2 = params["b2"].reshape(Cout, 1).astype(jnp.float32)
    we = params["we"].astype(jnp.float32)               # (Cout, emb_dim), torch layout
    be = params["be"].reshape(Cout, 1).astype(jnp.float32)

    kernel = make_down_kernel(Cin, Cmid, Cout, Hh, Wh)

    def full_spec(shape):
        return pl.BlockSpec(shape, lambda b, _n=len(shape): (0,) * _n)

    # Explicit VMEM budget (double-buffered I/O blocks + pad slabs + weights +
    # im2col / accumulator temporaries), clamped to v7x's 64 MiB physical VMEM.
    est = 4 * (2 * Cin * H * W + 2 * Cout * Hh * Wh
               + (Cin + Cmid) * (Hh + 2) * (Wh + 2)
               + 12 * (Cin + Cmid + Cout) * Hh * Wh) \
        + 2 * (Cmid * 9 * Cin + Cout * 9 * Cmid)
    vmem_limit = int(min(max(2 * est, 16 << 20), 64 << 20))

    out_cp = pl.pallas_call(
        kernel,
        out_shape=jax.ShapeDtypeStruct((B, Cout, Hh * Wh), jnp.float32),
        grid_spec=pltpu.PrefetchScalarGridSpec(
            num_scalar_prefetch=0,
            grid=(B,),
            in_specs=[
                pl.BlockSpec((None, Cin, H, W), lambda b: (b, 0, 0, 0)),   # x (NCHW)
                pl.BlockSpec((None, 1, emb_dim), lambda b: (b, 0, 0)),     # t
                full_spec((Cmid, 9 * Cin)),                                # conv1 W (bf16)
                full_spec((Cout, 9 * Cmid)),                               # conv2 W (bf16)
                full_spec((Cmid, 1)), full_spec((Cmid, 1)),                # gn1 gamma/beta
                full_spec((Cout, 1)), full_spec((Cout, 1)),                # gn2 gamma/beta
                full_spec((Cout, emb_dim)), full_spec((Cout, 1)),          # emb W / bias
            ],
            out_specs=pl.BlockSpec((None, Cout, Hh * Wh), lambda b: (b, 0, 0)),
            scratch_shapes=[
                pltpu.VMEM((Cin, Hh + 2, Wh + 2), jnp.float32),    # padded pooled x
                pltpu.VMEM((Cmid, Hh + 2, Wh + 2), jnp.float32),   # padded gelu(gn1(conv1))
            ],
        ),
        compiler_params=pltpu.CompilerParams(
            dimension_semantics=("parallel",),
            vmem_limit_bytes=vmem_limit,
        ),
    )(x, t3, w1r, w2r, g1, b1, g2, b2, we, be)

    # (B, Cout, Hh*Wh) -> NCHW is a free reshape (no transpose needed).
    return out_cp.reshape(B, Cout, Hh, Wh)


def down_ref(x, t, p, eps=1e-5):
    """Pure-JAX reference mirroring the PyTorch module (for validation)."""
    B, Cin, H, W = x.shape
    xp = jnp.max(x.reshape(B, Cin, H // 2, 2, W // 2, 2), axis=(3, 5))

    def conv(z, w):
        return lax.conv_general_dilated(z, w, (1, 1), ((1, 1), (1, 1)),
                                        dimension_numbers=("NCHW", "OIHW", "NCHW"),
                                        precision=lax.Precision.HIGHEST)

    def gn(z, g, b):
        m = jnp.mean(z, axis=(1, 2, 3), keepdims=True)
        v = jnp.mean((z - m) ** 2, axis=(1, 2, 3), keepdims=True)
        return (z - m) * lax.rsqrt(v + eps) * g[None, :, None, None] + b[None, :, None, None]

    h = conv(xp, p["w1"])
    h = gn(h, p["g1"], p["b1"])
    h = _gelu_exact(h)
    h = conv(h, p["w2"])
    h = gn(h, p["g2"], p["b2"])
    ts = t * jax.nn.sigmoid(t)
    emb = jnp.dot(ts, p["we"].T, precision=lax.Precision.HIGHEST) + p["be"]
    return h + emb[:, :, None, None]


if __name__ == "__main__":
    B, Cin, Cout, H, W, emb_dim = 2, 4, 8, 16, 16, 4   # DoubleConv: mid_channels == out_channels
    key = jax.random.PRNGKey(0)
    kx, kt, k1, k2, k3, k4 = jax.random.split(key, 6)

    x = jax.random.normal(kx, (B, Cin, H, W), jnp.float32)
    t = jax.random.normal(kt, (B, emb_dim), jnp.float32)

    params = dict(
        w1=jax.random.normal(k1, (Cout, Cin, 3, 3), jnp.float32) * 0.2,
        g1=jnp.ones((Cout,), jnp.float32),   # GroupNorm defaults: weight=1, bias=0
        b1=jnp.zeros((Cout,), jnp.float32),
        w2=jax.random.normal(k2, (Cout, Cout, 3, 3), jnp.float32) * 0.2,
        g2=jnp.ones((Cout,), jnp.float32),
        b2=jnp.zeros((Cout,), jnp.float32),
        we=jax.random.normal(k3, (Cout, emb_dim), jnp.float32) * 0.2,
        be=jax.random.normal(k4, (Cout,), jnp.float32) * 0.1,
    )

    out = jax.block_until_ready(down_forward(x, t, params))
    assert out.shape == (B, Cout, H // 2, W // 2), out.shape

    ref = down_ref(x, t, params)
    err = float(jnp.max(jnp.abs(out - ref)))
    # Kernel conv matmuls use native bf16 MXU operands (f32 accumulation); the
    # reference uses f32 HIGHEST precision, so allow bf16 operand rounding.
    assert err < 5e-2, f"max abs err vs reference: {err}"

    print("KERNEL_OK")
</pallas_src>

<mosaic_0001>
module attributes {stable_mosaic.version = 11 : i64} {
  func.func @kernel(%arg0: i32, %arg1: memref<1x4x16x16xf32, #tpu.memory_space<vmem>>, %arg2: memref<1x1x4xf32, #tpu.memory_space<vmem>>, %arg3: memref<8x36xbf16, #tpu.memory_space<vmem>>, %arg4: memref<8x72xbf16, #tpu.memory_space<vmem>>, %arg5: memref<8x1xf32, #tpu.memory_space<vmem>>, %arg6: memref<8x1xf32, #tpu.memory_space<vmem>>, %arg7: memref<8x1xf32, #tpu.memory_space<vmem>>, %arg8: memref<8x1xf32, #tpu.memory_space<vmem>>, %arg9: memref<8x4xf32, #tpu.memory_space<vmem>>, %arg10: memref<8x1xf32, #tpu.memory_space<vmem>>, %arg11: memref<1x8x64xf32, #tpu.memory_space<vmem>>, %arg12: memref<4x10x10xf32, #tpu.memory_space<vmem>>, %arg13: memref<8x10x10xf32, #tpu.memory_space<vmem>>) attributes {dimension_semantics = [#tpu.dimension_semantics<parallel>], iteration_bounds = array<i64: 2>, scalar_prefetch = 0 : i64, scratch_operands = 2 : i64, tpu.core_type = #tpu.core_type<tc>, window_params = [{transform_indices = @transform_0, window_bounds = array<i64: 1, 4, 16, 16>}, {transform_indices = @transform_1, window_bounds = array<i64: 1, 1, 4>}, {pipeline_mode = #tpu.pipeline_mode<synchronous>, transform_indices = @transform_2, window_bounds = array<i64: 8, 36>}, {pipeline_mode = #tpu.pipeline_mode<synchronous>, transform_indices = @transform_3, window_bounds = array<i64: 8, 72>}, {pipeline_mode = #tpu.pipeline_mode<synchronous>, transform_indices = @transform_4, window_bounds = array<i64: 8, 1>}, {pipeline_mode = #tpu.pipeline_mode<synchronous>, transform_indices = @transform_5, window_bounds = array<i64: 8, 1>}, {pipeline_mode = #tpu.pipeline_mode<synchronous>, transform_indices = @transform_6, window_bounds = array<i64: 8, 1>}, {pipeline_mode = #tpu.pipeline_mode<synchronous>, transform_indices = @transform_7, window_bounds = array<i64: 8, 1>}, {pipeline_mode = #tpu.pipeline_mode<synchronous>, transform_indices = @transform_8, window_bounds = array<i64: 8, 4>}, {pipeline_mode = #tpu.pipeline_mode<synchronous>, transform_indices = @transform_9, window_bounds = array<i64: 8, 1>}, {transform_indices = @transform_10, window_bounds = array<i64: 1, 8, 64>}]} {
    %c0 = arith.constant 0 : index
    %c0_0 = arith.constant 0 : index
    %c0_1 = arith.constant 0 : index
    %0 = vector.load %arg2[%c0, %c0_0, %c0_1] : memref<1x1x4xf32, #tpu.memory_space<vmem>>, vector<1x1x4xf32>
    %1 = vector.shape_cast %0 : vector<1x1x4xf32> to vector<1x4xf32>
    %2 = arith.negf %1 : vector<1x4xf32>
    %3 = math.exp %2 : vector<1x4xf32>
    %cst = arith.constant 1.000000e+00 : f32
    %4 = vector.broadcast %cst : f32 to vector<1x4xf32>
    %5 = arith.addf %4, %3 : vector<1x4xf32>
    %6 = arith.divf %4, %5 : vector<1x4xf32>
    %7 = arith.mulf %1, %6 : vector<1x4xf32>
    %c0_2 = arith.constant 0 : index
    %c0_3 = arith.constant 0 : index
    %8 = vector.load %arg9[%c0_2, %c0_3] : memref<8x4xf32, #tpu.memory_space<vmem>>, vector<8x4xf32>
    %9 = vector.broadcast %7 : vector<1x4xf32> to vector<8x4xf32>
    %10 = arith.mulf %8, %9 : vector<8x4xf32>
    %cst_4 = arith.constant dense<0.000000e+00> : vector<8xf32>
    %11 = vector.multi_reduction <add>, %10, %cst_4 [1] : vector<8x4xf32> to vector<8xf32>
    %12 = vector.shape_cast %11 : vector<8xf32> to vector<8x1xf32>
    %c0_5 = arith.constant 0 : index
    %c0_6 = arith.constant 0 : index
    %13 = vector.load %arg10[%c0_5, %c0_6] : memref<8x1xf32, #tpu.memory_space<vmem>>, vector<8x1xf32>
    %14 = arith.addf %12, %13 : vector<8x1xf32>
    %cst_7 = arith.constant 0.000000e+00 : f32
    %15 = vector.broadcast %cst_7 : f32 to vector<4x1x10xf32>
    %c0_8 = arith.constant 0 : index
    %c0_9 = arith.constant 0 : index
    %c0_10 = arith.constant 0 : index
    %16 = vector.load %arg12[%c0_8, %c0_9, %c0_10] : memref<4x10x10xf32, #tpu.memory_space<vmem>>, vector<4x1x10xf32>
    tpu.vector_store %arg12[%c0_8, %c0_9, %c0_10], %15 {strides = array<i32>} : memref<4x10x10xf32, #tpu.memory_space<vmem>>, vector<4x1x10xf32>,
    %cst_11 = arith.constant 0.000000e+00 : f32
    %17 = vector.broadcast %cst_11 : f32 to vector<4x1x10xf32>
    %c0_12 = arith.constant 0 : index
    %c9 = arith.constant 9 : index
    %c0_13 = arith.constant 0 : index
    %18 = vector.load %arg12[%c0_12, %c9, %c0_13] : memref<4x10x10xf32, #tpu.memory_space<vmem>>, vector<4x1x10xf32>
    tpu.vector_store %arg12[%c0_12, %c9, %c0_13], %17 {strides = array<i32>} : memref<4x10x10xf32, #tpu.memory_space<vmem>>, vector<4x1x10xf32>,
    %cst_14 = arith.constant 0.000000e+00 : f32
    %19 = vector.broadcast %cst_14 : f32 to vector<4x10x1xf32>
    %c0_15 = arith.constant 0 : index
    %c0_16 = arith.constant 0 : index
    %c0_17 = arith.constant 0 : index
    %20 = vector.load %arg12[%c0_15, %c0_16, %c0_17] : memref<4x10x10xf32, #tpu.memory_space<vmem>>, vector<4x10x1xf32>
    tpu.vector_store %arg12[%c0_15, %c0_16, %c0_17], %19 {strides = array<i32>} : memref<4x10x10xf32, #tpu.memory_space<vmem>>, vector<4x10x1xf32>,
    %cst_18 = arith.constant 0.000000e+00 : f32
    %21 = vector.broadcast %cst_18 : f32 to vector<4x10x1xf32>
    %c0_19 = arith.constant 0 : index
    %c0_20 = arith.constant 0 : index
    %c9_21 = arith.constant 9 : index
    %22 = vector.load %arg12[%c0_19, %c0_20, %c9_21] : memref<4x10x10xf32, #tpu.memory_space<vmem>>, vector<4x10x1xf32>
    tpu.vector_store %arg12[%c0_19, %c0_20, %c9_21], %21 {strides = array<i32>} : memref<4x10x10xf32, #tpu.memory_space<vmem>>, vector<4x10x1xf32>,
    %cst_22 = arith.constant 0.000000e+00 : f32
    %23 = vector.broadcast %cst_22 : f32 to vector<8x1x10xf32>
    %c0_23 = arith.constant 0 : index
    %c0_24 = arith.constant 0 : index
    %c0_25 = arith.constant 0 : index
    %24 = vector.load %arg13[%c0_23, %c0_24, %c0_25] : memref<8x10x10xf32, #tpu.memory_space<vmem>>, vector<8x1x10xf32>
    tpu.vector_store %arg13[%c0_23, %c0_24, %c0_25], %23 {strides = array<i32>} : memref<8x10x10xf32, #tpu.memory_space<vmem>>, vector<8x1x10xf32>,
    %cst_26 = arith.constant 0.000000e+00 : f32
    %25 = vector.broadcast %cst_26 : f32 to vector<8x1x10xf32>
    %c0_27 = arith.constant 0 : index
    %c9_28 = arith.constant 9 : index
    %c0_29 = arith.constant 0 : index
    %26 = vector.load %arg13[%c0_27, %c9_28, %c0_29] : memref<8x10x10xf32, #tpu.memory_space<vmem>>, vector<8x1x10xf32>
    tpu.vector_store %arg13[%c0_27, %c9_28, %c0_29], %25 {strides = array<i32>} : memref<8x10x10xf32, #tpu.memory_space<vmem>>, vector<8x1x10xf32>,
    %cst_30 = arith.constant 0.000000e+00 : f32
    %27 = vector.broadcast %cst_30 : f32 to vector<8x10x1xf32>
    %c0_31 = arith.constant 0 : index
    %c0_32 = arith.constant 0 : index
    %c0_33 = arith.constant 0 : index
    %28 = vector.load %arg13[%c0_31, %c0_32, %c0_33] : memref<8x10x10xf32, #tpu.memory_space<vmem>>, vector<8x10x1xf32>
    tpu.vector_store %arg13[%c0_31, %c0_32, %c0_33], %27 {strides = array<i32>} : memref<8x10x10xf32, #tpu.memory_space<vmem>>, vector<8x10x1xf32>,
    %cst_34 = arith.constant 0.000000e+00 : f32
    %29 = vector.broadcast %cst_34 : f32 to vector<8x10x1xf32>
    %c0_35 = arith.constant 0 : index
    %c0_36 = arith.constant 0 : index
    %c9_37 = arith.constant 9 : index
    %30 = vector.load %arg13[%c0_35, %c0_36, %c9_37] : memref<8x10x10xf32, #tpu.memory_space<vmem>>, vector<8x10x1xf32>
    tpu.vector_store %arg13[%c0_35, %c0_36, %c9_37], %29 {strides = array<i32>} : memref<8x10x10xf32, #tpu.memory_space<vmem>>, vector<8x10x1xf32>,
    %c0_38 = arith.constant 0 : index
    %c0_39 = arith.constant 0 : index
    %c0_40 = arith.constant 0 : index
    %c0_41 = arith.constant 0 : index
    %31 = vector.load %arg1[%c0_38, %c0_39, %c0_40, %c0_41] : memref<1x4x16x16xf32, #tpu.memory_space<vmem>>, vector<1x4x16x16xf32>
    %32 = vector.shape_cast %31 : vector<1x4x16x16xf32> to vector<4x16x16xf32>
    %33 = vector.shape_cast %32 : vector<4x16x16xf32> to vector<32x2x16xf32>
    %34 = vector.extract_strided_slice %33 {offsets = [0, 0, 0], sizes = [32, 1, 16], strides = [1, 1, 1]} : vector<32x2x16xf32> to vector<32x1x16xf32>
    %35 = vector.shape_cast %34 : vector<32x1x16xf32> to vector<32x16xf32>
    %36 = vector.extract_strided_slice %33 {offsets = [0, 1, 0], sizes = [32, 1, 16], strides = [1, 1, 1]} : vector<32x2x16xf32> to vector<32x1x16xf32>
    %37 = vector.shape_cast %36 : vector<32x1x16xf32> to vector<32x16xf32>
    %38 = arith.maximumf %35, %37 : vector<32x16xf32>
    %39 = vector.shape_cast %38 : vector<32x16xf32> to vector<32x8x2xf32>
    %40 = vector.extract_strided_slice %39 {offsets = [0, 0, 0], sizes = [32, 8, 1], strides = [1, 1, 1]} : vector<32x8x2xf32> to vector<32x8x1xf32>
    %41 = vector.shape_cast %40 : vector<32x8x1xf32> to vector<32x8xf32>
    %42 = vector.extract_strided_slice %39 {offsets = [0, 0, 1], sizes = [32, 8, 1], strides = [1, 1, 1]} : vector<32x8x2xf32> to vector<32x8x1xf32>
    %43 = vector.shape_cast %42 : vector<32x8x1xf32> to vector<32x8xf32>
    %44 = arith.maximumf %41, %43 : vector<32x8xf32>
    %45 = vector.shape_cast %44 : vector<32x8xf32> to vector<4x8x8xf32>
    %c0_42 = arith.constant 0 : index
    %c1 = arith.constant 1 : index
    %c1_43 = arith.constant 1 : index
    %46 = vector.load %arg12[%c0_42, %c1, %c1_43] : memref<4x10x10xf32, #tpu.memory_space<vmem>>, vector<4x8x8xf32>
    tpu.vector_store %arg12[%c0_42, %c1, %c1_43], %45 {strides = array<i32>} : memref<4x10x10xf32, #tpu.memory_space<vmem>>, vector<4x8x8xf32>,
    %c0_44 = arith.constant 0 : index
    %c0_45 = arith.constant 0 : index
    %c0_46 = arith.constant 0 : index
    %47 = vector.load %arg12[%c0_44, %c0_45, %c0_46] : memref<4x10x10xf32, #tpu.memory_space<vmem>>, vector<4x8x8xf32>
    %48 = vector.shape_cast %47 : vector<4x8x8xf32> to vector<4x64xf32>
    %c0_47 = arith.constant 0 : index
    %c0_48 = arith.constant 0 : index
    %c1_49 = arith.constant 1 : index
    %49 = vector.load %arg12[%c0_47, %c0_48, %c1_49] : memref<4x10x10xf32, #tpu.memory_space<vmem>>, vector<4x8x8xf32>
    %50 = vector.shape_cast %49 : vector<4x8x8xf32> to vector<4x64xf32>
    %c0_50 = arith.constant 0 : index
    %c0_51 = arith.constant 0 : index
    %c2 = arith.constant 2 : index
    %51 = vector.load %arg12[%c0_50, %c0_51, %c2] : memref<4x10x10xf32, #tpu.memory_space<vmem>>, vector<4x8x8xf32>
    %52 = vector.shape_cast %51 : vector<4x8x8xf32> to vector<4x64xf32>
    %c0_52 = arith.constant 0 : index
    %c1_53 = arith.constant 1 : index
    %c0_54 = arith.constant 0 : index
    %53 = vector.load %arg12[%c0_52, %c1_53, %c0_54] : memref<4x10x10xf32, #tpu.memory_space<vmem>>, vector<4x8x8xf32>
    %54 = vector.shape_cast %53 : vector<4x8x8xf32> to vector<4x64xf32>
    %c0_55 = arith.constant 0 : index
    %c1_56 = arith.constant 1 : index
    %c1_57 = arith.constant 1 : index
    %55 = vector.load %arg12[%c0_55, %c1_56, %c1_57] : memref<4x10x10xf32, #tpu.memory_space<vmem>>, vector<4x8x8xf32>
    %56 = vector.shape_cast %55 : vector<4x8x8xf32> to vector<4x64xf32>
    %c0_58 = arith.constant 0 : index
    %c1_59 = arith.constant 1 : index
    %c2_60 = arith.constant 2 : index
    %57 = vector.load %arg12[%c0_58, %c1_59, %c2_60] : memref<4x10x10xf32, #tpu.memory_space<vmem>>, vector<4x8x8xf32>
    %58 = vector.shape_cast %57 : vector<4x8x8xf32> to vector<4x64xf32>
    %c0_61 = arith.constant 0 : index
    %c2_62 = arith.constant 2 : index
    %c0_63 = arith.constant 0 : index
    %59 = vector.load %arg12[%c0_61, %c2_62, %c0_63] : memref<4x10x10xf32, #tpu.memory_space<vmem>>, vector<4x8x8xf32>
    %60 = vector.shape_cast %59 : vector<4x8x8xf32> to vector<4x64xf32>
    %c0_64 = arith.constant 0 : index
    %c2_65 = arith.constant 2 : index
    %c1_66 = arith.constant 1 : index
    %61 = vector.load %arg12[%c0_64, %c2_65, %c1_66] : memref<4x10x10xf32, #tpu.memory_space<vmem>>, vector<4x8x8xf32>
    %62 = vector.shape_cast %61 : vector<4x8x8xf32> to vector<4x64xf32>
    %c0_67 = arith.constant 0 : index
    %c2_68 = arith.constant 2 : index
    %c2_69 = arith.constant 2 : index
    %63 = vector.load %arg12[%c0_67, %c2_68, %c2_69] : memref<4x10x10xf32, #tpu.memory_space<vmem>>, vector<4x8x8xf32>
    %64 = vector.shape_cast %63 : vector<4x8x8xf32> to vector<4x64xf32>
    %65 = tpu.concatenate %48, %50, %52, %54, %56, %58, %60, %62, %64 in 0 : vector<4x64xf32>, vector<4x64xf32>, vector<4x64xf32>, vector<4x64xf32>, vector<4x64xf32>, vector<4x64xf32>, vector<4x64xf32>, vector<4x64xf32>, vector<4x64xf32> -> vector<36x64xf32>
    %66 = arith.truncf %65 : vector<36x64xf32> to vector<36x64xbf16>
    %c0_70 = arith.constant 0 : index
    %c0_71 = arith.constant 0 : index
    %67 = vector.load %arg3[%c0_70, %c0_71] : memref<8x36xbf16, #tpu.memory_space<vmem>>, vector<8x36xbf16>
    %cst_72 = arith.constant dense<0.000000e+00> : vector<8x64xf32>
    %68 = tpu.matmul %67, %66, %cst_72 {dimension_numbers = #tpu.dot_dimension_numbers<[1], [0], [0], [1], [0, 0, 1, 1], [], []>} : vector<8x36xbf16>, vector<36x64xbf16>, vector<8x64xf32> -> vector<8x64xf32>
    %69 = vector.shape_cast %68 : vector<8x64xf32> to vector<1x8x64xf32>
    %cst_73 = arith.constant dense<0.000000e+00> : vector<1xf32>
    %70 = vector.multi_reduction <add>, %69, %cst_73 [1, 2] : vector<1x8x64xf32> to vector<1xf32>
    %71 = vector.shape_cast %70 : vector<1xf32> to vector<1x1x1xf32>
    %72 = vector.extract %71[0, 0, 0] : f32 from vector<1x1x1xf32>
    %73 = vector.broadcast %72 : f32 to vector<1x1xf32>
    %74 = arith.mulf %68, %68 : vector<8x64xf32>
    %75 = vector.shape_cast %74 : vector<8x64xf32> to vector<1x8x64xf32>
    %cst_74 = arith.constant dense<0.000000e+00> : vector<1xf32>
    %76 = vector.multi_reduction <add>, %75, %cst_74 [1, 2] : vector<1x8x64xf32> to vector<1xf32>
    %77 = vector.shape_cast %76 : vector<1xf32> to vector<1x1x1xf32>
    %78 = vector.extract %77[0, 0, 0] : f32 from vector<1x1x1xf32>
    %79 = vector.broadcast %78 : f32 to vector<1x1xf32>
    %cst_75 = arith.constant 0.001953125 : f32
    %80 = vector.broadcast %cst_75 : f32 to vector<1x1xf32>
    %81 = arith.mulf %73, %80 : vector<1x1xf32>
    %cst_76 = arith.constant 0.001953125 : f32
    %82 = vector.broadcast %cst_76 : f32 to vector<1x1xf32>
    %83 = arith.mulf %79, %82 : vector<1x1xf32>
    %84 = arith.mulf %81, %81 : vector<1x1xf32>
    %85 = arith.subf %83, %84 : vector<1x1xf32>
    %86 = vector.broadcast %81 : vector<1x1xf32> to vector<8x64xf32>
    %87 = arith.subf %68, %86 : vector<8x64xf32>
    %cst_77 = arith.constant 9.99999974E-6 : f32
    %88 = vector.broadcast %cst_77 : f32 to vector<1x1xf32>
    %89 = arith.addf %85, %88 : vector<1x1xf32>
    %90 = math.rsqrt %89 : vector<1x1xf32>
    %91 = vector.broadcast %90 : vector<1x1xf32> to vector<8x64xf32>
    %92 = arith.mulf %87, %91 : vector<8x64xf32>
    %c0_78 = arith.constant 0 : index
    %c0_79 = arith.constant 0 : index
    %93 = vector.load %arg5[%c0_78, %c0_79] : memref<8x1xf32, #tpu.memory_space<vmem>>, vector<8x1xf32>
    %94 = vector.broadcast %93 : vector<8x1xf32> to vector<8x64xf32>
    %95 = arith.mulf %92, %94 : vector<8x64xf32>
    %c0_80 = arith.constant 0 : index
    %c0_81 = arith.constant 0 : index
    %96 = vector.load %arg6[%c0_80, %c0_81] : memref<8x1xf32, #tpu.memory_space<vmem>>, vector<8x1xf32>
    %97 = vector.broadcast %96 : vector<8x1xf32> to vector<8x64xf32>
    %98 = arith.addf %95, %97 : vector<8x64xf32>
    %cst_82 = arith.constant 5.000000e-01 : f32
    %99 = vector.broadcast %cst_82 : f32 to vector<8x64xf32>
    %100 = arith.mulf %99, %98 : vector<8x64xf32>
    %cst_83 = arith.constant 0.707106769 : f32
    %101 = vector.broadcast %cst_83 : f32 to vector<8x64xf32>
    %102 = arith.mulf %98, %101 : vector<8x64xf32>
    %103 = math.erf %102 : vector<8x64xf32>
    %cst_84 = arith.constant 1.000000e+00 : f32
    %104 = vector.broadcast %cst_84 : f32 to vector<8x64xf32>
    %105 = arith.addf %104, %103 : vector<8x64xf32>
    %106 = arith.mulf %100, %105 : vector<8x64xf32>
    %107 = vector.shape_cast %106 : vector<8x64xf32> to vector<8x8x8xf32>
    %c0_85 = arith.constant 0 : index
    %c1_86 = arith.constant 1 : index
    %c1_87 = arith.constant 1 : index
    %108 = vector.load %arg13[%c0_85, %c1_86, %c1_87] : memref<8x10x10xf32, #tpu.memory_space<vmem>>, vector<8x8x8xf32>
    tpu.vector_store %arg13[%c0_85, %c1_86, %c1_87], %107 {strides = array<i32>} : memref<8x10x10xf32, #tpu.memory_space<vmem>>, vector<8x8x8xf32>,
    %c0_88 = arith.constant 0 : index
    %c0_89 = arith.constant 0 : index
    %c0_90 = arith.constant 0 : index
    %109 = vector.load %arg13[%c0_88, %c0_89, %c0_90] : memref<8x10x10xf32, #tpu.memory_space<vmem>>, vector<8x8x8xf32>
    %110 = vector.shape_cast %109 : vector<8x8x8xf32> to vector<8x64xf32>
    %c0_91 = arith.constant 0 : index
    %c0_92 = arith.constant 0 : index
    %c1_93 = arith.constant 1 : index
    %111 = vector.load %arg13[%c0_91, %c0_92, %c1_93] : memref<8x10x10xf32, #tpu.memory_space<vmem>>, vector<8x8x8xf32>
    %112 = vector.shape_cast %111 : vector<8x8x8xf32> to vector<8x64xf32>
    %c0_94 = arith.constant 0 : index
    %c0_95 = arith.constant 0 : index
    %c2_96 = arith.constant 2 : index
    %113 = vector.load %arg13[%c0_94, %c0_95, %c2_96] : memref<8x10x10xf32, #tpu.memory_space<vmem>>, vector<8x8x8xf32>
    %114 = vector.shape_cast %113 : vector<8x8x8xf32> to vector<8x64xf32>
    %c0_97 = arith.constant 0 : index
    %c1_98 = arith.constant 1 : index
    %c0_99 = arith.constant 0 : index
    %115 = vector.load %arg13[%c0_97, %c1_98, %c0_99] : memref<8x10x10xf32, #tpu.memory_space<vmem>>, vector<8x8x8xf32>
    %116 = vector.shape_cast %115 : vector<8x8x8xf32> to vector<8x64xf32>
    %c0_100 = arith.constant 0 : index
    %c1_101 = arith.constant 1 : index
    %c1_102 = arith.constant 1 : index
    %117 = vector.load %arg13[%c0_100, %c1_101, %c1_102] : memref<8x10x10xf32, #tpu.memory_space<vmem>>, vector<8x8x8xf32>
    %118 = vector.shape_cast %117 : vector<8x8x8xf32> to vector<8x64xf32>
    %c0_103 = arith.constant 0 : index
    %c1_104 = arith.constant 1 : index
    %c2_105 = arith.constant 2 : index
    %119 = vector.load %arg13[%c0_103, %c1_104, %c2_105] : memref<8x10x10xf32, #tpu.memory_space<vmem>>, vector<8x8x8xf32>
    %120 = vector.shape_cast %119 : vector<8x8x8xf32> to vector<8x64xf32>
    %c0_106 = arith.constant 0 : index
    %c2_107 = arith.constant 2 : index
    %c0_108 = arith.constant 0 : index
    %121 = vector.load %arg13[%c0_106, %c2_107, %c0_108] : memref<8x10x10xf32, #tpu.memory_space<vmem>>, vector<8x8x8xf32>
    %122 = vector.shape_cast %121 : vector<8x8x8xf32> to vector<8x64xf32>
    %c0_109 = arith.constant 0 : index
    %c2_110 = arith.constant 2 : index
    %c1_111 = arith.constant 1 : index
    %123 = vector.load %arg13[%c0_109, %c2_110, %c1_111] : memref<8x10x10xf32, #tpu.memory_space<vmem>>, vector<8x8x8xf32>
    %124 = vector.shape_cast %123 : vector<8x8x8xf32> to vector<8x64xf32>
    %c0_112 = arith.constant 0 : index
    %c2_113 = arith.constant 2 : index
    %c2_114 = arith.constant 2 : index
    %125 = vector.load %arg13[%c0_112, %c2_113, %c2_114] : memref<8x10x10xf32, #tpu.memory_space<vmem>>, vector<8x8x8xf32>
    %126 = vector.shape_cast %125 : vector<8x8x8xf32> to vector<8x64xf32>
    %127 = tpu.concatenate %110, %112, %114, %116, %118, %120, %122, %124, %126 in 0 : vector<8x64xf32>, vector<8x64xf32>, vector<8x64xf32>, vector<8x64xf32>, vector<8x64xf32>, vector<8x64xf32>, vector<8x64xf32>, vector<8x64xf32>, vector<8x64xf32> -> vector<72x64xf32>
    %128 = arith.truncf %127 : vector<72x64xf32> to vector<72x64xbf16>
    %c0_115 = arith.constant 0 : index
    %c0_116 = arith.constant 0 : index
    %129 = vector.load %arg4[%c0_115, %c0_116] : memref<8x72xbf16, #tpu.memory_space<vmem>>, vector<8x72xbf16>
    %cst_117 = arith.constant dense<0.000000e+00> : vector<8x64xf32>
    %130 = tpu.matmul %129, %128, %cst_117 {dimension_numbers = #tpu.dot_dimension_numbers<[1], [0], [0], [1], [0, 0, 1, 1], [], []>} : vector<8x72xbf16>, vector<72x64xbf16>, vector<8x64xf32> -> vector<8x64xf32>
    %131 = vector.shape_cast %130 : vector<8x64xf32> to vector<1x8x64xf32>
    %cst_118 = arith.constant dense<0.000000e+00> : vector<1xf32>
    %132 = vector.multi_reduction <add>, %131, %cst_118 [1, 2] : vector<1x8x64xf32> to vector<1xf32>
    %133 = vector.shape_cast %132 : vector<1xf32> to vector<1x1x1xf32>
    %134 = vector.extract %133[0, 0, 0] : f32 from vector<1x1x1xf32>
    %135 = vector.broadcast %134 : f32 to vector<1x1xf32>
    %136 = arith.mulf %130, %130 : vector<8x64xf32>
    %137 = vector.shape_cast %136 : vector<8x64xf32> to vector<1x8x64xf32>
    %cst_119 = arith.constant dense<0.000000e+00> : vector<1xf32>
    %138 = vector.multi_reduction <add>, %137, %cst_119 [1, 2] : vector<1x8x64xf32> to vector<1xf32>
    %139 = vector.shape_cast %138 : vector<1xf32> to vector<1x1x1xf32>
    %140 = vector.extract %139[0, 0, 0] : f32 from vector<1x1x1xf32>
    %141 = vector.broadcast %140 : f32 to vector<1x1xf32>
    %cst_120 = arith.constant 0.001953125 : f32
    %142 = vector.broadcast %cst_120 : f32 to vector<1x1xf32>
    %143 = arith.mulf %135, %142 : vector<1x1xf32>
    %cst_121 = arith.constant 0.001953125 : f32
    %144 = vector.broadcast %cst_121 : f32 to vector<1x1xf32>
    %145 = arith.mulf %141, %144 : vector<1x1xf32>
    %146 = arith.mulf %143, %143 : vector<1x1xf32>
    %147 = arith.subf %145, %146 : vector<1x1xf32>
    %148 = vector.broadcast %143 : vector<1x1xf32> to vector<8x64xf32>
    %149 = arith.subf %130, %148 : vector<8x64xf32>
    %cst_122 = arith.constant 9.99999974E-6 : f32
    %150 = vector.broadcast %cst_122 : f32 to vector<1x1xf32>
    %151 = arith.addf %147, %150 : vector<1x1xf32>
    %152 = math.rsqrt %151 : vector<1x1xf32>
    %153 = vector.broadcast %152 : vector<1x1xf32> to vector<8x64xf32>
    %154 = arith.mulf %149, %153 : vector<8x64xf32>
    %c0_123 = arith.constant 0 : index
    %c0_124 = arith.constant 0 : index
    %155 = vector.load %arg7[%c0_123, %c0_124] : memref<8x1xf32, #tpu.memory_space<vmem>>, vector<8x1xf32>
    %156 = vector.broadcast %155 : vector<8x1xf32> to vector<8x64xf32>
    %157 = arith.mulf %154, %156 : vector<8x64xf32>
    %c0_125 = arith.constant 0 : index
    %c0_126 = arith.constant 0 : index
    %158 = vector.load %arg8[%c0_125, %c0_126] : memref<8x1xf32, #tpu.memory_space<vmem>>, vector<8x1xf32>
    %159 = vector.broadcast %158 : vector<8x1xf32> to vector<8x64xf32>
    %160 = arith.addf %157, %159 : vector<8x64xf32>
    %161 = vector.broadcast %14 : vector<8x1xf32> to vector<8x64xf32>
    %162 = arith.addf %160, %161 : vector<8x64xf32>
    %c0_127 = arith.constant 0 : index
    %c0_128 = arith.constant 0 : index
    %c0_129 = arith.constant 0 : index
    %163 = vector.load %arg11[%c0_127, %c0_128, %c0_129] : memref<1x8x64xf32, #tpu.memory_space<vmem>>, vector<1x8x64xf32>
    %164 = vector.shape_cast %163 : vector<1x8x64xf32> to vector<8x64xf32>
    %165 = vector.shape_cast %162 : vector<8x64xf32> to vector<1x8x64xf32>
    tpu.vector_store %arg11[%c0_127, %c0_128, %c0_129], %165 {strides = array<i32>} : memref<1x8x64xf32, #tpu.memory_space<vmem>>, vector<1x8x64xf32>,
    return
  }
  func.func @transform_0(%arg0: i32) -> (i32, i32, i32, i32) {
    %c0_i32 = arith.constant 0 : i32
    %c0_i32_0 = arith.constant 0 : i32
    %c0_i32_1 = arith.constant 0 : i32
    %c0_i32_2 = arith.constant 0 : i32
    return %arg0, %c0_i32, %c0_i32_0, %c0_i32_1 : i32, i32, i32, i32
  }
  func.func @transform_1(%arg0: i32) -> (i32, i32, i32) {
    %c0_i32 = arith.constant 0 : i32
    %c0_i32_0 = arith.constant 0 : i32
    %c0_i32_1 = arith.constant 0 : i32
    return %arg0, %c0_i32, %c0_i32_0 : i32, i32, i32
  }
  func.func @transform_2(%arg0: i32) -> (i32, i32) {
    %c0_i32 = arith.constant 0 : i32
    %c0_i32_0 = arith.constant 0 : i32
    %c0_i32_1 = arith.constant 0 : i32
    return %c0_i32, %c0_i32_0 : i32, i32
  }
  func.func @transform_3(%arg0: i32) -> (i32, i32) {
    %c0_i32 = arith.constant 0 : i32
    %c0_i32_0 = arith.constant 0 : i32
    %c0_i32_1 = arith.constant 0 : i32
    return %c0_i32, %c0_i32_0 : i32, i32
  }
  func.func @transform_4(%arg0: i32) -> (i32, i32) {
    %c0_i32 = arith.constant 0 : i32
    %c0_i32_0 = arith.constant 0 : i32
    %c0_i32_1 = arith.constant 0 : i32
    return %c0_i32, %c0_i32_0 : i32, i32
  }
  func.func @transform_5(%arg0: i32) -> (i32, i32) {
    %c0_i32 = arith.constant 0 : i32
    %c0_i32_0 = arith.constant 0 : i32
    %c0_i32_1 = arith.constant 0 : i32
    return %c0_i32, %c0_i32_0 : i32, i32
  }
  func.func @transform_6(%arg0: i32) -> (i32, i32) {
    %c0_i32 = arith.constant 0 : i32
    %c0_i32_0 = arith.constant 0 : i32
    %c0_i32_1 = arith.constant 0 : i32
    return %c0_i32, %c0_i32_0 : i32, i32
  }
  func.func @transform_7(%arg0: i32) -> (i32, i32) {
    %c0_i32 = arith.constant 0 : i32
    %c0_i32_0 = arith.constant 0 : i32
    %c0_i32_1 = arith.constant 0 : i32
    return %c0_i32, %c0_i32_0 : i32, i32
  }
  func.func @transform_8(%arg0: i32) -> (i32, i32) {
    %c0_i32 = arith.constant 0 : i32
    %c0_i32_0 = arith.constant 0 : i32
    %c0_i32_1 = arith.constant 0 : i32
    return %c0_i32, %c0_i32_0 : i32, i32
  }
  func.func @transform_9(%arg0: i32) -> (i32, i32) {
    %c0_i32 = arith.constant 0 : i32
    %c0_i32_0 = arith.constant 0 : i32
    %c0_i32_1 = arith.constant 0 : i32
    return %c0_i32, %c0_i32_0 : i32, i32
  }
  func.func @transform_10(%arg0: i32) -> (i32, i32, i32) {
    %c0_i32 = arith.constant 0 : i32
    %c0_i32_0 = arith.constant 0 : i32
    %c0_i32_1 = arith.constant 0 : i32
    return %arg0, %c0_i32, %c0_i32_0 : i32, i32, i32
  }
}

</mosaic_0001>

<llo_original>
// kernel: tpu_custom_call.1
$region0: #{tpu_custom_call.1}
  #allocation0 [shape = 'u32[]', space=smem, size = 0x4, offset = 0x4, fixed_abs, tag = 'smem constant byte address 0x4 - core index']
  #allocation1 [shape = 'u32[144,128]{1,0:T(1,128)}', space=vmem, size = 0x12000, scoped, tag = 'internal scratch']
  #allocation2 [shape = 'f32[4,10,10]{2,1,0:T(8,128)}', space=vmem, size = 0x8000, scoped, tag = 'scratch operand']
  #allocation3 [shape = 'f32[8,10,10]{2,1,0:T(8,128)}', space=vmem, size = 0x10000, scoped, tag = 'scratch operand']
  %s0 = inlined_call_operand.hbm [shape: f32[2,4,16,16], index: 0, kind: input, shape index: {}]
  %s1 = inlined_call_operand.vmem [shape: f32[2,1,4], index: 1, kind: input, shape index: {}]
  %s2 = inlined_call_operand.vmem [shape: bf16[8,36], index: 2, kind: input, shape index: {}]
  %s3 = inlined_call_operand.vmem [shape: bf16[8,72], index: 3, kind: input, shape index: {}]
  %s4 = inlined_call_operand.vmem [shape: f32[8,1], index: 4, kind: input, shape index: {}]
  %s5 = inlined_call_operand.vmem [shape: f32[8,1], index: 5, kind: input, shape index: {}]
  %s6 = inlined_call_operand.vmem [shape: f32[8,1], index: 6, kind: input, shape index: {}]
  %s7 = inlined_call_operand.vmem [shape: f32[8,1], index: 7, kind: input, shape index: {}]
  %s8 = inlined_call_operand.vmem [shape: f32[8,4], index: 8, kind: input, shape index: {}]
  %s9 = inlined_call_operand.vmem [shape: f32[8,1], index: 9, kind: input, shape index: {}]
  %s10 = inlined_call_operand.hbm [shape: f32[2,8,64], index: 10, kind: output, shape index: {}]
  %s11 = sld [smem:[#allocation0]]
  $region77: #{tpu_custom_call.1} parent=0
    _
  %s13 = ssub.s32 1, %s11
  %s14 = scalar_select 0, %s13, %s11
  $region1: #{tpu_custom_call.1} parent=0
    #allocation4 [shape = 'u8[65536]{0}', space=vmem, size = 0x10000, scoped, tag = 'input window, operand 0']
    #allocation5 [shape = 's32[2]{0}', space=sflag, size = 0x8, scoped, tag = 'scoped memory for tpu_custom_call.1']
    #allocation6 [shape = 's32[2]{0}', space=sflag, size = 0x8, scoped, tag = 'scoped memory for tpu_custom_call.1']
    #allocation7 [shape = 'u8[8192]{0}', space=vmem, size = 0x2000, scoped, tag = 'output window, operand 0']
    %15 = vsyncpa [#allocation5], 0
    %s16 = scalar_lea.sflag [#allocation5], 1
    %17 = vsyncpa %s16, 0
    %18 = vsyncpa [#allocation6], 0
    %s19 = scalar_lea.sflag [#allocation6], 1
    %20 = vsyncpa %s19, 0
    loop: start=0, step=1, limit=4
    $region2: #{tpu_custom_call.1} parent=1 // loop_pre_header
      _
    $region3: #{tpu_custom_call.1} parent=1 // loop_header
      %s22 = sphi 0, %s26
      %p23 = scmp.ge.s32.totalorder %s22, 4
      %s32 = sphi 0, %s34
      %s35 = sphi 0, %s32
      %s36 = sphi 0, %s35
      %s52 = sphi 0, %s36
      %s58 = sphi 0, %s60
      %s61 = sphi 0, %s58
      %s62 = sphi 0, %s61
      %s78 = sphi 0, %s62
      %s82 = sphi 0, %s82
      %s84 = sphi 0, %s82
      %s85 = sphi 0, %s84
      %s99 = sphi 0, %s85
      %s103 = sphi 0, %s103
      %s105 = sphi 0, %s103
      %s106 = sphi 0, %s105
      %s120 = sphi 0, %s106
      %s124 = sphi 0, %s124
      %s126 = sphi 0, %s124
      %s127 = sphi 0, %s126
      %s141 = sphi 0, %s127
      %s145 = sphi 0, %s145
      %s147 = sphi 0, %s145
      %s148 = sphi 0, %s147
      %s162 = sphi 0, %s148
      %s166 = sphi 0, %s166
      %s168 = sphi 0, %s166
      %s169 = sphi 0, %s168
      %s183 = sphi 0, %s169
      %s187 = sphi 0, %s187
      %s189 = sphi 0, %s187
      %s190 = sphi 0, %s189
      %s204 = sphi 0, %s190
      %s208 = sphi 0, %s208
      %s210 = sphi 0, %s208
      %s211 = sphi 0, %s210
      %s225 = sphi 0, %s211
      %s229 = sphi 0, %s229
      %s231 = sphi 0, %s229
      %s232 = sphi 0, %s231
      %s246 = sphi 0, %s232
      %s252 = sphi 0, %s254
      %s255 = sphi 0, %s252
      %s256 = sphi 0, %s255
      %s272 = sphi 0, %s256
    $region4: #{tpu_custom_call.1} parent=1 // loop_header_branch
      %25 = sbr.rel (%p23) target = $region8
    $region5: #{tpu_custom_call.1} parent=1 // loop_body
      %s27 = ssub.s32 %s22, 1
      %s28 = ssub.s32 %s22, 2
      %s29 = sadd.s32 %s22, 1
      %s30 = ssub.s32 %s22, %s29
      %p31 = scmp.eq.s32.totalorder %s30, 0
      %s33 = sadd.s32 %s32, 1
      %s34 = scalar_select %p31, %s32, %s33
      %p37 = pneg %p31
      %p38 = scmp.eq.s32.totalorder %s22, 1
      %p39 = por %p37, %p38
      %p40 = scmp.ne.s32.totalorder %s32, %s35
      %p41 = scmp.eq.s32.totalorder %s22, 0
      %p42 = por %p40, %p41
      %p43 = scmp.ne.s32.totalorder %s32, %s35
      %p44 = scmp.eq.s32.totalorder %s27, 1
      %p45 = por %p43, %p44
      %p46 = scmp.ne.s32.totalorder %s35, %s36
      %p47 = scmp.eq.s32.totalorder %s27, 0
      %p48 = por %p46, %p47
      %p49 = scmp.ne.s32.totalorder %s35, %s36
      %p50 = scmp.eq.s32.totalorder %s28, 1
      %p51 = por %p49, %p50
      %p53 = scmp.ne.s32.totalorder %s36, %s52
      %p54 = scmp.eq.s32.totalorder %s28, 0
      %p55 = por %p53, %p54
      %s56 = ssub.s32 %s22, %s29
      %p57 = scmp.eq.s32.totalorder %s56, 0
      %s59 = sadd.s32 %s58, 1
      %s60 = scalar_select %p57, %s58, %s59
      %p63 = pneg %p57
      %p64 = scmp.eq.s32.totalorder %s22, 1
      %p65 = por %p63, %p64
      %p66 = scmp.ne.s32.totalorder %s58, %s61
      %p67 = scmp.eq.s32.totalorder %s22, 0
      %p68 = por %p66, %p67
      %p69 = scmp.ne.s32.totalorder %s58, %s61
      %p70 = scmp.eq.s32.totalorder %s27, 1
      %p71 = por %p69, %p70
      %p72 = scmp.ne.s32.totalorder %s61, %s62
      %p73 = scmp.eq.s32.totalorder %s27, 0
      %p74 = por %p72, %p73
      %p75 = scmp.ne.s32.totalorder %s61, %s62
      %p76 = scmp.eq.s32.totalorder %s28, 1
      %p77 = por %p75, %p76
      %p79 = scmp.ne.s32.totalorder %s62, %s78
      %p80 = scmp.eq.s32.totalorder %s28, 0
      %p81 = por %p79, %p80
      %s83 = sadd.s32 %s82, 1
      %p86 = scmp.eq.s32.totalorder %s22, 1
      %p87 = scmp.ne.s32.totalorder %s82, %s84
      %p88 = scmp.eq.s32.totalorder %s22, 0
      %p89 = por %p87, %p88
      %p90 = scmp.ne.s32.totalorder %s82, %s84
      %p91 = scmp.eq.s32.totalorder %s27, 1
      %p92 = por %p90, %p91
      %p93 = scmp.ne.s32.totalorder %s84, %s85
      %p94 = scmp.eq.s32.totalorder %s27, 0
      %p95 = por %p93, %p94
      %p96 = scmp.ne.s32.totalorder %s84, %s85
      %p97 = scmp.eq.s32.totalorder %s28, 1
      %p98 = por %p96, %p97
      %p100 = scmp.ne.s32.totalorder %s85, %s99
      %p101 = scmp.eq.s32.totalorder %s28, 0
      %p102 = por %p100, %p101
      %s104 = sadd.s32 %s103, 1
      %p107 = scmp.eq.s32.totalorder %s22, 1
      %p108 = scmp.ne.s32.totalorder %s103, %s105
      %p109 = scmp.eq.s32.totalorder %s22, 0
      %p110 = por %p108, %p109
      %p111 = scmp.ne.s32.totalorder %s103, %s105
      %p112 = scmp.eq.s32.totalorder %s27, 1
      %p113 = por %p111, %p112
      %p114 = scmp.ne.s32.totalorder %s105, %s106
      %p115 = scmp.eq.s32.totalorder %s27, 0
      %p116 = por %p114, %p115
      %p117 = scmp.ne.s32.totalorder %s105, %s106
      %p118 = scmp.eq.s32.totalorder %s28, 1
      %p119 = por %p117, %p118
      %p121 = scmp.ne.s32.totalorder %s106, %s120
      %p122 = scmp.eq.s32.totalorder %s28, 0
      %p123 = por %p121, %p122
      %s125 = sadd.s32 %s124, 1
      %p128 = scmp.eq.s32.totalorder %s22, 1
      %p129 = scmp.ne.s32.totalorder %s124, %s126
      %p130 = scmp.eq.s32.totalorder %s22, 0
      %p131 = por %p129, %p130
      %p132 = scmp.ne.s32.totalorder %s124, %s126
      %p133 = scmp.eq.s32.totalorder %s27, 1
      %p134 = por %p132, %p133
      %p135 = scmp.ne.s32.totalorder %s126, %s127
      %p136 = scmp.eq.s32.totalorder %s27, 0
      %p137 = por %p135, %p136
      %p138 = scmp.ne.s32.totalorder %s126, %s127
      %p139 = scmp.eq.s32.totalorder %s28, 1
      %p140 = por %p138, %p139
      %p142 = scmp.ne.s32.totalorder %s127, %s141
      %p143 = scmp.eq.s32.totalorder %s28, 0
      %p144 = por %p142, %p143
      %s146 = sadd.s32 %s145, 1
      %p149 = scmp.eq.s32.totalorder %s22, 1
      %p150 = scmp.ne.s32.totalorder %s145, %s147
      %p151 = scmp.eq.s32.totalorder %s22, 0
      %p152 = por %p150, %p151
      %p153 = scmp.ne.s32.totalorder %s145, %s147
      %p154 = scmp.eq.s32.totalorder %s27, 1
      %p155 = por %p153, %p154
      %p156 = scmp.ne.s32.totalorder %s147, %s148
      %p157 = scmp.eq.s32.totalorder %s27, 0
      %p158 = por %p156, %p157
      %p159 = scmp.ne.s32.totalorder %s147, %s148
      %p160 = scmp.eq.s32.totalorder %s28, 1
      %p161 = por %p159, %p160
      %p163 = scmp.ne.s32.totalorder %s148, %s162
      %p164 = scmp.eq.s32.totalorder %s28, 0
      %p165 = por %p163, %p164
      %s167 = sadd.s32 %s166, 1
      %p170 = scmp.eq.s32.totalorder %s22, 1
      %p171 = scmp.ne.s32.totalorder %s166, %s168
      %p172 = scmp.eq.s32.totalorder %s22, 0
      %p173 = por %p171, %p172
      %p174 = scmp.ne.s32.totalorder %s166, %s168
      %p175 = scmp.eq.s32.totalorder %s27, 1
      %p176 = por %p174, %p175
      %p177 = scmp.ne.s32.totalorder %s168, %s169
      %p178 = scmp.eq.s32.totalorder %s27, 0
      %p179 = por %p177, %p178
      %p180 = scmp.ne.s32.totalorder %s168, %s169
      %p181 = scmp.eq.s32.totalorder %s28, 1
      %p182 = por %p180, %p181
      %p184 = scmp.ne.s32.totalorder %s169, %s183
      %p185 = scmp.eq.s32.totalorder %s28, 0
      %p186 = por %p184, %p185
      %s188 = sadd.s32 %s187, 1
      %p191 = scmp.eq.s32.totalorder %s22, 1
      %p192 = scmp.ne.s32.totalorder %s187, %s189
      %p193 = scmp.eq.s32.totalorder %s22, 0
      %p194 = por %p192, %p193
      %p195 = scmp.ne.s32.totalorder %s187, %s189
      %p196 = scmp.eq.s32.totalorder %s27, 1
      %p197 = por %p195, %p196
      %p198 = scmp.ne.s32.totalorder %s189, %s190
      %p199 = scmp.eq.s32.totalorder %s27, 0
      %p200 = por %p198, %p199
      %p201 = scmp.ne.s32.totalorder %s189, %s190
      %p202 = scmp.eq.s32.totalorder %s28, 1
      %p203 = por %p201, %p202
      %p205 = scmp.ne.s32.totalorder %s190, %s204
      %p206 = scmp.eq.s32.totalorder %s28, 0
      %p207 = por %p205, %p206
      %s209 = sadd.s32 %s208, 1
      %p212 = scmp.eq.s32.totalorder %s22, 1
      %p213 = scmp.ne.s32.totalorder %s208, %s210
      %p214 = scmp.eq.s32.totalorder %s22, 0
      %p215 = por %p213, %p214
      %p216 = scmp.ne.s32.totalorder %s208, %s210
      %p217 = scmp.eq.s32.totalorder %s27, 1
      %p218 = por %p216, %p217
      %p219 = scmp.ne.s32.totalorder %s210, %s211
      %p220 = scmp.eq.s32.totalorder %s27, 0
      %p221 = por %p219, %p220
      %p222 = scmp.ne.s32.totalorder %s210, %s211
      %p223 = scmp.eq.s32.totalorder %s28, 1
      %p224 = por %p222, %p223
      %p226 = scmp.ne.s32.totalorder %s211, %s225
      %p227 = scmp.eq.s32.totalorder %s28, 0
      %p228 = por %p226, %p227
      %s230 = sadd.s32 %s229, 1
      %p233 = scmp.eq.s32.totalorder %s22, 1
      %p234 = scmp.ne.s32.totalorder %s229, %s231
      %p235 = scmp.eq.s32.totalorder %s22, 0
      %p236 = por %p234, %p235
      %p237 = scmp.ne.s32.totalorder %s229, %s231
      %p238 = scmp.eq.s32.totalorder %s27, 1
      %p239 = por %p237, %p238
      %p240 = scmp.ne.s32.totalorder %s231, %s232
      %p241 = scmp.eq.s32.totalorder %s27, 0
      %p242 = por %p240, %p241
      %p243 = scmp.ne.s32.totalorder %s231, %s232
      %p244 = scmp.eq.s32.totalorder %s28, 1
      %p245 = por %p243, %p244
      %p247 = scmp.ne.s32.totalorder %s232, %s246
      %p248 = scmp.eq.s32.totalorder %s28, 0
      %p249 = por %p247, %p248
      %s250 = ssub.s32 %s22, %s29
      %p251 = scmp.eq.s32.totalorder %s250, 0
      %s253 = sadd.s32 %s252, 1
      %s254 = scalar_select %p251, %s252, %s253
      %p257 = pneg %p251
      %p258 = scmp.eq.s32.totalorder %s22, 1
      %p259 = por %p257, %p258
      %p260 = scmp.ne.s32.totalorder %s252, %s255
      %p261 = scmp.eq.s32.totalorder %s22, 0
      %p262 = por %p260, %p261
      %p263 = scmp.ne.s32.totalorder %s252, %s255
      %p264 = scmp.eq.s32.totalorder %s27, 1
      %p265 = por %p263, %p264
      %p266 = scmp.ne.s32.totalorder %s255, %s256
      %p267 = scmp.eq.s32.totalorder %s27, 0
      %p268 = por %p266, %p267
      %p269 = scmp.ne.s32.totalorder %s255, %s256
      %p270 = scmp.eq.s32.totalorder %s28, 1
      %p271 = por %p269, %p270
      %p273 = scmp.ne.s32.totalorder %s256, %s272
      %p274 = scmp.eq.s32.totalorder %s28, 0
      %p275 = por %p273, %p274
      %p276 = scmp.le.s32.totalorder 1, %s22
      %p277 = scmp.lt.s32.totalorder %s22, 3
      %p278 = pnand %p276, %p277
      %p279 = pneg %p278
      // Predicated region
      $region9: #{tpu_custom_call.1} parent=5 // pred_check
        _
      $region10: #{tpu_custom_call.1} parent=5 // pred_check_branch
        %281 = sbr.rel (%p278) target = $region12
      $region11: #{tpu_custom_call.1} parent=5 // pred_region
        %s282 = ssub.s32 %s22, 1
        // Predicated region
        $region13: #{tpu_custom_call.1} parent=11 // pred_check
          %p283 = pneg %p95
        $region14: #{tpu_custom_call.1} parent=11 // pred_check_branch
          %285 = sbr.rel (%p283) target = $region16
        $region15: #{tpu_custom_call.1} parent=11 // pred_region
          _
        $region16: #{tpu_custom_call.1} parent=11 // pred_fallthru
          _
        // Predicated region
        $region17: #{tpu_custom_call.1} parent=11 // pred_check
          %p286 = pneg %p116
        $region18: #{tpu_custom_call.1} parent=11 // pred_check_branch
          %288 = sbr.rel (%p286) target = $region20
        $region19: #{tpu_custom_call.1} parent=11 // pred_region
          _
        $region20: #{tpu_custom_call.1} parent=11 // pred_fallthru
          _
        // Predicated region
        $region21: #{tpu_custom_call.1} parent=11 // pred_check
          %p289 = pneg %p137
        $region22: #{tpu_custom_call.1} parent=11 // pred_check_branch
          %291 = sbr.rel (%p289) target = $region24
        $region23: #{tpu_custom_call.1} parent=11 // pred_region
          _
        $region24: #{tpu_custom_call.1} parent=11 // pred_fallthru
          _
        // Predicated region
        $region25: #{tpu_custom_call.1} parent=11 // pred_check
          %p292 = pneg %p158
        $region26: #{tpu_custom_call.1} parent=11 // pred_check_branch
          %294 = sbr.rel (%p292) target = $region28
        $region27: #{tpu_custom_call.1} parent=11 // pred_region
          _
        $region28: #{tpu_custom_call.1} parent=11 // pred_fallthru
          _
        // Predicated region
        $region29: #{tpu_custom_call.1} parent=11 // pred_check
          %p295 = pneg %p179
        $region30: #{tpu_custom_call.1} parent=11 // pred_check_branch
          %297 = sbr.rel (%p295) target = $region32
        $region31: #{tpu_custom_call.1} parent=11 // pred_region
          _
        $region32: #{tpu_custom_call.1} parent=11 // pred_fallthru
          _
        // Predicated region
        $region33: #{tpu_custom_call.1} parent=11 // pred_check
          %p298 = pneg %p200
        $region34: #{tpu_custom_call.1} parent=11 // pred_check_branch
          %300 = sbr.rel (%p298) target = $region36
        $region35: #{tpu_custom_call.1} parent=11 // pred_region
          _
        $region36: #{tpu_custom_call.1} parent=11 // pred_fallthru
          _
        // Predicated region
        $region37: #{tpu_custom_call.1} parent=11 // pred_check
          %p301 = pneg %p221
        $region38: #{tpu_custom_call.1} parent=11 // pred_check_branch
          %303 = sbr.rel (%p301) target = $region40
        $region39: #{tpu_custom_call.1} parent=11 // pred_region
          _
        $region40: #{tpu_custom_call.1} parent=11 // pred_fallthru
          _
        // Predicated region
        $region41: #{tpu_custom_call.1} parent=11 // pred_check
          %p304 = pneg %p242
        $region42: #{tpu_custom_call.1} parent=11 // pred_check_branch
          %306 = sbr.rel (%p304) target = $region44
        $region43: #{tpu_custom_call.1} parent=11 // pred_region
          _
        $region44: #{tpu_custom_call.1} parent=11 // pred_fallthru
          _
      $region12: #{tpu_custom_call.1} parent=5 // pred_fallthru
        _
      %p307 = scmp.lt.s32.totalorder %s22, 2
      // Predicated region
      $region45: #{tpu_custom_call.1} parent=5 // pred_check
        %p308 = pneg %p307
      $region46: #{tpu_custom_call.1} parent=5 // pred_check_branch
        %310 = sbr.rel (%p308) target = $region48
      $region47: #{tpu_custom_call.1} parent=5 // pred_region
        // Predicated region
        $region49: #{tpu_custom_call.1} parent=47 // pred_check
          %p311 = pneg %p42
        $region50: #{tpu_custom_call.1} parent=47 // pred_check_branch
          %313 = sbr.rel (%p311) target = $region52
        $region51: #{tpu_custom_call.1} parent=47 // pred_region
          %s314 = sand.u32 %s32, 1
          %s315 = scalar_lea.sflag [#allocation5], %s314
          %s316 = sand.u32 %s32, 1
          %s317 = smul.addr %s316, 64
          %s318 = scalar_lea.vmem [#allocation4], %s317
          %s320 = ssub.s32 1024, 1024
          %321 = vsyncadd %s315, %s320
          %s322 = smul.addr %s22, 8
          %s323 = smul.addr %s322, 128
          %s324 = scalar_lea.hbm %s0, %s323
          %s325 = sshll.u32 %s318, 4
          %s326 = int_to_ptr.vmem [resolvable:$true] %s325
          %331 = dma.hbm_to_vmem [thread:$0]  %s324, 1024, %s326, %s315, 128, 128, 8
        $region52: #{tpu_custom_call.1} parent=47 // pred_fallthru
          _
        // Predicated region
        $region53: #{tpu_custom_call.1} parent=47 // pred_check
          %p332 = pneg %p68
        $region54: #{tpu_custom_call.1} parent=47 // pred_check_branch
          %334 = sbr.rel (%p332) target = $region56
        $region55: #{tpu_custom_call.1} parent=47 // pred_region
          %p335 = scmp.lt.s32.totalorder %s22, 1
          %s336 = scalar_select %p335, %s22, 1
          %s337 = scalar_lea.vmem %s1, %s336
        $region56: #{tpu_custom_call.1} parent=47 // pred_fallthru
          _
      $region48: #{tpu_custom_call.1} parent=5 // pred_fallthru
        _
      %p338 = scmp.le.s32.totalorder 1, %s22
      %p339 = scmp.lt.s32.totalorder %s22, 3
      %p340 = pnand %p338, %p339
      %p341 = pneg %p340
      // Predicated region
      $region57: #{tpu_custom_call.1} parent=5 // pred_check
        _
      $region58: #{tpu_custom_call.1} parent=5 // pred_check_branch
        %343 = sbr.rel (%p340) target = $region60
      $region59: #{tpu_custom_call.1} parent=5 // pred_region
        %s344 = ssub.s32 %s22, 1
        %s345 = sand.u32 %s35, 1
        %s346 = scalar_lea.sflag [#allocation5], %s345
        %s347 = sand.u32 %s35, 1
        %s348 = smul.addr %s347, 64
        %s349 = scalar_lea.vmem [#allocation4], %s348
        // Predicated region
        $region61: #{tpu_custom_call.1} parent=59 // pred_check
          %p350 = pneg %p48
        $region62: #{tpu_custom_call.1} parent=59 // pred_check_branch
          %352 = sbr.rel (%p350) target = $region64
        $region63: #{tpu_custom_call.1} parent=59 // pred_region
          %353 = dma.done %s346, 1024
        $region64: #{tpu_custom_call.1} parent=59 // pred_fallthru
          _
        %s354 = sand.u32 %s35, 1
        %s355 = scalar_lea.sflag [#allocation5], %s354
        %s356 = sand.u32 %s35, 1
        %s357 = smul.addr %s356, 64
        %s358 = scalar_lea.vmem [#allocation4], %s357
        %p359 = pneg %p48
        %p360 = pneg %p45
        %p361 = scmp.lt.s32.totalorder %s27, 1
        %s362 = scalar_select %p361, %s27, 1
        %s363 = scalar_lea.vmem %s1, %s362
        %p364 = pneg %p74
        %p365 = pneg %p71
        %p366 = pneg %p95
        %p367 = pneg %p92
        %p368 = pneg %p116
        %p369 = pneg %p113
        %p370 = pneg %p137
        %p371 = pneg %p134
        %p372 = pneg %p158
        %p373 = pneg %p155
        %p374 = pneg %p179
        %p375 = pneg %p176
        %p376 = pneg %p200
        %p377 = pneg %p197
        %p378 = pneg %p221
        %p379 = pneg %p218
        %p380 = pneg %p242
        %p381 = pneg %p239
        %p382 = pneg %p268
        %p383 = pneg %p265
        %s384 = sand.u32 %s255, 1
        %s385 = scalar_lea.sflag [#allocation6], %s384
        %s386 = sand.u32 %s255, 1
        %s387 = smul.addr %s386, 8
        %s388 = scalar_lea.vmem [#allocation7], %s387
        %p389 = scmp.lt.s32.totalorder %s27, 1
        %s390 = scalar_select %p389, %s27, 1
        %s391 = scalar_lea.vmem %s1, %s390
        %v393 = vld [vmem:[%s391] sm:$0x1]
        %v394 = vxor.u32 %v393, 2147483648
        %v395 = vmul.f32 %v394, 1.442695
        %v396 = vpow.pop %v395
        %v397 = vadd.f32 %v396, 1.0
        %v398 = vrcp.pop %v397
        %v399 = vmul.f32 1.0, %v398
        %v400 = vmul.f32 %v393, %v399
        %v401 = vld [vmem:[%s8] sm:$0xff]
        %v403 = vlaneseq
        %v404 = vshrl.u32 %v403, 7
        %v405 = vsub.s32 0, %v404
        %v406 = vrot.slane %v400, %v405
        %v408 = vmul.f32 %v401, %v406
        %vm409 = vcmask 31744
        %v410 = vsel %vm409, %v408, 0.0
        %411 = vadd.xlane.f32.xlu0 %v410
        %v412 = vpop.xlane.xlu0 %411
        %v413 = vld [vmem:[%s9] sm:$0xff]
        %v414 = vadd.f32 %v412, %v413
        %vm415 = vcmask 73728
        %416 = vst.msk [vmem:[#allocation2] sm:$0x1] %vm415, 0.0
        %417 = vst.msk [vmem:[#allocation2 + $0x10] sm:$0x1] %vm415, 0.0
        %418 = vst.msk [vmem:[#allocation2 + $0x20] sm:$0x1] %vm415, 0.0
        %419 = vst.msk [vmem:[#allocation2 + $0x30] sm:$0x1] %vm415, 0.0
        %420 = vst.msk [vmem:[#allocation2 + $0x9] sm:$0x1] %vm415, 0.0
        %421 = vst.msk [vmem:[#allocation2 + $0x19] sm:$0x1] %vm415, 0.0
        %422 = vst.msk [vmem:[#allocation2 + $0x29] sm:$0x1] %vm415, 0.0
        %423 = vst.msk [vmem:[#allocation2 + $0x39] sm:$0x1] %vm415, 0.0
        %vm424 = vcmask 7168
        %425 = vst.msk [vmem:[#allocation2] sm:$0xff] %vm424, 0.0
        %vm426 = vcmask 1024
        %427 = vst.msk [vmem:[#allocation2 + $0x8] sm:$0x3] %vm426, 0.0
        %428 = vst.msk [vmem:[#allocation2 + $0x10] sm:$0xff] %vm424, 0.0
        %429 = vst.msk [vmem:[#allocation2 + $0x18] sm:$0x3] %vm426, 0.0
        %430 = vst.msk [vmem:[#allocation2 + $0x20] sm:$0xff] %vm424, 0.0
        %431 = vst.msk [vmem:[#allocation2 + $0x28] sm:$0x3] %vm426, 0.0
        %432 = vst.msk [vmem:[#allocation2 + $0x30] sm:$0xff] %vm424, 0.0
        %433 = vst.msk [vmem:[#allocation2 + $0x38] sm:$0x3] %vm426, 0.0
        %vm434 = vcmask 80968
        %435 = vst.msk [vmem:[#allocation2] sm:$0xff] %vm434, 0.0
        %vm436 = vcmask 74824
        %437 = vst.msk [vmem:[#allocation2 + $0x8] sm:$0x3] %vm436, 0.0
        %438 = vst.msk [vmem:[#allocation2 + $0x10] sm:$0xff] %vm434, 0.0
        %439 = vst.msk [vmem:[#allocation2 + $0x18] sm:$0x3] %vm436, 0.0
        %440 = vst.msk [vmem:[#allocation2 + $0x20] sm:$0xff] %vm434, 0.0
        %441 = vst.msk [vmem:[#allocation2 + $0x28] sm:$0x3] %vm436, 0.0
        %442 = vst.msk [vmem:[#allocation2 + $0x30] sm:$0xff] %vm434, 0.0
        %443 = vst.msk [vmem:[#allocation2 + $0x38] sm:$0x3] %vm436, 0.0
        %444 = vst.msk [vmem:[#allocation3] sm:$0x1] %vm415, 0.0
        %445 = vst.msk [vmem:[#allocation3 + $0x10] sm:$0x1] %vm415, 0.0
        %446 = vst.msk [vmem:[#allocation3 + $0x20] sm:$0x1] %vm415, 0.0
        %447 = vst.msk [vmem:[#allocation3 + $0x30] sm:$0x1] %vm415, 0.0
        %448 = vst.msk [vmem:[#allocation3 + $0x40] sm:$0x1] %vm415, 0.0
        %449 = vst.msk [vmem:[#allocation3 + $0x50] sm:$0x1] %vm415, 0.0
        %450 = vst.msk [vmem:[#allocation3 + $0x60] sm:$0x1] %vm415, 0.0
        %451 = vst.msk [vmem:[#allocation3 + $0x70] sm:$0x1] %vm415, 0.0
        %452 = vst.msk [vmem:[#allocation3 + $0x9] sm:$0x1] %vm415, 0.0
        %453 = vst.msk [vmem:[#allocation3 + $0x19] sm:$0x1] %vm415, 0.0
        %454 = vst.msk [vmem:[#allocation3 + $0x29] sm:$0x1] %vm415, 0.0
        %455 = vst.msk [vmem:[#allocation3 + $0x39] sm:$0x1] %vm415, 0.0
        %456 = vst.msk [vmem:[#allocation3 + $0x49] sm:$0x1] %vm415, 0.0
        %457 = vst.msk [vmem:[#allocation3 + $0x59] sm:$0x1] %vm415, 0.0
        %458 = vst.msk [vmem:[#allocation3 + $0x69] sm:$0x1] %vm415, 0.0
        %459 = vst.msk [vmem:[#allocation3 + $0x79] sm:$0x1] %vm415, 0.0
        %460 = vst.msk [vmem:[#allocation3] sm:$0xff] %vm424, 0.0
        %461 = vst.msk [vmem:[#allocation3 + $0x8] sm:$0x3] %vm426, 0.0
        %462 = vst.msk [vmem:[#allocation3 + $0x10] sm:$0xff] %vm424, 0.0
        %463 = vst.msk [vmem:[#allocation3 + $0x18] sm:$0x3] %vm426, 0.0
        %464 = vst.msk [vmem:[#allocation3 + $0x20] sm:$0xff] %vm424, 0.0
        %465 = vst.msk [vmem:[#allocation3 + $0x28] sm:$0x3] %vm426, 0.0
        %466 = vst.msk [vmem:[#allocation3 + $0x30] sm:$0xff] %vm424, 0.0
        %467 = vst.msk [vmem:[#allocation3 + $0x38] sm:$0x3] %vm426, 0.0
        %468 = vst.msk [vmem:[#allocation3 + $0x40] sm:$0xff] %vm424, 0.0
        %469 = vst.msk [vmem:[#allocation3 + $0x48] sm:$0x3] %vm426, 0.0
        %470 = vst.msk [vmem:[#allocation3 + $0x50] sm:$0xff] %vm424, 0.0
        %471 = vst.msk [vmem:[#allocation3 + $0x58] sm:$0x3] %vm426, 0.0
        %472 = vst.msk [vmem:[#allocation3 + $0x60] sm:$0xff] %vm424, 0.0
        %473 = vst.msk [vmem:[#allocation3 + $0x68] sm:$0x3] %vm426, 0.0
        %474 = vst.msk [vmem:[#allocation3 + $0x70] sm:$0xff] %vm424, 0.0
        %475 = vst.msk [vmem:[#allocation3 + $0x78] sm:$0x3] %vm426, 0.0
        %476 = vst.msk [vmem:[#allocation3] sm:$0xff] %vm434, 0.0
        %477 = vst.msk [vmem:[#allocation3 + $0x8] sm:$0x3] %vm436, 0.0
        %478 = vst.msk [vmem:[#allocation3 + $0x10] sm:$0xff] %vm434, 0.0
        %479 = vst.msk [vmem:[#allocation3 + $0x18] sm:$0x3] %vm436, 0.0
        %480 = vst.msk [vmem:[#allocation3 + $0x20] sm:$0xff] %vm434, 0.0
        %481 = vst.msk [vmem:[#allocation3 + $0x28] sm:$0x3] %vm436, 0.0
        %482 = vst.msk [vmem:[#allocation3 + $0x30] sm:$0xff] %vm434, 0.0
        %483 = vst.msk [vmem:[#allocation3 + $0x38] sm:$0x3] %vm436, 0.0
        %484 = vst.msk [vmem:[#allocation3 + $0x40] sm:$0xff] %vm434, 0.0
        %485 = vst.msk [vmem:[#allocation3 + $0x48] sm:$0x3] %vm436, 0.0
        %486 = vst.msk [vmem:[#allocation3 + $0x50] sm:$0xff] %vm434, 0.0
        %487 = vst.msk [vmem:[#allocation3 + $0x58] sm:$0x3] %vm436, 0.0
        %488 = vst.msk [vmem:[#allocation3 + $0x60] sm:$0xff] %vm434, 0.0
        %489 = vst.msk [vmem:[#allocation3 + $0x68] sm:$0x3] %vm436, 0.0
        %490 = vst.msk [vmem:[#allocation3 + $0x70] sm:$0xff] %vm434, 0.0
        %491 = vst.msk [vmem:[#allocation3 + $0x78] sm:$0x3] %vm436, 0.0
        %v492 = vld [vmem:[%s349] sm:$0xff]
        %v493 = vld [vmem:[%s349 + $0x8] sm:$0xff]
        %v494 = vld [vmem:[%s349 + $0x10] sm:$0xff]
        %v495 = vld [vmem:[%s349 + $0x18] sm:$0xff]
        %v496 = vld [vmem:[%s349 + $0x20] sm:$0xff]
        %v497 = vld [vmem:[%s349 + $0x28] sm:$0xff]
        %v498 = vld [vmem:[%s349 + $0x30] sm:$0xff]
        %v499 = vld [vmem:[%s349 + $0x38] sm:$0xff]
        %v508 = vcombine.high %v492, %v492
        %v510 = vunpack.c.l.s4 1983009808
        %v511 = vunpack.c.0.s8 %v510
        %v512 = vlaneseq
        %v513 = vshrl.u32 %v512, 7
        %v514 = vsub.s32 %v511, %v513
        %v515 = vrot.slane %v492, %v514
        %v517 = vunpack.c.l.s4 1983009808
        %v518 = vunpack.c.0.s8 %v517
        %v519 = vlaneseq
        %v520 = vshrl.u32 %v519, 7
        %v521 = vsub.s32 %v518, %v520
        %v522 = vrot.slane %v508, %v521
        %v523 = vcombine.high %v515, %v515
        %v524 = vcombine.high %v522, %v522
        %v525 = vcombine.high %v493, %v493
        %v527 = vunpack.c.l.s4 1983009808
        %v528 = vunpack.c.0.s8 %v527
        %v529 = vlaneseq
        %v530 = vshrl.u32 %v529, 7
        %v531 = vsub.s32 %v528, %v530
        %v532 = vrot.slane %v493, %v531
        %v534 = vunpack.c.l.s4 1983009808
        %v535 = vunpack.c.0.s8 %v534
        %v536 = vlaneseq
        %v537 = vshrl.u32 %v536, 7
        %v538 = vsub.s32 %v535, %v537
        %v539 = vrot.slane %v525, %v538
        %v540 = vcombine.high %v532, %v532
        %v541 = vcombine.high %v539, %v539
        %v542 = vcombine.high %v494, %v494
        %v544 = vunpack.c.l.s4 1983009808
        %v545 = vunpack.c.0.s8 %v544
        %v546 = vlaneseq
        %v547 = vshrl.u32 %v546, 7
        %v548 = vsub.s32 %v545, %v547
        %v549 = vrot.slane %v494, %v548
        %v551 = vunpack.c.l.s4 1983009808
        %v552 = vunpack.c.0.s8 %v551
        %v553 = vlaneseq
        %v554 = vshrl.u32 %v553, 7
        %v555 = vsub.s32 %v552, %v554
        %v556 = vrot.slane %v542, %v555
        %v557 = vcombine.high %v549, %v549
        %v558 = vcombine.high %v556, %v556
        %v559 = vcombine.high %v495, %v495
        %v561 = vunpack.c.l.s4 1983009808
        %v562 = vunpack.c.0.s8 %v561
        %v563 = vlaneseq
        %v564 = vshrl.u32 %v563, 7
        %v565 = vsub.s32 %v562, %v564
        %v566 = vrot.slane %v495, %v565
        %v568 = vunpack.c.l.s4 1983009808
        %v569 = vunpack.c.0.s8 %v568
        %v570 = vlaneseq
        %v571 = vshrl.u32 %v570, 7
        %v572 = vsub.s32 %v569, %v571
        %v573 = vrot.slane %v559, %v572
        %v574 = vcombine.high %v566, %v566
        %v575 = vcombine.high %v573, %v573
        %v576 = vcombine.high %v496, %v496
        %v578 = vunpack.c.l.s4 1983009808
        %v579 = vunpack.c.0.s8 %v578
        %v580 = vlaneseq
        %v581 = vshrl.u32 %v580, 7
        %v582 = vsub.s32 %v579, %v581
        %v583 = vrot.slane %v496, %v582
        %v585 = vunpack.c.l.s4 1983009808
        %v586 = vunpack.c.0.s8 %v585
        %v587 = vlaneseq
        %v588 = vshrl.u32 %v587, 7
        %v589 = vsub.s32 %v586, %v588
        %v590 = vrot.slane %v576, %v589
        %v591 = vcombine.high %v583, %v583
        %v592 = vcombine.high %v590, %v590
        %v593 = vcombine.high %v497, %v497
        %v595 = vunpack.c.l.s4 1983009808
        %v596 = vunpack.c.0.s8 %v595
        %v597 = vlaneseq
        %v598 = vshrl.u32 %v597, 7
        %v599 = vsub.s32 %v596, %v598
        %v600 = vrot.slane %v497, %v599
        %v602 = vunpack.c.l.s4 1983009808
        %v603 = vunpack.c.0.s8 %v602
        %v604 = vlaneseq
        %v605 = vshrl.u32 %v604, 7
        %v606 = vsub.s32 %v603, %v605
        %v607 = vrot.slane %v593, %v606
        %v608 = vcombine.high %v600, %v600
        %v609 = vcombine.high %v607, %v607
        %v610 = vcombine.high %v498, %v498
        %v612 = vunpack.c.l.s4 1983009808
        %v613 = vunpack.c.0.s8 %v612
        %v614 = vlaneseq
        %v615 = vshrl.u32 %v614, 7
        %v616 = vsub.s32 %v613, %v615
        %v617 = vrot.slane %v498, %v616
        %v619 = vunpack.c.l.s4 1983009808
        %v620 = vunpack.c.0.s8 %v619
        %v621 = vlaneseq
        %v622 = vshrl.u32 %v621, 7
        %v623 = vsub.s32 %v620, %v622
        %v624 = vrot.slane %v610, %v623
        %v625 = vcombine.high %v617, %v617
        %v626 = vcombine.high %v624, %v624
        %v627 = vcombine.high %v499, %v499
        %v629 = vunpack.c.l.s4 1983009808
        %v630 = vunpack.c.0.s8 %v629
        %v631 = vlaneseq
        %v632 = vshrl.u32 %v631, 7
        %v633 = vsub.s32 %v630, %v632
        %v634 = vrot.slane %v499, %v633
        %v636 = vunpack.c.l.s4 1983009808
        %v637 = vunpack.c.0.s8 %v636
        %v638 = vlaneseq
        %v639 = vshrl.u32 %v638, 7
        %v640 = vsub.s32 %v637, %v639
        %v641 = vrot.slane %v627, %v640
        %v642 = vcombine.high %v634, %v634
        %v643 = vcombine.high %v641, %v641
        %v676 = vrot.slane %v515, 7
        %v677 = vrot.slane %v676, 2
        %v678 = vrot.slane %v523, 7
        %v679 = vrot.slane %v678, 2
        %v680 = vrot.slane %v522, 7
        %v681 = vrot.slane %v680, 2
        %v682 = vrot.slane %v524, 7
        %v683 = vrot.slane %v682, 2
        %v684 = vrot.slane %v532, 7
        %v685 = vrot.slane %v684, 2
        %v686 = vrot.slane %v540, 7
        %v687 = vrot.slane %v686, 2
        %v688 = vrot.slane %v539, 7
        %v689 = vrot.slane %v688, 2
        %v690 = vrot.slane %v541, 7
        %v691 = vrot.slane %v690, 2
        %v692 = vrot.slane %v549, 7
        %v693 = vrot.slane %v692, 2
        %v694 = vrot.slane %v557, 7
        %v695 = vrot.slane %v694, 2
        %v696 = vrot.slane %v556, 7
        %v697 = vrot.slane %v696, 2
        %v698 = vrot.slane %v558, 7
        %v699 = vrot.slane %v698, 2
        %v700 = vrot.slane %v566, 7
        %v701 = vrot.slane %v700, 2
        %v702 = vrot.slane %v574, 7
        %v703 = vrot.slane %v702, 2
        %v704 = vrot.slane %v573, 7
        %v705 = vrot.slane %v704, 2
        %v706 = vrot.slane %v575, 7
        %v707 = vrot.slane %v706, 2
        %v708 = vrot.slane %v583, 7
        %v709 = vrot.slane %v708, 2
        %v710 = vrot.slane %v591, 7
        %v711 = vrot.slane %v710, 2
        %v712 = vrot.slane %v590, 7
        %v713 = vrot.slane %v712, 2
        %v714 = vrot.slane %v592, 7
        %v715 = vrot.slane %v714, 2
        %v716 = vrot.slane %v600, 7
        %v717 = vrot.slane %v716, 2
        %v718 = vrot.slane %v608, 7
        %v719 = vrot.slane %v718, 2
        %v720 = vrot.slane %v607, 7
        %v721 = vrot.slane %v720, 2
        %v722 = vrot.slane %v609, 7
        %v723 = vrot.slane %v722, 2
        %v724 = vrot.slane %v617, 7
        %v725 = vrot.slane %v724, 2
        %v726 = vrot.slane %v625, 7
        %v727 = vrot.slane %v726, 2
        %v728 = vrot.slane %v624, 7
        %v729 = vrot.slane %v728, 2
        %v730 = vrot.slane %v626, 7
        %v731 = vrot.slane %v730, 2
        %v732 = vrot.slane %v634, 7
        %v733 = vrot.slane %v732, 2
        %v734 = vrot.slane %v642, 7
        %v735 = vrot.slane %v734, 2
        %v736 = vrot.slane %v641, 7
        %v737 = vrot.slane %v736, 2
        %v738 = vrot.slane %v643, 7
        %v739 = vrot.slane %v738, 2
        %v772 = vmax.f32 %v515, %v677
        %v773 = vmax.f32 %v523, %v679
        %v774 = vmax.f32 %v522, %v681
        %v775 = vmax.f32 %v524, %v683
        %v776 = vmax.f32 %v532, %v685
        %v777 = vmax.f32 %v540, %v687
        %v778 = vmax.f32 %v539, %v689
        %v779 = vmax.f32 %v541, %v691
        %v780 = vmax.f32 %v549, %v693
        %v781 = vmax.f32 %v557, %v695
        %v782 = vmax.f32 %v556, %v697
        %v783 = vmax.f32 %v558, %v699
        %v784 = vmax.f32 %v566, %v701
        %v785 = vmax.f32 %v574, %v703
        %v786 = vmax.f32 %v573, %v705
        %v787 = vmax.f32 %v575, %v707
        %v788 = vmax.f32 %v583, %v709
        %v789 = vmax.f32 %v591, %v711
        %v790 = vmax.f32 %v590, %v713
        %v791 = vmax.f32 %v592, %v715
        %v792 = vmax.f32 %v600, %v717
        %v793 = vmax.f32 %v608, %v719
        %v794 = vmax.f32 %v607, %v721
        %v795 = vmax.f32 %v609, %v723
        %v796 = vmax.f32 %v617, %v725
        %v797 = vmax.f32 %v625, %v727
        %v798 = vmax.f32 %v624, %v729
        %v799 = vmax.f32 %v626, %v731
        %v800 = vmax.f32 %v634, %v733
        %v801 = vmax.f32 %v642, %v735
        %v802 = vmax.f32 %v641, %v737
        %v803 = vmax.f32 %v643, %v739
        %836 = vrot.lane.b32.xlu0 %v772, 126
        %v837 = vpop.permute.xlu0 %836
        %838 = vrot.lane.b32.xlu0 %v773, 126
        %v839 = vpop.permute.xlu0 %838
        %840 = vrot.lane.b32.xlu0 %v774, 126
        %v841 = vpop.permute.xlu0 %840
        %842 = vrot.lane.b32.xlu0 %v775, 126
        %v843 = vpop.permute.xlu0 %842
        %844 = vrot.lane.b32.xlu0 %v776, 126
        %v845 = vpop.permute.xlu0 %844
        %846 = vrot.lane.b32.xlu0 %v777, 126
        %v847 = vpop.permute.xlu0 %846
        %848 = vrot.lane.b32.xlu0 %v778, 126
        %v849 = vpop.permute.xlu0 %848
        %850 = vrot.lane.b32.xlu0 %v779, 126
        %v851 = vpop.permute.xlu0 %850
        %852 = vrot.lane.b32.xlu0 %v780, 126
        %v853 = vpop.permute.xlu0 %852
        %854 = vrot.lane.b32.xlu0 %v781, 126
        %v855 = vpop.permute.xlu0 %854
        %856 = vrot.lane.b32.xlu0 %v782, 126
        %v857 = vpop.permute.xlu0 %856
        %858 = vrot.lane.b32.xlu0 %v783, 126
        %v859 = vpop.permute.xlu0 %858
        %860 = vrot.lane.b32.xlu0 %v784, 126
        %v861 = vpop.permute.xlu0 %860
        %862 = vrot.lane.b32.xlu0 %v785, 126
        %v863 = vpop.permute.xlu0 %862
        %864 = vrot.lane.b32.xlu0 %v786, 126
        %v865 = vpop.permute.xlu0 %864
        %866 = vrot.lane.b32.xlu0 %v787, 126
        %v867 = vpop.permute.xlu0 %866
        %868 = vrot.lane.b32.xlu0 %v788, 126
        %v869 = vpop.permute.xlu0 %868
        %870 = vrot.lane.b32.xlu0 %v789, 126
        %v871 = vpop.permute.xlu0 %870
        %872 = vrot.lane.b32.xlu0 %v790, 126
        %v873 = vpop.permute.xlu0 %872
        %874 = vrot.lane.b32.xlu0 %v791, 126
        %v875 = vpop.permute.xlu0 %874
        %876 = vrot.lane.b32.xlu0 %v792, 126
        %v877 = vpop.permute.xlu0 %876
        %878 = vrot.lane.b32.xlu0 %v793, 126
        %v879 = vpop.permute.xlu0 %878
        %880 = vrot.lane.b32.xlu0 %v794, 126
        %v881 = vpop.permute.xlu0 %880
        %882 = vrot.lane.b32.xlu0 %v795, 126
        %v883 = vpop.permute.xlu0 %882
        %884 = vrot.lane.b32.xlu0 %v796, 126
        %v885 = vpop.permute.xlu0 %884
        %886 = vrot.lane.b32.xlu0 %v797, 126
        %v887 = vpop.permute.xlu0 %886
        %888 = vrot.lane.b32.xlu0 %v798, 126
        %v889 = vpop.permute.xlu0 %888
        %890 = vrot.lane.b32.xlu0 %v799, 126
        %v891 = vpop.permute.xlu0 %890
        %892 = vrot.lane.b32.xlu0 %v800, 126
        %v893 = vpop.permute.xlu0 %892
        %894 = vrot.lane.b32.xlu0 %v801, 126
        %v895 = vpop.permute.xlu0 %894
        %896 = vrot.lane.b32.xlu0 %v802, 126
        %v897 = vpop.permute.xlu0 %896
        %898 = vrot.lane.b32.xlu0 %v803, 126
        %v899 = vpop.permute.xlu0 %898
        %900 = vrot.lane.b32.xlu0 %v772, 124
        %v901 = vpop.permute.xlu0 %900
        %902 = vrot.lane.b32.xlu0 %v773, 124
        %v903 = vpop.permute.xlu0 %902
        %904 = vrot.lane.b32.xlu0 %v774, 124
        %v905 = vpop.permute.xlu0 %904
        %906 = vrot.lane.b32.xlu0 %v775, 124
        %v907 = vpop.permute.xlu0 %906
        %908 = vrot.lane.b32.xlu0 %v776, 124
        %v909 = vpop.permute.xlu0 %908
        %910 = vrot.lane.b32.xlu0 %v777, 124
        %v911 = vpop.permute.xlu0 %910
        %912 = vrot.lane.b32.xlu0 %v778, 124
        %v913 = vpop.permute.xlu0 %912
        %914 = vrot.lane.b32.xlu0 %v779, 124
        %v915 = vpop.permute.xlu0 %914
        %916 = vrot.lane.b32.xlu0 %v780, 124
        %v917 = vpop.permute.xlu0 %916
        %918 = vrot.lane.b32.xlu0 %v781, 124
        %v919 = vpop.permute.xlu0 %918
        %920 = vrot.lane.b32.xlu0 %v782, 124
        %v921 = vpop.permute.xlu0 %920
        %922 = vrot.lane.b32.xlu0 %v783, 124
        %v923 = vpop.permute.xlu0 %922
        %924 = vrot.lane.b32.xlu0 %v784, 124
        %v925 = vpop.permute.xlu0 %924
        %926 = vrot.lane.b32.xlu0 %v785, 124
        %v927 = vpop.permute.xlu0 %926
        %928 = vrot.lane.b32.xlu0 %v786, 124
        %v929 = vpop.permute.xlu0 %928
        %930 = vrot.lane.b32.xlu0 %v787, 124
        %v931 = vpop.permute.xlu0 %930
        %932 = vrot.lane.b32.xlu0 %v788, 124
        %v933 = vpop.permute.xlu0 %932
        %934 = vrot.lane.b32.xlu0 %v789, 124
        %v935 = vpop.permute.xlu0 %934
        %936 = vrot.lane.b32.xlu0 %v790, 124
        %v937 = vpop.permute.xlu0 %936
        %938 = vrot.lane.b32.xlu0 %v791, 124
        %v939 = vpop.permute.xlu0 %938
        %940 = vrot.lane.b32.xlu0 %v792, 124
        %v941 = vpop.permute.xlu0 %940
        %942 = vrot.lane.b32.xlu0 %v793, 124
        %v943 = vpop.permute.xlu0 %942
        %944 = vrot.lane.b32.xlu0 %v794, 124
        %v945 = vpop.permute.xlu0 %944
        %946 = vrot.lane.b32.xlu0 %v795, 124
        %v947 = vpop.permute.xlu0 %946
        %948 = vrot.lane.b32.xlu0 %v796, 124
        %v949 = vpop.permute.xlu0 %948
        %950 = vrot.lane.b32.xlu0 %v797, 124
        %v951 = vpop.permute.xlu0 %950
        %952 = vrot.lane.b32.xlu0 %v798, 124
        %v953 = vpop.permute.xlu0 %952
        %954 = vrot.lane.b32.xlu0 %v799, 124
        %v955 = vpop.permute.xlu0 %954
        %956 = vrot.lane.b32.xlu0 %v800, 124
        %v957 = vpop.permute.xlu0 %956
        %958 = vrot.lane.b32.xlu0 %v801, 124
        %v959 = vpop.permute.xlu0 %958
        %960 = vrot.lane.b32.xlu0 %v802, 124
        %v961 = vpop.permute.xlu0 %960
        %962 = vrot.lane.b32.xlu0 %v803, 124
        %v963 = vpop.permute.xlu0 %962
        %964 = vrot.lane.b32.xlu0 %v772, 122
        %v965 = vpop.permute.xlu0 %964
        %966 = vrot.lane.b32.xlu0 %v773, 122
        %v967 = vpop.permute.xlu0 %966
        %968 = vrot.lane.b32.xlu0 %v774, 122
        %v969 = vpop.permute.xlu0 %968
        %970 = vrot.lane.b32.xlu0 %v775, 122
        %v971 = vpop.permute.xlu0 %970
        %972 = vrot.lane.b32.xlu0 %v776, 122
        %v973 = vpop.permute.xlu0 %972
        %974 = vrot.lane.b32.xlu0 %v777, 122
        %v975 = vpop.permute.xlu0 %974
        %976 = vrot.lane.b32.xlu0 %v778, 122
        %v977 = vpop.permute.xlu0 %976
        %978 = vrot.lane.b32.xlu0 %v779, 122
        %v979 = vpop.permute.xlu0 %978
        %980 = vrot.lane.b32.xlu0 %v780, 122
        %v981 = vpop.permute.xlu0 %980
        %982 = vrot.lane.b32.xlu0 %v781, 122
        %v983 = vpop.permute.xlu0 %982
        %984 = vrot.lane.b32.xlu0 %v782, 122
        %v985 = vpop.permute.xlu0 %984
        %986 = vrot.lane.b32.xlu0 %v783, 122
        %v987 = vpop.permute.xlu0 %986
        %988 = vrot.lane.b32.xlu0 %v784, 122
        %v989 = vpop.permute.xlu0 %988
        %990 = vrot.lane.b32.xlu0 %v785, 122
        %v991 = vpop.permute.xlu0 %990
        %992 = vrot.lane.b32.xlu0 %v786, 122
        %v993 = vpop.permute.xlu0 %992
        %994 = vrot.lane.b32.xlu0 %v787, 122
        %v995 = vpop.permute.xlu0 %994
        %996 = vrot.lane.b32.xlu0 %v788, 122
        %v997 = vpop.permute.xlu0 %996
        %998 = vrot.lane.b32.xlu0 %v789, 122
        %v999 = vpop.permute.xlu0 %998
        %1000 = vrot.lane.b32.xlu0 %v790, 122
        %v1001 = vpop.permute.xlu0 %1000
        %1002 = vrot.lane.b32.xlu0 %v791, 122
        %v1003 = vpop.permute.xlu0 %1002
        %1004 = vrot.lane.b32.xlu0 %v792, 122
        %v1005 = vpop.permute.xlu0 %1004
        %1006 = vrot.lane.b32.xlu0 %v793, 122
        %v1007 = vpop.permute.xlu0 %1006
        %1008 = vrot.lane.b32.xlu0 %v794, 122
        %v1009 = vpop.permute.xlu0 %1008
        %1010 = vrot.lane.b32.xlu0 %v795, 122
        %v1011 = vpop.permute.xlu0 %1010
        %1012 = vrot.lane.b32.xlu0 %v796, 122
        %v1013 = vpop.permute.xlu0 %1012
        %1014 = vrot.lane.b32.xlu0 %v797, 122
        %v1015 = vpop.permute.xlu0 %1014
        %1016 = vrot.lane.b32.xlu0 %v798, 122
        %v1017 = vpop.permute.xlu0 %1016
        %1018 = vrot.lane.b32.xlu0 %v799, 122
        %v1019 = vpop.permute.xlu0 %1018
        %1020 = vrot.lane.b32.xlu0 %v800, 122
        %v1021 = vpop.permute.xlu0 %1020
        %1022 = vrot.lane.b32.xlu0 %v801, 122
        %v1023 = vpop.permute.xlu0 %1022
        %1024 = vrot.lane.b32.xlu0 %v802, 122
        %v1025 = vpop.permute.xlu0 %1024
        %1026 = vrot.lane.b32.xlu0 %v803, 122
        %v1027 = vpop.permute.xlu0 %1026
        %1028 = vrot.lane.b32.xlu0 %v772, 120
        %v1029 = vpop.permute.xlu0 %1028
        %1030 = vrot.lane.b32.xlu0 %v773, 120
        %v1031 = vpop.permute.xlu0 %1030
        %1032 = vrot.lane.b32.xlu0 %v774, 120
        %v1033 = vpop.permute.xlu0 %1032
        %1034 = vrot.lane.b32.xlu0 %v775, 120
        %v1035 = vpop.permute.xlu0 %1034
        %1036 = vrot.lane.b32.xlu0 %v776, 120
        %v1037 = vpop.permute.xlu0 %1036
        %1038 = vrot.lane.b32.xlu0 %v777, 120
        %v1039 = vpop.permute.xlu0 %1038
        %1040 = vrot.lane.b32.xlu0 %v778, 120
        %v1041 = vpop.permute.xlu0 %1040
        %1042 = vrot.lane.b32.xlu0 %v779, 120
        %v1043 = vpop.permute.xlu0 %1042
        %1044 = vrot.lane.b32.xlu0 %v780, 120
        %v1045 = vpop.permute.xlu0 %1044
        %1046 = vrot.lane.b32.xlu0 %v781, 120
        %v1047 = vpop.permute.xlu0 %1046
        %1048 = vrot.lane.b32.xlu0 %v782, 120
        %v1049 = vpop.permute.xlu0 %1048
        %1050 = vrot.lane.b32.xlu0 %v783, 120
        %v1051 = vpop.permute.xlu0 %1050
        %1052 = vrot.lane.b32.xlu0 %v784, 120
        %v1053 = vpop.permute.xlu0 %1052
        %1054 = vrot.lane.b32.xlu0 %v785, 120
        %v1055 = vpop.permute.xlu0 %1054
        %1056 = vrot.lane.b32.xlu0 %v786, 120
        %v1057 = vpop.permute.xlu0 %1056
        %1058 = vrot.lane.b32.xlu0 %v787, 120
        %v1059 = vpop.permute.xlu0 %1058
        %1060 = vrot.lane.b32.xlu0 %v788, 120
        %v1061 = vpop.permute.xlu0 %1060
        %1062 = vrot.lane.b32.xlu0 %v789, 120
        %v1063 = vpop.permute.xlu0 %1062
        %1064 = vrot.lane.b32.xlu0 %v790, 120
        %v1065 = vpop.permute.xlu0 %1064
        %1066 = vrot.lane.b32.xlu0 %v791, 120
        %v1067 = vpop.permute.xlu0 %1066
        %1068 = vrot.lane.b32.xlu0 %v792, 120
        %v1069 = vpop.permute.xlu0 %1068
        %1070 = vrot.lane.b32.xlu0 %v793, 120
        %v1071 = vpop.permute.xlu0 %1070
        %1072 = vrot.lane.b32.xlu0 %v794, 120
        %v1073 = vpop.permute.xlu0 %1072
        %1074 = vrot.lane.b32.xlu0 %v795, 120
        %v1075 = vpop.permute.xlu0 %1074
        %1076 = vrot.lane.b32.xlu0 %v796, 120
        %v1077 = vpop.permute.xlu0 %1076
        %1078 = vrot.lane.b32.xlu0 %v797, 120
        %v1079 = vpop.permute.xlu0 %1078
        %1080 = vrot.lane.b32.xlu0 %v798, 120
        %v1081 = vpop.permute.xlu0 %1080
        %1082 = vrot.lane.b32.xlu0 %v799, 120
        %v1083 = vpop.permute.xlu0 %1082
        %1084 = vrot.lane.b32.xlu0 %v800, 120
        %v1085 = vpop.permute.xlu0 %1084
        %1086 = vrot.lane.b32.xlu0 %v801, 120
        %v1087 = vpop.permute.xlu0 %1086
        %1088 = vrot.lane.b32.xlu0 %v802, 120
        %v1089 = vpop.permute.xlu0 %1088
        %1090 = vrot.lane.b32.xlu0 %v803, 120
        %v1091 = vpop.permute.xlu0 %1090
        %1092 = vrot.lane.b32.xlu0 %v772, 118
        %v1093 = vpop.permute.xlu0 %1092
        %1094 = vrot.lane.b32.xlu0 %v773, 118
        %v1095 = vpop.permute.xlu0 %1094
        %1096 = vrot.lane.b32.xlu0 %v774, 118
        %v1097 = vpop.permute.xlu0 %1096
        %1098 = vrot.lane.b32.xlu0 %v775, 118
        %v1099 = vpop.permute.xlu0 %1098
        %1100 = vrot.lane.b32.xlu0 %v776, 118
        %v1101 = vpop.permute.xlu0 %1100
        %1102 = vrot.lane.b32.xlu0 %v777, 118
        %v1103 = vpop.permute.xlu0 %1102
        %1104 = vrot.lane.b32.xlu0 %v778, 118
        %v1105 = vpop.permute.xlu0 %1104
        %1106 = vrot.lane.b32.xlu0 %v779, 118
        %v1107 = vpop.permute.xlu0 %1106
        %1108 = vrot.lane.b32.xlu0 %v780, 118
        %v1109 = vpop.permute.xlu0 %1108
        %1110 = vrot.lane.b32.xlu0 %v781, 118
        %v1111 = vpop.permute.xlu0 %1110
        %1112 = vrot.lane.b32.xlu0 %v782, 118
        %v1113 = vpop.permute.xlu0 %1112
        %1114 = vrot.lane.b32.xlu0 %v783, 118
        %v1115 = vpop.permute.xlu0 %1114
        %1116 = vrot.lane.b32.xlu0 %v784, 118
        %v1117 = vpop.permute.xlu0 %1116
        %1118 = vrot.lane.b32.xlu0 %v785, 118
        %v1119 = vpop.permute.xlu0 %1118
        %1120 = vrot.lane.b32.xlu0 %v786, 118
        %v1121 = vpop.permute.xlu0 %1120
        %1122 = vrot.lane.b32.xlu0 %v787, 118
        %v1123 = vpop.permute.xlu0 %1122
        %1124 = vrot.lane.b32.xlu0 %v788, 118
        %v1125 = vpop.permute.xlu0 %1124
        %1126 = vrot.lane.b32.xlu0 %v789, 118
        %v1127 = vpop.permute.xlu0 %1126
        %1128 = vrot.lane.b32.xlu0 %v790, 118
        %v1129 = vpop.permute.xlu0 %1128
        %1130 = vrot.lane.b32.xlu0 %v791, 118
        %v1131 = vpop.permute.xlu0 %1130
        %1132 = vrot.lane.b32.xlu0 %v792, 118
        %v1133 = vpop.permute.xlu0 %1132
        %1134 = vrot.lane.b32.xlu0 %v793, 118
        %v1135 = vpop.permute.xlu0 %1134
        %1136 = vrot.lane.b32.xlu0 %v794, 118
        %v1137 = vpop.permute.xlu0 %1136
        %1138 = vrot.lane.b32.xlu0 %v795, 118
        %v1139 = vpop.permute.xlu0 %1138
        %1140 = vrot.lane.b32.xlu0 %v796, 118
        %v1141 = vpop.permute.xlu0 %1140
        %1142 = vrot.lane.b32.xlu0 %v797, 118
        %v1143 = vpop.permute.xlu0 %1142
        %1144 = vrot.lane.b32.xlu0 %v798, 118
        %v1145 = vpop.permute.xlu0 %1144
        %1146 = vrot.lane.b32.xlu0 %v799, 118
        %v1147 = vpop.permute.xlu0 %1146
        %1148 = vrot.lane.b32.xlu0 %v800, 118
        %v1149 = vpop.permute.xlu0 %1148
        %1150 = vrot.lane.b32.xlu0 %v801, 118
        %v1151 = vpop.permute.xlu0 %1150
        %1152 = vrot.lane.b32.xlu0 %v802, 118
        %v1153 = vpop.permute.xlu0 %1152
        %1154 = vrot.lane.b32.xlu0 %v803, 118
        %v1155 = vpop.permute.xlu0 %1154
        %1156 = vrot.lane.b32.xlu0 %v772, 116
        %v1157 = vpop.permute.xlu0 %1156
        %1158 = vrot.lane.b32.xlu0 %v773, 116
        %v1159 = vpop.permute.xlu0 %1158
        %1160 = vrot.lane.b32.xlu0 %v774, 116
        %v1161 = vpop.permute.xlu0 %1160
        %1162 = vrot.lane.b32.xlu0 %v775, 116
        %v1163 = vpop.permute.xlu0 %1162
        %1164 = vrot.lane.b32.xlu0 %v776, 116
        %v1165 = vpop.permute.xlu0 %1164
        %1166 = vrot.lane.b32.xlu0 %v777, 116
        %v1167 = vpop.permute.xlu0 %1166
        %1168 = vrot.lane.b32.xlu0 %v778, 116
        %v1169 = vpop.permute.xlu0 %1168
        %1170 = vrot.lane.b32.xlu0 %v779, 116
        %v1171 = vpop.permute.xlu0 %1170
        %1172 = vrot.lane.b32.xlu0 %v780, 116
        %v1173 = vpop.permute.xlu0 %1172
        %1174 = vrot.lane.b32.xlu0 %v781, 116
        %v1175 = vpop.permute.xlu0 %1174
        %1176 = vrot.lane.b32.xlu0 %v782, 116
        %v1177 = vpop.permute.xlu0 %1176
        %1178 = vrot.lane.b32.xlu0 %v783, 116
        %v1179 = vpop.permute.xlu0 %1178
        %1180 = vrot.lane.b32.xlu0 %v784, 116
        %v1181 = vpop.permute.xlu0 %1180
        %1182 = vrot.lane.b32.xlu0 %v785, 116
        %v1183 = vpop.permute.xlu0 %1182
        %1184 = vrot.lane.b32.xlu0 %v786, 116
        %v1185 = vpop.permute.xlu0 %1184
        %1186 = vrot.lane.b32.xlu0 %v787, 116
        %v1187 = vpop.permute.xlu0 %1186
        %1188 = vrot.lane.b32.xlu0 %v788, 116
        %v1189 = vpop.permute.xlu0 %1188
        %1190 = vrot.lane.b32.xlu0 %v789, 116
        %v1191 = vpop.permute.xlu0 %1190
        %1192 = vrot.lane.b32.xlu0 %v790, 116
        %v1193 = vpop.permute.xlu0 %1192
        %1194 = vrot.lane.b32.xlu0 %v791, 116
        %v1195 = vpop.permute.xlu0 %1194
        %1196 = vrot.lane.b32.xlu0 %v792, 116
        %v1197 = vpop.permute.xlu0 %1196
        %1198 = vrot.lane.b32.xlu0 %v793, 116
        %v1199 = vpop.permute.xlu0 %1198
        %1200 = vrot.lane.b32.xlu0 %v794, 116
        %v1201 = vpop.permute.xlu0 %1200
        %1202 = vrot.lane.b32.xlu0 %v795, 116
        %v1203 = vpop.permute.xlu0 %1202
        %1204 = vrot.lane.b32.xlu0 %v796, 116
        %v1205 = vpop.permute.xlu0 %1204
        %1206 = vrot.lane.b32.xlu0 %v797, 116
        %v1207 = vpop.permute.xlu0 %1206
        %1208 = vrot.lane.b32.xlu0 %v798, 116
        %v1209 = vpop.permute.xlu0 %1208
        %1210 = vrot.lane.b32.xlu0 %v799, 116
        %v1211 = vpop.permute.xlu0 %1210
        %1212 = vrot.lane.b32.xlu0 %v800, 116
        %v1213 = vpop.permute.xlu0 %1212
        %1214 = vrot.lane.b32.xlu0 %v801, 116
        %v1215 = vpop.permute.xlu0 %1214
        %1216 = vrot.lane.b32.xlu0 %v802, 116
        %v1217 = vpop.permute.xlu0 %1216
        %1218 = vrot.lane.b32.xlu0 %v803, 116
        %v1219 = vpop.permute.xlu0 %1218
        %1220 = vrot.lane.b32.xlu0 %v772, 114
        %v1221 = vpop.permute.xlu0 %1220
        %1222 = vrot.lane.b32.xlu0 %v773, 114
        %v1223 = vpop.permute.xlu0 %1222
        %1224 = vrot.lane.b32.xlu0 %v774, 114
        %v1225 = vpop.permute.xlu0 %1224
        %1226 = vrot.lane.b32.xlu0 %v775, 114
        %v1227 = vpop.permute.xlu0 %1226
        %1228 = vrot.lane.b32.xlu0 %v776, 114
        %v1229 = vpop.permute.xlu0 %1228
        %1230 = vrot.lane.b32.xlu0 %v777, 114
        %v1231 = vpop.permute.xlu0 %1230
        %1232 = vrot.lane.b32.xlu0 %v778, 114
        %v1233 = vpop.permute.xlu0 %1232
        %1234 = vrot.lane.b32.xlu0 %v779, 114
        %v1235 = vpop.permute.xlu0 %1234
        %1236 = vrot.lane.b32.xlu0 %v780, 114
        %v1237 = vpop.permute.xlu0 %1236
        %1238 = vrot.lane.b32.xlu0 %v781, 114
        %v1239 = vpop.permute.xlu0 %1238
        %1240 = vrot.lane.b32.xlu0 %v782, 114
        %v1241 = vpop.permute.xlu0 %1240
        %1242 = vrot.lane.b32.xlu0 %v783, 114
        %v1243 = vpop.permute.xlu0 %1242
        %1244 = vrot.lane.b32.xlu0 %v784, 114
        %v1245 = vpop.permute.xlu0 %1244
        %1246 = vrot.lane.b32.xlu0 %v785, 114
        %v1247 = vpop.permute.xlu0 %1246
        %1248 = vrot.lane.b32.xlu0 %v786, 114
        %v1249 = vpop.permute.xlu0 %1248
        %1250 = vrot.lane.b32.xlu0 %v787, 114
        %v1251 = vpop.permute.xlu0 %1250
        %1252 = vrot.lane.b32.xlu0 %v788, 114
        %v1253 = vpop.permute.xlu0 %1252
        %1254 = vrot.lane.b32.xlu0 %v789, 114
        %v1255 = vpop.permute.xlu0 %1254
        %1256 = vrot.lane.b32.xlu0 %v790, 114
        %v1257 = vpop.permute.xlu0 %1256
        %1258 = vrot.lane.b32.xlu0 %v791, 114
        %v1259 = vpop.permute.xlu0 %1258
        %1260 = vrot.lane.b32.xlu0 %v792, 114
        %v1261 = vpop.permute.xlu0 %1260
        %1262 = vrot.lane.b32.xlu0 %v793, 114
        %v1263 = vpop.permute.xlu0 %1262
        %1264 = vrot.lane.b32.xlu0 %v794, 114
        %v1265 = vpop.permute.xlu0 %1264
        %1266 = vrot.lane.b32.xlu0 %v795, 114
        %v1267 = vpop.permute.xlu0 %1266
        %1268 = vrot.lane.b32.xlu0 %v796, 114
        %v1269 = vpop.permute.xlu0 %1268
        %1270 = vrot.lane.b32.xlu0 %v797, 114
        %v1271 = vpop.permute.xlu0 %1270
        %1272 = vrot.lane.b32.xlu0 %v798, 114
        %v1273 = vpop.permute.xlu0 %1272
        %1274 = vrot.lane.b32.xlu0 %v799, 114
        %v1275 = vpop.permute.xlu0 %1274
        %1276 = vrot.lane.b32.xlu0 %v800, 114
        %v1277 = vpop.permute.xlu0 %1276
        %1278 = vrot.lane.b32.xlu0 %v801, 114
        %v1279 = vpop.permute.xlu0 %1278
        %1280 = vrot.lane.b32.xlu0 %v802, 114
        %v1281 = vpop.permute.xlu0 %1280
        %1282 = vrot.lane.b32.xlu0 %v803, 114
        %v1283 = vpop.permute.xlu0 %1282
        %vm1284 = vcmask 1042434
        %vm1285 = vcmask 1044484
        %v1286 = vsel %vm1285, %v772, %v772
        %vm1287 = vcmask 1046534
        %v1288 = vsel %vm1287, %v772, %v1286
        %v1289 = vrot.slane %v773, 7
        %vm1290 = vcmask 1041409
        %v1291 = vsel %vm1290, %v1289, %v1288
        %vm1292 = vcmask 1043459
        %v1293 = vsel %vm1292, %v1289, %v1291
        %vm1294 = vcmask 1045509
        %v1295 = vsel %vm1294, %v1289, %v1293
        %vm1296 = vcmask 1047559
        %v1297 = vsel %vm1296, %v1289, %v1295
        %v1298 = vsel %vm1285, %v774, %v774
        %v1299 = vsel %vm1287, %v774, %v1298
        %v1300 = vrot.slane %v775, 7
        %v1301 = vsel %vm1290, %v1300, %v1299
        %v1302 = vsel %vm1292, %v1300, %v1301
        %v1303 = vsel %vm1294, %v1300, %v1302
        %v1304 = vsel %vm1296, %v1300, %v1303
        %v1305 = vsel %vm1285, %v776, %v776
        %v1306 = vsel %vm1287, %v776, %v1305
        %v1307 = vrot.slane %v777, 7
        %v1308 = vsel %vm1290, %v1307, %v1306
        %v1309 = vsel %vm1292, %v1307, %v1308
        %v1310 = vsel %vm1294, %v1307, %v1309
        %v1311 = vsel %vm1296, %v1307, %v1310
        %v1312 = vsel %vm1285, %v778, %v778
        %v1313 = vsel %vm1287, %v778, %v1312
        %v1314 = vrot.slane %v779, 7
        %v1315 = vsel %vm1290, %v1314, %v1313
        %v1316 = vsel %vm1292, %v1314, %v1315
        %v1317 = vsel %vm1294, %v1314, %v1316
        %v1318 = vsel %vm1296, %v1314, %v1317
        %v1319 = vsel %vm1285, %v780, %v780
        %v1320 = vsel %vm1287, %v780, %v1319
        %v1321 = vrot.slane %v781, 7
        %v1322 = vsel %vm1290, %v1321, %v1320
        %v1323 = vsel %vm1292, %v1321, %v1322
        %v1324 = vsel %vm1294, %v1321, %v1323
        %v1325 = vsel %vm1296, %v1321, %v1324
        %v1326 = vsel %vm1285, %v782, %v782
        %v1327 = vsel %vm1287, %v782, %v1326
        %v1328 = vrot.slane %v783, 7
        %v1329 = vsel %vm1290, %v1328, %v1327
        %v1330 = vsel %vm1292, %v1328, %v1329
        %v1331 = vsel %vm1294, %v1328, %v1330
        %v1332 = vsel %vm1296, %v1328, %v1331
        %v1333 = vsel %vm1285, %v784, %v784
        %v1334 = vsel %vm1287, %v784, %v1333
        %v1335 = vrot.slane %v785, 7
        %v1336 = vsel %vm1290, %v1335, %v1334
        %v1337 = vsel %vm1292, %v1335, %v1336
        %v1338 = vsel %vm1294, %v1335, %v1337
        %v1339 = vsel %vm1296, %v1335, %v1338
        %v1340 = vsel %vm1285, %v786, %v786
        %v1341 = vsel %vm1287, %v786, %v1340
        %v1342 = vrot.slane %v787, 7
        %v1343 = vsel %vm1290, %v1342, %v1341
        %v1344 = vsel %vm1292, %v1342, %v1343
        %v1345 = vsel %vm1294, %v1342, %v1344
        %v1346 = vsel %vm1296, %v1342, %v1345
        %v1347 = vsel %vm1285, %v788, %v788
        %v1348 = vsel %vm1287, %v788, %v1347
        %v1349 = vrot.slane %v789, 7
        %v1350 = vsel %vm1290, %v1349, %v1348
        %v1351 = vsel %vm1292, %v1349, %v1350
        %v1352 = vsel %vm1294, %v1349, %v1351
        %v1353 = vsel %vm1296, %v1349, %v1352
        %v1354 = vsel %vm1285, %v790, %v790
        %v1355 = vsel %vm1287, %v790, %v1354
        %v1356 = vrot.slane %v791, 7
        %v1357 = vsel %vm1290, %v1356, %v1355
        %v1358 = vsel %vm1292, %v1356, %v1357
        %v1359 = vsel %vm1294, %v1356, %v1358
        %v1360 = vsel %vm1296, %v1356, %v1359
        %v1361 = vsel %vm1285, %v792, %v792
        %v1362 = vsel %vm1287, %v792, %v1361
        %v1363 = vrot.slane %v793, 7
        %v1364 = vsel %vm1290, %v1363, %v1362
        %v1365 = vsel %vm1292, %v1363, %v1364
        %v1366 = vsel %vm1294, %v1363, %v1365
        %v1367 = vsel %vm1296, %v1363, %v1366
        %v1368 = vsel %vm1285, %v794, %v794
        %v1369 = vsel %vm1287, %v794, %v1368
        %v1370 = vrot.slane %v795, 7
        %v1371 = vsel %vm1290, %v1370, %v1369
        %v1372 = vsel %vm1292, %v1370, %v1371
        %v1373 = vsel %vm1294, %v1370, %v1372
        %v1374 = vsel %vm1296, %v1370, %v1373
        %v1375 = vsel %vm1285, %v796, %v796
        %v1376 = vsel %vm1287, %v796, %v1375
        %v1377 = vrot.slane %v797, 7
        %v1378 = vsel %vm1290, %v1377, %v1376
        %v1379 = vsel %vm1292, %v1377, %v1378
        %v1380 = vsel %vm1294, %v1377, %v1379
        %v1381 = vsel %vm1296, %v1377, %v1380
        %v1382 = vsel %vm1285, %v798, %v798
        %v1383 = vsel %vm1287, %v798, %v1382
        %v1384 = vrot.slane %v799, 7
        %v1385 = vsel %vm1290, %v1384, %v1383
        %v1386 = vsel %vm1292, %v1384, %v1385
        %v1387 = vsel %vm1294, %v1384, %v1386
        %v1388 = vsel %vm1296, %v1384, %v1387
        %v1389 = vsel %vm1285, %v800, %v800
        %v1390 = vsel %vm1287, %v800, %v1389
        %v1391 = vrot.slane %v801, 7
        %v1392 = vsel %vm1290, %v1391, %v1390
        %v1393 = vsel %vm1292, %v1391, %v1392
        %v1394 = vsel %vm1294, %v1391, %v1393
        %v1395 = vsel %vm1296, %v1391, %v1394
        %v1396 = vsel %vm1285, %v802, %v802
        %v1397 = vsel %vm1287, %v802, %v1396
        %v1398 = vrot.slane %v803, 7
        %v1399 = vsel %vm1290, %v1398, %v1397
        %v1400 = vsel %vm1292, %v1398, %v1399
        %v1401 = vsel %vm1294, %v1398, %v1400
        %v1402 = vsel %vm1296, %v1398, %v1401
        %v1403 = vsel %vm1285, %v837, %v837
        %v1404 = vsel %vm1287, %v837, %v1403
        %v1405 = vrot.slane %v839, 7
        %v1406 = vsel %vm1290, %v1405, %v1404
        %v1407 = vsel %vm1292, %v1405, %v1406
        %v1408 = vsel %vm1294, %v1405, %v1407
        %v1409 = vsel %vm1296, %v1405, %v1408
        %v1410 = vsel %vm1285, %v841, %v841
        %v1411 = vsel %vm1287, %v841, %v1410
        %v1412 = vrot.slane %v843, 7
        %v1413 = vsel %vm1290, %v1412, %v1411
        %v1414 = vsel %vm1292, %v1412, %v1413
        %v1415 = vsel %vm1294, %v1412, %v1414
        %v1416 = vsel %vm1296, %v1412, %v1415
        %v1417 = vsel %vm1285, %v845, %v845
        %v1418 = vsel %vm1287, %v845, %v1417
        %v1419 = vrot.slane %v847, 7
        %v1420 = vsel %vm1290, %v1419, %v1418
        %v1421 = vsel %vm1292, %v1419, %v1420
        %v1422 = vsel %vm1294, %v1419, %v1421
        %v1423 = vsel %vm1296, %v1419, %v1422
        %v1424 = vsel %vm1285, %v849, %v849
        %v1425 = vsel %vm1287, %v849, %v1424
        %v1426 = vrot.slane %v851, 7
        %v1427 = vsel %vm1290, %v1426, %v1425
        %v1428 = vsel %vm1292, %v1426, %v1427
        %v1429 = vsel %vm1294, %v1426, %v1428
        %v1430 = vsel %vm1296, %v1426, %v1429
        %v1431 = vsel %vm1285, %v853, %v853
        %v1432 = vsel %vm1287, %v853, %v1431
        %v1433 = vrot.slane %v855, 7
        %v1434 = vsel %vm1290, %v1433, %v1432
        %v1435 = vsel %vm1292, %v1433, %v1434
        %v1436 = vsel %vm1294, %v1433, %v1435
        %v1437 = vsel %vm1296, %v1433, %v1436
        %v1438 = vsel %vm1285, %v857, %v857
        %v1439 = vsel %vm1287, %v857, %v1438
        %v1440 = vrot.slane %v859, 7
        %v1441 = vsel %vm1290, %v1440, %v1439
        %v1442 = vsel %vm1292, %v1440, %v1441
        %v1443 = vsel %vm1294, %v1440, %v1442
        %v1444 = vsel %vm1296, %v1440, %v1443
        %v1445 = vsel %vm1285, %v861, %v861
        %v1446 = vsel %vm1287, %v861, %v1445
        %v1447 = vrot.slane %v863, 7
        %v1448 = vsel %vm1290, %v1447, %v1446
        %v1449 = vsel %vm1292, %v1447, %v1448
        %v1450 = vsel %vm1294, %v1447, %v1449
        %v1451 = vsel %vm1296, %v1447, %v1450
        %v1452 = vsel %vm1285, %v865, %v865
        %v1453 = vsel %vm1287, %v865, %v1452
        %v1454 = vrot.slane %v867, 7
        %v1455 = vsel %vm1290, %v1454, %v1453
        %v1456 = vsel %vm1292, %v1454, %v1455
        %v1457 = vsel %vm1294, %v1454, %v1456
        %v1458 = vsel %vm1296, %v1454, %v1457
        %v1459 = vsel %vm1285, %v869, %v869
        %v1460 = vsel %vm1287, %v869, %v1459
        %v1461 = vrot.slane %v871, 7
        %v1462 = vsel %vm1290, %v1461, %v1460
        %v1463 = vsel %vm1292, %v1461, %v1462
        %v1464 = vsel %vm1294, %v1461, %v1463
        %v1465 = vsel %vm1296, %v1461, %v1464
        %v1466 = vsel %vm1285, %v873, %v873
        %v1467 = vsel %vm1287, %v873, %v1466
        %v1468 = vrot.slane %v875, 7
        %v1469 = vsel %vm1290, %v1468, %v1467
        %v1470 = vsel %vm1292, %v1468, %v1469
        %v1471 = vsel %vm1294, %v1468, %v1470
        %v1472 = vsel %vm1296, %v1468, %v1471
        %v1473 = vsel %vm1285, %v877, %v877
        %v1474 = vsel %vm1287, %v877, %v1473
        %v1475 = vrot.slane %v879, 7
        %v1476 = vsel %vm1290, %v1475, %v1474
        %v1477 = vsel %vm1292, %v1475, %v1476
        %v1478 = vsel %vm1294, %v1475, %v1477
        %v1479 = vsel %vm1296, %v1475, %v1478
        %v1480 = vsel %vm1285, %v881, %v881
        %v1481 = vsel %vm1287, %v881, %v1480
        %v1482 = vrot.slane %v883, 7
        %v1483 = vsel %vm1290, %v1482, %v1481
        %v1484 = vsel %vm1292, %v1482, %v1483
        %v1485 = vsel %vm1294, %v1482, %v1484
        %v1486 = vsel %vm1296, %v1482, %v1485
        %v1487 = vsel %vm1285, %v885, %v885
        %v1488 = vsel %vm1287, %v885, %v1487
        %v1489 = vrot.slane %v887, 7
        %v1490 = vsel %vm1290, %v1489, %v1488
        %v1491 = vsel %vm1292, %v1489, %v1490
        %v1492 = vsel %vm1294, %v1489, %v1491
        %v1493 = vsel %vm1296, %v1489, %v1492
        %v1494 = vsel %vm1285, %v889, %v889
        %v1495 = vsel %vm1287, %v889, %v1494
        %v1496 = vrot.slane %v891, 7
        %v1497 = vsel %vm1290, %v1496, %v1495
        %v1498 = vsel %vm1292, %v1496, %v1497
        %v1499 = vsel %vm1294, %v1496, %v1498
        %v1500 = vsel %vm1296, %v1496, %v1499
        %v1501 = vsel %vm1285, %v893, %v893
        %v1502 = vsel %vm1287, %v893, %v1501
        %v1503 = vrot.slane %v895, 7
        %v1504 = vsel %vm1290, %v1503, %v1502
        %v1505 = vsel %vm1292, %v1503, %v1504
        %v1506 = vsel %vm1294, %v1503, %v1505
        %v1507 = vsel %vm1296, %v1503, %v1506
        %v1508 = vsel %vm1285, %v897, %v897
        %v1509 = vsel %vm1287, %v897, %v1508
        %v1510 = vrot.slane %v899, 7
        %v1511 = vsel %vm1290, %v1510, %v1509
        %v1512 = vsel %vm1292, %v1510, %v1511
        %v1513 = vsel %vm1294, %v1510, %v1512
        %v1514 = vsel %vm1296, %v1510, %v1513
        %v1515 = vsel %vm1285, %v901, %v901
        %v1516 = vsel %vm1287, %v901, %v1515
        %v1517 = vrot.slane %v903, 7
        %v1518 = vsel %vm1290, %v1517, %v1516
        %v1519 = vsel %vm1292, %v1517, %v1518
        %v1520 = vsel %vm1294, %v1517, %v1519
        %v1521 = vsel %vm1296, %v1517, %v1520
        %v1522 = vsel %vm1285, %v905, %v905
        %v1523 = vsel %vm1287, %v905, %v1522
        %v1524 = vrot.slane %v907, 7
        %v1525 = vsel %vm1290, %v1524, %v1523
        %v1526 = vsel %vm1292, %v1524, %v1525
        %v1527 = vsel %vm1294, %v1524, %v1526
        %v1528 = vsel %vm1296, %v1524, %v1527
        %v1529 = vsel %vm1285, %v909, %v909
        %v1530 = vsel %vm1287, %v909, %v1529
        %v1531 = vrot.slane %v911, 7
        %v1532 = vsel %vm1290, %v1531, %v1530
        %v1533 = vsel %vm1292, %v1531, %v1532
        %v1534 = vsel %vm1294, %v1531, %v1533
        %v1535 = vsel %vm1296, %v1531, %v1534
        %v1536 = vsel %vm1285, %v913, %v913
        %v1537 = vsel %vm1287, %v913, %v1536
        %v1538 = vrot.slane %v915, 7
        %v1539 = vsel %vm1290, %v1538, %v1537
        %v1540 = vsel %vm1292, %v1538, %v1539
        %v1541 = vsel %vm1294, %v1538, %v1540
        %v1542 = vsel %vm1296, %v1538, %v1541
        %v1543 = vsel %vm1285, %v917, %v917
        %v1544 = vsel %vm1287, %v917, %v1543
        %v1545 = vrot.slane %v919, 7
        %v1546 = vsel %vm1290, %v1545, %v1544
        %v1547 = vsel %vm1292, %v1545, %v1546
        %v1548 = vsel %vm1294, %v1545, %v1547
        %v1549 = vsel %vm1296, %v1545, %v1548
        %v1550 = vsel %vm1285, %v921, %v921
        %v1551 = vsel %vm1287, %v921, %v1550
        %v1552 = vrot.slane %v923, 7
        %v1553 = vsel %vm1290, %v1552, %v1551
        %v1554 = vsel %vm1292, %v1552, %v1553
        %v1555 = vsel %vm1294, %v1552, %v1554
        %v1556 = vsel %vm1296, %v1552, %v1555
        %v1557 = vsel %vm1285, %v925, %v925
        %v1558 = vsel %vm1287, %v925, %v1557
        %v1559 = vrot.slane %v927, 7
        %v1560 = vsel %vm1290, %v1559, %v1558
        %v1561 = vsel %vm1292, %v1559, %v1560
        %v1562 = vsel %vm1294, %v1559, %v1561
        %v1563 = vsel %vm1296, %v1559, %v1562
        %v1564 = vsel %vm1285, %v929, %v929
        %v1565 = vsel %vm1287, %v929, %v1564
        %v1566 = vrot.slane %v931, 7
        %v1567 = vsel %vm1290, %v1566, %v1565
        %v1568 = vsel %vm1292, %v1566, %v1567
        %v1569 = vsel %vm1294, %v1566, %v1568
        %v1570 = vsel %vm1296, %v1566, %v1569
        %v1571 = vsel %vm1285, %v933, %v933
        %v1572 = vsel %vm1287, %v933, %v1571
        %v1573 = vrot.slane %v935, 7
        %v1574 = vsel %vm1290, %v1573, %v1572
        %v1575 = vsel %vm1292, %v1573, %v1574
        %v1576 = vsel %vm1294, %v1573, %v1575
        %v1577 = vsel %vm1296, %v1573, %v1576
        %v1578 = vsel %vm1285, %v937, %v937
        %v1579 = vsel %vm1287, %v937, %v1578
        %v1580 = vrot.slane %v939, 7
        %v1581 = vsel %vm1290, %v1580, %v1579
        %v1582 = vsel %vm1292, %v1580, %v1581
        %v1583 = vsel %vm1294, %v1580, %v1582
        %v1584 = vsel %vm1296, %v1580, %v1583
        %v1585 = vsel %vm1285, %v941, %v941
        %v1586 = vsel %vm1287, %v941, %v1585
        %v1587 = vrot.slane %v943, 7
        %v1588 = vsel %vm1290, %v1587, %v1586
        %v1589 = vsel %vm1292, %v1587, %v1588
        %v1590 = vsel %vm1294, %v1587, %v1589
        %v1591 = vsel %vm1296, %v1587, %v1590
        %v1592 = vsel %vm1285, %v945, %v945
        %v1593 = vsel %vm1287, %v945, %v1592
        %v1594 = vrot.slane %v947, 7
        %v1595 = vsel %vm1290, %v1594, %v1593
        %v1596 = vsel %vm1292, %v1594, %v1595
        %v1597 = vsel %vm1294, %v1594, %v1596
        %v1598 = vsel %vm1296, %v1594, %v1597
        %v1599 = vsel %vm1285, %v949, %v949
        %v1600 = vsel %vm1287, %v949, %v1599
        %v1601 = vrot.slane %v951, 7
        %v1602 = vsel %vm1290, %v1601, %v1600
        %v1603 = vsel %vm1292, %v1601, %v1602
        %v1604 = vsel %vm1294, %v1601, %v1603
        %v1605 = vsel %vm1296, %v1601, %v1604
        %v1606 = vsel %vm1285, %v953, %v953
        %v1607 = vsel %vm1287, %v953, %v1606
        %v1608 = vrot.slane %v955, 7
        %v1609 = vsel %vm1290, %v1608, %v1607
        %v1610 = vsel %vm1292, %v1608, %v1609
        %v1611 = vsel %vm1294, %v1608, %v1610
        %v1612 = vsel %vm1296, %v1608, %v1611
        %v1613 = vsel %vm1285, %v957, %v957
        %v1614 = vsel %vm1287, %v957, %v1613
        %v1615 = vrot.slane %v959, 7
        %v1616 = vsel %vm1290, %v1615, %v1614
        %v1617 = vsel %vm1292, %v1615, %v1616
        %v1618 = vsel %vm1294, %v1615, %v1617
        %v1619 = vsel %vm1296, %v1615, %v1618
        %v1620 = vsel %vm1285, %v961, %v961
        %v1621 = vsel %vm1287, %v961, %v1620
        %v1622 = vrot.slane %v963, 7
        %v1623 = vsel %vm1290, %v1622, %v1621
        %v1624 = vsel %vm1292, %v1622, %v1623
        %v1625 = vsel %vm1294, %v1622, %v1624
        %v1626 = vsel %vm1296, %v1622, %v1625
        %v1627 = vsel %vm1285, %v965, %v965
        %v1628 = vsel %vm1287, %v965, %v1627
        %v1629 = vrot.slane %v967, 7
        %v1630 = vsel %vm1290, %v1629, %v1628
        %v1631 = vsel %vm1292, %v1629, %v1630
        %v1632 = vsel %vm1294, %v1629, %v1631
        %v1633 = vsel %vm1296, %v1629, %v1632
        %v1634 = vsel %vm1285, %v969, %v969
        %v1635 = vsel %vm1287, %v969, %v1634
        %v1636 = vrot.slane %v971, 7
        %v1637 = vsel %vm1290, %v1636, %v1635
        %v1638 = vsel %vm1292, %v1636, %v1637
        %v1639 = vsel %vm1294, %v1636, %v1638
        %v1640 = vsel %vm1296, %v1636, %v1639
        %v1641 = vsel %vm1285, %v973, %v973
        %v1642 = vsel %vm1287, %v973, %v1641
        %v1643 = vrot.slane %v975, 7
        %v1644 = vsel %vm1290, %v1643, %v1642
        %v1645 = vsel %vm1292, %v1643, %v1644
        %v1646 = vsel %vm1294, %v1643, %v1645
        %v1647 = vsel %vm1296, %v1643, %v1646
        %v1648 = vsel %vm1285, %v977, %v977
        %v1649 = vsel %vm1287, %v977, %v1648
        %v1650 = vrot.slane %v979, 7
        %v1651 = vsel %vm1290, %v1650, %v1649
        %v1652 = vsel %vm1292, %v1650, %v1651
        %v1653 = vsel %vm1294, %v1650, %v1652
        %v1654 = vsel %vm1296, %v1650, %v1653
        %v1655 = vsel %vm1285, %v981, %v981
        %v1656 = vsel %vm1287, %v981, %v1655
        %v1657 = vrot.slane %v983, 7
        %v1658 = vsel %vm1290, %v1657, %v1656
        %v1659 = vsel %vm1292, %v1657, %v1658
        %v1660 = vsel %vm1294, %v1657, %v1659
        %v1661 = vsel %vm1296, %v1657, %v1660
        %v1662 = vsel %vm1285, %v985, %v985
        %v1663 = vsel %vm1287, %v985, %v1662
        %v1664 = vrot.slane %v987, 7
        %v1665 = vsel %vm1290, %v1664, %v1663
        %v1666 = vsel %vm1292, %v1664, %v1665
        %v1667 = vsel %vm1294, %v1664, %v1666
        %v1668 = vsel %vm1296, %v1664, %v1667
        %v1669 = vsel %vm1285, %v989, %v989
        %v1670 = vsel %vm1287, %v989, %v1669
        %v1671 = vrot.slane %v991, 7
        %v1672 = vsel %vm1290, %v1671, %v1670
        %v1673 = vsel %vm1292, %v1671, %v1672
        %v1674 = vsel %vm1294, %v1671, %v1673
        %v1675 = vsel %vm1296, %v1671, %v1674
        %v1676 = vsel %vm1285, %v993, %v993
        %v1677 = vsel %vm1287, %v993, %v1676
        %v1678 = vrot.slane %v995, 7
        %v1679 = vsel %vm1290, %v1678, %v1677
        %v1680 = vsel %vm1292, %v1678, %v1679
        %v1681 = vsel %vm1294, %v1678, %v1680
        %v1682 = vsel %vm1296, %v1678, %v1681
        %v1683 = vsel %vm1285, %v997, %v997
        %v1684 = vsel %vm1287, %v997, %v1683
        %v1685 = vrot.slane %v999, 7
        %v1686 = vsel %vm1290, %v1685, %v1684
        %v1687 = vsel %vm1292, %v1685, %v1686
        %v1688 = vsel %vm1294, %v1685, %v1687
        %v1689 = vsel %vm1296, %v1685, %v1688
        %v1690 = vsel %vm1285, %v1001, %v1001
        %v1691 = vsel %vm1287, %v1001, %v1690
        %v1692 = vrot.slane %v1003, 7
        %v1693 = vsel %vm1290, %v1692, %v1691
        %v1694 = vsel %vm1292, %v1692, %v1693
        %v1695 = vsel %vm1294, %v1692, %v1694
        %v1696 = vsel %vm1296, %v1692, %v1695
        %v1697 = vsel %vm1285, %v1005, %v1005
        %v1698 = vsel %vm1287, %v1005, %v1697
        %v1699 = vrot.slane %v1007, 7
        %v1700 = vsel %vm1290, %v1699, %v1698
        %v1701 = vsel %vm1292, %v1699, %v1700
        %v1702 = vsel %vm1294, %v1699, %v1701
        %v1703 = vsel %vm1296, %v1699, %v1702
        %v1704 = vsel %vm1285, %v1009, %v1009
        %v1705 = vsel %vm1287, %v1009, %v1704
        %v1706 = vrot.slane %v1011, 7
        %v1707 = vsel %vm1290, %v1706, %v1705
        %v1708 = vsel %vm1292, %v1706, %v1707
        %v1709 = vsel %vm1294, %v1706, %v1708
        %v1710 = vsel %vm1296, %v1706, %v1709
        %v1711 = vsel %vm1285, %v1013, %v1013
        %v1712 = vsel %vm1287, %v1013, %v1711
        %v1713 = vrot.slane %v1015, 7
        %v1714 = vsel %vm1290, %v1713, %v1712
        %v1715 = vsel %vm1292, %v1713, %v1714
        %v1716 = vsel %vm1294, %v1713, %v1715
        %v1717 = vsel %vm1296, %v1713, %v1716
        %v1718 = vsel %vm1285, %v1017, %v1017
        %v1719 = vsel %vm1287, %v1017, %v1718
        %v1720 = vrot.slane %v1019, 7
        %v1721 = vsel %vm1290, %v1720, %v1719
        %v1722 = vsel %vm1292, %v1720, %v1721
        %v1723 = vsel %vm1294, %v1720, %v1722
        %v1724 = vsel %vm1296, %v1720, %v1723
        %v1725 = vsel %vm1285, %v1021, %v1021
        %v1726 = vsel %vm1287, %v1021, %v1725
        %v1727 = vrot.slane %v1023, 7
        %v1728 = vsel %vm1290, %v1727, %v1726
        %v1729 = vsel %vm1292, %v1727, %v1728
        %v1730 = vsel %vm1294, %v1727, %v1729
        %v1731 = vsel %vm1296, %v1727, %v1730
        %v1732 = vsel %vm1285, %v1025, %v1025
        %v1733 = vsel %vm1287, %v1025, %v1732
        %v1734 = vrot.slane %v1027, 7
        %v1735 = vsel %vm1290, %v1734, %v1733
        %v1736 = vsel %vm1292, %v1734, %v1735
        %v1737 = vsel %vm1294, %v1734, %v1736
        %v1738 = vsel %vm1296, %v1734, %v1737
        %v1739 = vsel %vm1285, %v1029, %v1029
        %v1740 = vsel %vm1287, %v1029, %v1739
        %v1741 = vrot.slane %v1031, 7
        %v1742 = vsel %vm1290, %v1741, %v1740
        %v1743 = vsel %vm1292, %v1741, %v1742
        %v1744 = vsel %vm1294, %v1741, %v1743
        %v1745 = vsel %vm1296, %v1741, %v1744
        %v1746 = vsel %vm1285, %v1033, %v1033
        %v1747 = vsel %vm1287, %v1033, %v1746
        %v1748 = vrot.slane %v1035, 7
        %v1749 = vsel %vm1290, %v1748, %v1747
        %v1750 = vsel %vm1292, %v1748, %v1749
        %v1751 = vsel %vm1294, %v1748, %v1750
        %v1752 = vsel %vm1296, %v1748, %v1751
        %v1753 = vsel %vm1285, %v1037, %v1037
        %v1754 = vsel %vm1287, %v1037, %v1753
        %v1755 = vrot.slane %v1039, 7
        %v1756 = vsel %vm1290, %v1755, %v1754
        %v1757 = vsel %vm1292, %v1755, %v1756
        %v1758 = vsel %vm1294, %v1755, %v1757
        %v1759 = vsel %vm1296, %v1755, %v1758
        %v1760 = vsel %vm1285, %v1041, %v1041
        %v1761 = vsel %vm1287, %v1041, %v1760
        %v1762 = vrot.slane %v1043, 7
        %v1763 = vsel %vm1290, %v1762, %v1761
        %v1764 = vsel %vm1292, %v1762, %v1763
        %v1765 = vsel %vm1294, %v1762, %v1764
        %v1766 = vsel %vm1296, %v1762, %v1765
        %v1767 = vsel %vm1285, %v1045, %v1045
        %v1768 = vsel %vm1287, %v1045, %v1767
        %v1769 = vrot.slane %v1047, 7
        %v1770 = vsel %vm1290, %v1769, %v1768
        %v1771 = vsel %vm1292, %v1769, %v1770
        %v1772 = vsel %vm1294, %v1769, %v1771
        %v1773 = vsel %vm1296, %v1769, %v1772
        %v1774 = vsel %vm1285, %v1049, %v1049
        %v1775 = vsel %vm1287, %v1049, %v1774
        %v1776 = vrot.slane %v1051, 7
        %v1777 = vsel %vm1290, %v1776, %v1775
        %v1778 = vsel %vm1292, %v1776, %v1777
        %v1779 = vsel %vm1294, %v1776, %v1778
        %v1780 = vsel %vm1296, %v1776, %v1779
        %v1781 = vsel %vm1285, %v1053, %v1053
        %v1782 = vsel %vm1287, %v1053, %v1781
        %v1783 = vrot.slane %v1055, 7
        %v1784 = vsel %vm1290, %v1783, %v1782
        %v1785 = vsel %vm1292, %v1783, %v1784
        %v1786 = vsel %vm1294, %v1783, %v1785
        %v1787 = vsel %vm1296, %v1783, %v1786
        %v1788 = vsel %vm1285, %v1057, %v1057
        %v1789 = vsel %vm1287, %v1057, %v1788
        %v1790 = vrot.slane %v1059, 7
        %v1791 = vsel %vm1290, %v1790, %v1789
        %v1792 = vsel %vm1292, %v1790, %v1791
        %v1793 = vsel %vm1294, %v1790, %v1792
        %v1794 = vsel %vm1296, %v1790, %v1793
        %v1795 = vsel %vm1285, %v1061, %v1061
        %v1796 = vsel %vm1287, %v1061, %v1795
        %v1797 = vrot.slane %v1063, 7
        %v1798 = vsel %vm1290, %v1797, %v1796
        %v1799 = vsel %vm1292, %v1797, %v1798
        %v1800 = vsel %vm1294, %v1797, %v1799
        %v1801 = vsel %vm1296, %v1797, %v1800
        %v1802 = vsel %vm1285, %v1065, %v1065
        %v1803 = vsel %vm1287, %v1065, %v1802
        %v1804 = vrot.slane %v1067, 7
        %v1805 = vsel %vm1290, %v1804, %v1803
        %v1806 = vsel %vm1292, %v1804, %v1805
        %v1807 = vsel %vm1294, %v1804, %v1806
        %v1808 = vsel %vm1296, %v1804, %v1807
        %v1809 = vsel %vm1285, %v1069, %v1069
        %v1810 = vsel %vm1287, %v1069, %v1809
        %v1811 = vrot.slane %v1071, 7
        %v1812 = vsel %vm1290, %v1811, %v1810
        %v1813 = vsel %vm1292, %v1811, %v1812
        %v1814 = vsel %vm1294, %v1811, %v1813
        %v1815 = vsel %vm1296, %v1811, %v1814
        %v1816 = vsel %vm1285, %v1073, %v1073
        %v1817 = vsel %vm1287, %v1073, %v1816
        %v1818 = vrot.slane %v1075, 7
        %v1819 = vsel %vm1290, %v1818, %v1817
        %v1820 = vsel %vm1292, %v1818, %v1819
        %v1821 = vsel %vm1294, %v1818, %v1820
        %v1822 = vsel %vm1296, %v1818, %v1821
        %v1823 = vsel %vm1285, %v1077, %v1077
        %v1824 = vsel %vm1287, %v1077, %v1823
        %v1825 = vrot.slane %v1079, 7
        %v1826 = vsel %vm1290, %v1825, %v1824
        %v1827 = vsel %vm1292, %v1825, %v1826
        %v1828 = vsel %vm1294, %v1825, %v1827
        %v1829 = vsel %vm1296, %v1825, %v1828
        %v1830 = vsel %vm1285, %v1081, %v1081
        %v1831 = vsel %vm1287, %v1081, %v1830
        %v1832 = vrot.slane %v1083, 7
        %v1833 = vsel %vm1290, %v1832, %v1831
        %v1834 = vsel %vm1292, %v1832, %v1833
        %v1835 = vsel %vm1294, %v1832, %v1834
        %v1836 = vsel %vm1296, %v1832, %v1835
        %v1837 = vsel %vm1285, %v1085, %v1085
        %v1838 = vsel %vm1287, %v1085, %v1837
        %v1839 = vrot.slane %v1087, 7
        %v1840 = vsel %vm1290, %v1839, %v1838
        %v1841 = vsel %vm1292, %v1839, %v1840
        %v1842 = vsel %vm1294, %v1839, %v1841
        %v1843 = vsel %vm1296, %v1839, %v1842
        %v1844 = vsel %vm1285, %v1089, %v1089
        %v1845 = vsel %vm1287, %v1089, %v1844
        %v1846 = vrot.slane %v1091, 7
        %v1847 = vsel %vm1290, %v1846, %v1845
        %v1848 = vsel %vm1292, %v1846, %v1847
        %v1849 = vsel %vm1294, %v1846, %v1848
        %v1850 = vsel %vm1296, %v1846, %v1849
        %v1851 = vsel %vm1285, %v1093, %v1093
        %v1852 = vsel %vm1287, %v1093, %v1851
        %v1853 = vrot.slane %v1095, 7
        %v1854 = vsel %vm1290, %v1853, %v1852
        %v1855 = vsel %vm1292, %v1853, %v1854
        %v1856 = vsel %vm1294, %v1853, %v1855
        %v1857 = vsel %vm1296, %v1853, %v1856
        %v1858 = vsel %vm1285, %v1097, %v1097
        %v1859 = vsel %vm1287, %v1097, %v1858
        %v1860 = vrot.slane %v1099, 7
        %v1861 = vsel %vm1290, %v1860, %v1859
        %v1862 = vsel %vm1292, %v1860, %v1861
        %v1863 = vsel %vm1294, %v1860, %v1862
        %v1864 = vsel %vm1296, %v1860, %v1863
        %v1865 = vsel %vm1285, %v1101, %v1101
        %v1866 = vsel %vm1287, %v1101, %v1865
        %v1867 = vrot.slane %v1103, 7
        %v1868 = vsel %vm1290, %v1867, %v1866
        %v1869 = vsel %vm1292, %v1867, %v1868
        %v1870 = vsel %vm1294, %v1867, %v1869
        %v1871 = vsel %vm1296, %v1867, %v1870
        %v1872 = vsel %vm1285, %v1105, %v1105
        %v1873 = vsel %vm1287, %v1105, %v1872
        %v1874 = vrot.slane %v1107, 7
        %v1875 = vsel %vm1290, %v1874, %v1873
        %v1876 = vsel %vm1292, %v1874, %v1875
        %v1877 = vsel %vm1294, %v1874, %v1876
        %v1878 = vsel %vm1296, %v1874, %v1877
        %v1879 = vsel %vm1285, %v1109, %v1109
        %v1880 = vsel %vm1287, %v1109, %v1879
        %v1881 = vrot.slane %v1111, 7
        %v1882 = vsel %vm1290, %v1881, %v1880
        %v1883 = vsel %vm1292, %v1881, %v1882
        %v1884 = vsel %vm1294, %v1881, %v1883
        %v1885 = vsel %vm1296, %v1881, %v1884
        %v1886 = vsel %vm1285, %v1113, %v1113
        %v1887 = vsel %vm1287, %v1113, %v1886
        %v1888 = vrot.slane %v1115, 7
        %v1889 = vsel %vm1290, %v1888, %v1887
        %v1890 = vsel %vm1292, %v1888, %v1889
        %v1891 = vsel %vm1294, %v1888, %v1890
        %v1892 = vsel %vm1296, %v1888, %v1891
        %v1893 = vsel %vm1285, %v1117, %v1117
        %v1894 = vsel %vm1287, %v1117, %v1893
        %v1895 = vrot.slane %v1119, 7
        %v1896 = vsel %vm1290, %v1895, %v1894
        %v1897 = vsel %vm1292, %v1895, %v1896
        %v1898 = vsel %vm1294, %v1895, %v1897
        %v1899 = vsel %vm1296, %v1895, %v1898
        %v1900 = vsel %vm1285, %v1121, %v1121
        %v1901 = vsel %vm1287, %v1121, %v1900
        %v1902 = vrot.slane %v1123, 7
        %v1903 = vsel %vm1290, %v1902, %v1901
        %v1904 = vsel %vm1292, %v1902, %v1903
        %v1905 = vsel %vm1294, %v1902, %v1904
        %v1906 = vsel %vm1296, %v1902, %v1905
        %v1907 = vsel %vm1285, %v1125, %v1125
        %v1908 = vsel %vm1287, %v1125, %v1907
        %v1909 = vrot.slane %v1127, 7
        %v1910 = vsel %vm1290, %v1909, %v1908
        %v1911 = vsel %vm1292, %v1909, %v1910
        %v1912 = vsel %vm1294, %v1909, %v1911
        %v1913 = vsel %vm1296, %v1909, %v1912
        %v1914 = vsel %vm1285, %v1129, %v1129
        %v1915 = vsel %vm1287, %v1129, %v1914
        %v1916 = vrot.slane %v1131, 7
        %v1917 = vsel %vm1290, %v1916, %v1915
        %v1918 = vsel %vm1292, %v1916, %v1917
        %v1919 = vsel %vm1294, %v1916, %v1918
        %v1920 = vsel %vm1296, %v1916, %v1919
        %v1921 = vsel %vm1285, %v1133, %v1133
        %v1922 = vsel %vm1287, %v1133, %v1921
        %v1923 = vrot.slane %v1135, 7
        %v1924 = vsel %vm1290, %v1923, %v1922
        %v1925 = vsel %vm1292, %v1923, %v1924
        %v1926 = vsel %vm1294, %v1923, %v1925
        %v1927 = vsel %vm1296, %v1923, %v1926
        %v1928 = vsel %vm1285, %v1137, %v1137
        %v1929 = vsel %vm1287, %v1137, %v1928
        %v1930 = vrot.slane %v1139, 7
        %v1931 = vsel %vm1290, %v1930, %v1929
        %v1932 = vsel %vm1292, %v1930, %v1931
        %v1933 = vsel %vm1294, %v1930, %v1932
        %v1934 = vsel %vm1296, %v1930, %v1933
        %v1935 = vsel %vm1285, %v1141, %v1141
        %v1936 = vsel %vm1287, %v1141, %v1935
        %v1937 = vrot.slane %v1143, 7
        %v1938 = vsel %vm1290, %v1937, %v1936
        %v1939 = vsel %vm1292, %v1937, %v1938
        %v1940 = vsel %vm1294, %v1937, %v1939
        %v1941 = vsel %vm1296, %v1937, %v1940
        %v1942 = vsel %vm1285, %v1145, %v1145
        %v1943 = vsel %vm1287, %v1145, %v1942
        %v1944 = vrot.slane %v1147, 7
        %v1945 = vsel %vm1290, %v1944, %v1943
        %v1946 = vsel %vm1292, %v1944, %v1945
        %v1947 = vsel %vm1294, %v1944, %v1946
        %v1948 = vsel %vm1296, %v1944, %v1947
        %v1949 = vsel %vm1285, %v1149, %v1149
        %v1950 = vsel %vm1287, %v1149, %v1949
        %v1951 = vrot.slane %v1151, 7
        %v1952 = vsel %vm1290, %v1951, %v1950
        %v1953 = vsel %vm1292, %v1951, %v1952
        %v1954 = vsel %vm1294, %v1951, %v1953
        %v1955 = vsel %vm1296, %v1951, %v1954
        %v1956 = vsel %vm1285, %v1153, %v1153
        %v1957 = vsel %vm1287, %v1153, %v1956
        %v1958 = vrot.slane %v1155, 7
        %v1959 = vsel %vm1290, %v1958, %v1957
        %v1960 = vsel %vm1292, %v1958, %v1959
        %v1961 = vsel %vm1294, %v1958, %v1960
        %v1962 = vsel %vm1296, %v1958, %v1961
        %v1963 = vsel %vm1285, %v1157, %v1157
        %v1964 = vsel %vm1287, %v1157, %v1963
        %v1965 = vrot.slane %v1159, 7
        %v1966 = vsel %vm1290, %v1965, %v1964
        %v1967 = vsel %vm1292, %v1965, %v1966
        %v1968 = vsel %vm1294, %v1965, %v1967
        %v1969 = vsel %vm1296, %v1965, %v1968
        %v1970 = vsel %vm1285, %v1161, %v1161
        %v1971 = vsel %vm1287, %v1161, %v1970
        %v1972 = vrot.slane %v1163, 7
        %v1973 = vsel %vm1290, %v1972, %v1971
        %v1974 = vsel %vm1292, %v1972, %v1973
        %v1975 = vsel %vm1294, %v1972, %v1974
        %v1976 = vsel %vm1296, %v1972, %v1975
        %v1977 = vsel %vm1285, %v1165, %v1165
        %v1978 = vsel %vm1287, %v1165, %v1977
        %v1979 = vrot.slane %v1167, 7
        %v1980 = vsel %vm1290, %v1979, %v1978
        %v1981 = vsel %vm1292, %v1979, %v1980
        %v1982 = vsel %vm1294, %v1979, %v1981
        %v1983 = vsel %vm1296, %v1979, %v1982
        %v1984 = vsel %vm1285, %v1169, %v1169
        %v1985 = vsel %vm1287, %v1169, %v1984
        %v1986 = vrot.slane %v1171, 7
        %v1987 = vsel %vm1290, %v1986, %v1985
        %v1988 = vsel %vm1292, %v1986, %v1987
        %v1989 = vsel %vm1294, %v1986, %v1988
        %v1990 = vsel %vm1296, %v1986, %v1989
        %v1991 = vsel %vm1285, %v1173, %v1173
        %v1992 = vsel %vm1287, %v1173, %v1991
        %v1993 = vrot.slane %v1175, 7
        %v1994 = vsel %vm1290, %v1993, %v1992
        %v1995 = vsel %vm1292, %v1993, %v1994
        %v1996 = vsel %vm1294, %v1993, %v1995
        %v1997 = vsel %vm1296, %v1993, %v1996
        %v1998 = vsel %vm1285, %v1177, %v1177
        %v1999 = vsel %vm1287, %v1177, %v1998
        %v2000 = vrot.slane %v1179, 7
        %v2001 = vsel %vm1290, %v2000, %v1999
        %v2002 = vsel %vm1292, %v2000, %v2001
        %v2003 = vsel %vm1294, %v2000, %v2002
        %v2004 = vsel %vm1296, %v2000, %v2003
        %v2005 = vsel %vm1285, %v1181, %v1181
        %v2006 = vsel %vm1287, %v1181, %v2005
        %v2007 = vrot.slane %v1183, 7
        %v2008 = vsel %vm1290, %v2007, %v2006
        %v2009 = vsel %vm1292, %v2007, %v2008
        %v2010 = vsel %vm1294, %v2007, %v2009
        %v2011 = vsel %vm1296, %v2007, %v2010
        %v2012 = vsel %vm1285, %v1185, %v1185
        %v2013 = vsel %vm1287, %v1185, %v2012
        %v2014 = vrot.slane %v1187, 7
        %v2015 = vsel %vm1290, %v2014, %v2013
        %v2016 = vsel %vm1292, %v2014, %v2015
        %v2017 = vsel %vm1294, %v2014, %v2016
        %v2018 = vsel %vm1296, %v2014, %v2017
        %v2019 = vsel %vm1285, %v1189, %v1189
        %v2020 = vsel %vm1287, %v1189, %v2019
        %v2021 = vrot.slane %v1191, 7
        %v2022 = vsel %vm1290, %v2021, %v2020
        %v2023 = vsel %vm1292, %v2021, %v2022
        %v2024 = vsel %vm1294, %v2021, %v2023
        %v2025 = vsel %vm1296, %v2021, %v2024
        %v2026 = vsel %vm1285, %v1193, %v1193
        %v2027 = vsel %vm1287, %v1193, %v2026
        %v2028 = vrot.slane %v1195, 7
        %v2029 = vsel %vm1290, %v2028, %v2027
        %v2030 = vsel %vm1292, %v2028, %v2029
        %v2031 = vsel %vm1294, %v2028, %v2030
        %v2032 = vsel %vm1296, %v2028, %v2031
        %v2033 = vsel %vm1285, %v1197, %v1197
        %v2034 = vsel %vm1287, %v1197, %v2033
        %v2035 = vrot.slane %v1199, 7
        %v2036 = vsel %vm1290, %v2035, %v2034
        %v2037 = vsel %vm1292, %v2035, %v2036
        %v2038 = vsel %vm1294, %v2035, %v2037
        %v2039 = vsel %vm1296, %v2035, %v2038
        %v2040 = vsel %vm1285, %v1201, %v1201
        %v2041 = vsel %vm1287, %v1201, %v2040
        %v2042 = vrot.slane %v1203, 7
        %v2043 = vsel %vm1290, %v2042, %v2041
        %v2044 = vsel %vm1292, %v2042, %v2043
        %v2045 = vsel %vm1294, %v2042, %v2044
        %v2046 = vsel %vm1296, %v2042, %v2045
        %v2047 = vsel %vm1285, %v1205, %v1205
        %v2048 = vsel %vm1287, %v1205, %v2047
        %v2049 = vrot.slane %v1207, 7
        %v2050 = vsel %vm1290, %v2049, %v2048
        %v2051 = vsel %vm1292, %v2049, %v2050
        %v2052 = vsel %vm1294, %v2049, %v2051
        %v2053 = vsel %vm1296, %v2049, %v2052
        %v2054 = vsel %vm1285, %v1209, %v1209
        %v2055 = vsel %vm1287, %v1209, %v2054
        %v2056 = vrot.slane %v1211, 7
        %v2057 = vsel %vm1290, %v2056, %v2055
        %v2058 = vsel %vm1292, %v2056, %v2057
        %v2059 = vsel %vm1294, %v2056, %v2058
        %v2060 = vsel %vm1296, %v2056, %v2059
        %v2061 = vsel %vm1285, %v1213, %v1213
        %v2062 = vsel %vm1287, %v1213, %v2061
        %v2063 = vrot.slane %v1215, 7
        %v2064 = vsel %vm1290, %v2063, %v2062
        %v2065 = vsel %vm1292, %v2063, %v2064
        %v2066 = vsel %vm1294, %v2063, %v2065
        %v2067 = vsel %vm1296, %v2063, %v2066
        %v2068 = vsel %vm1285, %v1217, %v1217
        %v2069 = vsel %vm1287, %v1217, %v2068
        %v2070 = vrot.slane %v1219, 7
        %v2071 = vsel %vm1290, %v2070, %v2069
        %v2072 = vsel %vm1292, %v2070, %v2071
        %v2073 = vsel %vm1294, %v2070, %v2072
        %v2074 = vsel %vm1296, %v2070, %v2073
        %v2075 = vsel %vm1285, %v1221, %v1221
        %v2076 = vsel %vm1287, %v1221, %v2075
        %v2077 = vrot.slane %v1223, 7
        %v2078 = vsel %vm1290, %v2077, %v2076
        %v2079 = vsel %vm1292, %v2077, %v2078
        %v2080 = vsel %vm1294, %v2077, %v2079
        %v2081 = vsel %vm1296, %v2077, %v2080
        %v2082 = vsel %vm1285, %v1225, %v1225
        %v2083 = vsel %vm1287, %v1225, %v2082
        %v2084 = vrot.slane %v1227, 7
        %v2085 = vsel %vm1290, %v2084, %v2083
        %v2086 = vsel %vm1292, %v2084, %v2085
        %v2087 = vsel %vm1294, %v2084, %v2086
        %v2088 = vsel %vm1296, %v2084, %v2087
        %v2089 = vsel %vm1285, %v1229, %v1229
        %v2090 = vsel %vm1287, %v1229, %v2089
        %v2091 = vrot.slane %v1231, 7
        %v2092 = vsel %vm1290, %v2091, %v2090
        %v2093 = vsel %vm1292, %v2091, %v2092
        %v2094 = vsel %vm1294, %v2091, %v2093
        %v2095 = vsel %vm1296, %v2091, %v2094
        %v2096 = vsel %vm1285, %v1233, %v1233
        %v2097 = vsel %vm1287, %v1233, %v2096
        %v2098 = vrot.slane %v1235, 7
        %v2099 = vsel %vm1290, %v2098, %v2097
        %v2100 = vsel %vm1292, %v2098, %v2099
        %v2101 = vsel %vm1294, %v2098, %v2100
        %v2102 = vsel %vm1296, %v2098, %v2101
        %v2103 = vsel %vm1285, %v1237, %v1237
        %v2104 = vsel %vm1287, %v1237, %v2103
        %v2105 = vrot.slane %v1239, 7
        %v2106 = vsel %vm1290, %v2105, %v2104
        %v2107 = vsel %vm1292, %v2105, %v2106
        %v2108 = vsel %vm1294, %v2105, %v2107
        %v2109 = vsel %vm1296, %v2105, %v2108
        %v2110 = vsel %vm1285, %v1241, %v1241
        %v2111 = vsel %vm1287, %v1241, %v2110
        %v2112 = vrot.slane %v1243, 7
        %v2113 = vsel %vm1290, %v2112, %v2111
        %v2114 = vsel %vm1292, %v2112, %v2113
        %v2115 = vsel %vm1294, %v2112, %v2114
        %v2116 = vsel %vm1296, %v2112, %v2115
        %v2117 = vsel %vm1285, %v1245, %v1245
        %v2118 = vsel %vm1287, %v1245, %v2117
        %v2119 = vrot.slane %v1247, 7
        %v2120 = vsel %vm1290, %v2119, %v2118
        %v2121 = vsel %vm1292, %v2119, %v2120
        %v2122 = vsel %vm1294, %v2119, %v2121
        %v2123 = vsel %vm1296, %v2119, %v2122
        %v2124 = vsel %vm1285, %v1249, %v1249
        %v2125 = vsel %vm1287, %v1249, %v2124
        %v2126 = vrot.slane %v1251, 7
        %v2127 = vsel %vm1290, %v2126, %v2125
        %v2128 = vsel %vm1292, %v2126, %v2127
        %v2129 = vsel %vm1294, %v2126, %v2128
        %v2130 = vsel %vm1296, %v2126, %v2129
        %v2131 = vsel %vm1285, %v1253, %v1253
        %v2132 = vsel %vm1287, %v1253, %v2131
        %v2133 = vrot.slane %v1255, 7
        %v2134 = vsel %vm1290, %v2133, %v2132
        %v2135 = vsel %vm1292, %v2133, %v2134
        %v2136 = vsel %vm1294, %v2133, %v2135
        %v2137 = vsel %vm1296, %v2133, %v2136
        %v2138 = vsel %vm1285, %v1257, %v1257
        %v2139 = vsel %vm1287, %v1257, %v2138
        %v2140 = vrot.slane %v1259, 7
        %v2141 = vsel %vm1290, %v2140, %v2139
        %v2142 = vsel %vm1292, %v2140, %v2141
        %v2143 = vsel %vm1294, %v2140, %v2142
        %v2144 = vsel %vm1296, %v2140, %v2143
        %v2145 = vsel %vm1285, %v1261, %v1261
        %v2146 = vsel %vm1287, %v1261, %v2145
        %v2147 = vrot.slane %v1263, 7
        %v2148 = vsel %vm1290, %v2147, %v2146
        %v2149 = vsel %vm1292, %v2147, %v2148
        %v2150 = vsel %vm1294, %v2147, %v2149
        %v2151 = vsel %vm1296, %v2147, %v2150
        %v2152 = vsel %vm1285, %v1265, %v1265
        %v2153 = vsel %vm1287, %v1265, %v2152
        %v2154 = vrot.slane %v1267, 7
        %v2155 = vsel %vm1290, %v2154, %v2153
        %v2156 = vsel %vm1292, %v2154, %v2155
        %v2157 = vsel %vm1294, %v2154, %v2156
        %v2158 = vsel %vm1296, %v2154, %v2157
        %v2159 = vsel %vm1285, %v1269, %v1269
        %v2160 = vsel %vm1287, %v1269, %v2159
        %v2161 = vrot.slane %v1271, 7
        %v2162 = vsel %vm1290, %v2161, %v2160
        %v2163 = vsel %vm1292, %v2161, %v2162
        %v2164 = vsel %vm1294, %v2161, %v2163
        %v2165 = vsel %vm1296, %v2161, %v2164
        %v2166 = vsel %vm1285, %v1273, %v1273
        %v2167 = vsel %vm1287, %v1273, %v2166
        %v2168 = vrot.slane %v1275, 7
        %v2169 = vsel %vm1290, %v2168, %v2167
        %v2170 = vsel %vm1292, %v2168, %v2169
        %v2171 = vsel %vm1294, %v2168, %v2170
        %v2172 = vsel %vm1296, %v2168, %v2171
        %v2173 = vsel %vm1285, %v1277, %v1277
        %v2174 = vsel %vm1287, %v1277, %v2173
        %v2175 = vrot.slane %v1279, 7
        %v2176 = vsel %vm1290, %v2175, %v2174
        %v2177 = vsel %vm1292, %v2175, %v2176
        %v2178 = vsel %vm1294, %v2175, %v2177
        %v2179 = vsel %vm1296, %v2175, %v2178
        %v2180 = vsel %vm1285, %v1281, %v1281
        %v2181 = vsel %vm1287, %v1281, %v2180
        %v2182 = vrot.slane %v1283, 7
        %v2183 = vsel %vm1290, %v2182, %v2181
        %v2184 = vsel %vm1292, %v2182, %v2183
        %v2185 = vsel %vm1294, %v2182, %v2184
        %v2186 = vsel %vm1296, %v2182, %v2185
        %v2315 = vcombine.low %v1297, %v1409
        %v2317 = vunpack.c.l.s4 1934713408
        %v2318 = vunpack.c.0.s8 %v2317
        %v2319 = vlaneseq
        %v2320 = vshrl.u32 %v2319, 7
        %v2321 = vsub.s32 %v2318, %v2320
        %v2322 = vrot.slane %v2315, %v2321
        %v2323 = vcombine.high %v2322, 0.0
        %v2324 = vcombine.low %v1521, %v1633
        %v2326 = vunpack.c.l.s4 1934713408
        %v2327 = vunpack.c.0.s8 %v2326
        %v2328 = vlaneseq
        %v2329 = vshrl.u32 %v2328, 7
        %v2330 = vsub.s32 %v2327, %v2329
        %v2331 = vrot.slane %v2324, %v2330
        %v2332 = vcombine.high %v2331, 0.0
        %v2333 = vcombine.low %v1745, %v1857
        %v2335 = vunpack.c.l.s4 1934713408
        %v2336 = vunpack.c.0.s8 %v2335
        %v2337 = vlaneseq
        %v2338 = vshrl.u32 %v2337, 7
        %v2339 = vsub.s32 %v2336, %v2338
        %v2340 = vrot.slane %v2333, %v2339
        %v2341 = vcombine.high %v2340, 0.0
        %v2342 = vcombine.low %v1969, %v2081
        %v2344 = vunpack.c.l.s4 1934713408
        %v2345 = vunpack.c.0.s8 %v2344
        %v2346 = vlaneseq
        %v2347 = vshrl.u32 %v2346, 7
        %v2348 = vsub.s32 %v2345, %v2347
        %v2349 = vrot.slane %v2342, %v2348
        %v2350 = vcombine.high %v2349, 0.0
        %v2351 = vcombine.low %v1304, %v1416
        %v2353 = vunpack.c.l.s4 1934713408
        %v2354 = vunpack.c.0.s8 %v2353
        %v2355 = vlaneseq
        %v2356 = vshrl.u32 %v2355, 7
        %v2357 = vsub.s32 %v2354, %v2356
        %v2358 = vrot.slane %v2351, %v2357
        %v2359 = vcombine.high %v2358, 0.0
        %v2360 = vcombine.low %v1528, %v1640
        %v2362 = vunpack.c.l.s4 1934713408
        %v2363 = vunpack.c.0.s8 %v2362
        %v2364 = vlaneseq
        %v2365 = vshrl.u32 %v2364, 7
        %v2366 = vsub.s32 %v2363, %v2365
        %v2367 = vrot.slane %v2360, %v2366
        %v2368 = vcombine.high %v2367, 0.0
        %v2369 = vcombine.low %v1752, %v1864
        %v2371 = vunpack.c.l.s4 1934713408
        %v2372 = vunpack.c.0.s8 %v2371
        %v2373 = vlaneseq
        %v2374 = vshrl.u32 %v2373, 7
        %v2375 = vsub.s32 %v2372, %v2374
        %v2376 = vrot.slane %v2369, %v2375
        %v2377 = vcombine.high %v2376, 0.0
        %v2378 = vcombine.low %v1976, %v2088
        %v2380 = vunpack.c.l.s4 1934713408
        %v2381 = vunpack.c.0.s8 %v2380
        %v2382 = vlaneseq
        %v2383 = vshrl.u32 %v2382, 7
        %v2384 = vsub.s32 %v2381, %v2383
        %v2385 = vrot.slane %v2378, %v2384
        %v2386 = vcombine.high %v2385, 0.0
        %v2387 = vcombine.low %v1311, %v1423
        %v2389 = vunpack.c.l.s4 1934713408
        %v2390 = vunpack.c.0.s8 %v2389
        %v2391 = vlaneseq
        %v2392 = vshrl.u32 %v2391, 7
        %v2393 = vsub.s32 %v2390, %v2392
        %v2394 = vrot.slane %v2387, %v2393
        %v2395 = vcombine.high %v2394, 0.0
        %v2396 = vcombine.low %v1535, %v1647
        %v2398 = vunpack.c.l.s4 1934713408
        %v2399 = vunpack.c.0.s8 %v2398
        %v2400 = vlaneseq
        %v2401 = vshrl.u32 %v2400, 7
        %v2402 = vsub.s32 %v2399, %v2401
        %v2403 = vrot.slane %v2396, %v2402
        %v2404 = vcombine.high %v2403, 0.0
        %v2405 = vcombine.low %v1759, %v1871
        %v2407 = vunpack.c.l.s4 1934713408
        %v2408 = vunpack.c.0.s8 %v2407
        %v2409 = vlaneseq
        %v2410 = vshrl.u32 %v2409, 7
        %v2411 = vsub.s32 %v2408, %v2410
        %v2412 = vrot.slane %v2405, %v2411
        %v2413 = vcombine.high %v2412, 0.0
        %v2414 = vcombine.low %v1983, %v2095
        %v2416 = vunpack.c.l.s4 1934713408
        %v2417 = vunpack.c.0.s8 %v2416
        %v2418 = vlaneseq
        %v2419 = vshrl.u32 %v2418, 7
        %v2420 = vsub.s32 %v2417, %v2419
        %v2421 = vrot.slane %v2414, %v2420
        %v2422 = vcombine.high %v2421, 0.0
        %v2423 = vcombine.low %v1318, %v1430
        %v2425 = vunpack.c.l.s4 1934713408
        %v2426 = vunpack.c.0.s8 %v2425
        %v2427 = vlaneseq
        %v2428 = vshrl.u32 %v2427, 7
        %v2429 = vsub.s32 %v2426, %v2428
        %v2430 = vrot.slane %v2423, %v2429
        %v2431 = vcombine.high %v2430, 0.0
        %v2432 = vcombine.low %v1542, %v1654
        %v2434 = vunpack.c.l.s4 1934713408
        %v2435 = vunpack.c.0.s8 %v2434
        %v2436 = vlaneseq
        %v2437 = vshrl.u32 %v2436, 7
        %v2438 = vsub.s32 %v2435, %v2437
        %v2439 = vrot.slane %v2432, %v2438
        %v2440 = vcombine.high %v2439, 0.0
        %v2441 = vcombine.low %v1766, %v1878
        %v2443 = vunpack.c.l.s4 1934713408
        %v2444 = vunpack.c.0.s8 %v2443
        %v2445 = vlaneseq
        %v2446 = vshrl.u32 %v2445, 7
        %v2447 = vsub.s32 %v2444, %v2446
        %v2448 = vrot.slane %v2441, %v2447
        %v2449 = vcombine.high %v2448, 0.0
        %v2450 = vcombine.low %v1990, %v2102
        %v2452 = vunpack.c.l.s4 1934713408
        %v2453 = vunpack.c.0.s8 %v2452
        %v2454 = vlaneseq
        %v2455 = vshrl.u32 %v2454, 7
        %v2456 = vsub.s32 %v2453, %v2455
        %v2457 = vrot.slane %v2450, %v2456
        %v2458 = vcombine.high %v2457, 0.0
        %v2459 = vcombine.low %v1325, %v1437
        %v2461 = vunpack.c.l.s4 1934713408
        %v2462 = vunpack.c.0.s8 %v2461
        %v2463 = vlaneseq
        %v2464 = vshrl.u32 %v2463, 7
        %v2465 = vsub.s32 %v2462, %v2464
        %v2466 = vrot.slane %v2459, %v2465
        %v2467 = vcombine.high %v2466, 0.0
        %v2468 = vcombine.low %v1549, %v1661
        %v2470 = vunpack.c.l.s4 1934713408
        %v2471 = vunpack.c.0.s8 %v2470
        %v2472 = vlaneseq
        %v2473 = vshrl.u32 %v2472, 7
        %v2474 = vsub.s32 %v2471, %v2473
        %v2475 = vrot.slane %v2468, %v2474
        %v2476 = vcombine.high %v2475, 0.0
        %v2477 = vcombine.low %v1773, %v1885
        %v2479 = vunpack.c.l.s4 1934713408
        %v2480 = vunpack.c.0.s8 %v2479
        %v2481 = vlaneseq
        %v2482 = vshrl.u32 %v2481, 7
        %v2483 = vsub.s32 %v2480, %v2482
        %v2484 = vrot.slane %v2477, %v2483
        %v2485 = vcombine.high %v2484, 0.0
        %v2486 = vcombine.low %v1997, %v2109
        %v2488 = vunpack.c.l.s4 1934713408
        %v2489 = vunpack.c.0.s8 %v2488
        %v2490 = vlaneseq
        %v2491 = vshrl.u32 %v2490, 7
        %v2492 = vsub.s32 %v2489, %v2491
        %v2493 = vrot.slane %v2486, %v2492
        %v2494 = vcombine.high %v2493, 0.0
        %v2495 = vcombine.low %v1332, %v1444
        %v2497 = vunpack.c.l.s4 1934713408
        %v2498 = vunpack.c.0.s8 %v2497
        %v2499 = vlaneseq
        %v2500 = vshrl.u32 %v2499, 7
        %v2501 = vsub.s32 %v2498, %v2500
        %v2502 = vrot.slane %v2495, %v2501
        %v2503 = vcombine.high %v2502, 0.0
        %v2504 = vcombine.low %v1556, %v1668
        %v2506 = vunpack.c.l.s4 1934713408
        %v2507 = vunpack.c.0.s8 %v2506
        %v2508 = vlaneseq
        %v2509 = vshrl.u32 %v2508, 7
        %v2510 = vsub.s32 %v2507, %v2509
        %v2511 = vrot.slane %v2504, %v2510
        %v2512 = vcombine.high %v2511, 0.0
        %v2513 = vcombine.low %v1780, %v1892
        %v2515 = vunpack.c.l.s4 1934713408
        %v2516 = vunpack.c.0.s8 %v2515
        %v2517 = vlaneseq
        %v2518 = vshrl.u32 %v2517, 7
        %v2519 = vsub.s32 %v2516, %v2518
        %v2520 = vrot.slane %v2513, %v2519
        %v2521 = vcombine.high %v2520, 0.0
        %v2522 = vcombine.low %v2004, %v2116
        %v2524 = vunpack.c.l.s4 1934713408
        %v2525 = vunpack.c.0.s8 %v2524
        %v2526 = vlaneseq
        %v2527 = vshrl.u32 %v2526, 7
        %v2528 = vsub.s32 %v2525, %v2527
        %v2529 = vrot.slane %v2522, %v2528
        %v2530 = vcombine.high %v2529, 0.0
        %v2531 = vcombine.low %v1339, %v1451
        %v2533 = vunpack.c.l.s4 1934713408
        %v2534 = vunpack.c.0.s8 %v2533
        %v2535 = vlaneseq
        %v2536 = vshrl.u32 %v2535, 7
        %v2537 = vsub.s32 %v2534, %v2536
        %v2538 = vrot.slane %v2531, %v2537
        %v2539 = vcombine.high %v2538, 0.0
        %v2540 = vcombine.low %v1563, %v1675
        %v2542 = vunpack.c.l.s4 1934713408
        %v2543 = vunpack.c.0.s8 %v2542
        %v2544 = vlaneseq
        %v2545 = vshrl.u32 %v2544, 7
        %v2546 = vsub.s32 %v2543, %v2545
        %v2547 = vrot.slane %v2540, %v2546
        %v2548 = vcombine.high %v2547, 0.0
        %v2549 = vcombine.low %v1787, %v1899
        %v2551 = vunpack.c.l.s4 1934713408
        %v2552 = vunpack.c.0.s8 %v2551
        %v2553 = vlaneseq
        %v2554 = vshrl.u32 %v2553, 7
        %v2555 = vsub.s32 %v2552, %v2554
        %v2556 = vrot.slane %v2549, %v2555
        %v2557 = vcombine.high %v2556, 0.0
        %v2558 = vcombine.low %v2011, %v2123
        %v2560 = vunpack.c.l.s4 1934713408
        %v2561 = vunpack.c.0.s8 %v2560
        %v2562 = vlaneseq
        %v2563 = vshrl.u32 %v2562, 7
        %v2564 = vsub.s32 %v2561, %v2563
        %v2565 = vrot.slane %v2558, %v2564
        %v2566 = vcombine.high %v2565, 0.0
        %v2567 = vcombine.low %v1346, %v1458
        %v2569 = vunpack.c.l.s4 1934713408
        %v2570 = vunpack.c.0.s8 %v2569
        %v2571 = vlaneseq
        %v2572 = vshrl.u32 %v2571, 7
        %v2573 = vsub.s32 %v2570, %v2572
        %v2574 = vrot.slane %v2567, %v2573
        %v2575 = vcombine.high %v2574, 0.0
        %v2576 = vcombine.low %v1570, %v1682
        %v2578 = vunpack.c.l.s4 1934713408
        %v2579 = vunpack.c.0.s8 %v2578
        %v2580 = vlaneseq
        %v2581 = vshrl.u32 %v2580, 7
        %v2582 = vsub.s32 %v2579, %v2581
        %v2583 = vrot.slane %v2576, %v2582
        %v2584 = vcombine.high %v2583, 0.0
        %v2585 = vcombine.low %v1794, %v1906
        %v2587 = vunpack.c.l.s4 1934713408
        %v2588 = vunpack.c.0.s8 %v2587
        %v2589 = vlaneseq
        %v2590 = vshrl.u32 %v2589, 7
        %v2591 = vsub.s32 %v2588, %v2590
        %v2592 = vrot.slane %v2585, %v2591
        %v2593 = vcombine.high %v2592, 0.0
        %v2594 = vcombine.low %v2018, %v2130
        %v2596 = vunpack.c.l.s4 1934713408
        %v2597 = vunpack.c.0.s8 %v2596
        %v2598 = vlaneseq
        %v2599 = vshrl.u32 %v2598, 7
        %v2600 = vsub.s32 %v2597, %v2599
        %v2601 = vrot.slane %v2594, %v2600
        %v2602 = vcombine.high %v2601, 0.0
        %v2603 = vcombine.low %v1353, %v1465
        %v2605 = vunpack.c.l.s4 1934713408
        %v2606 = vunpack.c.0.s8 %v2605
        %v2607 = vlaneseq
        %v2608 = vshrl.u32 %v2607, 7
        %v2609 = vsub.s32 %v2606, %v2608
        %v2610 = vrot.slane %v2603, %v2609
        %v2611 = vcombine.high %v2610, 0.0
        %v2612 = vcombine.low %v1577, %v1689
        %v2614 = vunpack.c.l.s4 1934713408
        %v2615 = vunpack.c.0.s8 %v2614
        %v2616 = vlaneseq
        %v2617 = vshrl.u32 %v2616, 7
        %v2618 = vsub.s32 %v2615, %v2617
        %v2619 = vrot.slane %v2612, %v2618
        %v2620 = vcombine.high %v2619, 0.0
        %v2621 = vcombine.low %v1801, %v1913
        %v2623 = vunpack.c.l.s4 1934713408
        %v2624 = vunpack.c.0.s8 %v2623
        %v2625 = vlaneseq
        %v2626 = vshrl.u32 %v2625, 7
        %v2627 = vsub.s32 %v2624, %v2626
        %v2628 = vrot.slane %v2621, %v2627
        %v2629 = vcombine.high %v2628, 0.0
        %v2630 = vcombine.low %v2025, %v2137
        %v2632 = vunpack.c.l.s4 1934713408
        %v2633 = vunpack.c.0.s8 %v2632
        %v2634 = vlaneseq
        %v2635 = vshrl.u32 %v2634, 7
        %v2636 = vsub.s32 %v2633, %v2635
        %v2637 = vrot.slane %v2630, %v2636
        %v2638 = vcombine.high %v2637, 0.0
        %v2639 = vcombine.low %v1360, %v1472
        %v2641 = vunpack.c.l.s4 1934713408
        %v2642 = vunpack.c.0.s8 %v2641
        %v2643 = vlaneseq
        %v2644 = vshrl.u32 %v2643, 7
        %v2645 = vsub.s32 %v2642, %v2644
        %v2646 = vrot.slane %v2639, %v2645
        %v2647 = vcombine.high %v2646, 0.0
        %v2648 = vcombine.low %v1584, %v1696
        %v2650 = vunpack.c.l.s4 1934713408
        %v2651 = vunpack.c.0.s8 %v2650
        %v2652 = vlaneseq
        %v2653 = vshrl.u32 %v2652, 7
        %v2654 = vsub.s32 %v2651, %v2653
        %v2655 = vrot.slane %v2648, %v2654
        %v2656 = vcombine.high %v2655, 0.0
        %v2657 = vcombine.low %v1808, %v1920
        %v2659 = vunpack.c.l.s4 1934713408
        %v2660 = vunpack.c.0.s8 %v2659
        %v2661 = vlaneseq
        %v2662 = vshrl.u32 %v2661, 7
        %v2663 = vsub.s32 %v2660, %v2662
        %v2664 = vrot.slane %v2657, %v2663
        %v2665 = vcombine.high %v2664, 0.0
        %v2666 = vcombine.low %v2032, %v2144
        %v2668 = vunpack.c.l.s4 1934713408
        %v2669 = vunpack.c.0.s8 %v2668
        %v2670 = vlaneseq
        %v2671 = vshrl.u32 %v2670, 7
        %v2672 = vsub.s32 %v2669, %v2671
        %v2673 = vrot.slane %v2666, %v2672
        %v2674 = vcombine.high %v2673, 0.0
        %v2675 = vcombine.low %v1367, %v1479
        %v2677 = vunpack.c.l.s4 1934713408
        %v2678 = vunpack.c.0.s8 %v2677
        %v2679 = vlaneseq
        %v2680 = vshrl.u32 %v2679, 7
        %v2681 = vsub.s32 %v2678, %v2680
        %v2682 = vrot.slane %v2675, %v2681
        %v2683 = vcombine.high %v2682, 0.0
        %v2684 = vcombine.low %v1591, %v1703
        %v2686 = vunpack.c.l.s4 1934713408
        %v2687 = vunpack.c.0.s8 %v2686
        %v2688 = vlaneseq
        %v2689 = vshrl.u32 %v2688, 7
        %v2690 = vsub.s32 %v2687, %v2689
        %v2691 = vrot.slane %v2684, %v2690
        %v2692 = vcombine.high %v2691, 0.0
        %v2693 = vcombine.low %v1815, %v1927
        %v2695 = vunpack.c.l.s4 1934713408
        %v2696 = vunpack.c.0.s8 %v2695
        %v2697 = vlaneseq
        %v2698 = vshrl.u32 %v2697, 7
        %v2699 = vsub.s32 %v2696, %v2698
        %v2700 = vrot.slane %v2693, %v2699
        %v2701 = vcombine.high %v2700, 0.0
        %v2702 = vcombine.low %v2039, %v2151
        %v2704 = vunpack.c.l.s4 1934713408
        %v2705 = vunpack.c.0.s8 %v2704
        %v2706 = vlaneseq
        %v2707 = vshrl.u32 %v2706, 7
        %v2708 = vsub.s32 %v2705, %v2707
        %v2709 = vrot.slane %v2702, %v2708
        %v2710 = vcombine.high %v2709, 0.0
        %v2711 = vcombine.low %v1374, %v1486
        %v2713 = vunpack.c.l.s4 1934713408
        %v2714 = vunpack.c.0.s8 %v2713
        %v2715 = vlaneseq
        %v2716 = vshrl.u32 %v2715, 7
        %v2717 = vsub.s32 %v2714, %v2716
        %v2718 = vrot.slane %v2711, %v2717
        %v2719 = vcombine.high %v2718, 0.0
        %v2720 = vcombine.low %v1598, %v1710
        %v2722 = vunpack.c.l.s4 1934713408
        %v2723 = vunpack.c.0.s8 %v2722
        %v2724 = vlaneseq
        %v2725 = vshrl.u32 %v2724, 7
        %v2726 = vsub.s32 %v2723, %v2725
        %v2727 = vrot.slane %v2720, %v2726
        %v2728 = vcombine.high %v2727, 0.0
        %v2729 = vcombine.low %v1822, %v1934
        %v2731 = vunpack.c.l.s4 1934713408
        %v2732 = vunpack.c.0.s8 %v2731
        %v2733 = vlaneseq
        %v2734 = vshrl.u32 %v2733, 7
        %v2735 = vsub.s32 %v2732, %v2734
        %v2736 = vrot.slane %v2729, %v2735
        %v2737 = vcombine.high %v2736, 0.0
        %v2738 = vcombine.low %v2046, %v2158
        %v2740 = vunpack.c.l.s4 1934713408
        %v2741 = vunpack.c.0.s8 %v2740
        %v2742 = vlaneseq
        %v2743 = vshrl.u32 %v2742, 7
        %v2744 = vsub.s32 %v2741, %v2743
        %v2745 = vrot.slane %v2738, %v2744
        %v2746 = vcombine.high %v2745, 0.0
        %v2747 = vcombine.low %v1381, %v1493
        %v2749 = vunpack.c.l.s4 1934713408
        %v2750 = vunpack.c.0.s8 %v2749
        %v2751 = vlaneseq
        %v2752 = vshrl.u32 %v2751, 7
        %v2753 = vsub.s32 %v2750, %v2752
        %v2754 = vrot.slane %v2747, %v2753
        %v2755 = vcombine.high %v2754, 0.0
        %v2756 = vcombine.low %v1605, %v1717
        %v2758 = vunpack.c.l.s4 1934713408
        %v2759 = vunpack.c.0.s8 %v2758
        %v2760 = vlaneseq
        %v2761 = vshrl.u32 %v2760, 7
        %v2762 = vsub.s32 %v2759, %v2761
        %v2763 = vrot.slane %v2756, %v2762
        %v2764 = vcombine.high %v2763, 0.0
        %v2765 = vcombine.low %v1829, %v1941
        %v2767 = vunpack.c.l.s4 1934713408
        %v2768 = vunpack.c.0.s8 %v2767
        %v2769 = vlaneseq
        %v2770 = vshrl.u32 %v2769, 7
        %v2771 = vsub.s32 %v2768, %v2770
        %v2772 = vrot.slane %v2765, %v2771
        %v2773 = vcombine.high %v2772, 0.0
        %v2774 = vcombine.low %v2053, %v2165
        %v2776 = vunpack.c.l.s4 1934713408
        %v2777 = vunpack.c.0.s8 %v2776
        %v2778 = vlaneseq
        %v2779 = vshrl.u32 %v2778, 7
        %v2780 = vsub.s32 %v2777, %v2779
        %v2781 = vrot.slane %v2774, %v2780
        %v2782 = vcombine.high %v2781, 0.0
        %v2783 = vcombine.low %v1388, %v1500
        %v2785 = vunpack.c.l.s4 1934713408
        %v2786 = vunpack.c.0.s8 %v2785
        %v2787 = vlaneseq
        %v2788 = vshrl.u32 %v2787, 7
        %v2789 = vsub.s32 %v2786, %v2788
        %v2790 = vrot.slane %v2783, %v2789
        %v2791 = vcombine.high %v2790, 0.0
        %v2792 = vcombine.low %v1612, %v1724
        %v2794 = vunpack.c.l.s4 1934713408
        %v2795 = vunpack.c.0.s8 %v2794
        %v2796 = vlaneseq
        %v2797 = vshrl.u32 %v2796, 7
        %v2798 = vsub.s32 %v2795, %v2797
        %v2799 = vrot.slane %v2792, %v2798
        %v2800 = vcombine.high %v2799, 0.0
        %v2801 = vcombine.low %v1836, %v1948
        %v2803 = vunpack.c.l.s4 1934713408
        %v2804 = vunpack.c.0.s8 %v2803
        %v2805 = vlaneseq
        %v2806 = vshrl.u32 %v2805, 7
        %v2807 = vsub.s32 %v2804, %v2806
        %v2808 = vrot.slane %v2801, %v2807
        %v2809 = vcombine.high %v2808, 0.0
        %v2810 = vcombine.low %v2060, %v2172
        %v2812 = vunpack.c.l.s4 1934713408
        %v2813 = vunpack.c.0.s8 %v2812
        %v2814 = vlaneseq
        %v2815 = vshrl.u32 %v2814, 7
        %v2816 = vsub.s32 %v2813, %v2815
        %v2817 = vrot.slane %v2810, %v2816
        %v2818 = vcombine.high %v2817, 0.0
        %v2819 = vcombine.low %v1395, %v1507
        %v2821 = vunpack.c.l.s4 1934713408
        %v2822 = vunpack.c.0.s8 %v2821
        %v2823 = vlaneseq
        %v2824 = vshrl.u32 %v2823, 7
        %v2825 = vsub.s32 %v2822, %v2824
        %v2826 = vrot.slane %v2819, %v2825
        %v2827 = vcombine.high %v2826, 0.0
        %v2828 = vcombine.low %v1619, %v1731
        %v2830 = vunpack.c.l.s4 1934713408
        %v2831 = vunpack.c.0.s8 %v2830
        %v2832 = vlaneseq
        %v2833 = vshrl.u32 %v2832, 7
        %v2834 = vsub.s32 %v2831, %v2833
        %v2835 = vrot.slane %v2828, %v2834
        %v2836 = vcombine.high %v2835, 0.0
        %v2837 = vcombine.low %v1843, %v1955
        %v2839 = vunpack.c.l.s4 1934713408
        %v2840 = vunpack.c.0.s8 %v2839
        %v2841 = vlaneseq
        %v2842 = vshrl.u32 %v2841, 7
        %v2843 = vsub.s32 %v2840, %v2842
        %v2844 = vrot.slane %v2837, %v2843
        %v2845 = vcombine.high %v2844, 0.0
        %v2846 = vcombine.low %v2067, %v2179
        %v2848 = vunpack.c.l.s4 1934713408
        %v2849 = vunpack.c.0.s8 %v2848
        %v2850 = vlaneseq
        %v2851 = vshrl.u32 %v2850, 7
        %v2852 = vsub.s32 %v2849, %v2851
        %v2853 = vrot.slane %v2846, %v2852
        %v2854 = vcombine.high %v2853, 0.0
        %v2855 = vcombine.low %v1402, %v1514
        %v2857 = vunpack.c.l.s4 1934713408
        %v2858 = vunpack.c.0.s8 %v2857
        %v2859 = vlaneseq
        %v2860 = vshrl.u32 %v2859, 7
        %v2861 = vsub.s32 %v2858, %v2860
        %v2862 = vrot.slane %v2855, %v2861
        %v2863 = vcombine.high %v2862, 0.0
        %v2864 = vcombine.low %v1626, %v1738
        %v2866 = vunpack.c.l.s4 1934713408
        %v2867 = vunpack.c.0.s8 %v2866
        %v2868 = vlaneseq
        %v2869 = vshrl.u32 %v2868, 7
        %v2870 = vsub.s32 %v2867, %v2869
        %v2871 = vrot.slane %v2864, %v2870
        %v2872 = vcombine.high %v2871, 0.0
        %v2873 = vcombine.low %v1850, %v1962
        %v2875 = vunpack.c.l.s4 1934713408
        %v2876 = vunpack.c.0.s8 %v2875
        %v2877 = vlaneseq
        %v2878 = vshrl.u32 %v2877, 7
        %v2879 = vsub.s32 %v2876, %v2878
        %v2880 = vrot.slane %v2873, %v2879
        %v2881 = vcombine.high %v2880, 0.0
        %v2882 = vcombine.low %v2074, %v2186
        %v2884 = vunpack.c.l.s4 1934713408
        %v2885 = vunpack.c.0.s8 %v2884
        %v2886 = vlaneseq
        %v2887 = vshrl.u32 %v2886, 7
        %v2888 = vsub.s32 %v2885, %v2887
        %v2889 = vrot.slane %v2882, %v2888
        %v2890 = vcombine.high %v2889, 0.0
        %3019 = vrot.lane.b32.xlu0 %v2322, 127
        %v3020 = vpop.permute.xlu0 %3019
        %3021 = vrot.lane.b32.xlu0 %v2331, 127
        %v3022 = vpop.permute.xlu0 %3021
        %3023 = vrot.lane.b32.xlu0 %v2340, 127
        %v3024 = vpop.permute.xlu0 %3023
        %3025 = vrot.lane.b32.xlu0 %v2349, 127
        %v3026 = vpop.permute.xlu0 %3025
        %3027 = vrot.lane.b32.xlu0 %v2323, 127
        %v3028 = vpop.permute.xlu0 %3027
        %3029 = vrot.lane.b32.xlu0 %v2332, 127
        %v3030 = vpop.permute.xlu0 %3029
        %3031 = vrot.lane.b32.xlu0 %v2341, 127
        %v3032 = vpop.permute.xlu0 %3031
        %3033 = vrot.lane.b32.xlu0 %v2350, 127
        %v3034 = vpop.permute.xlu0 %3033
        %3035 = vrot.lane.b32.xlu0 %v2358, 127
        %v3036 = vpop.permute.xlu0 %3035
        %3037 = vrot.lane.b32.xlu0 %v2367, 127
        %v3038 = vpop.permute.xlu0 %3037
        %3039 = vrot.lane.b32.xlu0 %v2376, 127
        %v3040 = vpop.permute.xlu0 %3039
        %3041 = vrot.lane.b32.xlu0 %v2385, 127
        %v3042 = vpop.permute.xlu0 %3041
        %3043 = vrot.lane.b32.xlu0 %v2359, 127
        %v3044 = vpop.permute.xlu0 %3043
        %3045 = vrot.lane.b32.xlu0 %v2368, 127
        %v3046 = vpop.permute.xlu0 %3045
        %3047 = vrot.lane.b32.xlu0 %v2377, 127
        %v3048 = vpop.permute.xlu0 %3047
        %3049 = vrot.lane.b32.xlu0 %v2386, 127
        %v3050 = vpop.permute.xlu0 %3049
        %3051 = vrot.lane.b32.xlu0 %v2394, 127
        %v3052 = vpop.permute.xlu0 %3051
        %3053 = vrot.lane.b32.xlu0 %v2403, 127
        %v3054 = vpop.permute.xlu0 %3053
        %3055 = vrot.lane.b32.xlu0 %v2412, 127
        %v3056 = vpop.permute.xlu0 %3055
        %3057 = vrot.lane.b32.xlu0 %v2421, 127
        %v3058 = vpop.permute.xlu0 %3057
        %3059 = vrot.lane.b32.xlu0 %v2395, 127
        %v3060 = vpop.permute.xlu0 %3059
        %3061 = vrot.lane.b32.xlu0 %v2404, 127
        %v3062 = vpop.permute.xlu0 %3061
        %3063 = vrot.lane.b32.xlu0 %v2413, 127
        %v3064 = vpop.permute.xlu0 %3063
        %3065 = vrot.lane.b32.xlu0 %v2422, 127
        %v3066 = vpop.permute.xlu0 %3065
        %3067 = vrot.lane.b32.xlu0 %v2430, 127
        %v3068 = vpop.permute.xlu0 %3067
        %3069 = vrot.lane.b32.xlu0 %v2439, 127
        %v3070 = vpop.permute.xlu0 %3069
        %3071 = vrot.lane.b32.xlu0 %v2448, 127
        %v3072 = vpop.permute.xlu0 %3071
        %3073 = vrot.lane.b32.xlu0 %v2457, 127
        %v3074 = vpop.permute.xlu0 %3073
        %3075 = vrot.lane.b32.xlu0 %v2431, 127
        %v3076 = vpop.permute.xlu0 %3075
        %3077 = vrot.lane.b32.xlu0 %v2440, 127
        %v3078 = vpop.permute.xlu0 %3077
        %3079 = vrot.lane.b32.xlu0 %v2449, 127
        %v3080 = vpop.permute.xlu0 %3079
        %3081 = vrot.lane.b32.xlu0 %v2458, 127
        %v3082 = vpop.permute.xlu0 %3081
        %3083 = vrot.lane.b32.xlu0 %v2466, 127
        %v3084 = vpop.permute.xlu0 %3083
        %3085 = vrot.lane.b32.xlu0 %v2475, 127
        %v3086 = vpop.permute.xlu0 %3085
        %3087 = vrot.lane.b32.xlu0 %v2484, 127
        %v3088 = vpop.permute.xlu0 %3087
        %3089 = vrot.lane.b32.xlu0 %v2493, 127
        %v3090 = vpop.permute.xlu0 %3089
        %3091 = vrot.lane.b32.xlu0 %v2467, 127
        %v3092 = vpop.permute.xlu0 %3091
        %3093 = vrot.lane.b32.xlu0 %v2476, 127
        %v3094 = vpop.permute.xlu0 %3093
        %3095 = vrot.lane.b32.xlu0 %v2485, 127
        %v3096 = vpop.permute.xlu0 %3095
        %3097 = vrot.lane.b32.xlu0 %v2494, 127
        %v3098 = vpop.permute.xlu0 %3097
        %3099 = vrot.lane.b32.xlu0 %v2502, 127
        %v3100 = vpop.permute.xlu0 %3099
        %3101 = vrot.lane.b32.xlu0 %v2511, 127
        %v3102 = vpop.permute.xlu0 %3101
        %3103 = vrot.lane.b32.xlu0 %v2520, 127
        %v3104 = vpop.permute.xlu0 %3103
        %3105 = vrot.lane.b32.xlu0 %v2529, 127
        %v3106 = vpop.permute.xlu0 %3105
        %3107 = vrot.lane.b32.xlu0 %v2503, 127
        %v3108 = vpop.permute.xlu0 %3107
        %3109 = vrot.lane.b32.xlu0 %v2512, 127
        %v3110 = vpop.permute.xlu0 %3109
        %3111 = vrot.lane.b32.xlu0 %v2521, 127
        %v3112 = vpop.permute.xlu0 %3111
        %3113 = vrot.lane.b32.xlu0 %v2530, 127
        %v3114 = vpop.permute.xlu0 %3113
        %3115 = vrot.lane.b32.xlu0 %v2538, 127
        %v3116 = vpop.permute.xlu0 %3115
        %3117 = vrot.lane.b32.xlu0 %v2547, 127
        %v3118 = vpop.permute.xlu0 %3117
        %3119 = vrot.lane.b32.xlu0 %v2556, 127
        %v3120 = vpop.permute.xlu0 %3119
        %3121 = vrot.lane.b32.xlu0 %v2565, 127
        %v3122 = vpop.permute.xlu0 %3121
        %3123 = vrot.lane.b32.xlu0 %v2539, 127
        %v3124 = vpop.permute.xlu0 %3123
        %3125 = vrot.lane.b32.xlu0 %v2548, 127
        %v3126 = vpop.permute.xlu0 %3125
        %3127 = vrot.lane.b32.xlu0 %v2557, 127
        %v3128 = vpop.permute.xlu0 %3127
        %3129 = vrot.lane.b32.xlu0 %v2566, 127
        %v3130 = vpop.permute.xlu0 %3129
        %3131 = vrot.lane.b32.xlu0 %v2574, 127
        %v3132 = vpop.permute.xlu0 %3131
        %3133 = vrot.lane.b32.xlu0 %v2583, 127
        %v3134 = vpop.permute.xlu0 %3133
        %3135 = vrot.lane.b32.xlu0 %v2592, 127
        %v3136 = vpop.permute.xlu0 %3135
        %3137 = vrot.lane.b32.xlu0 %v2601, 127
        %v3138 = vpop.permute.xlu0 %3137
        %3139 = vrot.lane.b32.xlu0 %v2575, 127
        %v3140 = vpop.permute.xlu0 %3139
        %3141 = vrot.lane.b32.xlu0 %v2584, 127
        %v3142 = vpop.permute.xlu0 %3141
        %3143 = vrot.lane.b32.xlu0 %v2593, 127
        %v3144 = vpop.permute.xlu0 %3143
        %3145 = vrot.lane.b32.xlu0 %v2602, 127
        %v3146 = vpop.permute.xlu0 %3145
        %3147 = vrot.lane.b32.xlu0 %v2610, 127
        %v3148 = vpop.permute.xlu0 %3147
        %3149 = vrot.lane.b32.xlu0 %v2619, 127
        %v3150 = vpop.permute.xlu0 %3149
        %3151 = vrot.lane.b32.xlu0 %v2628, 127
        %v3152 = vpop.permute.xlu0 %3151
        %3153 = vrot.lane.b32.xlu0 %v2637, 127
        %v3154 = vpop.permute.xlu0 %3153
        %3155 = vrot.lane.b32.xlu0 %v2611, 127
        %v3156 = vpop.permute.xlu0 %3155
        %3157 = vrot.lane.b32.xlu0 %v2620, 127
        %v3158 = vpop.permute.xlu0 %3157
        %3159 = vrot.lane.b32.xlu0 %v2629, 127
        %v3160 = vpop.permute.xlu0 %3159
        %3161 = vrot.lane.b32.xlu0 %v2638, 127
        %v3162 = vpop.permute.xlu0 %3161
        %3163 = vrot.lane.b32.xlu0 %v2646, 127
        %v3164 = vpop.permute.xlu0 %3163
        %3165 = vrot.lane.b32.xlu0 %v2655, 127
        %v3166 = vpop.permute.xlu0 %3165
        %3167 = vrot.lane.b32.xlu0 %v2664, 127
        %v3168 = vpop.permute.xlu0 %3167
        %3169 = vrot.lane.b32.xlu0 %v2673, 127
        %v3170 = vpop.permute.xlu0 %3169
        %3171 = vrot.lane.b32.xlu0 %v2647, 127
        %v3172 = vpop.permute.xlu0 %3171
        %3173 = vrot.lane.b32.xlu0 %v2656, 127
        %v3174 = vpop.permute.xlu0 %3173
        %3175 = vrot.lane.b32.xlu0 %v2665, 127
        %v3176 = vpop.permute.xlu0 %3175
        %3177 = vrot.lane.b32.xlu0 %v2674, 127
        %v3178 = vpop.permute.xlu0 %3177
        %3179 = vrot.lane.b32.xlu0 %v2682, 127
        %v3180 = vpop.permute.xlu0 %3179
        %3181 = vrot.lane.b32.xlu0 %v2691, 127
        %v3182 = vpop.permute.xlu0 %3181
        %3183 = vrot.lane.b32.xlu0 %v2700, 127
        %v3184 = vpop.permute.xlu0 %3183
        %3185 = vrot.lane.b32.xlu0 %v2709, 127
        %v3186 = vpop.permute.xlu0 %3185
        %3187 = vrot.lane.b32.xlu0 %v2683, 127
        %v3188 = vpop.permute.xlu0 %3187
        %3189 = vrot.lane.b32.xlu0 %v2692, 127
        %v3190 = vpop.permute.xlu0 %3189
        %3191 = vrot.lane.b32.xlu0 %v2701, 127
        %v3192 = vpop.permute.xlu0 %3191
        %3193 = vrot.lane.b32.xlu0 %v2710, 127
        %v3194 = vpop.permute.xlu0 %3193
        %3195 = vrot.lane.b32.xlu0 %v2718, 127
        %v3196 = vpop.permute.xlu0 %3195
        %3197 = vrot.lane.b32.xlu0 %v2727, 127
        %v3198 = vpop.permute.xlu0 %3197
        %3199 = vrot.lane.b32.xlu0 %v2736, 127
        %v3200 = vpop.permute.xlu0 %3199
        %3201 = vrot.lane.b32.xlu0 %v2745, 127
        %v3202 = vpop.permute.xlu0 %3201
        %3203 = vrot.lane.b32.xlu0 %v2719, 127
        %v3204 = vpop.permute.xlu0 %3203
        %3205 = vrot.lane.b32.xlu0 %v2728, 127
        %v3206 = vpop.permute.xlu0 %3205
        %3207 = vrot.lane.b32.xlu0 %v2737, 127
        %v3208 = vpop.permute.xlu0 %3207
        %3209 = vrot.lane.b32.xlu0 %v2746, 127
        %v3210 = vpop.permute.xlu0 %3209
        %3211 = vrot.lane.b32.xlu0 %v2754, 127
        %v3212 = vpop.permute.xlu0 %3211
        %3213 = vrot.lane.b32.xlu0 %v2763, 127
        %v3214 = vpop.permute.xlu0 %3213
        %3215 = vrot.lane.b32.xlu0 %v2772, 127
        %v3216 = vpop.permute.xlu0 %3215
        %3217 = vrot.lane.b32.xlu0 %v2781, 127
        %v3218 = vpop.permute.xlu0 %3217
        %3219 = vrot.lane.b32.xlu0 %v2755, 127
        %v3220 = vpop.permute.xlu0 %3219
        %3221 = vrot.lane.b32.xlu0 %v2764, 127
        %v3222 = vpop.permute.xlu0 %3221
        %3223 = vrot.lane.b32.xlu0 %v2773, 127
        %v3224 = vpop.permute.xlu0 %3223
        %3225 = vrot.lane.b32.xlu0 %v2782, 127
        %v3226 = vpop.permute.xlu0 %3225
        %3227 = vrot.lane.b32.xlu0 %v2790, 127
        %v3228 = vpop.permute.xlu0 %3227
        %3229 = vrot.lane.b32.xlu0 %v2799, 127
        %v3230 = vpop.permute.xlu0 %3229
        %3231 = vrot.lane.b32.xlu0 %v2808, 127
        %v3232 = vpop.permute.xlu0 %3231
        %3233 = vrot.lane.b32.xlu0 %v2817, 127
        %v3234 = vpop.permute.xlu0 %3233
        %3235 = vrot.lane.b32.xlu0 %v2791, 127
        %v3236 = vpop.permute.xlu0 %3235
        %3237 = vrot.lane.b32.xlu0 %v2800, 127
        %v3238 = vpop.permute.xlu0 %3237
        %3239 = vrot.lane.b32.xlu0 %v2809, 127
        %v3240 = vpop.permute.xlu0 %3239
        %3241 = vrot.lane.b32.xlu0 %v2818, 127
        %v3242 = vpop.permute.xlu0 %3241
        %3243 = vrot.lane.b32.xlu0 %v2826, 127
        %v3244 = vpop.permute.xlu0 %3243
        %3245 = vrot.lane.b32.xlu0 %v2835, 127
        %v3246 = vpop.permute.xlu0 %3245
        %3247 = vrot.lane.b32.xlu0 %v2844, 127
        %v3248 = vpop.permute.xlu0 %3247
        %3249 = vrot.lane.b32.xlu0 %v2853, 127
        %v3250 = vpop.permute.xlu0 %3249
        %3251 = vrot.lane.b32.xlu0 %v2827, 127
        %v3252 = vpop.permute.xlu0 %3251
        %3253 = vrot.lane.b32.xlu0 %v2836, 127
        %v3254 = vpop.permute.xlu0 %3253
        %3255 = vrot.lane.b32.xlu0 %v2845, 127
        %v3256 = vpop.permute.xlu0 %3255
        %3257 = vrot.lane.b32.xlu0 %v2854, 127
        %v3258 = vpop.permute.xlu0 %3257
        %3259 = vrot.lane.b32.xlu0 %v2862, 127
        %v3260 = vpop.permute.xlu0 %3259
        %3261 = vrot.lane.b32.xlu0 %v2871, 127
        %v3262 = vpop.permute.xlu0 %3261
        %3263 = vrot.lane.b32.xlu0 %v2880, 127
        %v3264 = vpop.permute.xlu0 %3263
        %3265 = vrot.lane.b32.xlu0 %v2889, 127
        %v3266 = vpop.permute.xlu0 %3265
        %3267 = vrot.lane.b32.xlu0 %v2863, 127
        %v3268 = vpop.permute.xlu0 %3267
        %3269 = vrot.lane.b32.xlu0 %v2872, 127
        %v3270 = vpop.permute.xlu0 %3269
        %3271 = vrot.lane.b32.xlu0 %v2881, 127
        %v3272 = vpop.permute.xlu0 %3271
        %3273 = vrot.lane.b32.xlu0 %v2890, 127
        %v3274 = vpop.permute.xlu0 %3273
        %v3403 = vmax.f32 %v2322, %v3020
        %v3404 = vmax.f32 %v2331, %v3022
        %v3405 = vmax.f32 %v2340, %v3024
        %v3406 = vmax.f32 %v2349, %v3026
        %v3407 = vmax.f32 %v2323, %v3028
        %v3408 = vmax.f32 %v2332, %v3030
        %v3409 = vmax.f32 %v2341, %v3032
        %v3410 = vmax.f32 %v2350, %v3034
        %v3411 = vmax.f32 %v2358, %v3036
        %v3412 = vmax.f32 %v2367, %v3038
        %v3413 = vmax.f32 %v2376, %v3040
        %v3414 = vmax.f32 %v2385, %v3042
        %v3415 = vmax.f32 %v2359, %v3044
        %v3416 = vmax.f32 %v2368, %v3046
        %v3417 = vmax.f32 %v2377, %v3048
        %v3418 = vmax.f32 %v2386, %v3050
        %v3419 = vmax.f32 %v2394, %v3052
        %v3420 = vmax.f32 %v2403, %v3054
        %v3421 = vmax.f32 %v2412, %v3056
        %v3422 = vmax.f32 %v2421, %v3058
        %v3423 = vmax.f32 %v2395, %v3060
        %v3424 = vmax.f32 %v2404, %v3062
        %v3425 = vmax.f32 %v2413, %v3064
        %v3426 = vmax.f32 %v2422, %v3066
        %v3427 = vmax.f32 %v2430, %v3068
        %v3428 = vmax.f32 %v2439, %v3070
        %v3429 = vmax.f32 %v2448, %v3072
        %v3430 = vmax.f32 %v2457, %v3074
        %v3431 = vmax.f32 %v2431, %v3076
        %v3432 = vmax.f32 %v2440, %v3078
        %v3433 = vmax.f32 %v2449, %v3080
        %v3434 = vmax.f32 %v2458, %v3082
        %v3435 = vmax.f32 %v2466, %v3084
        %v3436 = vmax.f32 %v2475, %v3086
        %v3437 = vmax.f32 %v2484, %v3088
        %v3438 = vmax.f32 %v2493, %v3090
        %v3439 = vmax.f32 %v2467, %v3092
        %v3440 = vmax.f32 %v2476, %v3094
        %v3441 = vmax.f32 %v2485, %v3096
        %v3442 = vmax.f32 %v2494, %v3098
        %v3443 = vmax.f32 %v2502, %v3100
        %v3444 = vmax.f32 %v2511, %v3102
        %v3445 = vmax.f32 %v2520, %v3104
        %v3446 = vmax.f32 %v2529, %v3106
        %v3447 = vmax.f32 %v2503, %v3108
        %v3448 = vmax.f32 %v2512, %v3110
        %v3449 = vmax.f32 %v2521, %v3112
        %v3450 = vmax.f32 %v2530, %v3114
        %v3451 = vmax.f32 %v2538, %v3116
        %v3452 = vmax.f32 %v2547, %v3118
        %v3453 = vmax.f32 %v2556, %v3120
        %v3454 = vmax.f32 %v2565, %v3122
        %v3455 = vmax.f32 %v2539, %v3124
        %v3456 = vmax.f32 %v2548, %v3126
        %v3457 = vmax.f32 %v2557, %v3128
        %v3458 = vmax.f32 %v2566, %v3130
        %v3459 = vmax.f32 %v2574, %v3132
        %v3460 = vmax.f32 %v2583, %v3134
        %v3461 = vmax.f32 %v2592, %v3136
        %v3462 = vmax.f32 %v2601, %v3138
        %v3463 = vmax.f32 %v2575, %v3140
        %v3464 = vmax.f32 %v2584, %v3142
        %v3465 = vmax.f32 %v2593, %v3144
        %v3466 = vmax.f32 %v2602, %v3146
        %v3467 = vmax.f32 %v2610, %v3148
        %v3468 = vmax.f32 %v2619, %v3150
        %v3469 = vmax.f32 %v2628, %v3152
        %v3470 = vmax.f32 %v2637, %v3154
        %v3471 = vmax.f32 %v2611, %v3156
        %v3472 = vmax.f32 %v2620, %v3158
        %v3473 = vmax.f32 %v2629, %v3160
        %v3474 = vmax.f32 %v2638, %v3162
        %v3475 = vmax.f32 %v2646, %v3164
        %v3476 = vmax.f32 %v2655, %v3166
        %v3477 = vmax.f32 %v2664, %v3168
        %v3478 = vmax.f32 %v2673, %v3170
        %v3479 = vmax.f32 %v2647, %v3172
        %v3480 = vmax.f32 %v2656, %v3174
        %v3481 = vmax.f32 %v2665, %v3176
        %v3482 = vmax.f32 %v2674, %v3178
        %v3483 = vmax.f32 %v2682, %v3180
        %v3484 = vmax.f32 %v2691, %v3182
        %v3485 = vmax.f32 %v2700, %v3184
        %v3486 = vmax.f32 %v2709, %v3186
        %v3487 = vmax.f32 %v2683, %v3188
        %v3488 = vmax.f32 %v2692, %v3190
        %v3489 = vmax.f32 %v2701, %v3192
        %v3490 = vmax.f32 %v2710, %v3194
        %v3491 = vmax.f32 %v2718, %v3196
        %v3492 = vmax.f32 %v2727, %v3198
        %v3493 = vmax.f32 %v2736, %v3200
        %v3494 = vmax.f32 %v2745, %v3202
        %v3495 = vmax.f32 %v2719, %v3204
        %v3496 = vmax.f32 %v2728, %v3206
        %v3497 = vmax.f32 %v2737, %v3208
        %v3498 = vmax.f32 %v2746, %v3210
        %v3499 = vmax.f32 %v2754, %v3212
        %v3500 = vmax.f32 %v2763, %v3214
        %v3501 = vmax.f32 %v2772, %v3216
        %v3502 = vmax.f32 %v2781, %v3218
        %v3503 = vmax.f32 %v2755, %v3220
        %v3504 = vmax.f32 %v2764, %v3222
        %v3505 = vmax.f32 %v2773, %v3224
        %v3506 = vmax.f32 %v2782, %v3226
        %v3507 = vmax.f32 %v2790, %v3228
        %v3508 = vmax.f32 %v2799, %v3230
        %v3509 = vmax.f32 %v2808, %v3232
        %v3510 = vmax.f32 %v2817, %v3234
        %v3511 = vmax.f32 %v2791, %v3236
        %v3512 = vmax.f32 %v2800, %v3238
        %v3513 = vmax.f32 %v2809, %v3240
        %v3514 = vmax.f32 %v2818, %v3242
        %v3515 = vmax.f32 %v2826, %v3244
        %v3516 = vmax.f32 %v2835, %v3246
        %v3517 = vmax.f32 %v2844, %v3248
        %v3518 = vmax.f32 %v2853, %v3250
        %v3519 = vmax.f32 %v2827, %v3252
        %v3520 = vmax.f32 %v2836, %v3254
        %v3521 = vmax.f32 %v2845, %v3256
        %v3522 = vmax.f32 %v2854, %v3258
        %v3523 = vmax.f32 %v2862, %v3260
        %v3524 = vmax.f32 %v2871, %v3262
        %v3525 = vmax.f32 %v2880, %v3264
        %v3526 = vmax.f32 %v2889, %v3266
        %v3527 = vmax.f32 %v2863, %v3268
        %v3528 = vmax.f32 %v2872, %v3270
        %v3529 = vmax.f32 %v2881, %v3272
        %v3530 = vmax.f32 %v2890, %v3274
        %v3659 = vcombine.low %v3403, %v3404
        %v3660 = vcombine.low %v3405, %v3406
        %v3662 = vunpack.c.l.s4 1983009808
        %v3663 = vunpack.c.0.s8 %v3662
        %v3664 = vlaneseq
        %v3665 = vshrl.u32 %v3664, 7
        %v3666 = vsub.s32 %v3663, %v3665
        %v3667 = vrot.slane %v3659, %v3666
        %v3669 = vunpack.c.l.s4 1983009808
        %v3670 = vunpack.c.0.s8 %v3669
        %v3671 = vlaneseq
        %v3672 = vshrl.u32 %v3671, 7
        %v3673 = vsub.s32 %v3670, %v3672
        %v3674 = vrot.slane %v3660, %v3673
        %v3675 = vcombine.low %v3667, %v3674
        %v3676 = vcombine.low %v3407, %v3408
        %v3677 = vcombine.low %v3409, %v3410
        %v3679 = vunpack.c.l.s4 1983009808
        %v3680 = vunpack.c.0.s8 %v3679
        %v3681 = vlaneseq
        %v3682 = vshrl.u32 %v3681, 7
        %v3683 = vsub.s32 %v3680, %v3682
        %v3684 = vrot.slane %v3676, %v3683
        %v3686 = vunpack.c.l.s4 1983009808
        %v3687 = vunpack.c.0.s8 %v3686
        %v3688 = vlaneseq
        %v3689 = vshrl.u32 %v3688, 7
        %v3690 = vsub.s32 %v3687, %v3689
        %v3691 = vrot.slane %v3677, %v3690
        %v3692 = vcombine.low %v3684, %v3691
        %v3693 = vcombine.low %v3411, %v3412
        %v3694 = vcombine.low %v3413, %v3414
        %v3696 = vunpack.c.l.s4 1983009808
        %v3697 = vunpack.c.0.s8 %v3696
        %v3698 = vlaneseq
        %v3699 = vshrl.u32 %v3698, 7
        %v3700 = vsub.s32 %v3697, %v3699
        %v3701 = vrot.slane %v3693, %v3700
        %v3703 = vunpack.c.l.s4 1983009808
        %v3704 = vunpack.c.0.s8 %v3703
        %v3705 = vlaneseq
        %v3706 = vshrl.u32 %v3705, 7
        %v3707 = vsub.s32 %v3704, %v3706
        %v3708 = vrot.slane %v3694, %v3707
        %v3709 = vcombine.low %v3701, %v3708
        %v3710 = vcombine.low %v3415, %v3416
        %v3711 = vcombine.low %v3417, %v3418
        %v3713 = vunpack.c.l.s4 1983009808
        %v3714 = vunpack.c.0.s8 %v3713
        %v3715 = vlaneseq
        %v3716 = vshrl.u32 %v3715, 7
        %v3717 = vsub.s32 %v3714, %v3716
        %v3718 = vrot.slane %v3710, %v3717
        %v3720 = vunpack.c.l.s4 1983009808
        %v3721 = vunpack.c.0.s8 %v3720
        %v3722 = vlaneseq
        %v3723 = vshrl.u32 %v3722, 7
        %v3724 = vsub.s32 %v3721, %v3723
        %v3725 = vrot.slane %v3711, %v3724
        %v3726 = vcombine.low %v3718, %v3725
        %v3727 = vcombine.low %v3419, %v3420
        %v3728 = vcombine.low %v3421, %v3422
        %v3730 = vunpack.c.l.s4 1983009808
        %v3731 = vunpack.c.0.s8 %v3730
        %v3732 = vlaneseq
        %v3733 = vshrl.u32 %v3732, 7
        %v3734 = vsub.s32 %v3731, %v3733
        %v3735 = vrot.slane %v3727, %v3734
        %v3737 = vunpack.c.l.s4 1983009808
        %v3738 = vunpack.c.0.s8 %v3737
        %v3739 = vlaneseq
        %v3740 = vshrl.u32 %v3739, 7
        %v3741 = vsub.s32 %v3738, %v3740
        %v3742 = vrot.slane %v3728, %v3741
        %v3743 = vcombine.low %v3735, %v3742
        %v3744 = vcombine.low %v3423, %v3424
        %v3745 = vcombine.low %v3425, %v3426
        %v3747 = vunpack.c.l.s4 1983009808
        %v3748 = vunpack.c.0.s8 %v3747
        %v3749 = vlaneseq
        %v3750 = vshrl.u32 %v3749, 7
        %v3751 = vsub.s32 %v3748, %v3750
        %v3752 = vrot.slane %v3744, %v3751
        %v3754 = vunpack.c.l.s4 1983009808
        %v3755 = vunpack.c.0.s8 %v3754
        %v3756 = vlaneseq
        %v3757 = vshrl.u32 %v3756, 7
        %v3758 = vsub.s32 %v3755, %v3757
        %v3759 = vrot.slane %v3745, %v3758
        %v3760 = vcombine.low %v3752, %v3759
        %v3761 = vcombine.low %v3427, %v3428
        %v3762 = vcombine.low %v3429, %v3430
        %v3764 = vunpack.c.l.s4 1983009808
        %v3765 = vunpack.c.0.s8 %v3764
        %v3766 = vlaneseq
        %v3767 = vshrl.u32 %v3766, 7
        %v3768 = vsub.s32 %v3765, %v3767
        %v3769 = vrot.slane %v3761, %v3768
        %v3771 = vunpack.c.l.s4 1983009808
        %v3772 = vunpack.c.0.s8 %v3771
        %v3773 = vlaneseq
        %v3774 = vshrl.u32 %v3773, 7
        %v3775 = vsub.s32 %v3772, %v3774
        %v3776 = vrot.slane %v3762, %v3775
        %v3777 = vcombine.low %v3769, %v3776
        %v3778 = vcombine.low %v3431, %v3432
        %v3779 = vcombine.low %v3433, %v3434
        %v3781 = vunpack.c.l.s4 1983009808
        %v3782 = vunpack.c.0.s8 %v3781
        %v3783 = vlaneseq
        %v3784 = vshrl.u32 %v3783, 7
        %v3785 = vsub.s32 %v3782, %v3784
        %v3786 = vrot.slane %v3778, %v3785
        %v3788 = vunpack.c.l.s4 1983009808
        %v3789 = vunpack.c.0.s8 %v3788
        %v3790 = vlaneseq
        %v3791 = vshrl.u32 %v3790, 7
        %v3792 = vsub.s32 %v3789, %v3791
        %v3793 = vrot.slane %v3779, %v3792
        %v3794 = vcombine.low %v3786, %v3793
        %v3795 = vcombine.low %v3435, %v3436
        %v3796 = vcombine.low %v3437, %v3438
        %v3798 = vunpack.c.l.s4 1983009808
        %v3799 = vunpack.c.0.s8 %v3798
        %v3800 = vlaneseq
        %v3801 = vshrl.u32 %v3800, 7
        %v3802 = vsub.s32 %v3799, %v3801
        %v3803 = vrot.slane %v3795, %v3802
        %v3805 = vunpack.c.l.s4 1983009808
        %v3806 = vunpack.c.0.s8 %v3805
        %v3807 = vlaneseq
        %v3808 = vshrl.u32 %v3807, 7
        %v3809 = vsub.s32 %v3806, %v3808
        %v3810 = vrot.slane %v3796, %v3809
        %v3811 = vcombine.low %v3803, %v3810
        %v3812 = vcombine.low %v3439, %v3440
        %v3813 = vcombine.low %v3441, %v3442
        %v3815 = vunpack.c.l.s4 1983009808
        %v3816 = vunpack.c.0.s8 %v3815
        %v3817 = vlaneseq
        %v3818 = vshrl.u32 %v3817, 7
        %v3819 = vsub.s32 %v3816, %v3818
        %v3820 = vrot.slane %v3812, %v3819
        %v3822 = vunpack.c.l.s4 1983009808
        %v3823 = vunpack.c.0.s8 %v3822
        %v3824 = vlaneseq
        %v3825 = vshrl.u32 %v3824, 7
        %v3826 = vsub.s32 %v3823, %v3825
        %v3827 = vrot.slane %v3813, %v3826
        %v3828 = vcombine.low %v3820, %v3827
        %v3829 = vcombine.low %v3443, %v3444
        %v3830 = vcombine.low %v3445, %v3446
        %v3832 = vunpack.c.l.s4 1983009808
        %v3833 = vunpack.c.0.s8 %v3832
        %v3834 = vlaneseq
        %v3835 = vshrl.u32 %v3834, 7
        %v3836 = vsub.s32 %v3833, %v3835
        %v3837 = vrot.slane %v3829, %v3836
        %v3839 = vunpack.c.l.s4 1983009808
        %v3840 = vunpack.c.0.s8 %v3839
        %v3841 = vlaneseq
        %v3842 = vshrl.u32 %v3841, 7
        %v3843 = vsub.s32 %v3840, %v3842
        %v3844 = vrot.slane %v3830, %v3843
        %v3845 = vcombine.low %v3837, %v3844
        %v3846 = vcombine.low %v3447, %v3448
        %v3847 = vcombine.low %v3449, %v3450
        %v3849 = vunpack.c.l.s4 1983009808
        %v3850 = vunpack.c.0.s8 %v3849
        %v3851 = vlaneseq
        %v3852 = vshrl.u32 %v3851, 7
        %v3853 = vsub.s32 %v3850, %v3852
        %v3854 = vrot.slane %v3846, %v3853
        %v3856 = vunpack.c.l.s4 1983009808
        %v3857 = vunpack.c.0.s8 %v3856
        %v3858 = vlaneseq
        %v3859 = vshrl.u32 %v3858, 7
        %v3860 = vsub.s32 %v3857, %v3859
        %v3861 = vrot.slane %v3847, %v3860
        %v3862 = vcombine.low %v3854, %v3861
        %v3863 = vcombine.low %v3451, %v3452
        %v3864 = vcombine.low %v3453, %v3454
        %v3866 = vunpack.c.l.s4 1983009808
        %v3867 = vunpack.c.0.s8 %v3866
        %v3868 = vlaneseq
        %v3869 = vshrl.u32 %v3868, 7
        %v3870 = vsub.s32 %v3867, %v3869
        %v3871 = vrot.slane %v3863, %v3870
        %v3873 = vunpack.c.l.s4 1983009808
        %v3874 = vunpack.c.0.s8 %v3873
        %v3875 = vlaneseq
        %v3876 = vshrl.u32 %v3875, 7
        %v3877 = vsub.s32 %v3874, %v3876
        %v3878 = vrot.slane %v3864, %v3877
        %v3879 = vcombine.low %v3871, %v3878
        %v3880 = vcombine.low %v3455, %v3456
        %v3881 = vcombine.low %v3457, %v3458
        %v3883 = vunpack.c.l.s4 1983009808
        %v3884 = vunpack.c.0.s8 %v3883
        %v3885 = vlaneseq
        %v3886 = vshrl.u32 %v3885, 7
        %v3887 = vsub.s32 %v3884, %v3886
        %v3888 = vrot.slane %v3880, %v3887
        %v3890 = vunpack.c.l.s4 1983009808
        %v3891 = vunpack.c.0.s8 %v3890
        %v3892 = vlaneseq
        %v3893 = vshrl.u32 %v3892, 7
        %v3894 = vsub.s32 %v3891, %v3893
        %v3895 = vrot.slane %v3881, %v3894
        %v3896 = vcombine.low %v3888, %v3895
        %v3897 = vcombine.low %v3459, %v3460
        %v3898 = vcombine.low %v3461, %v3462
        %v3900 = vunpack.c.l.s4 1983009808
        %v3901 = vunpack.c.0.s8 %v3900
        %v3902 = vlaneseq
        %v3903 = vshrl.u32 %v3902, 7
        %v3904 = vsub.s32 %v3901, %v3903
        %v3905 = vrot.slane %v3897, %v3904
        %v3907 = vunpack.c.l.s4 1983009808
        %v3908 = vunpack.c.0.s8 %v3907
        %v3909 = vlaneseq
        %v3910 = vshrl.u32 %v3909, 7
        %v3911 = vsub.s32 %v3908, %v3910
        %v3912 = vrot.slane %v3898, %v3911
        %v3913 = vcombine.low %v3905, %v3912
        %v3914 = vcombine.low %v3463, %v3464
        %v3915 = vcombine.low %v3465, %v3466
        %v3917 = vunpack.c.l.s4 1983009808
        %v3918 = vunpack.c.0.s8 %v3917
        %v3919 = vlaneseq
        %v3920 = vshrl.u32 %v3919, 7
        %v3921 = vsub.s32 %v3918, %v3920
        %v3922 = vrot.slane %v3914, %v3921
        %v3924 = vunpack.c.l.s4 1983009808
        %v3925 = vunpack.c.0.s8 %v3924
        %v3926 = vlaneseq
        %v3927 = vshrl.u32 %v3926, 7
        %v3928 = vsub.s32 %v3925, %v3927
        %v3929 = vrot.slane %v3915, %v3928
        %v3930 = vcombine.low %v3922, %v3929
        %v3931 = vcombine.low %v3467, %v3468
        %v3932 = vcombine.low %v3469, %v3470
        %v3934 = vunpack.c.l.s4 1983009808
        %v3935 = vunpack.c.0.s8 %v3934
        %v3936 = vlaneseq
        %v3937 = vshrl.u32 %v3936, 7
        %v3938 = vsub.s32 %v3935, %v3937
        %v3939 = vrot.slane %v3931, %v3938
        %v3941 = vunpack.c.l.s4 1983009808
        %v3942 = vunpack.c.0.s8 %v3941
        %v3943 = vlaneseq
        %v3944 = vshrl.u32 %v3943, 7
        %v3945 = vsub.s32 %v3942, %v3944
        %v3946 = vrot.slane %v3932, %v3945
        %v3947 = vcombine.low %v3939, %v3946
        %v3948 = vcombine.low %v3471, %v3472
        %v3949 = vcombine.low %v3473, %v3474
        %v3951 = vunpack.c.l.s4 1983009808
        %v3952 = vunpack.c.0.s8 %v3951
        %v3953 = vlaneseq
        %v3954 = vshrl.u32 %v3953, 7
        %v3955 = vsub.s32 %v3952, %v3954
        %v3956 = vrot.slane %v3948, %v3955
        %v3958 = vunpack.c.l.s4 1983009808
        %v3959 = vunpack.c.0.s8 %v3958
        %v3960 = vlaneseq
        %v3961 = vshrl.u32 %v3960, 7
        %v3962 = vsub.s32 %v3959, %v3961
        %v3963 = vrot.slane %v3949, %v3962
        %v3964 = vcombine.low %v3956, %v3963
        %v3965 = vcombine.low %v3475, %v3476
        %v3966 = vcombine.low %v3477, %v3478
        %v3968 = vunpack.c.l.s4 1983009808
        %v3969 = vunpack.c.0.s8 %v3968
        %v3970 = vlaneseq
        %v3971 = vshrl.u32 %v3970, 7
        %v3972 = vsub.s32 %v3969, %v3971
        %v3973 = vrot.slane %v3965, %v3972
        %v3975 = vunpack.c.l.s4 1983009808
        %v3976 = vunpack.c.0.s8 %v3975
        %v3977 = vlaneseq
        %v3978 = vshrl.u32 %v3977, 7
        %v3979 = vsub.s32 %v3976, %v3978
        %v3980 = vrot.slane %v3966, %v3979
        %v3981 = vcombine.low %v3973, %v3980
        %v3982 = vcombine.low %v3479, %v3480
        %v3983 = vcombine.low %v3481, %v3482
        %v3985 = vunpack.c.l.s4 1983009808
        %v3986 = vunpack.c.0.s8 %v3985
        %v3987 = vlaneseq
        %v3988 = vshrl.u32 %v3987, 7
        %v3989 = vsub.s32 %v3986, %v3988
        %v3990 = vrot.slane %v3982, %v3989
        %v3992 = vunpack.c.l.s4 1983009808
        %v3993 = vunpack.c.0.s8 %v3992
        %v3994 = vlaneseq
        %v3995 = vshrl.u32 %v3994, 7
        %v3996 = vsub.s32 %v3993, %v3995
        %v3997 = vrot.slane %v3983, %v3996
        %v3998 = vcombine.low %v3990, %v3997
        %v3999 = vcombine.low %v3483, %v3484
        %v4000 = vcombine.low %v3485, %v3486
        %v4002 = vunpack.c.l.s4 1983009808
        %v4003 = vunpack.c.0.s8 %v4002
        %v4004 = vlaneseq
        %v4005 = vshrl.u32 %v4004, 7
        %v4006 = vsub.s32 %v4003, %v4005
        %v4007 = vrot.slane %v3999, %v4006
        %v4009 = vunpack.c.l.s4 1983009808
        %v4010 = vunpack.c.0.s8 %v4009
        %v4011 = vlaneseq
        %v4012 = vshrl.u32 %v4011, 7
        %v4013 = vsub.s32 %v4010, %v4012
        %v4014 = vrot.slane %v4000, %v4013
        %v4015 = vcombine.low %v4007, %v4014
        %v4016 = vcombine.low %v3487, %v3488
        %v4017 = vcombine.low %v3489, %v3490
        %v4019 = vunpack.c.l.s4 1983009808
        %v4020 = vunpack.c.0.s8 %v4019
        %v4021 = vlaneseq
        %v4022 = vshrl.u32 %v4021, 7
        %v4023 = vsub.s32 %v4020, %v4022
        %v4024 = vrot.slane %v4016, %v4023
        %v4026 = vunpack.c.l.s4 1983009808
        %v4027 = vunpack.c.0.s8 %v4026
        %v4028 = vlaneseq
        %v4029 = vshrl.u32 %v4028, 7
        %v4030 = vsub.s32 %v4027, %v4029
        %v4031 = vrot.slane %v4017, %v4030
        %v4032 = vcombine.low %v4024, %v4031
        %v4033 = vcombine.low %v3491, %v3492
        %v4034 = vcombine.low %v3493, %v3494
        %v4036 = vunpack.c.l.s4 1983009808
        %v4037 = vunpack.c.0.s8 %v4036
        %v4038 = vlaneseq
        %v4039 = vshrl.u32 %v4038, 7
        %v4040 = vsub.s32 %v4037, %v4039
        %v4041 = vrot.slane %v4033, %v4040
        %v4043 = vunpack.c.l.s4 1983009808
        %v4044 = vunpack.c.0.s8 %v4043
        %v4045 = vlaneseq
        %v4046 = vshrl.u32 %v4045, 7
        %v4047 = vsub.s32 %v4044, %v4046
        %v4048 = vrot.slane %v4034, %v4047
        %v4049 = vcombine.low %v4041, %v4048
        %v4050 = vcombine.low %v3495, %v3496
        %v4051 = vcombine.low %v3497, %v3498
        %v4053 = vunpack.c.l.s4 1983009808
        %v4054 = vunpack.c.0.s8 %v4053
        %v4055 = vlaneseq
        %v4056 = vshrl.u32 %v4055, 7
        %v4057 = vsub.s32 %v4054, %v4056
        %v4058 = vrot.slane %v4050, %v4057
        %v4060 = vunpack.c.l.s4 1983009808
        %v4061 = vunpack.c.0.s8 %v4060
        %v4062 = vlaneseq
        %v4063 = vshrl.u32 %v4062, 7
        %v4064 = vsub.s32 %v4061, %v4063
        %v4065 = vrot.slane %v4051, %v4064
        %v4066 = vcombine.low %v4058, %v4065
        %v4067 = vcombine.low %v3499, %v3500
        %v4068 = vcombine.low %v3501, %v3502
        %v4070 = vunpack.c.l.s4 1983009808
        %v4071 = vunpack.c.0.s8 %v4070
        %v4072 = vlaneseq
        %v4073 = vshrl.u32 %v4072, 7
        %v4074 = vsub.s32 %v4071, %v4073
        %v4075 = vrot.slane %v4067, %v4074
        %v4077 = vunpack.c.l.s4 1983009808
        %v4078 = vunpack.c.0.s8 %v4077
        %v4079 = vlaneseq
        %v4080 = vshrl.u32 %v4079, 7
        %v4081 = vsub.s32 %v4078, %v4080
        %v4082 = vrot.slane %v4068, %v4081
        %v4083 = vcombine.low %v4075, %v4082
        %v4084 = vcombine.low %v3503, %v3504
        %v4085 = vcombine.low %v3505, %v3506
        %v4087 = vunpack.c.l.s4 1983009808
        %v4088 = vunpack.c.0.s8 %v4087
        %v4089 = vlaneseq
        %v4090 = vshrl.u32 %v4089, 7
        %v4091 = vsub.s32 %v4088, %v4090
        %v4092 = vrot.slane %v4084, %v4091
        %v4094 = vunpack.c.l.s4 1983009808
        %v4095 = vunpack.c.0.s8 %v4094
        %v4096 = vlaneseq
        %v4097 = vshrl.u32 %v4096, 7
        %v4098 = vsub.s32 %v4095, %v4097
        %v4099 = vrot.slane %v4085, %v4098
        %v4100 = vcombine.low %v4092, %v4099
        %v4101 = vcombine.low %v3507, %v3508
        %v4102 = vcombine.low %v3509, %v3510
        %v4104 = vunpack.c.l.s4 1983009808
        %v4105 = vunpack.c.0.s8 %v4104
        %v4106 = vlaneseq
        %v4107 = vshrl.u32 %v4106, 7
        %v4108 = vsub.s32 %v4105, %v4107
        %v4109 = vrot.slane %v4101, %v4108
        %v4111 = vunpack.c.l.s4 1983009808
        %v4112 = vunpack.c.0.s8 %v4111
        %v4113 = vlaneseq
        %v4114 = vshrl.u32 %v4113, 7
        %v4115 = vsub.s32 %v4112, %v4114
        %v4116 = vrot.slane %v4102, %v4115
        %v4117 = vcombine.low %v4109, %v4116
        %v4118 = vcombine.low %v3511, %v3512
        %v4119 = vcombine.low %v3513, %v3514
        %v4121 = vunpack.c.l.s4 1983009808
        %v4122 = vunpack.c.0.s8 %v4121
        %v4123 = vlaneseq
        %v4124 = vshrl.u32 %v4123, 7
        %v4125 = vsub.s32 %v4122, %v4124
        %v4126 = vrot.slane %v4118, %v4125
        %v4128 = vunpack.c.l.s4 1983009808
        %v4129 = vunpack.c.0.s8 %v4128
        %v4130 = vlaneseq
        %v4131 = vshrl.u32 %v4130, 7
        %v4132 = vsub.s32 %v4129, %v4131
        %v4133 = vrot.slane %v4119, %v4132
        %v4134 = vcombine.low %v4126, %v4133
        %v4135 = vcombine.low %v3515, %v3516
        %v4136 = vcombine.low %v3517, %v3518
        %v4138 = vunpack.c.l.s4 1983009808
        %v4139 = vunpack.c.0.s8 %v4138
        %v4140 = vlaneseq
        %v4141 = vshrl.u32 %v4140, 7
        %v4142 = vsub.s32 %v4139, %v4141
        %v4143 = vrot.slane %v4135, %v4142
        %v4145 = vunpack.c.l.s4 1983009808
        %v4146 = vunpack.c.0.s8 %v4145
        %v4147 = vlaneseq
        %v4148 = vshrl.u32 %v4147, 7
        %v4149 = vsub.s32 %v4146, %v4148
        %v4150 = vrot.slane %v4136, %v4149
        %v4151 = vcombine.low %v4143, %v4150
        %v4152 = vcombine.low %v3519, %v3520
        %v4153 = vcombine.low %v3521, %v3522
        %v4155 = vunpack.c.l.s4 1983009808
        %v4156 = vunpack.c.0.s8 %v4155
        %v4157 = vlaneseq
        %v4158 = vshrl.u32 %v4157, 7
        %v4159 = vsub.s32 %v4156, %v4158
        %v4160 = vrot.slane %v4152, %v4159
        %v4162 = vunpack.c.l.s4 1983009808
        %v4163 = vunpack.c.0.s8 %v4162
        %v4164 = vlaneseq
        %v4165 = vshrl.u32 %v4164, 7
        %v4166 = vsub.s32 %v4163, %v4165
        %v4167 = vrot.slane %v4153, %v4166
        %v4168 = vcombine.low %v4160, %v4167
        %v4169 = vcombine.low %v3523, %v3524
        %v4170 = vcombine.low %v3525, %v3526
        %v4172 = vunpack.c.l.s4 1983009808
        %v4173 = vunpack.c.0.s8 %v4172
        %v4174 = vlaneseq
        %v4175 = vshrl.u32 %v4174, 7
        %v4176 = vsub.s32 %v4173, %v4175
        %v4177 = vrot.slane %v4169, %v4176
        %v4179 = vunpack.c.l.s4 1983009808
        %v4180 = vunpack.c.0.s8 %v4179
        %v4181 = vlaneseq
        %v4182 = vshrl.u32 %v4181, 7
        %v4183 = vsub.s32 %v4180, %v4182
        %v4184 = vrot.slane %v4170, %v4183
        %v4185 = vcombine.low %v4177, %v4184
        %v4186 = vcombine.low %v3527, %v3528
        %v4187 = vcombine.low %v3529, %v3530
        %v4189 = vunpack.c.l.s4 1983009808
        %v4190 = vunpack.c.0.s8 %v4189
        %v4191 = vlaneseq
        %v4192 = vshrl.u32 %v4191, 7
        %v4193 = vsub.s32 %v4190, %v4192
        %v4194 = vrot.slane %v4186, %v4193
        %v4196 = vunpack.c.l.s4 1983009808
        %v4197 = vunpack.c.0.s8 %v4196
        %v4198 = vlaneseq
        %v4199 = vshrl.u32 %v4198, 7
        %v4200 = vsub.s32 %v4197, %v4199
        %v4201 = vrot.slane %v4187, %v4200
        %v4202 = vcombine.low %v4194, %v4201
        %4203 = vset.pattern.permute.xlu0 0
        %4204 = vperm.xlu0 %4203, %v3675
        %v4205 = vpop.permute.xlu0 %4204
        %4206 = vset.pattern.permute.xlu0 0
        %4207 = vperm.xlu0 %4206, %v3692
        %v4208 = vpop.permute.xlu0 %4207
        %4209 = vset.pattern.permute.xlu0 0
        %4210 = vperm.xlu0 %4209, %v3709
        %v4211 = vpop.permute.xlu0 %4210
        %4212 = vset.pattern.permute.xlu0 0
        %4213 = vperm.xlu0 %4212, %v3726
        %v4214 = vpop.permute.xlu0 %4213
        %4215 = vset.pattern.permute.xlu0 0
        %4216 = vperm.xlu0 %4215, %v3743
        %v4217 = vpop.permute.xlu0 %4216
        %4218 = vset.pattern.permute.xlu0 0
        %4219 = vperm.xlu0 %4218, %v3760
        %v4220 = vpop.permute.xlu0 %4219
        %4221 = vset.pattern.permute.xlu0 0
        %4222 = vperm.xlu0 %4221, %v3777
        %v4223 = vpop.permute.xlu0 %4222
        %4224 = vset.pattern.permute.xlu0 0
        %4225 = vperm.xlu0 %4224, %v3794
        %v4226 = vpop.permute.xlu0 %4225
        %4227 = vset.pattern.permute.xlu0 0
        %4228 = vperm.xlu0 %4227, %v3811
        %v4229 = vpop.permute.xlu0 %4228
        %4230 = vset.pattern.permute.xlu0 0
        %4231 = vperm.xlu0 %4230, %v3828
        %v4232 = vpop.permute.xlu0 %4231
        %4233 = vset.pattern.permute.xlu0 0
        %4234 = vperm.xlu0 %4233, %v3845
        %v4235 = vpop.permute.xlu0 %4234
        %4236 = vset.pattern.permute.xlu0 0
        %4237 = vperm.xlu0 %4236, %v3862
        %v4238 = vpop.permute.xlu0 %4237
        %4239 = vset.pattern.permute.xlu0 0
        %4240 = vperm.xlu0 %4239, %v3879
        %v4241 = vpop.permute.xlu0 %4240
        %4242 = vset.pattern.permute.xlu0 0
        %4243 = vperm.xlu0 %4242, %v3896
        %v4244 = vpop.permute.xlu0 %4243
        %4245 = vset.pattern.permute.xlu0 0
        %4246 = vperm.xlu0 %4245, %v3913
        %v4247 = vpop.permute.xlu0 %4246
        %4248 = vset.pattern.permute.xlu0 0
        %4249 = vperm.xlu0 %4248, %v3930
        %v4250 = vpop.permute.xlu0 %4249
        %4251 = vset.pattern.permute.xlu0 0
        %4252 = vperm.xlu0 %4251, %v3947
        %v4253 = vpop.permute.xlu0 %4252
        %4254 = vset.pattern.permute.xlu0 0
        %4255 = vperm.xlu0 %4254, %v3964
        %v4256 = vpop.permute.xlu0 %4255
        %4257 = vset.pattern.permute.xlu0 0
        %4258 = vperm.xlu0 %4257, %v3981
        %v4259 = vpop.permute.xlu0 %4258
        %4260 = vset.pattern.permute.xlu0 0
        %4261 = vperm.xlu0 %4260, %v3998
        %v4262 = vpop.permute.xlu0 %4261
        %4263 = vset.pattern.permute.xlu0 0
        %4264 = vperm.xlu0 %4263, %v4015
        %v4265 = vpop.permute.xlu0 %4264
        %4266 = vset.pattern.permute.xlu0 0
        %4267 = vperm.xlu0 %4266, %v4032
        %v4268 = vpop.permute.xlu0 %4267
        %4269 = vset.pattern.permute.xlu0 0
        %4270 = vperm.xlu0 %4269, %v4049
        %v4271 = vpop.permute.xlu0 %4270
        %4272 = vset.pattern.permute.xlu0 0
        %4273 = vperm.xlu0 %4272, %v4066
        %v4274 = vpop.permute.xlu0 %4273
        %4275 = vset.pattern.permute.xlu0 0
        %4276 = vperm.xlu0 %4275, %v4083
        %v4277 = vpop.permute.xlu0 %4276
        %4278 = vset.pattern.permute.xlu0 0
        %4279 = vperm.xlu0 %4278, %v4100
        %v4280 = vpop.permute.xlu0 %4279
        %4281 = vset.pattern.permute.xlu0 0
        %4282 = vperm.xlu0 %4281, %v4117
        %v4283 = vpop.permute.xlu0 %4282
        %4284 = vset.pattern.permute.xlu0 0
        %4285 = vperm.xlu0 %4284, %v4134
        %v4286 = vpop.permute.xlu0 %4285
        %4287 = vset.pattern.permute.xlu0 0
        %4288 = vperm.xlu0 %4287, %v4151
        %v4289 = vpop.permute.xlu0 %4288
        %4290 = vset.pattern.permute.xlu0 0
        %4291 = vperm.xlu0 %4290, %v4168
        %v4292 = vpop.permute.xlu0 %4291
        %4293 = vset.pattern.permute.xlu0 0
        %4294 = vperm.xlu0 %4293, %v4185
        %v4295 = vpop.permute.xlu0 %4294
        %4296 = vset.pattern.permute.xlu0 0
        %4297 = vperm.xlu0 %4296, %v4202
        %v4298 = vpop.permute.xlu0 %4297
        %v4299 = vlaneseq
        %v4300 = vand.u32 %v4299, 127
        %v4301 = vadd.s32 %v4300, 4294967295
        %v4302 = vlaneseq
        %v4303 = vshrl.u32 %v4302, 7
        %v4304 = vsub.s32 %v4301, %v4303
        %v4305 = vrot.slane %v4205, %v4304
        %v4306 = vlaneseq
        %v4307 = vshrl.u32 %v4306, 7
        %v4308 = vsub.s32 %v4301, %v4307
        %v4309 = vrot.slane %v4208, %v4308
        %v4310 = vlaneseq
        %v4311 = vshrl.u32 %v4310, 7
        %v4312 = vsub.s32 %v4301, %v4311
        %v4313 = vrot.slane %v4211, %v4312
        %v4314 = vlaneseq
        %v4315 = vshrl.u32 %v4314, 7
        %v4316 = vsub.s32 %v4301, %v4315
        %v4317 = vrot.slane %v4214, %v4316
        %v4318 = vlaneseq
        %v4319 = vshrl.u32 %v4318, 7
        %v4320 = vsub.s32 %v4301, %v4319
        %v4321 = vrot.slane %v4217, %v4320
        %v4322 = vlaneseq
        %v4323 = vshrl.u32 %v4322, 7
        %v4324 = vsub.s32 %v4301, %v4323
        %v4325 = vrot.slane %v4220, %v4324
        %v4326 = vlaneseq
        %v4327 = vshrl.u32 %v4326, 7
        %v4328 = vsub.s32 %v4301, %v4327
        %v4329 = vrot.slane %v4223, %v4328
        %v4330 = vlaneseq
        %v4331 = vshrl.u32 %v4330, 7
        %v4332 = vsub.s32 %v4301, %v4331
        %v4333 = vrot.slane %v4226, %v4332
        %v4334 = vlaneseq
        %v4335 = vshrl.u32 %v4334, 7
        %v4336 = vsub.s32 %v4301, %v4335
        %v4337 = vrot.slane %v4229, %v4336
        %v4338 = vlaneseq
        %v4339 = vshrl.u32 %v4338, 7
        %v4340 = vsub.s32 %v4301, %v4339
        %v4341 = vrot.slane %v4232, %v4340
        %v4342 = vlaneseq
        %v4343 = vshrl.u32 %v4342, 7
        %v4344 = vsub.s32 %v4301, %v4343
        %v4345 = vrot.slane %v4235, %v4344
        %v4346 = vlaneseq
        %v4347 = vshrl.u32 %v4346, 7
        %v4348 = vsub.s32 %v4301, %v4347
        %v4349 = vrot.slane %v4238, %v4348
        %v4350 = vlaneseq
        %v4351 = vshrl.u32 %v4350, 7
        %v4352 = vsub.s32 %v4301, %v4351
        %v4353 = vrot.slane %v4241, %v4352
        %v4354 = vlaneseq
        %v4355 = vshrl.u32 %v4354, 7
        %v4356 = vsub.s32 %v4301, %v4355
        %v4357 = vrot.slane %v4244, %v4356
        %v4358 = vlaneseq
        %v4359 = vshrl.u32 %v4358, 7
        %v4360 = vsub.s32 %v4301, %v4359
        %v4361 = vrot.slane %v4247, %v4360
        %v4362 = vlaneseq
        %v4363 = vshrl.u32 %v4362, 7
        %v4364 = vsub.s32 %v4301, %v4363
        %v4365 = vrot.slane %v4250, %v4364
        %v4366 = vlaneseq
        %v4367 = vshrl.u32 %v4366, 7
        %v4368 = vsub.s32 %v4301, %v4367
        %v4369 = vrot.slane %v4253, %v4368
        %v4370 = vlaneseq
        %v4371 = vshrl.u32 %v4370, 7
        %v4372 = vsub.s32 %v4301, %v4371
        %v4373 = vrot.slane %v4256, %v4372
        %v4374 = vlaneseq
        %v4375 = vshrl.u32 %v4374, 7
        %v4376 = vsub.s32 %v4301, %v4375
        %v4377 = vrot.slane %v4259, %v4376
        %v4378 = vlaneseq
        %v4379 = vshrl.u32 %v4378, 7
        %v4380 = vsub.s32 %v4301, %v4379
        %v4381 = vrot.slane %v4262, %v4380
        %v4382 = vlaneseq
        %v4383 = vshrl.u32 %v4382, 7
        %v4384 = vsub.s32 %v4301, %v4383
        %v4385 = vrot.slane %v4265, %v4384
        %v4386 = vlaneseq
        %v4387 = vshrl.u32 %v4386, 7
        %v4388 = vsub.s32 %v4301, %v4387
        %v4389 = vrot.slane %v4268, %v4388
        %v4390 = vlaneseq
        %v4391 = vshrl.u32 %v4390, 7
        %v4392 = vsub.s32 %v4301, %v4391
        %v4393 = vrot.slane %v4271, %v4392
        %v4394 = vlaneseq
        %v4395 = vshrl.u32 %v4394, 7
        %v4396 = vsub.s32 %v4301, %v4395
        %v4397 = vrot.slane %v4274, %v4396
        %v4398 = vlaneseq
        %v4399 = vshrl.u32 %v4398, 7
        %v4400 = vsub.s32 %v4301, %v4399
        %v4401 = vrot.slane %v4277, %v4400
        %v4402 = vlaneseq
        %v4403 = vshrl.u32 %v4402, 7
        %v4404 = vsub.s32 %v4301, %v4403
        %v4405 = vrot.slane %v4280, %v4404
        %v4406 = vlaneseq
        %v4407 = vshrl.u32 %v4406, 7
        %v4408 = vsub.s32 %v4301, %v4407
        %v4409 = vrot.slane %v4283, %v4408
        %v4410 = vlaneseq
        %v4411 = vshrl.u32 %v4410, 7
        %v4412 = vsub.s32 %v4301, %v4411
        %v4413 = vrot.slane %v4286, %v4412
        %v4414 = vlaneseq
        %v4415 = vshrl.u32 %v4414, 7
        %v4416 = vsub.s32 %v4301, %v4415
        %v4417 = vrot.slane %v4289, %v4416
        %v4418 = vlaneseq
        %v4419 = vshrl.u32 %v4418, 7
        %v4420 = vsub.s32 %v4301, %v4419
        %v4421 = vrot.slane %v4292, %v4420
        %v4422 = vlaneseq
        %v4423 = vshrl.u32 %v4422, 7
        %v4424 = vsub.s32 %v4301, %v4423
        %v4425 = vrot.slane %v4295, %v4424
        %v4426 = vlaneseq
        %v4427 = vshrl.u32 %v4426, 7
        %v4428 = vsub.s32 %v4301, %v4427
        %v4429 = vrot.slane %v4298, %v4428
        %v4430 = vsel %vm1290, %v4309, %v4305
        %v4431 = vsel %vm1284, %v4313, %v4430
        %v4432 = vsel %vm1292, %v4317, %v4431
        %v4433 = vsel %vm1285, %v4321, %v4432
        %v4434 = vsel %vm1294, %v4325, %v4433
        %v4435 = vsel %vm1287, %v4329, %v4434
        %v4436 = vsel %vm1296, %v4333, %v4435
        %v4437 = vsel %vm1290, %v4341, %v4337
        %v4438 = vsel %vm1284, %v4345, %v4437
        %v4439 = vsel %vm1292, %v4349, %v4438
        %v4440 = vsel %vm1285, %v4353, %v4439
        %v4441 = vsel %vm1294, %v4357, %v4440
        %v4442 = vsel %vm1287, %v4361, %v4441
        %v4443 = vsel %vm1296, %v4365, %v4442
        %v4444 = vsel %vm1290, %v4373, %v4369
        %v4445 = vsel %vm1284, %v4377, %v4444
        %v4446 = vsel %vm1292, %v4381, %v4445
        %v4447 = vsel %vm1285, %v4385, %v4446
        %v4448 = vsel %vm1294, %v4389, %v4447
        %v4449 = vsel %vm1287, %v4393, %v4448
        %v4450 = vsel %vm1296, %v4397, %v4449
        %v4451 = vsel %vm1290, %v4405, %v4401
        %v4452 = vsel %vm1284, %v4409, %v4451
        %v4453 = vsel %vm1292, %v4413, %v4452
        %v4454 = vsel %vm1285, %v4417, %v4453
        %v4455 = vsel %vm1294, %v4421, %v4454
        %v4456 = vsel %vm1287, %v4425, %v4455
        %v4457 = vsel %vm1296, %v4429, %v4456
        %vm4462 = vcmask 72712
        %4463 = vst.msk [vmem:[#allocation2 + $0x1] sm:$0xff] %vm4462, %v4436
        %4464 = vst.msk [vmem:[#allocation2 + $0x11] sm:$0xff] %vm4462, %v4443
        %4465 = vst.msk [vmem:[#allocation2 + $0x21] sm:$0xff] %vm4462, %v4450
        %4466 = vst.msk [vmem:[#allocation2 + $0x31] sm:$0xff] %vm4462, %v4457
        %v4467 = vld [vmem:[#allocation2] sm:$0xff]
        %v4468 = vld [vmem:[#allocation2 + $0x10] sm:$0xff]
        %v4469 = vld [vmem:[#allocation2 + $0x20] sm:$0xff]
        %v4470 = vld [vmem:[#allocation2 + $0x30] sm:$0xff]
        %v4471 = vcombine.low %v4467, %v4469
        %v4472 = vcombine.high %v4467, %v4469
        %v4474 = vunpack.c.l.s4 1983009808
        %v4475 = vunpack.c.0.s8 %v4474
        %v4476 = vlaneseq
        %v4477 = vshrl.u32 %v4476, 7
        %v4478 = vsub.s32 %v4475, %v4477
        %v4479 = vrot.slane %v4471, %v4478
        %v4481 = vunpack.c.l.s4 1983009808
        %v4482 = vunpack.c.0.s8 %v4481
        %v4483 = vlaneseq
        %v4484 = vshrl.u32 %v4483, 7
        %v4485 = vsub.s32 %v4482, %v4484
        %v4486 = vrot.slane %v4472, %v4485
        %v4487 = vcombine.low %v4468, %v4470
        %v4488 = vcombine.high %v4468, %v4470
        %v4490 = vunpack.c.l.s4 1983009808
        %v4491 = vunpack.c.0.s8 %v4490
        %v4492 = vlaneseq
        %v4493 = vshrl.u32 %v4492, 7
        %v4494 = vsub.s32 %v4491, %v4493
        %v4495 = vrot.slane %v4487, %v4494
        %v4497 = vunpack.c.l.s4 1983009808
        %v4498 = vunpack.c.0.s8 %v4497
        %v4499 = vlaneseq
        %v4500 = vshrl.u32 %v4499, 7
        %v4501 = vsub.s32 %v4498, %v4500
        %v4502 = vrot.slane %v4488, %v4501
        %v4503 = vcombine.low %v4479, %v4495
        %v4504 = vcombine.high %v4479, %v4495
        %v4506 = vunpack.c.l.s4 1934713408
        %v4507 = vunpack.c.0.s8 %v4506
        %v4508 = vlaneseq
        %v4509 = vshrl.u32 %v4508, 7
        %v4510 = vsub.s32 %v4507, %v4509
        %v4511 = vrot.slane %v4503, %v4510
        %v4513 = vunpack.c.l.s4 1934713408
        %v4514 = vunpack.c.0.s8 %v4513
        %v4515 = vlaneseq
        %v4516 = vshrl.u32 %v4515, 7
        %v4517 = vsub.s32 %v4514, %v4516
        %v4518 = vrot.slane %v4504, %v4517
        %v4519 = vcombine.low %v4486, %v4502
        %v4520 = vcombine.high %v4486, %v4502
        %v4522 = vunpack.c.l.s4 1934713408
        %v4523 = vunpack.c.0.s8 %v4522
        %v4524 = vlaneseq
        %v4525 = vshrl.u32 %v4524, 7
        %v4526 = vsub.s32 %v4523, %v4525
        %v4527 = vrot.slane %v4519, %v4526
        %v4529 = vunpack.c.l.s4 1934713408
        %v4530 = vunpack.c.0.s8 %v4529
        %v4531 = vlaneseq
        %v4532 = vshrl.u32 %v4531, 7
        %v4533 = vsub.s32 %v4530, %v4532
        %v4534 = vrot.slane %v4520, %v4533
        %v4535 = vcombine.high %v4511, 0.0
        %v4536 = vcombine.high %v4518, 0.0
        %v4537 = vcombine.high %v4527, 0.0
        %v4538 = vcombine.high %v4534, 0.0
        %4540 = vrot.lane.b32.xlu0 %v4535, 8
        %v4541 = vpop.permute.xlu0 %4540
        %4544 = vrot.lane.b32.xlu0 %v4518, 16
        %v4545 = vpop.permute.xlu0 %4544
        %4548 = vrot.lane.b32.xlu0 %v4536, 24
        %v4549 = vpop.permute.xlu0 %4548
        %4552 = vrot.lane.b32.xlu0 %v4527, 32
        %v4553 = vpop.permute.xlu0 %4552
        %4556 = vrot.lane.b32.xlu0 %v4537, 40
        %v4557 = vpop.permute.xlu0 %4556
        %4560 = vrot.lane.b32.xlu0 %v4534, 48
        %v4561 = vpop.permute.xlu0 %4560
        %4564 = vrot.lane.b32.xlu0 %v4538, 56
        %v4565 = vpop.permute.xlu0 %4564
        %vm4567 = vcmask 64512
        %v4568 = vsel %vm4567, %v4511, %v4541
        %vm4569 = vcmask 130048
        %v4570 = vsel %vm4569, %v4568, %v4545
        %vm4571 = vcmask 195584
        %v4572 = vsel %vm4571, %v4570, %v4549
        %vm4573 = vcmask 261120
        %v4574 = vsel %vm4573, %v4572, %v4553
        %vm4575 = vcmask 326656
        %v4576 = vsel %vm4575, %v4574, %v4557
        %vm4577 = vcmask 392192
        %v4578 = vsel %vm4577, %v4576, %v4561
        %vm4579 = vcmask 457728
        %v4580 = vsel %vm4579, %v4578, %v4565
        %4585 = vrot.lane.b32.xlu0 %v4467, 127
        %v4586 = vpop.permute.xlu0 %4585
        %4587 = vrot.lane.b32.xlu0 %v4468, 127
        %v4588 = vpop.permute.xlu0 %4587
        %4589 = vrot.lane.b32.xlu0 %v4469, 127
        %v4590 = vpop.permute.xlu0 %4589
        %4591 = vrot.lane.b32.xlu0 %v4470, 127
        %v4592 = vpop.permute.xlu0 %4591
        %v4597 = vcombine.low %v4586, %v4590
        %v4598 = vcombine.high %v4586, %v4590
        %v4600 = vunpack.c.l.s4 1983009808
        %v4601 = vunpack.c.0.s8 %v4600
        %v4602 = vlaneseq
        %v4603 = vshrl.u32 %v4602, 7
        %v4604 = vsub.s32 %v4601, %v4603
        %v4605 = vrot.slane %v4597, %v4604
        %v4607 = vunpack.c.l.s4 1983009808
        %v4608 = vunpack.c.0.s8 %v4607
        %v4609 = vlaneseq
        %v4610 = vshrl.u32 %v4609, 7
        %v4611 = vsub.s32 %v4608, %v4610
        %v4612 = vrot.slane %v4598, %v4611
        %v4613 = vcombine.low %v4588, %v4592
        %v4614 = vcombine.high %v4588, %v4592
        %v4616 = vunpack.c.l.s4 1983009808
        %v4617 = vunpack.c.0.s8 %v4616
        %v4618 = vlaneseq
        %v4619 = vshrl.u32 %v4618, 7
        %v4620 = vsub.s32 %v4617, %v4619
        %v4621 = vrot.slane %v4613, %v4620
        %v4623 = vunpack.c.l.s4 1983009808
        %v4624 = vunpack.c.0.s8 %v4623
        %v4625 = vlaneseq
        %v4626 = vshrl.u32 %v4625, 7
        %v4627 = vsub.s32 %v4624, %v4626
        %v4628 = vrot.slane %v4614, %v4627
        %v4629 = vcombine.low %v4605, %v4621
        %v4630 = vcombine.high %v4605, %v4621
        %v4632 = vunpack.c.l.s4 1934713408
        %v4633 = vunpack.c.0.s8 %v4632
        %v4634 = vlaneseq
        %v4635 = vshrl.u32 %v4634, 7
        %v4636 = vsub.s32 %v4633, %v4635
        %v4637 = vrot.slane %v4629, %v4636
        %v4639 = vunpack.c.l.s4 1934713408
        %v4640 = vunpack.c.0.s8 %v4639
        %v4641 = vlaneseq
        %v4642 = vshrl.u32 %v4641, 7
        %v4643 = vsub.s32 %v4640, %v4642
        %v4644 = vrot.slane %v4630, %v4643
        %v4645 = vcombine.low %v4612, %v4628
        %v4646 = vcombine.high %v4612, %v4628
        %v4648 = vunpack.c.l.s4 1934713408
        %v4649 = vunpack.c.0.s8 %v4648
        %v4650 = vlaneseq
        %v4651 = vshrl.u32 %v4650, 7
        %v4652 = vsub.s32 %v4649, %v4651
        %v4653 = vrot.slane %v4645, %v4652
        %v4655 = vunpack.c.l.s4 1934713408
        %v4656 = vunpack.c.0.s8 %v4655
        %v4657 = vlaneseq
        %v4658 = vshrl.u32 %v4657, 7
        %v4659 = vsub.s32 %v4656, %v4658
        %v4660 = vrot.slane %v4646, %v4659
        %v4661 = vcombine.high %v4637, 0.0
        %v4662 = vcombine.high %v4644, 0.0
        %v4663 = vcombine.high %v4653, 0.0
        %v4664 = vcombine.high %v4660, 0.0
        %4666 = vrot.lane.b32.xlu0 %v4661, 8
        %v4667 = vpop.permute.xlu0 %4666
        %4670 = vrot.lane.b32.xlu0 %v4644, 16
        %v4671 = vpop.permute.xlu0 %4670
        %4674 = vrot.lane.b32.xlu0 %v4662, 24
        %v4675 = vpop.permute.xlu0 %4674
        %4678 = vrot.lane.b32.xlu0 %v4653, 32
        %v4679 = vpop.permute.xlu0 %4678
        %4682 = vrot.lane.b32.xlu0 %v4663, 40
        %v4683 = vpop.permute.xlu0 %4682
        %4686 = vrot.lane.b32.xlu0 %v4660, 48
        %v4687 = vpop.permute.xlu0 %4686
        %4690 = vrot.lane.b32.xlu0 %v4664, 56
        %v4691 = vpop.permute.xlu0 %4690
        %v4693 = vsel %vm4567, %v4637, %v4667
        %v4694 = vsel %vm4569, %v4693, %v4671
        %v4695 = vsel %vm4571, %v4694, %v4675
        %v4696 = vsel %vm4573, %v4695, %v4679
        %v4697 = vsel %vm4575, %v4696, %v4683
        %v4698 = vsel %vm4577, %v4697, %v4687
        %v4699 = vsel %vm4579, %v4698, %v4691
        %4700 = vrot.lane.b32.xlu0 %v4467, 126
        %v4701 = vpop.permute.xlu0 %4700
        %4702 = vrot.lane.b32.xlu0 %v4468, 126
        %v4703 = vpop.permute.xlu0 %4702
        %4704 = vrot.lane.b32.xlu0 %v4469, 126
        %v4705 = vpop.permute.xlu0 %4704
        %4706 = vrot.lane.b32.xlu0 %v4470, 126
        %v4707 = vpop.permute.xlu0 %4706
        %v4712 = vcombine.low %v4701, %v4705
        %v4713 = vcombine.high %v4701, %v4705
        %v4715 = vunpack.c.l.s4 1983009808
        %v4716 = vunpack.c.0.s8 %v4715
        %v4717 = vlaneseq
        %v4718 = vshrl.u32 %v4717, 7
        %v4719 = vsub.s32 %v4716, %v4718
        %v4720 = vrot.slane %v4712, %v4719
        %v4722 = vunpack.c.l.s4 1983009808
        %v4723 = vunpack.c.0.s8 %v4722
        %v4724 = vlaneseq
        %v4725 = vshrl.u32 %v4724, 7
        %v4726 = vsub.s32 %v4723, %v4725
        %v4727 = vrot.slane %v4713, %v4726
        %v4728 = vcombine.low %v4703, %v4707
        %v4729 = vcombine.high %v4703, %v4707
        %v4731 = vunpack.c.l.s4 1983009808
        %v4732 = vunpack.c.0.s8 %v4731
        %v4733 = vlaneseq
        %v4734 = vshrl.u32 %v4733, 7
        %v4735 = vsub.s32 %v4732, %v4734
        %v4736 = vrot.slane %v4728, %v4735
        %v4738 = vunpack.c.l.s4 1983009808
        %v4739 = vunpack.c.0.s8 %v4738
        %v4740 = vlaneseq
        %v4741 = vshrl.u32 %v4740, 7
        %v4742 = vsub.s32 %v4739, %v4741
        %v4743 = vrot.slane %v4729, %v4742
        %v4744 = vcombine.low %v4720, %v4736
        %v4745 = vcombine.high %v4720, %v4736
        %v4747 = vunpack.c.l.s4 1934713408
        %v4748 = vunpack.c.0.s8 %v4747
        %v4749 = vlaneseq
        %v4750 = vshrl.u32 %v4749, 7
        %v4751 = vsub.s32 %v4748, %v4750
        %v4752 = vrot.slane %v4744, %v4751
        %v4754 = vunpack.c.l.s4 1934713408
        %v4755 = vunpack.c.0.s8 %v4754
        %v4756 = vlaneseq
        %v4757 = vshrl.u32 %v4756, 7
        %v4758 = vsub.s32 %v4755, %v4757
        %v4759 = vrot.slane %v4745, %v4758
        %v4760 = vcombine.low %v4727, %v4743
        %v4761 = vcombine.high %v4727, %v4743
        %v4763 = vunpack.c.l.s4 1934713408
        %v4764 = vunpack.c.0.s8 %v4763
        %v4765 = vlaneseq
        %v4766 = vshrl.u32 %v4765, 7
        %v4767 = vsub.s32 %v4764, %v4766
        %v4768 = vrot.slane %v4760, %v4767
        %v4770 = vunpack.c.l.s4 1934713408
        %v4771 = vunpack.c.0.s8 %v4770
        %v4772 = vlaneseq
        %v4773 = vshrl.u32 %v4772, 7
        %v4774 = vsub.s32 %v4771, %v4773
        %v4775 = vrot.slane %v4761, %v4774
        %v4776 = vcombine.high %v4752, 0.0
        %v4777 = vcombine.high %v4759, 0.0
        %v4778 = vcombine.high %v4768, 0.0
        %v4779 = vcombine.high %v4775, 0.0
        %4781 = vrot.lane.b32.xlu0 %v4776, 8
        %v4782 = vpop.permute.xlu0 %4781
        %4785 = vrot.lane.b32.xlu0 %v4759, 16
        %v4786 = vpop.permute.xlu0 %4785
        %4789 = vrot.lane.b32.xlu0 %v4777, 24
        %v4790 = vpop.permute.xlu0 %4789
        %4793 = vrot.lane.b32.xlu0 %v4768, 32
        %v4794 = vpop.permute.xlu0 %4793
        %4797 = vrot.lane.b32.xlu0 %v4778, 40
        %v4798 = vpop.permute.xlu0 %4797
        %4801 = vrot.lane.b32.xlu0 %v4775, 48
        %v4802 = vpop.permute.xlu0 %4801
        %4805 = vrot.lane.b32.xlu0 %v4779, 56
        %v4806 = vpop.permute.xlu0 %4805
        %v4808 = vsel %vm4567, %v4752, %v4782
        %v4809 = vsel %vm4569, %v4808, %v4786
        %v4810 = vsel %vm4571, %v4809, %v4790
        %v4811 = vsel %vm4573, %v4810, %v4794
        %v4812 = vsel %vm4575, %v4811, %v4798
        %v4813 = vsel %vm4577, %v4812, %v4802
        %v4814 = vsel %vm4579, %v4813, %v4806
        %v4815 = vld [vmem:[#allocation2 + $0x1] sm:$0xff]
        %v4816 = vld [vmem:[#allocation2 + $0x11] sm:$0xff]
        %v4817 = vld [vmem:[#allocation2 + $0x21] sm:$0xff]
        %v4818 = vld [vmem:[#allocation2 + $0x31] sm:$0xff]
        %v4819 = vcombine.low %v4815, %v4817
        %v4820 = vcombine.high %v4815, %v4817
        %v4822 = vunpack.c.l.s4 1983009808
        %v4823 = vunpack.c.0.s8 %v4822
        %v4824 = vlaneseq
        %v4825 = vshrl.u32 %v4824, 7
        %v4826 = vsub.s32 %v4823, %v4825
        %v4827 = vrot.slane %v4819, %v4826
        %v4829 = vunpack.c.l.s4 1983009808
        %v4830 = vunpack.c.0.s8 %v4829
        %v4831 = vlaneseq
        %v4832 = vshrl.u32 %v4831, 7
        %v4833 = vsub.s32 %v4830, %v4832
        %v4834 = vrot.slane %v4820, %v4833
        %v4835 = vcombine.low %v4816, %v4818
        %v4836 = vcombine.high %v4816, %v4818
        %v4838 = vunpack.c.l.s4 1983009808
        %v4839 = vunpack.c.0.s8 %v4838
        %v4840 = vlaneseq
        %v4841 = vshrl.u32 %v4840, 7
        %v4842 = vsub.s32 %v4839, %v4841
        %v4843 = vrot.slane %v4835, %v4842
        %v4845 = vunpack.c.l.s4 1983009808
        %v4846 = vunpack.c.0.s8 %v4845
        %v4847 = vlaneseq
        %v4848 = vshrl.u32 %v4847, 7
        %v4849 = vsub.s32 %v4846, %v4848
        %v4850 = vrot.slane %v4836, %v4849
        %v4851 = vcombine.low %v4827, %v4843
        %v4852 = vcombine.high %v4827, %v4843
        %v4854 = vunpack.c.l.s4 1934713408
        %v4855 = vunpack.c.0.s8 %v4854
        %v4856 = vlaneseq
        %v4857 = vshrl.u32 %v4856, 7
        %v4858 = vsub.s32 %v4855, %v4857
        %v4859 = vrot.slane %v4851, %v4858
        %v4861 = vunpack.c.l.s4 1934713408
        %v4862 = vunpack.c.0.s8 %v4861
        %v4863 = vlaneseq
        %v4864 = vshrl.u32 %v4863, 7
        %v4865 = vsub.s32 %v4862, %v4864
        %v4866 = vrot.slane %v4852, %v4865
        %v4867 = vcombine.low %v4834, %v4850
        %v4868 = vcombine.high %v4834, %v4850
        %v4870 = vunpack.c.l.s4 1934713408
        %v4871 = vunpack.c.0.s8 %v4870
        %v4872 = vlaneseq
        %v4873 = vshrl.u32 %v4872, 7
        %v4874 = vsub.s32 %v4871, %v4873
        %v4875 = vrot.slane %v4867, %v4874
        %v4877 = vunpack.c.l.s4 1934713408
        %v4878 = vunpack.c.0.s8 %v4877
        %v4879 = vlaneseq
        %v4880 = vshrl.u32 %v4879, 7
        %v4881 = vsub.s32 %v4878, %v4880
        %v4882 = vrot.slane %v4868, %v4881
        %v4883 = vcombine.high %v4859, 0.0
        %v4884 = vcombine.high %v4866, 0.0
        %v4885 = vcombine.high %v4875, 0.0
        %v4886 = vcombine.high %v4882, 0.0
        %4888 = vrot.lane.b32.xlu0 %v4883, 8
        %v4889 = vpop.permute.xlu0 %4888
        %4892 = vrot.lane.b32.xlu0 %v4866, 16
        %v4893 = vpop.permute.xlu0 %4892
        %4896 = vrot.lane.b32.xlu0 %v4884, 24
        %v4897 = vpop.permute.xlu0 %4896
        %4900 = vrot.lane.b32.xlu0 %v4875, 32
        %v4901 = vpop.permute.xlu0 %4900
        %4904 = vrot.lane.b32.xlu0 %v4885, 40
        %v4905 = vpop.permute.xlu0 %4904
        %4908 = vrot.lane.b32.xlu0 %v4882, 48
        %v4909 = vpop.permute.xlu0 %4908
        %4912 = vrot.lane.b32.xlu0 %v4886, 56
        %v4913 = vpop.permute.xlu0 %4912
        %v4915 = vsel %vm4567, %v4859, %v4889
        %v4916 = vsel %vm4569, %v4915, %v4893
        %v4917 = vsel %vm4571, %v4916, %v4897
        %v4918 = vsel %vm4573, %v4917, %v4901
        %v4919 = vsel %vm4575, %v4918, %v4905
        %v4920 = vsel %vm4577, %v4919, %v4909
        %v4921 = vsel %vm4579, %v4920, %v4913
        %4926 = vrot.lane.b32.xlu0 %v4815, 127
        %v4927 = vpop.permute.xlu0 %4926
        %4928 = vrot.lane.b32.xlu0 %v4816, 127
        %v4929 = vpop.permute.xlu0 %4928
        %4930 = vrot.lane.b32.xlu0 %v4817, 127
        %v4931 = vpop.permute.xlu0 %4930
        %4932 = vrot.lane.b32.xlu0 %v4818, 127
        %v4933 = vpop.permute.xlu0 %4932
        %v4938 = vcombine.low %v4927, %v4931
        %v4939 = vcombine.high %v4927, %v4931
        %v4941 = vunpack.c.l.s4 1983009808
        %v4942 = vunpack.c.0.s8 %v4941
        %v4943 = vlaneseq
        %v4944 = vshrl.u32 %v4943, 7
        %v4945 = vsub.s32 %v4942, %v4944
        %v4946 = vrot.slane %v4938, %v4945
        %v4948 = vunpack.c.l.s4 1983009808
        %v4949 = vunpack.c.0.s8 %v4948
        %v4950 = vlaneseq
        %v4951 = vshrl.u32 %v4950, 7
        %v4952 = vsub.s32 %v4949, %v4951
        %v4953 = vrot.slane %v4939, %v4952
        %v4954 = vcombine.low %v4929, %v4933
        %v4955 = vcombine.high %v4929, %v4933
        %v4957 = vunpack.c.l.s4 1983009808
        %v4958 = vunpack.c.0.s8 %v4957
        %v4959 = vlaneseq
        %v4960 = vshrl.u32 %v4959, 7
        %v4961 = vsub.s32 %v4958, %v4960
        %v4962 = vrot.slane %v4954, %v4961
        %v4964 = vunpack.c.l.s4 1983009808
        %v4965 = vunpack.c.0.s8 %v4964
        %v4966 = vlaneseq
        %v4967 = vshrl.u32 %v4966, 7
        %v4968 = vsub.s32 %v4965, %v4967
        %v4969 = vrot.slane %v4955, %v4968
        %v4970 = vcombine.low %v4946, %v4962
        %v4971 = vcombine.high %v4946, %v4962
        %v4973 = vunpack.c.l.s4 1934713408
        %v4974 = vunpack.c.0.s8 %v4973
        %v4975 = vlaneseq
        %v4976 = vshrl.u32 %v4975, 7
        %v4977 = vsub.s32 %v4974, %v4976
        %v4978 = vrot.slane %v4970, %v4977
        %v4980 = vunpack.c.l.s4 1934713408
        %v4981 = vunpack.c.0.s8 %v4980
        %v4982 = vlaneseq
        %v4983 = vshrl.u32 %v4982, 7
        %v4984 = vsub.s32 %v4981, %v4983
        %v4985 = vrot.slane %v4971, %v4984
        %v4986 = vcombine.low %v4953, %v4969
        %v4987 = vcombine.high %v4953, %v4969
        %v4989 = vunpack.c.l.s4 1934713408
        %v4990 = vunpack.c.0.s8 %v4989
        %v4991 = vlaneseq
        %v4992 = vshrl.u32 %v4991, 7
        %v4993 = vsub.s32 %v4990, %v4992
        %v4994 = vrot.slane %v4986, %v4993
        %v4996 = vunpack.c.l.s4 1934713408
        %v4997 = vunpack.c.0.s8 %v4996
        %v4998 = vlaneseq
        %v4999 = vshrl.u32 %v4998, 7
        %v5000 = vsub.s32 %v4997, %v4999
        %v5001 = vrot.slane %v4987, %v5000
        %v5002 = vcombine.high %v4978, 0.0
        %v5003 = vcombine.high %v4985, 0.0
        %v5004 = vcombine.high %v4994, 0.0
        %v5005 = vcombine.high %v5001, 0.0
        %5007 = vrot.lane.b32.xlu0 %v5002, 8
        %v5008 = vpop.permute.xlu0 %5007
        %5011 = vrot.lane.b32.xlu0 %v4985, 16
        %v5012 = vpop.permute.xlu0 %5011
        %5015 = vrot.lane.b32.xlu0 %v5003, 24
        %v5016 = vpop.permute.xlu0 %5015
        %5019 = vrot.lane.b32.xlu0 %v4994, 32
        %v5020 = vpop.permute.xlu0 %5019
        %5023 = vrot.lane.b32.xlu0 %v5004, 40
        %v5024 = vpop.permute.xlu0 %5023
        %5027 = vrot.lane.b32.xlu0 %v5001, 48
        %v5028 = vpop.permute.xlu0 %5027
        %5031 = vrot.lane.b32.xlu0 %v5005, 56
        %v5032 = vpop.permute.xlu0 %5031
        %v5034 = vsel %vm4567, %v4978, %v5008
        %v5035 = vsel %vm4569, %v5034, %v5012
        %v5036 = vsel %vm4571, %v5035, %v5016
        %v5037 = vsel %vm4573, %v5036, %v5020
        %v5038 = vsel %vm4575, %v5037, %v5024
        %v5039 = vsel %vm4577, %v5038, %v5028
        %v5040 = vsel %vm4579, %v5039, %v5032
        %5041 = vrot.lane.b32.xlu0 %v4815, 126
        %v5042 = vpop.permute.xlu0 %5041
        %5043 = vrot.lane.b32.xlu0 %v4816, 126
        %v5044 = vpop.permute.xlu0 %5043
        %5045 = vrot.lane.b32.xlu0 %v4817, 126
        %v5046 = vpop.permute.xlu0 %5045
        %5047 = vrot.lane.b32.xlu0 %v4818, 126
        %v5048 = vpop.permute.xlu0 %5047
        %v5053 = vcombine.low %v5042, %v5046
        %v5054 = vcombine.high %v5042, %v5046
        %v5056 = vunpack.c.l.s4 1983009808
        %v5057 = vunpack.c.0.s8 %v5056
        %v5058 = vlaneseq
        %v5059 = vshrl.u32 %v5058, 7
        %v5060 = vsub.s32 %v5057, %v5059
        %v5061 = vrot.slane %v5053, %v5060
        %v5063 = vunpack.c.l.s4 1983009808
        %v5064 = vunpack.c.0.s8 %v5063
        %v5065 = vlaneseq
        %v5066 = vshrl.u32 %v5065, 7
        %v5067 = vsub.s32 %v5064, %v5066
        %v5068 = vrot.slane %v5054, %v5067
        %v5069 = vcombine.low %v5044, %v5048
        %v5070 = vcombine.high %v5044, %v5048
        %v5072 = vunpack.c.l.s4 1983009808
        %v5073 = vunpack.c.0.s8 %v5072
        %v5074 = vlaneseq
        %v5075 = vshrl.u32 %v5074, 7
        %v5076 = vsub.s32 %v5073, %v5075
        %v5077 = vrot.slane %v5069, %v5076
        %v5079 = vunpack.c.l.s4 1983009808
        %v5080 = vunpack.c.0.s8 %v5079
        %v5081 = vlaneseq
        %v5082 = vshrl.u32 %v5081, 7
        %v5083 = vsub.s32 %v5080, %v5082
        %v5084 = vrot.slane %v5070, %v5083
        %v5085 = vcombine.low %v5061, %v5077
        %v5086 = vcombine.high %v5061, %v5077
        %v5088 = vunpack.c.l.s4 1934713408
        %v5089 = vunpack.c.0.s8 %v5088
        %v5090 = vlaneseq
        %v5091 = vshrl.u32 %v5090, 7
        %v5092 = vsub.s32 %v5089, %v5091
        %v5093 = vrot.slane %v5085, %v5092
        %v5095 = vunpack.c.l.s4 1934713408
        %v5096 = vunpack.c.0.s8 %v5095
        %v5097 = vlaneseq
        %v5098 = vshrl.u32 %v5097, 7
        %v5099 = vsub.s32 %v5096, %v5098
        %v5100 = vrot.slane %v5086, %v5099
        %v5101 = vcombine.low %v5068, %v5084
        %v5102 = vcombine.high %v5068, %v5084
        %v5104 = vunpack.c.l.s4 1934713408
        %v5105 = vunpack.c.0.s8 %v5104
        %v5106 = vlaneseq
        %v5107 = vshrl.u32 %v5106, 7
        %v5108 = vsub.s32 %v5105, %v5107
        %v5109 = vrot.slane %v5101, %v5108
        %v5111 = vunpack.c.l.s4 1934713408
        %v5112 = vunpack.c.0.s8 %v5111
        %v5113 = vlaneseq
        %v5114 = vshrl.u32 %v5113, 7
        %v5115 = vsub.s32 %v5112, %v5114
        %v5116 = vrot.slane %v5102, %v5115
        %v5117 = vcombine.high %v5093, 0.0
        %v5118 = vcombine.high %v5100, 0.0
        %v5119 = vcombine.high %v5109, 0.0
        %v5120 = vcombine.high %v5116, 0.0
        %5122 = vrot.lane.b32.xlu0 %v5117, 8
        %v5123 = vpop.permute.xlu0 %5122
        %5126 = vrot.lane.b32.xlu0 %v5100, 16
        %v5127 = vpop.permute.xlu0 %5126
        %5130 = vrot.lane.b32.xlu0 %v5118, 24
        %v5131 = vpop.permute.xlu0 %5130
        %5134 = vrot.lane.b32.xlu0 %v5109, 32
        %v5135 = vpop.permute.xlu0 %5134
        %5138 = vrot.lane.b32.xlu0 %v5119, 40
        %v5139 = vpop.permute.xlu0 %5138
        %5142 = vrot.lane.b32.xlu0 %v5116, 48
        %v5143 = vpop.permute.xlu0 %5142
        %5146 = vrot.lane.b32.xlu0 %v5120, 56
        %v5147 = vpop.permute.xlu0 %5146
        %v5149 = vsel %vm4567, %v5093, %v5123
        %v5150 = vsel %vm4569, %v5149, %v5127
        %v5151 = vsel %vm4571, %v5150, %v5131
        %v5152 = vsel %vm4573, %v5151, %v5135
        %v5153 = vsel %vm4575, %v5152, %v5139
        %v5154 = vsel %vm4577, %v5153, %v5143
        %v5155 = vsel %vm4579, %v5154, %v5147
        %v5156 = vld [vmem:[#allocation2 + $0x2] sm:$0xff]
        %v5157 = vld [vmem:[#allocation2 + $0x12] sm:$0xff]
        %v5158 = vld [vmem:[#allocation2 + $0x22] sm:$0xff]
        %v5159 = vld [vmem:[#allocation2 + $0x32] sm:$0xff]
        %v5160 = vcombine.low %v5156, %v5158
        %v5161 = vcombine.high %v5156, %v5158
        %v5163 = vunpack.c.l.s4 1983009808
        %v5164 = vunpack.c.0.s8 %v5163
        %v5165 = vlaneseq
        %v5166 = vshrl.u32 %v5165, 7
        %v5167 = vsub.s32 %v5164, %v5166
        %v5168 = vrot.slane %v5160, %v5167
        %v5170 = vunpack.c.l.s4 1983009808
        %v5171 = vunpack.c.0.s8 %v5170
        %v5172 = vlaneseq
        %v5173 = vshrl.u32 %v5172, 7
        %v5174 = vsub.s32 %v5171, %v5173
        %v5175 = vrot.slane %v5161, %v5174
        %v5176 = vcombine.low %v5157, %v5159
        %v5177 = vcombine.high %v5157, %v5159
        %v5179 = vunpack.c.l.s4 1983009808
        %v5180 = vunpack.c.0.s8 %v5179
        %v5181 = vlaneseq
        %v5182 = vshrl.u32 %v5181, 7
        %v5183 = vsub.s32 %v5180, %v5182
        %v5184 = vrot.slane %v5176, %v5183
        %v5186 = vunpack.c.l.s4 1983009808
        %v5187 = vunpack.c.0.s8 %v5186
        %v5188 = vlaneseq
        %v5189 = vshrl.u32 %v5188, 7
        %v5190 = vsub.s32 %v5187, %v5189
        %v5191 = vrot.slane %v5177, %v5190
        %v5192 = vcombine.low %v5168, %v5184
        %v5193 = vcombine.high %v5168, %v5184
        %v5195 = vunpack.c.l.s4 1934713408
        %v5196 = vunpack.c.0.s8 %v5195
        %v5197 = vlaneseq
        %v5198 = vshrl.u32 %v5197, 7
        %v5199 = vsub.s32 %v5196, %v5198
        %v5200 = vrot.slane %v5192, %v5199
        %v5202 = vunpack.c.l.s4 1934713408
        %v5203 = vunpack.c.0.s8 %v5202
        %v5204 = vlaneseq
        %v5205 = vshrl.u32 %v5204, 7
        %v5206 = vsub.s32 %v5203, %v5205
        %v5207 = vrot.slane %v5193, %v5206
        %v5208 = vcombine.low %v5175, %v5191
        %v5209 = vcombine.high %v5175, %v5191
        %v5211 = vunpack.c.l.s4 1934713408
        %v5212 = vunpack.c.0.s8 %v5211
        %v5213 = vlaneseq
        %v5214 = vshrl.u32 %v5213, 7
        %v5215 = vsub.s32 %v5212, %v5214
        %v5216 = vrot.slane %v5208, %v5215
        %v5218 = vunpack.c.l.s4 1934713408
        %v5219 = vunpack.c.0.s8 %v5218
        %v5220 = vlaneseq
        %v5221 = vshrl.u32 %v5220, 7
        %v5222 = vsub.s32 %v5219, %v5221
        %v5223 = vrot.slane %v5209, %v5222
        %v5224 = vcombine.high %v5200, 0.0
        %v5225 = vcombine.high %v5207, 0.0
        %v5226 = vcombine.high %v5216, 0.0
        %v5227 = vcombine.high %v5223, 0.0
        %5229 = vrot.lane.b32.xlu0 %v5224, 8
        %v5230 = vpop.permute.xlu0 %5229
        %5233 = vrot.lane.b32.xlu0 %v5207, 16
        %v5234 = vpop.permute.xlu0 %5233
        %5237 = vrot.lane.b32.xlu0 %v5225, 24
        %v5238 = vpop.permute.xlu0 %5237
        %5241 = vrot.lane.b32.xlu0 %v5216, 32
        %v5242 = vpop.permute.xlu0 %5241
        %5245 = vrot.lane.b32.xlu0 %v5226, 40
        %v5246 = vpop.permute.xlu0 %5245
        %5249 = vrot.lane.b32.xlu0 %v5223, 48
        %v5250 = vpop.permute.xlu0 %5249
        %5253 = vrot.lane.b32.xlu0 %v5227, 56
        %v5254 = vpop.permute.xlu0 %5253
        %v5256 = vsel %vm4567, %v5200, %v5230
        %v5257 = vsel %vm4569, %v5256, %v5234
        %v5258 = vsel %vm4571, %v5257, %v5238
        %v5259 = vsel %vm4573, %v5258, %v5242
        %v5260 = vsel %vm4575, %v5259, %v5246
        %v5261 = vsel %vm4577, %v5260, %v5250
        %v5262 = vsel %vm4579, %v5261, %v5254
        %5267 = vrot.lane.b32.xlu0 %v5156, 127
        %v5268 = vpop.permute.xlu0 %5267
        %5269 = vrot.lane.b32.xlu0 %v5157, 127
        %v5270 = vpop.permute.xlu0 %5269
        %5271 = vrot.lane.b32.xlu0 %v5158, 127
        %v5272 = vpop.permute.xlu0 %5271
        %5273 = vrot.lane.b32.xlu0 %v5159, 127
        %v5274 = vpop.permute.xlu0 %5273
        %v5279 = vcombine.low %v5268, %v5272
        %v5280 = vcombine.high %v5268, %v5272
        %v5282 = vunpack.c.l.s4 1983009808
        %v5283 = vunpack.c.0.s8 %v5282
        %v5284 = vlaneseq
        %v5285 = vshrl.u32 %v5284, 7
        %v5286 = vsub.s32 %v5283, %v5285
        %v5287 = vrot.slane %v5279, %v5286
        %v5289 = vunpack.c.l.s4 1983009808
        %v5290 = vunpack.c.0.s8 %v5289
        %v5291 = vlaneseq
        %v5292 = vshrl.u32 %v5291, 7
        %v5293 = vsub.s32 %v5290, %v5292
        %v5294 = vrot.slane %v5280, %v5293
        %v5295 = vcombine.low %v5270, %v5274
        %v5296 = vcombine.high %v5270, %v5274
        %v5298 = vunpack.c.l.s4 1983009808
        %v5299 = vunpack.c.0.s8 %v5298
        %v5300 = vlaneseq
        %v5301 = vshrl.u32 %v5300, 7
        %v5302 = vsub.s32 %v5299, %v5301
        %v5303 = vrot.slane %v5295, %v5302
        %v5305 = vunpack.c.l.s4 1983009808
        %v5306 = vunpack.c.0.s8 %v5305
        %v5307 = vlaneseq
        %v5308 = vshrl.u32 %v5307, 7
        %v5309 = vsub.s32 %v5306, %v5308
        %v5310 = vrot.slane %v5296, %v5309
        %v5311 = vcombine.low %v5287, %v5303
        %v5312 = vcombine.high %v5287, %v5303
        %v5314 = vunpack.c.l.s4 1934713408
        %v5315 = vunpack.c.0.s8 %v5314
        %v5316 = vlaneseq
        %v5317 = vshrl.u32 %v5316, 7
        %v5318 = vsub.s32 %v5315, %v5317
        %v5319 = vrot.slane %v5311, %v5318
        %v5321 = vunpack.c.l.s4 1934713408
        %v5322 = vunpack.c.0.s8 %v5321
        %v5323 = vlaneseq
        %v5324 = vshrl.u32 %v5323, 7
        %v5325 = vsub.s32 %v5322, %v5324
        %v5326 = vrot.slane %v5312, %v5325
        %v5327 = vcombine.low %v5294, %v5310
        %v5328 = vcombine.high %v5294, %v5310
        %v5330 = vunpack.c.l.s4 1934713408
        %v5331 = vunpack.c.0.s8 %v5330
        %v5332 = vlaneseq
        %v5333 = vshrl.u32 %v5332, 7
        %v5334 = vsub.s32 %v5331, %v5333
        %v5335 = vrot.slane %v5327, %v5334
        %v5337 = vunpack.c.l.s4 1934713408
        %v5338 = vunpack.c.0.s8 %v5337
        %v5339 = vlaneseq
        %v5340 = vshrl.u32 %v5339, 7
        %v5341 = vsub.s32 %v5338, %v5340
        %v5342 = vrot.slane %v5328, %v5341
        %v5343 = vcombine.high %v5319, 0.0
        %v5344 = vcombine.high %v5326, 0.0
        %v5345 = vcombine.high %v5335, 0.0
        %v5346 = vcombine.high %v5342, 0.0
        %5348 = vrot.lane.b32.xlu0 %v5343, 8
        %v5349 = vpop.permute.xlu0 %5348
        %5352 = vrot.lane.b32.xlu0 %v5326, 16
        %v5353 = vpop.permute.xlu0 %5352
        %5356 = vrot.lane.b32.xlu0 %v5344, 24
        %v5357 = vpop.permute.xlu0 %5356
        %5360 = vrot.lane.b32.xlu0 %v5335, 32
        %v5361 = vpop.permute.xlu0 %5360
        %5364 = vrot.lane.b32.xlu0 %v5345, 40
        %v5365 = vpop.permute.xlu0 %5364
        %5368 = vrot.lane.b32.xlu0 %v5342, 48
        %v5369 = vpop.permute.xlu0 %5368
        %5372 = vrot.lane.b32.xlu0 %v5346, 56
        %v5373 = vpop.permute.xlu0 %5372
        %v5375 = vsel %vm4567, %v5319, %v5349
        %v5376 = vsel %vm4569, %v5375, %v5353
        %v5377 = vsel %vm4571, %v5376, %v5357
        %v5378 = vsel %vm4573, %v5377, %v5361
        %v5379 = vsel %vm4575, %v5378, %v5365
        %v5380 = vsel %vm4577, %v5379, %v5369
        %v5381 = vsel %vm4579, %v5380, %v5373
        %5382 = vrot.lane.b32.xlu0 %v5156, 126
        %v5383 = vpop.permute.xlu0 %5382
        %5384 = vrot.lane.b32.xlu0 %v5157, 126
        %v5385 = vpop.permute.xlu0 %5384
        %5386 = vrot.lane.b32.xlu0 %v5158, 126
        %v5387 = vpop.permute.xlu0 %5386
        %5388 = vrot.lane.b32.xlu0 %v5159, 126
        %v5389 = vpop.permute.xlu0 %5388
        %v5394 = vcombine.low %v5383, %v5387
        %v5395 = vcombine.high %v5383, %v5387
        %v5397 = vunpack.c.l.s4 1983009808
        %v5398 = vunpack.c.0.s8 %v5397
        %v5399 = vlaneseq
        %v5400 = vshrl.u32 %v5399, 7
        %v5401 = vsub.s32 %v5398, %v5400
        %v5402 = vrot.slane %v5394, %v5401
        %v5404 = vunpack.c.l.s4 1983009808
        %v5405 = vunpack.c.0.s8 %v5404
        %v5406 = vlaneseq
        %v5407 = vshrl.u32 %v5406, 7
        %v5408 = vsub.s32 %v5405, %v5407
        %v5409 = vrot.slane %v5395, %v5408
        %v5410 = vcombine.low %v5385, %v5389
        %v5411 = vcombine.high %v5385, %v5389
        %v5413 = vunpack.c.l.s4 1983009808
        %v5414 = vunpack.c.0.s8 %v5413
        %v5415 = vlaneseq
        %v5416 = vshrl.u32 %v5415, 7
        %v5417 = vsub.s32 %v5414, %v5416
        %v5418 = vrot.slane %v5410, %v5417
        %v5420 = vunpack.c.l.s4 1983009808
        %v5421 = vunpack.c.0.s8 %v5420
        %v5422 = vlaneseq
        %v5423 = vshrl.u32 %v5422, 7
        %v5424 = vsub.s32 %v5421, %v5423
        %v5425 = vrot.slane %v5411, %v5424
        %v5426 = vcombine.low %v5402, %v5418
        %v5427 = vcombine.high %v5402, %v5418
        %v5429 = vunpack.c.l.s4 1934713408
        %v5430 = vunpack.c.0.s8 %v5429
        %v5431 = vlaneseq
        %v5432 = vshrl.u32 %v5431, 7
        %v5433 = vsub.s32 %v5430, %v5432
        %v5434 = vrot.slane %v5426, %v5433
        %v5436 = vunpack.c.l.s4 1934713408
        %v5437 = vunpack.c.0.s8 %v5436
        %v5438 = vlaneseq
        %v5439 = vshrl.u32 %v5438, 7
        %v5440 = vsub.s32 %v5437, %v5439
        %v5441 = vrot.slane %v5427, %v5440
        %v5442 = vcombine.low %v5409, %v5425
        %v5443 = vcombine.high %v5409, %v5425
        %v5445 = vunpack.c.l.s4 1934713408
        %v5446 = vunpack.c.0.s8 %v5445
        %v5447 = vlaneseq
        %v5448 = vshrl.u32 %v5447, 7
        %v5449 = vsub.s32 %v5446, %v5448
        %v5450 = vrot.slane %v5442, %v5449
        %v5452 = vunpack.c.l.s4 1934713408
        %v5453 = vunpack.c.0.s8 %v5452
        %v5454 = vlaneseq
        %v5455 = vshrl.u32 %v5454, 7
        %v5456 = vsub.s32 %v5453, %v5455
        %v5457 = vrot.slane %v5443, %v5456
        %v5458 = vcombine.high %v5434, 0.0
        %v5459 = vcombine.high %v5441, 0.0
        %v5460 = vcombine.high %v5450, 0.0
        %v5461 = vcombine.high %v5457, 0.0
        %5463 = vrot.lane.b32.xlu0 %v5458, 8
        %v5464 = vpop.permute.xlu0 %5463
        %5467 = vrot.lane.b32.xlu0 %v5441, 16
        %v5468 = vpop.permute.xlu0 %5467
        %5471 = vrot.lane.b32.xlu0 %v5459, 24
        %v5472 = vpop.permute.xlu0 %5471
        %5475 = vrot.lane.b32.xlu0 %v5450, 32
        %v5476 = vpop.permute.xlu0 %5475
        %5479 = vrot.lane.b32.xlu0 %v5460, 40
        %v5480 = vpop.permute.xlu0 %5479
        %5483 = vrot.lane.b32.xlu0 %v5457, 48
        %v5484 = vpop.permute.xlu0 %5483
        %5487 = vrot.lane.b32.xlu0 %v5461, 56
        %v5488 = vpop.permute.xlu0 %5487
        %v5490 = vsel %vm4567, %v5434, %v5464
        %v5491 = vsel %vm4569, %v5490, %v5468
        %v5492 = vsel %vm4571, %v5491, %v5472
        %v5493 = vsel %vm4573, %v5492, %v5476
        %v5494 = vsel %vm4575, %v5493, %v5480
        %v5495 = vsel %vm4577, %v5494, %v5484
        %v5496 = vsel %vm4579, %v5495, %v5488
        %v5498 = vrot.slane %v4699, 4
        %v5501 = vrot.slane %v4921, 4
        %v5504 = vrot.slane %v5155, 4
        %v5507 = vrot.slane %v5381, 4
        %vm5509 = vcmask 1043456
        %v5510 = vsel %vm5509, %v4580, %v5498
        %v5511 = vsel %vm5509, %v4814, %v5501
        %v5512 = vsel %vm5509, %v5040, %v5504
        %v5513 = vsel %vm5509, %v5262, %v5507
        %v5514 = vpack.c.bf16 %v5511, %v5510
        %v5515 = vpack.c.bf16 %v5513, %v5512
        %v5516 = vpack.c.bf16 %v5496, %v5496
        %v5517 = vld [vmem:[%s2] sm:$0xf]
        %vm5518 = vcmask 293888
        %v5520 = vsel %vm5518, %v5517, 0
        %vm5522 = vcmask 1041408
        %v5524 = vsel %vm5522, %v5516, 0
        %5526 = vmatprep.subr.bf16.mxu0 0
        %5527 = vmatpush1.bf16.msra.mxu0 %v5514
        %5528 = vmatprep.subr.bf16.mxu0 0
        %5529 = vmatpush1.bf16.msra.mxu0 %v5515
        %5530 = vmatprep.subr.bf16.mxu0 0
        %5531 = vmatpush1.bf16.msra.mxu0 %v5524
        %5532 = vmatprep.subr.bf16.mxu0 0
        %5533 = vmatpush1.bf16.msra.mxu0 0
        %5534 = vmatprep.subr.bf16.mxu0 0
        %5535 = vmatpush1.bf16.msra.mxu0 0
        %5536 = vmatprep.subr.bf16.mxu0 0
        %5537 = vmatpush1.bf16.msra.mxu0 0
        %5538 = vmatprep.subr.bf16.mxu0 0
        %5539 = vmatpush1.bf16.msra.mxu0 0
        %5540 = vmatprep.subr.bf16.mxu0 0
        %5541 = vmatpush1.bf16.msra.mxu0 0
        %5542 = vmatprep.subr.bf16.mxu0 0
        %5543 = vmatpush1.bf16.msra.mxu0 0
        %5544 = vmatprep.subr.bf16.mxu0 0
        %5545 = vmatpush1.bf16.msra.mxu0 0
        %5546 = vmatprep.subr.bf16.mxu0 0
        %5547 = vmatpush1.bf16.msra.mxu0 0
        %5548 = vmatprep.subr.bf16.mxu0 0
        %5549 = vmatpush1.bf16.msra.mxu0 0
        %5550 = vmatprep.subr.bf16.mxu0 0
        %5551 = vmatpush1.bf16.msra.mxu0 0
        %5552 = vmatprep.subr.bf16.mxu0 0
        %5553 = vmatpush1.bf16.msra.mxu0 0
        %5554 = vmatprep.subr.bf16.mxu0 0
        %5555 = vmatpush1.bf16.msra.mxu0 0
        %5556 = vmatprep.subr.bf16.mxu0 0
        %5557 = vmatpush1.bf16.msra.mxu0 0
        %5558 = vmatprep.mubr.bf16.mxu0 0
        %5559 = vmatmul.mubr.bf16.gmra.mrb[0].mxu0 %v5520
        %v5560 = vpop.f32.mrb[0].mxu0
        %v5561 = vadd.f32 0.0, %v5560
        %v5562 = vpop.f32.mrb[0].mxu0
        %v5563 = vpop.f32.mrb[0].mxu0
        %v5564 = vpop.f32.mrb[0].mxu0
        %5565 = vdwg.mxu0
        %vm5566 = vcmask 523264
        %v5567 = vsel %vm5566, %v5561, 0.0
        %5568 = vadd.xlane.f32.xlu0 %v5567
        %v5569 = vpop.xlane.xlu0 %5568
        %v5570 = vrot.slane %v5569, 4
        %v5571 = vadd.f32 %v5569, %v5570
        %v5572 = vrot.slane %v5571, 2
        %v5573 = vadd.f32 %v5571, %v5572
        %v5574 = vrot.slane %v5573, 1
        %v5575 = vadd.f32 %v5573, %v5574
        %s5576 = vtos %v5575
        %v5577 = vstv %s5576
        %v5578 = vmul.f32 %v5561, %v5561
        %v5579 = vsel %vm5566, %v5578, 0.0
        %5580 = vadd.xlane.f32.xlu0 %v5579
        %v5581 = vpop.xlane.xlu0 %5580
        %v5582 = vrot.slane %v5581, 4
        %v5583 = vadd.f32 %v5581, %v5582
        %v5584 = vrot.slane %v5583, 2
        %v5585 = vadd.f32 %v5583, %v5584
        %v5586 = vrot.slane %v5585, 1
        %v5587 = vadd.f32 %v5585, %v5586
        %s5588 = vtos %v5587
        %v5589 = vstv %s5588
        %v5590 = vmul.f32 %v5577, 0.001953125
        %v5591 = vmul.f32 %v5589, 0.001953125
        %v5592 = vmul.f32 %v5590, %v5590
        %v5593 = vsub.f32 %v5591, %v5592
        %v5594 = vsub.f32 %v5561, %v5590
        %v5595 = vadd.f32 %v5593, 1e-05
        %v5596 = vrsqrt.pop %v5595
        %v5597 = vmul.f32 %v5594, %v5596
        %v5598 = vld [vmem:[%s4] sm:$0xff]
        %5600 = vset.pattern.permute.xlu0 0
        %5601 = vperm.xlu0 %5600, %v5598
        %v5602 = vpop.permute.xlu0 %5601
        %v5604 = vmul.f32 %v5597, %v5602
        %v5605 = vld [vmem:[%s5] sm:$0xff]
        %5607 = vset.pattern.permute.xlu0 0
        %5608 = vperm.xlu0 %5607, %v5605
        %v5609 = vpop.permute.xlu0 %5608
        %v5611 = vadd.f32 %v5604, %v5609
        %v5612 = vmul.f32 %v5611, 0.5
        %v5613 = vmul.f32 %v5611, 0.70710677
        %v5614 = verf.f32.pop %v5613
        %v5615 = vadd.f32 %v5614, 1.0
        %v5616 = vmul.f32 %v5612, %v5615
        %5618 = vrot.lane.b32.xlu0 %v5616, 120
        %v5619 = vpop.permute.xlu0 %5618
        %5621 = vrot.lane.b32.xlu0 %v5616, 112
        %v5622 = vpop.permute.xlu0 %5621
        %5624 = vrot.lane.b32.xlu0 %v5616, 104
        %v5625 = vpop.permute.xlu0 %5624
        %5627 = vrot.lane.b32.xlu0 %v5616, 96
        %v5628 = vpop.permute.xlu0 %5627
        %5630 = vrot.lane.b32.xlu0 %v5616, 88
        %v5631 = vpop.permute.xlu0 %5630
        %5633 = vrot.lane.b32.xlu0 %v5616, 80
        %v5634 = vpop.permute.xlu0 %5633
        %5636 = vrot.lane.b32.xlu0 %v5616, 72
        %v5637 = vpop.permute.xlu0 %5636
        %v5639 = vcombine.low %v5616, %v5622
        %v5640 = vcombine.high %v5616, %v5622
        %v5642 = vunpack.c.l.s4 1983009808
        %v5643 = vunpack.c.0.s8 %v5642
        %v5644 = vlaneseq
        %v5645 = vshrl.u32 %v5644, 7
        %v5646 = vsub.s32 %v5643, %v5645
        %v5647 = vrot.slane %v5639, %v5646
        %v5649 = vunpack.c.l.s4 1983009808
        %v5650 = vunpack.c.0.s8 %v5649
        %v5651 = vlaneseq
        %v5652 = vshrl.u32 %v5651, 7
        %v5653 = vsub.s32 %v5650, %v5652
        %v5654 = vrot.slane %v5640, %v5653
        %v5655 = vcombine.low %v5619, %v5625
        %v5656 = vcombine.high %v5619, %v5625
        %v5658 = vunpack.c.l.s4 1983009808
        %v5659 = vunpack.c.0.s8 %v5658
        %v5660 = vlaneseq
        %v5661 = vshrl.u32 %v5660, 7
        %v5662 = vsub.s32 %v5659, %v5661
        %v5663 = vrot.slane %v5655, %v5662
        %v5665 = vunpack.c.l.s4 1983009808
        %v5666 = vunpack.c.0.s8 %v5665
        %v5667 = vlaneseq
        %v5668 = vshrl.u32 %v5667, 7
        %v5669 = vsub.s32 %v5666, %v5668
        %v5670 = vrot.slane %v5656, %v5669
        %v5671 = vcombine.low %v5628, %v5634
        %v5672 = vcombine.high %v5628, %v5634
        %v5674 = vunpack.c.l.s4 1983009808
        %v5675 = vunpack.c.0.s8 %v5674
        %v5676 = vlaneseq
        %v5677 = vshrl.u32 %v5676, 7
        %v5678 = vsub.s32 %v5675, %v5677
        %v5679 = vrot.slane %v5671, %v5678
        %v5681 = vunpack.c.l.s4 1983009808
        %v5682 = vunpack.c.0.s8 %v5681
        %v5683 = vlaneseq
        %v5684 = vshrl.u32 %v5683, 7
        %v5685 = vsub.s32 %v5682, %v5684
        %v5686 = vrot.slane %v5672, %v5685
        %v5687 = vcombine.low %v5631, %v5637
        %v5688 = vcombine.high %v5631, %v5637
        %v5690 = vunpack.c.l.s4 1983009808
        %v5691 = vunpack.c.0.s8 %v5690
        %v5692 = vlaneseq
        %v5693 = vshrl.u32 %v5692, 7
        %v5694 = vsub.s32 %v5691, %v5693
        %v5695 = vrot.slane %v5687, %v5694
        %v5697 = vunpack.c.l.s4 1983009808
        %v5698 = vunpack.c.0.s8 %v5697
        %v5699 = vlaneseq
        %v5700 = vshrl.u32 %v5699, 7
        %v5701 = vsub.s32 %v5698, %v5700
        %v5702 = vrot.slane %v5688, %v5701
        %v5703 = vcombine.low %v5647, %v5663
        %v5704 = vcombine.high %v5647, %v5663
        %v5706 = vunpack.c.l.s4 1934713408
        %v5707 = vunpack.c.0.s8 %v5706
        %v5708 = vlaneseq
        %v5709 = vshrl.u32 %v5708, 7
        %v5710 = vsub.s32 %v5707, %v5709
        %v5711 = vrot.slane %v5703, %v5710
        %v5713 = vunpack.c.l.s4 1934713408
        %v5714 = vunpack.c.0.s8 %v5713
        %v5715 = vlaneseq
        %v5716 = vshrl.u32 %v5715, 7
        %v5717 = vsub.s32 %v5714, %v5716
        %v5718 = vrot.slane %v5704, %v5717
        %v5719 = vcombine.low %v5654, %v5670
        %v5720 = vcombine.high %v5654, %v5670
        %v5722 = vunpack.c.l.s4 1934713408
        %v5723 = vunpack.c.0.s8 %v5722
        %v5724 = vlaneseq
        %v5725 = vshrl.u32 %v5724, 7
        %v5726 = vsub.s32 %v5723, %v5725
        %v5727 = vrot.slane %v5719, %v5726
        %v5729 = vunpack.c.l.s4 1934713408
        %v5730 = vunpack.c.0.s8 %v5729
        %v5731 = vlaneseq
        %v5732 = vshrl.u32 %v5731, 7
        %v5733 = vsub.s32 %v5730, %v5732
        %v5734 = vrot.slane %v5720, %v5733
        %v5735 = vcombine.low %v5679, %v5695
        %v5736 = vcombine.high %v5679, %v5695
        %v5738 = vunpack.c.l.s4 1934713408
        %v5739 = vunpack.c.0.s8 %v5738
        %v5740 = vlaneseq
        %v5741 = vshrl.u32 %v5740, 7
        %v5742 = vsub.s32 %v5739, %v5741
        %v5743 = vrot.slane %v5735, %v5742
        %v5745 = vunpack.c.l.s4 1934713408
        %v5746 = vunpack.c.0.s8 %v5745
        %v5747 = vlaneseq
        %v5748 = vshrl.u32 %v5747, 7
        %v5749 = vsub.s32 %v5746, %v5748
        %v5750 = vrot.slane %v5736, %v5749
        %v5751 = vcombine.low %v5686, %v5702
        %v5752 = vcombine.high %v5686, %v5702
        %v5754 = vunpack.c.l.s4 1934713408
        %v5755 = vunpack.c.0.s8 %v5754
        %v5756 = vlaneseq
        %v5757 = vshrl.u32 %v5756, 7
        %v5758 = vsub.s32 %v5755, %v5757
        %v5759 = vrot.slane %v5751, %v5758
        %v5761 = vunpack.c.l.s4 1934713408
        %v5762 = vunpack.c.0.s8 %v5761
        %v5763 = vlaneseq
        %v5764 = vshrl.u32 %v5763, 7
        %v5765 = vsub.s32 %v5762, %v5764
        %v5766 = vrot.slane %v5752, %v5765
        %v5767 = vcombine.low %v5711, %v5743
        %v5768 = vcombine.high %v5711, %v5743
        %v5769 = vcombine.low %v5718, %v5750
        %v5770 = vcombine.high %v5718, %v5750
        %v5771 = vcombine.low %v5727, %v5759
        %v5772 = vcombine.high %v5727, %v5759
        %v5773 = vcombine.low %v5734, %v5766
        %v5774 = vcombine.high %v5734, %v5766
        %5783 = vrot.lane.b32.xlu0 %v5767, 1
        %v5784 = vpop.permute.xlu0 %5783
        %5785 = vrot.lane.b32.xlu0 %v5768, 1
        %v5786 = vpop.permute.xlu0 %5785
        %5787 = vrot.lane.b32.xlu0 %v5769, 1
        %v5788 = vpop.permute.xlu0 %5787
        %5789 = vrot.lane.b32.xlu0 %v5770, 1
        %v5790 = vpop.permute.xlu0 %5789
        %5791 = vrot.lane.b32.xlu0 %v5771, 1
        %v5792 = vpop.permute.xlu0 %5791
        %5793 = vrot.lane.b32.xlu0 %v5772, 1
        %v5794 = vpop.permute.xlu0 %5793
        %5795 = vrot.lane.b32.xlu0 %v5773, 1
        %v5796 = vpop.permute.xlu0 %5795
        %5797 = vrot.lane.b32.xlu0 %v5774, 1
        %v5798 = vpop.permute.xlu0 %5797
        %5807 = vst.msk [vmem:[#allocation3 + $0x1] sm:$0xff] %vm4462, %v5784
        %5808 = vst.msk [vmem:[#allocation3 + $0x11] sm:$0xff] %vm4462, %v5786
        %5809 = vst.msk [vmem:[#allocation3 + $0x21] sm:$0xff] %vm4462, %v5788
        %5810 = vst.msk [vmem:[#allocation3 + $0x31] sm:$0xff] %vm4462, %v5790
        %5811 = vst.msk [vmem:[#allocation3 + $0x41] sm:$0xff] %vm4462, %v5792
        %5812 = vst.msk [vmem:[#allocation3 + $0x51] sm:$0xff] %vm4462, %v5794
        %5813 = vst.msk [vmem:[#allocation3 + $0x61] sm:$0xff] %vm4462, %v5796
        %5814 = vst.msk [vmem:[#allocation3 + $0x71] sm:$0xff] %vm4462, %v5798
        %v5815 = vld [vmem:[#allocation3] sm:$0xff]
        %v5816 = vld [vmem:[#allocation3 + $0x10] sm:$0xff]
        %v5817 = vld [vmem:[#allocation3 + $0x20] sm:$0xff]
        %v5818 = vld [vmem:[#allocation3 + $0x30] sm:$0xff]
        %v5819 = vld [vmem:[#allocation3 + $0x40] sm:$0xff]
        %v5820 = vld [vmem:[#allocation3 + $0x50] sm:$0xff]
        %v5821 = vld [vmem:[#allocation3 + $0x60] sm:$0xff]
        %v5822 = vld [vmem:[#allocation3 + $0x70] sm:$0xff]
        %v5823 = vcombine.low %v5815, %v5817
        %v5824 = vcombine.high %v5815, %v5817
        %v5826 = vunpack.c.l.s4 1983009808
        %v5827 = vunpack.c.0.s8 %v5826
        %v5828 = vlaneseq
        %v5829 = vshrl.u32 %v5828, 7
        %v5830 = vsub.s32 %v5827, %v5829
        %v5831 = vrot.slane %v5823, %v5830
        %v5833 = vunpack.c.l.s4 1983009808
        %v5834 = vunpack.c.0.s8 %v5833
        %v5835 = vlaneseq
        %v5836 = vshrl.u32 %v5835, 7
        %v5837 = vsub.s32 %v5834, %v5836
        %v5838 = vrot.slane %v5824, %v5837
        %v5839 = vcombine.low %v5816, %v5818
        %v5840 = vcombine.high %v5816, %v5818
        %v5842 = vunpack.c.l.s4 1983009808
        %v5843 = vunpack.c.0.s8 %v5842
        %v5844 = vlaneseq
        %v5845 = vshrl.u32 %v5844, 7
        %v5846 = vsub.s32 %v5843, %v5845
        %v5847 = vrot.slane %v5839, %v5846
        %v5849 = vunpack.c.l.s4 1983009808
        %v5850 = vunpack.c.0.s8 %v5849
        %v5851 = vlaneseq
        %v5852 = vshrl.u32 %v5851, 7
        %v5853 = vsub.s32 %v5850, %v5852
        %v5854 = vrot.slane %v5840, %v5853
        %v5855 = vcombine.low %v5819, %v5821
        %v5856 = vcombine.high %v5819, %v5821
        %v5858 = vunpack.c.l.s4 1983009808
        %v5859 = vunpack.c.0.s8 %v5858
        %v5860 = vlaneseq
        %v5861 = vshrl.u32 %v5860, 7
        %v5862 = vsub.s32 %v5859, %v5861
        %v5863 = vrot.slane %v5855, %v5862
        %v5865 = vunpack.c.l.s4 1983009808
        %v5866 = vunpack.c.0.s8 %v5865
        %v5867 = vlaneseq
        %v5868 = vshrl.u32 %v5867, 7
        %v5869 = vsub.s32 %v5866, %v5868
        %v5870 = vrot.slane %v5856, %v5869
        %v5871 = vcombine.low %v5820, %v5822
        %v5872 = vcombine.high %v5820, %v5822
        %v5874 = vunpack.c.l.s4 1983009808
        %v5875 = vunpack.c.0.s8 %v5874
        %v5876 = vlaneseq
        %v5877 = vshrl.u32 %v5876, 7
        %v5878 = vsub.s32 %v5875, %v5877
        %v5879 = vrot.slane %v5871, %v5878
        %v5881 = vunpack.c.l.s4 1983009808
        %v5882 = vunpack.c.0.s8 %v5881
        %v5883 = vlaneseq
        %v5884 = vshrl.u32 %v5883, 7
        %v5885 = vsub.s32 %v5882, %v5884
        %v5886 = vrot.slane %v5872, %v5885
        %v5887 = vcombine.low %v5831, %v5847
        %v5888 = vcombine.high %v5831, %v5847
        %v5890 = vunpack.c.l.s4 1934713408
        %v5891 = vunpack.c.0.s8 %v5890
        %v5892 = vlaneseq
        %v5893 = vshrl.u32 %v5892, 7
        %v5894 = vsub.s32 %v5891, %v5893
        %v5895 = vrot.slane %v5887, %v5894
        %v5897 = vunpack.c.l.s4 1934713408
        %v5898 = vunpack.c.0.s8 %v5897
        %v5899 = vlaneseq
        %v5900 = vshrl.u32 %v5899, 7
        %v5901 = vsub.s32 %v5898, %v5900
        %v5902 = vrot.slane %v5888, %v5901
        %v5903 = vcombine.low %v5838, %v5854
        %v5904 = vcombine.high %v5838, %v5854
        %v5906 = vunpack.c.l.s4 1934713408
        %v5907 = vunpack.c.0.s8 %v5906
        %v5908 = vlaneseq
        %v5909 = vshrl.u32 %v5908, 7
        %v5910 = vsub.s32 %v5907, %v5909
        %v5911 = vrot.slane %v5903, %v5910
        %v5913 = vunpack.c.l.s4 1934713408
        %v5914 = vunpack.c.0.s8 %v5913
        %v5915 = vlaneseq
        %v5916 = vshrl.u32 %v5915, 7
        %v5917 = vsub.s32 %v5914, %v5916
        %v5918 = vrot.slane %v5904, %v5917
        %v5919 = vcombine.low %v5863, %v5879
        %v5920 = vcombine.high %v5863, %v5879
        %v5922 = vunpack.c.l.s4 1934713408
        %v5923 = vunpack.c.0.s8 %v5922
        %v5924 = vlaneseq
        %v5925 = vshrl.u32 %v5924, 7
        %v5926 = vsub.s32 %v5923, %v5925
        %v5927 = vrot.slane %v5919, %v5926
        %v5929 = vunpack.c.l.s4 1934713408
        %v5930 = vunpack.c.0.s8 %v5929
        %v5931 = vlaneseq
        %v5932 = vshrl.u32 %v5931, 7
        %v5933 = vsub.s32 %v5930, %v5932
        %v5934 = vrot.slane %v5920, %v5933
        %v5935 = vcombine.low %v5870, %v5886
        %v5936 = vcombine.high %v5870, %v5886
        %v5938 = vunpack.c.l.s4 1934713408
        %v5939 = vunpack.c.0.s8 %v5938
        %v5940 = vlaneseq
        %v5941 = vshrl.u32 %v5940, 7
        %v5942 = vsub.s32 %v5939, %v5941
        %v5943 = vrot.slane %v5935, %v5942
        %v5945 = vunpack.c.l.s4 1934713408
        %v5946 = vunpack.c.0.s8 %v5945
        %v5947 = vlaneseq
        %v5948 = vshrl.u32 %v5947, 7
        %v5949 = vsub.s32 %v5946, %v5948
        %v5950 = vrot.slane %v5936, %v5949
        %v5951 = vcombine.low %v5895, %v5927
        %v5952 = vcombine.high %v5895, %v5927
        %v5953 = vcombine.low %v5902, %v5934
        %v5954 = vcombine.high %v5902, %v5934
        %v5955 = vcombine.low %v5911, %v5943
        %v5956 = vcombine.high %v5911, %v5943
        %v5957 = vcombine.low %v5918, %v5950
        %v5958 = vcombine.high %v5918, %v5950
        %5960 = vrot.lane.b32.xlu0 %v5952, 8
        %v5961 = vpop.permute.xlu0 %5960
        %5964 = vrot.lane.b32.xlu0 %v5953, 16
        %v5965 = vpop.permute.xlu0 %5964
        %5968 = vrot.lane.b32.xlu0 %v5954, 24
        %v5969 = vpop.permute.xlu0 %5968
        %5972 = vrot.lane.b32.xlu0 %v5955, 32
        %v5973 = vpop.permute.xlu0 %5972
        %5976 = vrot.lane.b32.xlu0 %v5956, 40
        %v5977 = vpop.permute.xlu0 %5976
        %5980 = vrot.lane.b32.xlu0 %v5957, 48
        %v5981 = vpop.permute.xlu0 %5980
        %5984 = vrot.lane.b32.xlu0 %v5958, 56
        %v5985 = vpop.permute.xlu0 %5984
        %v5987 = vsel %vm4567, %v5951, %v5961
        %v5988 = vsel %vm4569, %v5987, %v5965
        %v5989 = vsel %vm4571, %v5988, %v5969
        %v5990 = vsel %vm4573, %v5989, %v5973
        %v5991 = vsel %vm4575, %v5990, %v5977
        %v5992 = vsel %vm4577, %v5991, %v5981
        %v5993 = vsel %vm4579, %v5992, %v5985
        %6002 = vrot.lane.b32.xlu0 %v5815, 127
        %v6003 = vpop.permute.xlu0 %6002
        %6004 = vrot.lane.b32.xlu0 %v5816, 127
        %v6005 = vpop.permute.xlu0 %6004
        %6006 = vrot.lane.b32.xlu0 %v5817, 127
        %v6007 = vpop.permute.xlu0 %6006
        %6008 = vrot.lane.b32.xlu0 %v5818, 127
        %v6009 = vpop.permute.xlu0 %6008
        %6010 = vrot.lane.b32.xlu0 %v5819, 127
        %v6011 = vpop.permute.xlu0 %6010
        %6012 = vrot.lane.b32.xlu0 %v5820, 127
        %v6013 = vpop.permute.xlu0 %6012
        %6014 = vrot.lane.b32.xlu0 %v5821, 127
        %v6015 = vpop.permute.xlu0 %6014
        %6016 = vrot.lane.b32.xlu0 %v5822, 127
        %v6017 = vpop.permute.xlu0 %6016
        %v6026 = vcombine.low %v6003, %v6007
        %v6027 = vcombine.high %v6003, %v6007
        %v6029 = vunpack.c.l.s4 1983009808
        %v6030 = vunpack.c.0.s8 %v6029
        %v6031 = vlaneseq
        %v6032 = vshrl.u32 %v6031, 7
        %v6033 = vsub.s32 %v6030, %v6032
        %v6034 = vrot.slane %v6026, %v6033
        %v6036 = vunpack.c.l.s4 1983009808
        %v6037 = vunpack.c.0.s8 %v6036
        %v6038 = vlaneseq
        %v6039 = vshrl.u32 %v6038, 7
        %v6040 = vsub.s32 %v6037, %v6039
        %v6041 = vrot.slane %v6027, %v6040
        %v6042 = vcombine.low %v6005, %v6009
        %v6043 = vcombine.high %v6005, %v6009
        %v6045 = vunpack.c.l.s4 1983009808
        %v6046 = vunpack.c.0.s8 %v6045
        %v6047 = vlaneseq
        %v6048 = vshrl.u32 %v6047, 7
        %v6049 = vsub.s32 %v6046, %v6048
        %v6050 = vrot.slane %v6042, %v6049
        %v6052 = vunpack.c.l.s4 1983009808
        %v6053 = vunpack.c.0.s8 %v6052
        %v6054 = vlaneseq
        %v6055 = vshrl.u32 %v6054, 7
        %v6056 = vsub.s32 %v6053, %v6055
        %v6057 = vrot.slane %v6043, %v6056
        %v6058 = vcombine.low %v6011, %v6015
        %v6059 = vcombine.high %v6011, %v6015
        %v6061 = vunpack.c.l.s4 1983009808
        %v6062 = vunpack.c.0.s8 %v6061
        %v6063 = vlaneseq
        %v6064 = vshrl.u32 %v6063, 7
        %v6065 = vsub.s32 %v6062, %v6064
        %v6066 = vrot.slane %v6058, %v6065
        %v6068 = vunpack.c.l.s4 1983009808
        %v6069 = vunpack.c.0.s8 %v6068
        %v6070 = vlaneseq
        %v6071 = vshrl.u32 %v6070, 7
        %v6072 = vsub.s32 %v6069, %v6071
        %v6073 = vrot.slane %v6059, %v6072
        %v6074 = vcombine.low %v6013, %v6017
        %v6075 = vcombine.high %v6013, %v6017
        %v6077 = vunpack.c.l.s4 1983009808
        %v6078 = vunpack.c.0.s8 %v6077
        %v6079 = vlaneseq
        %v6080 = vshrl.u32 %v6079, 7
        %v6081 = vsub.s32 %v6078, %v6080
        %v6082 = vrot.slane %v6074, %v6081
        %v6084 = vunpack.c.l.s4 1983009808
        %v6085 = vunpack.c.0.s8 %v6084
        %v6086 = vlaneseq
        %v6087 = vshrl.u32 %v6086, 7
        %v6088 = vsub.s32 %v6085, %v6087
        %v6089 = vrot.slane %v6075, %v6088
        %v6090 = vcombine.low %v6034, %v6050
        %v6091 = vcombine.high %v6034, %v6050
        %v6093 = vunpack.c.l.s4 1934713408
        %v6094 = vunpack.c.0.s8 %v6093
        %v6095 = vlaneseq
        %v6096 = vshrl.u32 %v6095, 7
        %v6097 = vsub.s32 %v6094, %v6096
        %v6098 = vrot.slane %v6090, %v6097
        %v6100 = vunpack.c.l.s4 1934713408
        %v6101 = vunpack.c.0.s8 %v6100
        %v6102 = vlaneseq
        %v6103 = vshrl.u32 %v6102, 7
        %v6104 = vsub.s32 %v6101, %v6103
        %v6105 = vrot.slane %v6091, %v6104
        %v6106 = vcombine.low %v6041, %v6057
        %v6107 = vcombine.high %v6041, %v6057
        %v6109 = vunpack.c.l.s4 1934713408
        %v6110 = vunpack.c.0.s8 %v6109
        %v6111 = vlaneseq
        %v6112 = vshrl.u32 %v6111, 7
        %v6113 = vsub.s32 %v6110, %v6112
        %v6114 = vrot.slane %v6106, %v6113
        %v6116 = vunpack.c.l.s4 1934713408
        %v6117 = vunpack.c.0.s8 %v6116
        %v6118 = vlaneseq
        %v6119 = vshrl.u32 %v6118, 7
        %v6120 = vsub.s32 %v6117, %v6119
        %v6121 = vrot.slane %v6107, %v6120
        %v6122 = vcombine.low %v6066, %v6082
        %v6123 = vcombine.high %v6066, %v6082
        %v6125 = vunpack.c.l.s4 1934713408
        %v6126 = vunpack.c.0.s8 %v6125
        %v6127 = vlaneseq
        %v6128 = vshrl.u32 %v6127, 7
        %v6129 = vsub.s32 %v6126, %v6128
        %v6130 = vrot.slane %v6122, %v6129
        %v6132 = vunpack.c.l.s4 1934713408
        %v6133 = vunpack.c.0.s8 %v6132
        %v6134 = vlaneseq
        %v6135 = vshrl.u32 %v6134, 7
        %v6136 = vsub.s32 %v6133, %v6135
        %v6137 = vrot.slane %v6123, %v6136
        %v6138 = vcombine.low %v6073, %v6089
        %v6139 = vcombine.high %v6073, %v6089
        %v6141 = vunpack.c.l.s4 1934713408
        %v6142 = vunpack.c.0.s8 %v6141
        %v6143 = vlaneseq
        %v6144 = vshrl.u32 %v6143, 7
        %v6145 = vsub.s32 %v6142, %v6144
        %v6146 = vrot.slane %v6138, %v6145
        %v6148 = vunpack.c.l.s4 1934713408
        %v6149 = vunpack.c.0.s8 %v6148
        %v6150 = vlaneseq
        %v6151 = vshrl.u32 %v6150, 7
        %v6152 = vsub.s32 %v6149, %v6151
        %v6153 = vrot.slane %v6139, %v6152
        %v6154 = vcombine.low %v6098, %v6130
        %v6155 = vcombine.high %v6098, %v6130
        %v6156 = vcombine.low %v6105, %v6137
        %v6157 = vcombine.high %v6105, %v6137
        %v6158 = vcombine.low %v6114, %v6146
        %v6159 = vcombine.high %v6114, %v6146
        %v6160 = vcombine.low %v6121, %v6153
        %v6161 = vcombine.high %v6121, %v6153
        %6163 = vrot.lane.b32.xlu0 %v6155, 8
        %v6164 = vpop.permute.xlu0 %6163
        %6167 = vrot.lane.b32.xlu0 %v6156, 16
        %v6168 = vpop.permute.xlu0 %6167
        %6171 = vrot.lane.b32.xlu0 %v6157, 24
        %v6172 = vpop.permute.xlu0 %6171
        %6175 = vrot.lane.b32.xlu0 %v6158, 32
        %v6176 = vpop.permute.xlu0 %6175
        %6179 = vrot.lane.b32.xlu0 %v6159, 40
        %v6180 = vpop.permute.xlu0 %6179
        %6183 = vrot.lane.b32.xlu0 %v6160, 48
        %v6184 = vpop.permute.xlu0 %6183
        %6187 = vrot.lane.b32.xlu0 %v6161, 56
        %v6188 = vpop.permute.xlu0 %6187
        %v6190 = vsel %vm4567, %v6154, %v6164
        %v6191 = vsel %vm4569, %v6190, %v6168
        %v6192 = vsel %vm4571, %v6191, %v6172
        %v6193 = vsel %vm4573, %v6192, %v6176
        %v6194 = vsel %vm4575, %v6193, %v6180
        %v6195 = vsel %vm4577, %v6194, %v6184
        %v6196 = vsel %vm4579, %v6195, %v6188
        %6197 = vrot.lane.b32.xlu0 %v5815, 126
        %v6198 = vpop.permute.xlu0 %6197
        %6199 = vrot.lane.b32.xlu0 %v5816, 126
        %v6200 = vpop.permute.xlu0 %6199
        %6201 = vrot.lane.b32.xlu0 %v5817, 126
        %v6202 = vpop.permute.xlu0 %6201
        %6203 = vrot.lane.b32.xlu0 %v5818, 126
        %v6204 = vpop.permute.xlu0 %6203
        %6205 = vrot.lane.b32.xlu0 %v5819, 126
        %v6206 = vpop.permute.xlu0 %6205
        %6207 = vrot.lane.b32.xlu0 %v5820, 126
        %v6208 = vpop.permute.xlu0 %6207
        %6209 = vrot.lane.b32.xlu0 %v5821, 126
        %v6210 = vpop.permute.xlu0 %6209
        %6211 = vrot.lane.b32.xlu0 %v5822, 126
        %v6212 = vpop.permute.xlu0 %6211
        %v6221 = vcombine.low %v6198, %v6202
        %v6222 = vcombine.high %v6198, %v6202
        %v6224 = vunpack.c.l.s4 1983009808
        %v6225 = vunpack.c.0.s8 %v6224
        %v6226 = vlaneseq
        %v6227 = vshrl.u32 %v6226, 7
        %v6228 = vsub.s32 %v6225, %v6227
        %v6229 = vrot.slane %v6221, %v6228
        %v6231 = vunpack.c.l.s4 1983009808
        %v6232 = vunpack.c.0.s8 %v6231
        %v6233 = vlaneseq
        %v6234 = vshrl.u32 %v6233, 7
        %v6235 = vsub.s32 %v6232, %v6234
        %v6236 = vrot.slane %v6222, %v6235
        %v6237 = vcombine.low %v6200, %v6204
        %v6238 = vcombine.high %v6200, %v6204
        %v6240 = vunpack.c.l.s4 1983009808
        %v6241 = vunpack.c.0.s8 %v6240
        %v6242 = vlaneseq
        %v6243 = vshrl.u32 %v6242, 7
        %v6244 = vsub.s32 %v6241, %v6243
        %v6245 = vrot.slane %v6237, %v6244
        %v6247 = vunpack.c.l.s4 1983009808
        %v6248 = vunpack.c.0.s8 %v6247
        %v6249 = vlaneseq
        %v6250 = vshrl.u32 %v6249, 7
        %v6251 = vsub.s32 %v6248, %v6250
        %v6252 = vrot.slane %v6238, %v6251
        %v6253 = vcombine.low %v6206, %v6210
        %v6254 = vcombine.high %v6206, %v6210
        %v6256 = vunpack.c.l.s4 1983009808
        %v6257 = vunpack.c.0.s8 %v6256
        %v6258 = vlaneseq
        %v6259 = vshrl.u32 %v6258, 7
        %v6260 = vsub.s32 %v6257, %v6259
        %v6261 = vrot.slane %v6253, %v6260
        %v6263 = vunpack.c.l.s4 1983009808
        %v6264 = vunpack.c.0.s8 %v6263
        %v6265 = vlaneseq
        %v6266 = vshrl.u32 %v6265, 7
        %v6267 = vsub.s32 %v6264, %v6266
        %v6268 = vrot.slane %v6254, %v6267
        %v6269 = vcombine.low %v6208, %v6212
        %v6270 = vcombine.high %v6208, %v6212
        %v6272 = vunpack.c.l.s4 1983009808
        %v6273 = vunpack.c.0.s8 %v6272
        %v6274 = vlaneseq
        %v6275 = vshrl.u32 %v6274, 7
        %v6276 = vsub.s32 %v6273, %v6275
        %v6277 = vrot.slane %v6269, %v6276
        %v6279 = vunpack.c.l.s4 1983009808
        %v6280 = vunpack.c.0.s8 %v6279
        %v6281 = vlaneseq
        %v6282 = vshrl.u32 %v6281, 7
        %v6283 = vsub.s32 %v6280, %v6282
        %v6284 = vrot.slane %v6270, %v6283
        %v6285 = vcombine.low %v6229, %v6245
        %v6286 = vcombine.high %v6229, %v6245
        %v6288 = vunpack.c.l.s4 1934713408
        %v6289 = vunpack.c.0.s8 %v6288
        %v6290 = vlaneseq
        %v6291 = vshrl.u32 %v6290, 7
        %v6292 = vsub.s32 %v6289, %v6291
        %v6293 = vrot.slane %v6285, %v6292
        %v6295 = vunpack.c.l.s4 1934713408
        %v6296 = vunpack.c.0.s8 %v6295
        %v6297 = vlaneseq
        %v6298 = vshrl.u32 %v6297, 7
        %v6299 = vsub.s32 %v6296, %v6298
        %v6300 = vrot.slane %v6286, %v6299
        %v6301 = vcombine.low %v6236, %v6252
        %v6302 = vcombine.high %v6236, %v6252
        %v6304 = vunpack.c.l.s4 1934713408
        %v6305 = vunpack.c.0.s8 %v6304
        %v6306 = vlaneseq
        %v6307 = vshrl.u32 %v6306, 7
        %v6308 = vsub.s32 %v6305, %v6307
        %v6309 = vrot.slane %v6301, %v6308
        %v6311 = vunpack.c.l.s4 1934713408
        %v6312 = vunpack.c.0.s8 %v6311
        %v6313 = vlaneseq
        %v6314 = vshrl.u32 %v6313, 7
        %v6315 = vsub.s32 %v6312, %v6314
        %v6316 = vrot.slane %v6302, %v6315
        %v6317 = vcombine.low %v6261, %v6277
        %v6318 = vcombine.high %v6261, %v6277
        %v6320 = vunpack.c.l.s4 1934713408
        %v6321 = vunpack.c.0.s8 %v6320
        %v6322 = vlaneseq
        %v6323 = vshrl.u32 %v6322, 7
        %v6324 = vsub.s32 %v6321, %v6323
        %v6325 = vrot.slane %v6317, %v6324
        %v6327 = vunpack.c.l.s4 1934713408
        %v6328 = vunpack.c.0.s8 %v6327
        %v6329 = vlaneseq
        %v6330 = vshrl.u32 %v6329, 7
        %v6331 = vsub.s32 %v6328, %v6330
        %v6332 = vrot.slane %v6318, %v6331
        %v6333 = vcombine.low %v6268, %v6284
        %v6334 = vcombine.high %v6268, %v6284
        %v6336 = vunpack.c.l.s4 1934713408
        %v6337 = vunpack.c.0.s8 %v6336
        %v6338 = vlaneseq
        %v6339 = vshrl.u32 %v6338, 7
        %v6340 = vsub.s32 %v6337, %v6339
        %v6341 = vrot.slane %v6333, %v6340
        %v6343 = vunpack.c.l.s4 1934713408
        %v6344 = vunpack.c.0.s8 %v6343
        %v6345 = vlaneseq
        %v6346 = vshrl.u32 %v6345, 7
        %v6347 = vsub.s32 %v6344, %v6346
        %v6348 = vrot.slane %v6334, %v6347
        %v6349 = vcombine.low %v6293, %v6325
        %v6350 = vcombine.high %v6293, %v6325
        %v6351 = vcombine.low %v6300, %v6332
        %v6352 = vcombine.high %v6300, %v6332
        %v6353 = vcombine.low %v6309, %v6341
        %v6354 = vcombine.high %v6309, %v6341
        %v6355 = vcombine.low %v6316, %v6348
        %v6356 = vcombine.high %v6316, %v6348
        %6358 = vrot.lane.b32.xlu0 %v6350, 8
        %v6359 = vpop.permute.xlu0 %6358
        %6362 = vrot.lane.b32.xlu0 %v6351, 16
        %v6363 = vpop.permute.xlu0 %6362
        %6366 = vrot.lane.b32.xlu0 %v6352, 24
        %v6367 = vpop.permute.xlu0 %6366
        %6370 = vrot.lane.b32.xlu0 %v6353, 32
        %v6371 = vpop.permute.xlu0 %6370
        %6374 = vrot.lane.b32.xlu0 %v6354, 40
        %v6375 = vpop.permute.xlu0 %6374
        %6378 = vrot.lane.b32.xlu0 %v6355, 48
        %v6379 = vpop.permute.xlu0 %6378
        %6382 = vrot.lane.b32.xlu0 %v6356, 56
        %v6383 = vpop.permute.xlu0 %6382
        %v6385 = vsel %vm4567, %v6349, %v6359
        %v6386 = vsel %vm4569, %v6385, %v6363
        %v6387 = vsel %vm4571, %v6386, %v6367
        %v6388 = vsel %vm4573, %v6387, %v6371
        %v6389 = vsel %vm4575, %v6388, %v6375
        %v6390 = vsel %vm4577, %v6389, %v6379
        %v6391 = vsel %vm4579, %v6390, %v6383
        %v6392 = vld [vmem:[#allocation3 + $0x1] sm:$0xff]
        %v6393 = vld [vmem:[#allocation3 + $0x11] sm:$0xff]
        %v6394 = vld [vmem:[#allocation3 + $0x21] sm:$0xff]
        %v6395 = vld [vmem:[#allocation3 + $0x31] sm:$0xff]
        %v6396 = vld [vmem:[#allocation3 + $0x41] sm:$0xff]
        %v6397 = vld [vmem:[#allocation3 + $0x51] sm:$0xff]
        %v6398 = vld [vmem:[#allocation3 + $0x61] sm:$0xff]
        %v6399 = vld [vmem:[#allocation3 + $0x71] sm:$0xff]
        %v6400 = vcombine.low %v6392, %v6394
        %v6401 = vcombine.high %v6392, %v6394
        %v6403 = vunpack.c.l.s4 1983009808
        %v6404 = vunpack.c.0.s8 %v6403
        %v6405 = vlaneseq
        %v6406 = vshrl.u32 %v6405, 7
        %v6407 = vsub.s32 %v6404, %v6406
        %v6408 = vrot.slane %v6400, %v6407
        %v6410 = vunpack.c.l.s4 1983009808
        %v6411 = vunpack.c.0.s8 %v6410
        %v6412 = vlaneseq
        %v6413 = vshrl.u32 %v6412, 7
        %v6414 = vsub.s32 %v6411, %v6413
        %v6415 = vrot.slane %v6401, %v6414
        %v6416 = vcombine.low %v6393, %v6395
        %v6417 = vcombine.high %v6393, %v6395
        %v6419 = vunpack.c.l.s4 1983009808
        %v6420 = vunpack.c.0.s8 %v6419
        %v6421 = vlaneseq
        %v6422 = vshrl.u32 %v6421, 7
        %v6423 = vsub.s32 %v6420, %v6422
        %v6424 = vrot.slane %v6416, %v6423
        %v6426 = vunpack.c.l.s4 1983009808
        %v6427 = vunpack.c.0.s8 %v6426
        %v6428 = vlaneseq
        %v6429 = vshrl.u32 %v6428, 7
        %v6430 = vsub.s32 %v6427, %v6429
        %v6431 = vrot.slane %v6417, %v6430
        %v6432 = vcombine.low %v6396, %v6398
        %v6433 = vcombine.high %v6396, %v6398
        %v6435 = vunpack.c.l.s4 1983009808
        %v6436 = vunpack.c.0.s8 %v6435
        %v6437 = vlaneseq
        %v6438 = vshrl.u32 %v6437, 7
        %v6439 = vsub.s32 %v6436, %v6438
        %v6440 = vrot.slane %v6432, %v6439
        %v6442 = vunpack.c.l.s4 1983009808
        %v6443 = vunpack.c.0.s8 %v6442
        %v6444 = vlaneseq
        %v6445 = vshrl.u32 %v6444, 7
        %v6446 = vsub.s32 %v6443, %v6445
        %v6447 = vrot.slane %v6433, %v6446
        %v6448 = vcombine.low %v6397, %v6399
        %v6449 = vcombine.high %v6397, %v6399
        %v6451 = vunpack.c.l.s4 1983009808
        %v6452 = vunpack.c.0.s8 %v6451
        %v6453 = vlaneseq
        %v6454 = vshrl.u32 %v6453, 7
        %v6455 = vsub.s32 %v6452, %v6454
        %v6456 = vrot.slane %v6448, %v6455
        %v6458 = vunpack.c.l.s4 1983009808
        %v6459 = vunpack.c.0.s8 %v6458
        %v6460 = vlaneseq
        %v6461 = vshrl.u32 %v6460, 7
        %v6462 = vsub.s32 %v6459, %v6461
        %v6463 = vrot.slane %v6449, %v6462
        %v6464 = vcombine.low %v6408, %v6424
        %v6465 = vcombine.high %v6408, %v6424
        %v6467 = vunpack.c.l.s4 1934713408
        %v6468 = vunpack.c.0.s8 %v6467
        %v6469 = vlaneseq
        %v6470 = vshrl.u32 %v6469, 7
        %v6471 = vsub.s32 %v6468, %v6470
        %v6472 = vrot.slane %v6464, %v6471
        %v6474 = vunpack.c.l.s4 1934713408
        %v6475 = vunpack.c.0.s8 %v6474
        %v6476 = vlaneseq
        %v6477 = vshrl.u32 %v6476, 7
        %v6478 = vsub.s32 %v6475, %v6477
        %v6479 = vrot.slane %v6465, %v6478
        %v6480 = vcombine.low %v6415, %v6431
        %v6481 = vcombine.high %v6415, %v6431
        %v6483 = vunpack.c.l.s4 1934713408
        %v6484 = vunpack.c.0.s8 %v6483
        %v6485 = vlaneseq
        %v6486 = vshrl.u32 %v6485, 7
        %v6487 = vsub.s32 %v6484, %v6486
        %v6488 = vrot.slane %v6480, %v6487
        %v6490 = vunpack.c.l.s4 1934713408
        %v6491 = vunpack.c.0.s8 %v6490
        %v6492 = vlaneseq
        %v6493 = vshrl.u32 %v6492, 7
        %v6494 = vsub.s32 %v6491, %v6493
        %v6495 = vrot.slane %v6481, %v6494
        %v6496 = vcombine.low %v6440, %v6456
        %v6497 = vcombine.high %v6440, %v6456
        %v6499 = vunpack.c.l.s4 1934713408
        %v6500 = vunpack.c.0.s8 %v6499
        %v6501 = vlaneseq
        %v6502 = vshrl.u32 %v6501, 7
        %v6503 = vsub.s32 %v6500, %v6502
        %v6504 = vrot.slane %v6496, %v6503
        %v6506 = vunpack.c.l.s4 1934713408
        %v6507 = vunpack.c.0.s8 %v6506
        %v6508 = vlaneseq
        %v6509 = vshrl.u32 %v6508, 7
        %v6510 = vsub.s32 %v6507, %v6509
        %v6511 = vrot.slane %v6497, %v6510
        %v6512 = vcombine.low %v6447, %v6463
        %v6513 = vcombine.high %v6447, %v6463
        %v6515 = vunpack.c.l.s4 1934713408
        %v6516 = vunpack.c.0.s8 %v6515
        %v6517 = vlaneseq
        %v6518 = vshrl.u32 %v6517, 7
        %v6519 = vsub.s32 %v6516, %v6518
        %v6520 = vrot.slane %v6512, %v6519
        %v6522 = vunpack.c.l.s4 1934713408
        %v6523 = vunpack.c.0.s8 %v6522
        %v6524 = vlaneseq
        %v6525 = vshrl.u32 %v6524, 7
        %v6526 = vsub.s32 %v6523, %v6525
        %v6527 = vrot.slane %v6513, %v6526
        %v6528 = vcombine.low %v6472, %v6504
        %v6529 = vcombine.high %v6472, %v6504
        %v6530 = vcombine.low %v6479, %v6511
        %v6531 = vcombine.high %v6479, %v6511
        %v6532 = vcombine.low %v6488, %v6520
        %v6533 = vcombine.high %v6488, %v6520
        %v6534 = vcombine.low %v6495, %v6527
        %v6535 = vcombine.high %v6495, %v6527
        %6537 = vrot.lane.b32.xlu0 %v6529, 8
        %v6538 = vpop.permute.xlu0 %6537
        %6541 = vrot.lane.b32.xlu0 %v6530, 16
        %v6542 = vpop.permute.xlu0 %6541
        %6545 = vrot.lane.b32.xlu0 %v6531, 24
        %v6546 = vpop.permute.xlu0 %6545
        %6549 = vrot.lane.b32.xlu0 %v6532, 32
        %v6550 = vpop.permute.xlu0 %6549
        %6553 = vrot.lane.b32.xlu0 %v6533, 40
        %v6554 = vpop.permute.xlu0 %6553
        %6557 = vrot.lane.b32.xlu0 %v6534, 48
        %v6558 = vpop.permute.xlu0 %6557
        %6561 = vrot.lane.b32.xlu0 %v6535, 56
        %v6562 = vpop.permute.xlu0 %6561
        %v6564 = vsel %vm4567, %v6528, %v6538
        %v6565 = vsel %vm4569, %v6564, %v6542
        %v6566 = vsel %vm4571, %v6565, %v6546
        %v6567 = vsel %vm4573, %v6566, %v6550
        %v6568 = vsel %vm4575, %v6567, %v6554
        %v6569 = vsel %vm4577, %v6568, %v6558
        %v6570 = vsel %vm4579, %v6569, %v6562
        %6579 = vrot.lane.b32.xlu0 %v6392, 127
        %v6580 = vpop.permute.xlu0 %6579
        %6581 = vrot.lane.b32.xlu0 %v6393, 127
        %v6582 = vpop.permute.xlu0 %6581
        %6583 = vrot.lane.b32.xlu0 %v6394, 127
        %v6584 = vpop.permute.xlu0 %6583
        %6585 = vrot.lane.b32.xlu0 %v6395, 127
        %v6586 = vpop.permute.xlu0 %6585
        %6587 = vrot.lane.b32.xlu0 %v6396, 127
        %v6588 = vpop.permute.xlu0 %6587
        %6589 = vrot.lane.b32.xlu0 %v6397, 127
        %v6590 = vpop.permute.xlu0 %6589
        %6591 = vrot.lane.b32.xlu0 %v6398, 127
        %v6592 = vpop.permute.xlu0 %6591
        %6593 = vrot.lane.b32.xlu0 %v6399, 127
        %v6594 = vpop.permute.xlu0 %6593
        %v6603 = vcombine.low %v6580, %v6584
        %v6604 = vcombine.high %v6580, %v6584
        %v6606 = vunpack.c.l.s4 1983009808
        %v6607 = vunpack.c.0.s8 %v6606
        %v6608 = vlaneseq
        %v6609 = vshrl.u32 %v6608, 7
        %v6610 = vsub.s32 %v6607, %v6609
        %v6611 = vrot.slane %v6603, %v6610
        %v6613 = vunpack.c.l.s4 1983009808
        %v6614 = vunpack.c.0.s8 %v6613
        %v6615 = vlaneseq
        %v6616 = vshrl.u32 %v6615, 7
        %v6617 = vsub.s32 %v6614, %v6616
        %v6618 = vrot.slane %v6604, %v6617
        %v6619 = vcombine.low %v6582, %v6586
        %v6620 = vcombine.high %v6582, %v6586
        %v6622 = vunpack.c.l.s4 1983009808
        %v6623 = vunpack.c.0.s8 %v6622
        %v6624 = vlaneseq
        %v6625 = vshrl.u32 %v6624, 7
        %v6626 = vsub.s32 %v6623, %v6625
        %v6627 = vrot.slane %v6619, %v6626
        %v6629 = vunpack.c.l.s4 1983009808
        %v6630 = vunpack.c.0.s8 %v6629
        %v6631 = vlaneseq
        %v6632 = vshrl.u32 %v6631, 7
        %v6633 = vsub.s32 %v6630, %v6632
        %v6634 = vrot.slane %v6620, %v6633
        %v6635 = vcombine.low %v6588, %v6592
        %v6636 = vcombine.high %v6588, %v6592
        %v6638 = vunpack.c.l.s4 1983009808
        %v6639 = vunpack.c.0.s8 %v6638
        %v6640 = vlaneseq
        %v6641 = vshrl.u32 %v6640, 7
        %v6642 = vsub.s32 %v6639, %v6641
        %v6643 = vrot.slane %v6635, %v6642
        %v6645 = vunpack.c.l.s4 1983009808
        %v6646 = vunpack.c.0.s8 %v6645
        %v6647 = vlaneseq
        %v6648 = vshrl.u32 %v6647, 7
        %v6649 = vsub.s32 %v6646, %v6648
        %v6650 = vrot.slane %v6636, %v6649
        %v6651 = vcombine.low %v6590, %v6594
        %v6652 = vcombine.high %v6590, %v6594
        %v6654 = vunpack.c.l.s4 1983009808
        %v6655 = vunpack.c.0.s8 %v6654
        %v6656 = vlaneseq
        %v6657 = vshrl.u32 %v6656, 7
        %v6658 = vsub.s32 %v6655, %v6657
        %v6659 = vrot.slane %v6651, %v6658
        %v6661 = vunpack.c.l.s4 1983009808
        %v6662 = vunpack.c.0.s8 %v6661
        %v6663 = vlaneseq
        %v6664 = vshrl.u32 %v6663, 7
        %v6665 = vsub.s32 %v6662, %v6664
        %v6666 = vrot.slane %v6652, %v6665
        %v6667 = vcombine.low %v6611, %v6627
        %v6668 = vcombine.high %v6611, %v6627
        %v6670 = vunpack.c.l.s4 1934713408
        %v6671 = vunpack.c.0.s8 %v6670
        %v6672 = vlaneseq
        %v6673 = vshrl.u32 %v6672, 7
        %v6674 = vsub.s32 %v6671, %v6673
        %v6675 = vrot.slane %v6667, %v6674
        %v6677 = vunpack.c.l.s4 1934713408
        %v6678 = vunpack.c.0.s8 %v6677
        %v6679 = vlaneseq
        %v6680 = vshrl.u32 %v6679, 7
        %v6681 = vsub.s32 %v6678, %v6680
        %v6682 = vrot.slane %v6668, %v6681
        %v6683 = vcombine.low %v6618, %v6634
        %v6684 = vcombine.high %v6618, %v6634
        %v6686 = vunpack.c.l.s4 1934713408
        %v6687 = vunpack.c.0.s8 %v6686
        %v6688 = vlaneseq
        %v6689 = vshrl.u32 %v6688, 7
        %v6690 = vsub.s32 %v6687, %v6689
        %v6691 = vrot.slane %v6683, %v6690
        %v6693 = vunpack.c.l.s4 1934713408
        %v6694 = vunpack.c.0.s8 %v6693
        %v6695 = vlaneseq
        %v6696 = vshrl.u32 %v6695, 7
        %v6697 = vsub.s32 %v6694, %v6696
        %v6698 = vrot.slane %v6684, %v6697
        %v6699 = vcombine.low %v6643, %v6659
        %v6700 = vcombine.high %v6643, %v6659
        %v6702 = vunpack.c.l.s4 1934713408
        %v6703 = vunpack.c.0.s8 %v6702
        %v6704 = vlaneseq
        %v6705 = vshrl.u32 %v6704, 7
        %v6706 = vsub.s32 %v6703, %v6705
        %v6707 = vrot.slane %v6699, %v6706
        %v6709 = vunpack.c.l.s4 1934713408
        %v6710 = vunpack.c.0.s8 %v6709
        %v6711 = vlaneseq
        %v6712 = vshrl.u32 %v6711, 7
        %v6713 = vsub.s32 %v6710, %v6712
        %v6714 = vrot.slane %v6700, %v6713
        %v6715 = vcombine.low %v6650, %v6666
        %v6716 = vcombine.high %v6650, %v6666
        %v6718 = vunpack.c.l.s4 1934713408
        %v6719 = vunpack.c.0.s8 %v6718
        %v6720 = vlaneseq
        %v6721 = vshrl.u32 %v6720, 7
        %v6722 = vsub.s32 %v6719, %v6721
        %v6723 = vrot.slane %v6715, %v6722
        %v6725 = vunpack.c.l.s4 1934713408
        %v6726 = vunpack.c.0.s8 %v6725
        %v6727 = vlaneseq
        %v6728 = vshrl.u32 %v6727, 7
        %v6729 = vsub.s32 %v6726, %v6728
        %v6730 = vrot.slane %v6716, %v6729
        %v6731 = vcombine.low %v6675, %v6707
        %v6732 = vcombine.high %v6675, %v6707
        %v6733 = vcombine.low %v6682, %v6714
        %v6734 = vcombine.high %v6682, %v6714
        %v6735 = vcombine.low %v6691, %v6723
        %v6736 = vcombine.high %v6691, %v6723
        %v6737 = vcombine.low %v6698, %v6730
        %v6738 = vcombine.high %v6698, %v6730
        %6740 = vrot.lane.b32.xlu0 %v6732, 8
        %v6741 = vpop.permute.xlu0 %6740
        %6744 = vrot.lane.b32.xlu0 %v6733, 16
        %v6745 = vpop.permute.xlu0 %6744
        %6748 = vrot.lane.b32.xlu0 %v6734, 24
        %v6749 = vpop.permute.xlu0 %6748
        %6752 = vrot.lane.b32.xlu0 %v6735, 32
        %v6753 = vpop.permute.xlu0 %6752
        %6756 = vrot.lane.b32.xlu0 %v6736, 40
        %v6757 = vpop.permute.xlu0 %6756
        %6760 = vrot.lane.b32.xlu0 %v6737, 48
        %v6761 = vpop.permute.xlu0 %6760
        %6764 = vrot.lane.b32.xlu0 %v6738, 56
        %v6765 = vpop.permute.xlu0 %6764
        %v6767 = vsel %vm4567, %v6731, %v6741
        %v6768 = vsel %vm4569, %v6767, %v6745
        %v6769 = vsel %vm4571, %v6768, %v6749
        %v6770 = vsel %vm4573, %v6769, %v6753
        %v6771 = vsel %vm4575, %v6770, %v6757
        %v6772 = vsel %vm4577, %v6771, %v6761
        %v6773 = vsel %vm4579, %v6772, %v6765
        %6774 = vrot.lane.b32.xlu0 %v6392, 126
        %v6775 = vpop.permute.xlu0 %6774
        %6776 = vrot.lane.b32.xlu0 %v6393, 126
        %v6777 = vpop.permute.xlu0 %6776
        %6778 = vrot.lane.b32.xlu0 %v6394, 126
        %v6779 = vpop.permute.xlu0 %6778
        %6780 = vrot.lane.b32.xlu0 %v6395, 126
        %v6781 = vpop.permute.xlu0 %6780
        %6782 = vrot.lane.b32.xlu0 %v6396, 126
        %v6783 = vpop.permute.xlu0 %6782
        %6784 = vrot.lane.b32.xlu0 %v6397, 126
        %v6785 = vpop.permute.xlu0 %6784
        %6786 = vrot.lane.b32.xlu0 %v6398, 126
        %v6787 = vpop.permute.xlu0 %6786
        %6788 = vrot.lane.b32.xlu0 %v6399, 126
        %v6789 = vpop.permute.xlu0 %6788
        %v6798 = vcombine.low %v6775, %v6779
        %v6799 = vcombine.high %v6775, %v6779
        %v6801 = vunpack.c.l.s4 1983009808
        %v6802 = vunpack.c.0.s8 %v6801
        %v6803 = vlaneseq
        %v6804 = vshrl.u32 %v6803, 7
        %v6805 = vsub.s32 %v6802, %v6804
        %v6806 = vrot.slane %v6798, %v6805
        %v6808 = vunpack.c.l.s4 1983009808
        %v6809 = vunpack.c.0.s8 %v6808
        %v6810 = vlaneseq
        %v6811 = vshrl.u32 %v6810, 7
        %v6812 = vsub.s32 %v6809, %v6811
        %v6813 = vrot.slane %v6799, %v6812
        %v6814 = vcombine.low %v6777, %v6781
        %v6815 = vcombine.high %v6777, %v6781
        %v6817 = vunpack.c.l.s4 1983009808
        %v6818 = vunpack.c.0.s8 %v6817
        %v6819 = vlaneseq
        %v6820 = vshrl.u32 %v6819, 7
        %v6821 = vsub.s32 %v6818, %v6820
        %v6822 = vrot.slane %v6814, %v6821
        %v6824 = vunpack.c.l.s4 1983009808
        %v6825 = vunpack.c.0.s8 %v6824
        %v6826 = vlaneseq
        %v6827 = vshrl.u32 %v6826, 7
        %v6828 = vsub.s32 %v6825, %v6827
        %v6829 = vrot.slane %v6815, %v6828
        %v6830 = vcombine.low %v6783, %v6787
        %v6831 = vcombine.high %v6783, %v6787
        %v6833 = vunpack.c.l.s4 1983009808
        %v6834 = vunpack.c.0.s8 %v6833
        %v6835 = vlaneseq
        %v6836 = vshrl.u32 %v6835, 7
        %v6837 = vsub.s32 %v6834, %v6836
        %v6838 = vrot.slane %v6830, %v6837
        %v6840 = vunpack.c.l.s4 1983009808
        %v6841 = vunpack.c.0.s8 %v6840
        %v6842 = vlaneseq
        %v6843 = vshrl.u32 %v6842, 7
        %v6844 = vsub.s32 %v6841, %v6843
        %v6845 = vrot.slane %v6831, %v6844
        %v6846 = vcombine.low %v6785, %v6789
        %v6847 = vcombine.high %v6785, %v6789
        %v6849 = vunpack.c.l.s4 1983009808
        %v6850 = vunpack.c.0.s8 %v6849
        %v6851 = vlaneseq
        %v6852 = vshrl.u32 %v6851, 7
        %v6853 = vsub.s32 %v6850, %v6852
        %v6854 = vrot.slane %v6846, %v6853
        %v6856 = vunpack.c.l.s4 1983009808
        %v6857 = vunpack.c.0.s8 %v6856
        %v6858 = vlaneseq
        %v6859 = vshrl.u32 %v6858, 7
        %v6860 = vsub.s32 %v6857, %v6859
        %v6861 = vrot.slane %v6847, %v6860
        %v6862 = vcombine.low %v6806, %v6822
        %v6863 = vcombine.high %v6806, %v6822
        %v6865 = vunpack.c.l.s4 1934713408
        %v6866 = vunpack.c.0.s8 %v6865
        %v6867 = vlaneseq
        %v6868 = vshrl.u32 %v6867, 7
        %v6869 = vsub.s32 %v6866, %v6868
        %v6870 = vrot.slane %v6862, %v6869
        %v6872 = vunpack.c.l.s4 1934713408
        %v6873 = vunpack.c.0.s8 %v6872
        %v6874 = vlaneseq
        %v6875 = vshrl.u32 %v6874, 7
        %v6876 = vsub.s32 %v6873, %v6875
        %v6877 = vrot.slane %v6863, %v6876
        %v6878 = vcombine.low %v6813, %v6829
        %v6879 = vcombine.high %v6813, %v6829
        %v6881 = vunpack.c.l.s4 1934713408
        %v6882 = vunpack.c.0.s8 %v6881
        %v6883 = vlaneseq
        %v6884 = vshrl.u32 %v6883, 7
        %v6885 = vsub.s32 %v6882, %v6884
        %v6886 = vrot.slane %v6878, %v6885
        %v6888 = vunpack.c.l.s4 1934713408
        %v6889 = vunpack.c.0.s8 %v6888
        %v6890 = vlaneseq
        %v6891 = vshrl.u32 %v6890, 7
        %v6892 = vsub.s32 %v6889, %v6891
        %v6893 = vrot.slane %v6879, %v6892
        %v6894 = vcombine.low %v6838, %v6854
        %v6895 = vcombine.high %v6838, %v6854
        %v6897 = vunpack.c.l.s4 1934713408
        %v6898 = vunpack.c.0.s8 %v6897
        %v6899 = vlaneseq
        %v6900 = vshrl.u32 %v6899, 7
        %v6901 = vsub.s32 %v6898, %v6900
        %v6902 = vrot.slane %v6894, %v6901
        %v6904 = vunpack.c.l.s4 1934713408
        %v6905 = vunpack.c.0.s8 %v6904
        %v6906 = vlaneseq
        %v6907 = vshrl.u32 %v6906, 7
        %v6908 = vsub.s32 %v6905, %v6907
        %v6909 = vrot.slane %v6895, %v6908
        %v6910 = vcombine.low %v6845, %v6861
        %v6911 = vcombine.high %v6845, %v6861
        %v6913 = vunpack.c.l.s4 1934713408
        %v6914 = vunpack.c.0.s8 %v6913
        %v6915 = vlaneseq
        %v6916 = vshrl.u32 %v6915, 7
        %v6917 = vsub.s32 %v6914, %v6916
        %v6918 = vrot.slane %v6910, %v6917
        %v6920 = vunpack.c.l.s4 1934713408
        %v6921 = vunpack.c.0.s8 %v6920
        %v6922 = vlaneseq
        %v6923 = vshrl.u32 %v6922, 7
        %v6924 = vsub.s32 %v6921, %v6923
        %v6925 = vrot.slane %v6911, %v6924
        %v6926 = vcombine.low %v6870, %v6902
        %v6927 = vcombine.high %v6870, %v6902
        %v6928 = vcombine.low %v6877, %v6909
        %v6929 = vcombine.high %v6877, %v6909
        %v6930 = vcombine.low %v6886, %v6918
        %v6931 = vcombine.high %v6886, %v6918
        %v6932 = vcombine.low %v6893, %v6925
        %v6933 = vcombine.high %v6893, %v6925
        %6935 = vrot.lane.b32.xlu0 %v6927, 8
        %v6936 = vpop.permute.xlu0 %6935
        %6939 = vrot.lane.b32.xlu0 %v6928, 16
        %v6940 = vpop.permute.xlu0 %6939
        %6943 = vrot.lane.b32.xlu0 %v6929, 24
        %v6944 = vpop.permute.xlu0 %6943
        %6947 = vrot.lane.b32.xlu0 %v6930, 32
        %v6948 = vpop.permute.xlu0 %6947
        %6951 = vrot.lane.b32.xlu0 %v6931, 40
        %v6952 = vpop.permute.xlu0 %6951
        %6955 = vrot.lane.b32.xlu0 %v6932, 48
        %v6956 = vpop.permute.xlu0 %6955
        %6959 = vrot.lane.b32.xlu0 %v6933, 56
        %v6960 = vpop.permute.xlu0 %6959
        %v6962 = vsel %vm4567, %v6926, %v6936
        %v6963 = vsel %vm4569, %v6962, %v6940
        %v6964 = vsel %vm4571, %v6963, %v6944
        %v6965 = vsel %vm4573, %v6964, %v6948
        %v6966 = vsel %vm4575, %v6965, %v6952
        %v6967 = vsel %vm4577, %v6966, %v6956
        %v6968 = vsel %vm4579, %v6967, %v6960
        %v6969 = vld [vmem:[#allocation3 + $0x2] sm:$0xff]
        %v6970 = vld [vmem:[#allocation3 + $0x12] sm:$0xff]
        %v6971 = vld [vmem:[#allocation3 + $0x22] sm:$0xff]
        %v6972 = vld [vmem:[#allocation3 + $0x32] sm:$0xff]
        %v6973 = vld [vmem:[#allocation3 + $0x42] sm:$0xff]
        %v6974 = vld [vmem:[#allocation3 + $0x52] sm:$0xff]
        %v6975 = vld [vmem:[#allocation3 + $0x62] sm:$0xff]
        %v6976 = vld [vmem:[#allocation3 + $0x72] sm:$0xff]
        %v6977 = vcombine.low %v6969, %v6971
        %v6978 = vcombine.high %v6969, %v6971
        %v6980 = vunpack.c.l.s4 1983009808
        %v6981 = vunpack.c.0.s8 %v6980
        %v6982 = vlaneseq
        %v6983 = vshrl.u32 %v6982, 7
        %v6984 = vsub.s32 %v6981, %v6983
        %v6985 = vrot.slane %v6977, %v6984
        %v6987 = vunpack.c.l.s4 1983009808
        %v6988 = vunpack.c.0.s8 %v6987
        %v6989 = vlaneseq
        %v6990 = vshrl.u32 %v6989, 7
        %v6991 = vsub.s32 %v6988, %v6990
        %v6992 = vrot.slane %v6978, %v6991
        %v6993 = vcombine.low %v6970, %v6972
        %v6994 = vcombine.high %v6970, %v6972
        %v6996 = vunpack.c.l.s4 1983009808
        %v6997 = vunpack.c.0.s8 %v6996
        %v6998 = vlaneseq
        %v6999 = vshrl.u32 %v6998, 7
        %v7000 = vsub.s32 %v6997, %v6999
        %v7001 = vrot.slane %v6993, %v7000
        %v7003 = vunpack.c.l.s4 1983009808
        %v7004 = vunpack.c.0.s8 %v7003
        %v7005 = vlaneseq
        %v7006 = vshrl.u32 %v7005, 7
        %v7007 = vsub.s32 %v7004, %v7006
        %v7008 = vrot.slane %v6994, %v7007
        %v7009 = vcombine.low %v6973, %v6975
        %v7010 = vcombine.high %v6973, %v6975
        %v7012 = vunpack.c.l.s4 1983009808
        %v7013 = vunpack.c.0.s8 %v7012
        %v7014 = vlaneseq
        %v7015 = vshrl.u32 %v7014, 7
        %v7016 = vsub.s32 %v7013, %v7015
        %v7017 = vrot.slane %v7009, %v7016
        %v7019 = vunpack.c.l.s4 1983009808
        %v7020 = vunpack.c.0.s8 %v7019
        %v7021 = vlaneseq
        %v7022 = vshrl.u32 %v7021, 7
        %v7023 = vsub.s32 %v7020, %v7022
        %v7024 = vrot.slane %v7010, %v7023
        %v7025 = vcombine.low %v6974, %v6976
        %v7026 = vcombine.high %v6974, %v6976
        %v7028 = vunpack.c.l.s4 1983009808
        %v7029 = vunpack.c.0.s8 %v7028
        %v7030 = vlaneseq
        %v7031 = vshrl.u32 %v7030, 7
        %v7032 = vsub.s32 %v7029, %v7031
        %v7033 = vrot.slane %v7025, %v7032
        %v7035 = vunpack.c.l.s4 1983009808
        %v7036 = vunpack.c.0.s8 %v7035
        %v7037 = vlaneseq
        %v7038 = vshrl.u32 %v7037, 7
        %v7039 = vsub.s32 %v7036, %v7038
        %v7040 = vrot.slane %v7026, %v7039
        %v7041 = vcombine.low %v6985, %v7001
        %v7042 = vcombine.high %v6985, %v7001
        %v7044 = vunpack.c.l.s4 1934713408
        %v7045 = vunpack.c.0.s8 %v7044
        %v7046 = vlaneseq
        %v7047 = vshrl.u32 %v7046, 7
        %v7048 = vsub.s32 %v7045, %v7047
        %v7049 = vrot.slane %v7041, %v7048
        %v7051 = vunpack.c.l.s4 1934713408
        %v7052 = vunpack.c.0.s8 %v7051
        %v7053 = vlaneseq
        %v7054 = vshrl.u32 %v7053, 7
        %v7055 = vsub.s32 %v7052, %v7054
        %v7056 = vrot.slane %v7042, %v7055
        %v7057 = vcombine.low %v6992, %v7008
        %v7058 = vcombine.high %v6992, %v7008
        %v7060 = vunpack.c.l.s4 1934713408
        %v7061 = vunpack.c.0.s8 %v7060
        %v7062 = vlaneseq
        %v7063 = vshrl.u32 %v7062, 7
        %v7064 = vsub.s32 %v7061, %v7063
        %v7065 = vrot.slane %v7057, %v7064
        %v7067 = vunpack.c.l.s4 1934713408
        %v7068 = vunpack.c.0.s8 %v7067
        %v7069 = vlaneseq
        %v7070 = vshrl.u32 %v7069, 7
        %v7071 = vsub.s32 %v7068, %v7070
        %v7072 = vrot.slane %v7058, %v7071
        %v7073 = vcombine.low %v7017, %v7033
        %v7074 = vcombine.high %v7017, %v7033
        %v7076 = vunpack.c.l.s4 1934713408
        %v7077 = vunpack.c.0.s8 %v7076
        %v7078 = vlaneseq
        %v7079 = vshrl.u32 %v7078, 7
        %v7080 = vsub.s32 %v7077, %v7079
        %v7081 = vrot.slane %v7073, %v7080
        %v7083 = vunpack.c.l.s4 1934713408
        %v7084 = vunpack.c.0.s8 %v7083
        %v7085 = vlaneseq
        %v7086 = vshrl.u32 %v7085, 7
        %v7087 = vsub.s32 %v7084, %v7086
        %v7088 = vrot.slane %v7074, %v7087
        %v7089 = vcombine.low %v7024, %v7040
        %v7090 = vcombine.high %v7024, %v7040
        %v7092 = vunpack.c.l.s4 1934713408
        %v7093 = vunpack.c.0.s8 %v7092
        %v7094 = vlaneseq
        %v7095 = vshrl.u32 %v7094, 7
        %v7096 = vsub.s32 %v7093, %v7095
        %v7097 = vrot.slane %v7089, %v7096
        %v7099 = vunpack.c.l.s4 1934713408
        %v7100 = vunpack.c.0.s8 %v7099
        %v7101 = vlaneseq
        %v7102 = vshrl.u32 %v7101, 7
        %v7103 = vsub.s32 %v7100, %v7102
        %v7104 = vrot.slane %v7090, %v7103
        %v7105 = vcombine.low %v7049, %v7081
        %v7106 = vcombine.high %v7049, %v7081
        %v7107 = vcombine.low %v7056, %v7088
        %v7108 = vcombine.high %v7056, %v7088
        %v7109 = vcombine.low %v7065, %v7097
        %v7110 = vcombine.high %v7065, %v7097
        %v7111 = vcombine.low %v7072, %v7104
        %v7112 = vcombine.high %v7072, %v7104
        %7114 = vrot.lane.b32.xlu0 %v7106, 8
        %v7115 = vpop.permute.xlu0 %7114
        %7118 = vrot.lane.b32.xlu0 %v7107, 16
        %v7119 = vpop.permute.xlu0 %7118
        %7122 = vrot.lane.b32.xlu0 %v7108, 24
        %v7123 = vpop.permute.xlu0 %7122
        %7126 = vrot.lane.b32.xlu0 %v7109, 32
        %v7127 = vpop.permute.xlu0 %7126
        %7130 = vrot.lane.b32.xlu0 %v7110, 40
        %v7131 = vpop.permute.xlu0 %7130
        %7134 = vrot.lane.b32.xlu0 %v7111, 48
        %v7135 = vpop.permute.xlu0 %7134
        %7138 = vrot.lane.b32.xlu0 %v7112, 56
        %v7139 = vpop.permute.xlu0 %7138
        %v7141 = vsel %vm4567, %v7105, %v7115
        %v7142 = vsel %vm4569, %v7141, %v7119
        %v7143 = vsel %vm4571, %v7142, %v7123
        %v7144 = vsel %vm4573, %v7143, %v7127
        %v7145 = vsel %vm4575, %v7144, %v7131
        %v7146 = vsel %vm4577, %v7145, %v7135
        %v7147 = vsel %vm4579, %v7146, %v7139
        %7156 = vrot.lane.b32.xlu0 %v6969, 127
        %v7157 = vpop.permute.xlu0 %7156
        %7158 = vrot.lane.b32.xlu0 %v6970, 127
        %v7159 = vpop.permute.xlu0 %7158
        %7160 = vrot.lane.b32.xlu0 %v6971, 127
        %v7161 = vpop.permute.xlu0 %7160
        %7162 = vrot.lane.b32.xlu0 %v6972, 127
        %v7163 = vpop.permute.xlu0 %7162
        %7164 = vrot.lane.b32.xlu0 %v6973, 127
        %v7165 = vpop.permute.xlu0 %7164
        %7166 = vrot.lane.b32.xlu0 %v6974, 127
        %v7167 = vpop.permute.xlu0 %7166
        %7168 = vrot.lane.b32.xlu0 %v6975, 127
        %v7169 = vpop.permute.xlu0 %7168
        %7170 = vrot.lane.b32.xlu0 %v6976, 127
        %v7171 = vpop.permute.xlu0 %7170
        %v7180 = vcombine.low %v7157, %v7161
        %v7181 = vcombine.high %v7157, %v7161
        %v7183 = vunpack.c.l.s4 1983009808
        %v7184 = vunpack.c.0.s8 %v7183
        %v7185 = vlaneseq
        %v7186 = vshrl.u32 %v7185, 7
        %v7187 = vsub.s32 %v7184, %v7186
        %v7188 = vrot.slane %v7180, %v7187
        %v7190 = vunpack.c.l.s4 1983009808
        %v7191 = vunpack.c.0.s8 %v7190
        %v7192 = vlaneseq
        %v7193 = vshrl.u32 %v7192, 7
        %v7194 = vsub.s32 %v7191, %v7193
        %v7195 = vrot.slane %v7181, %v7194
        %v7196 = vcombine.low %v7159, %v7163
        %v7197 = vcombine.high %v7159, %v7163
        %v7199 = vunpack.c.l.s4 1983009808
        %v7200 = vunpack.c.0.s8 %v7199
        %v7201 = vlaneseq
        %v7202 = vshrl.u32 %v7201, 7
        %v7203 = vsub.s32 %v7200, %v7202
        %v7204 = vrot.slane %v7196, %v7203
        %v7206 = vunpack.c.l.s4 1983009808
        %v7207 = vunpack.c.0.s8 %v7206
        %v7208 = vlaneseq
        %v7209 = vshrl.u32 %v7208, 7
        %v7210 = vsub.s32 %v7207, %v7209
        %v7211 = vrot.slane %v7197, %v7210
        %v7212 = vcombine.low %v7165, %v7169
        %v7213 = vcombine.high %v7165, %v7169
        %v7215 = vunpack.c.l.s4 1983009808
        %v7216 = vunpack.c.0.s8 %v7215
        %v7217 = vlaneseq
        %v7218 = vshrl.u32 %v7217, 7
        %v7219 = vsub.s32 %v7216, %v7218
        %v7220 = vrot.slane %v7212, %v7219
        %v7222 = vunpack.c.l.s4 1983009808
        %v7223 = vunpack.c.0.s8 %v7222
        %v7224 = vlaneseq
        %v7225 = vshrl.u32 %v7224, 7
        %v7226 = vsub.s32 %v7223, %v7225
        %v7227 = vrot.slane %v7213, %v7226
        %v7228 = vcombine.low %v7167, %v7171
        %v7229 = vcombine.high %v7167, %v7171
        %v7231 = vunpack.c.l.s4 1983009808
        %v7232 = vunpack.c.0.s8 %v7231
        %v7233 = vlaneseq
        %v7234 = vshrl.u32 %v7233, 7
        %v7235 = vsub.s32 %v7232, %v7234
        %v7236 = vrot.slane %v7228, %v7235
        %v7238 = vunpack.c.l.s4 1983009808
        %v7239 = vunpack.c.0.s8 %v7238
        %v7240 = vlaneseq
        %v7241 = vshrl.u32 %v7240, 7
        %v7242 = vsub.s32 %v7239, %v7241
        %v7243 = vrot.slane %v7229, %v7242
        %v7244 = vcombine.low %v7188, %v7204
        %v7245 = vcombine.high %v7188, %v7204
        %v7247 = vunpack.c.l.s4 1934713408
        %v7248 = vunpack.c.0.s8 %v7247
        %v7249 = vlaneseq
        %v7250 = vshrl.u32 %v7249, 7
        %v7251 = vsub.s32 %v7248, %v7250
        %v7252 = vrot.slane %v7244, %v7251
        %v7254 = vunpack.c.l.s4 1934713408
        %v7255 = vunpack.c.0.s8 %v7254
        %v7256 = vlaneseq
        %v7257 = vshrl.u32 %v7256, 7
        %v7258 = vsub.s32 %v7255, %v7257
        %v7259 = vrot.slane %v7245, %v7258
        %v7260 = vcombine.low %v7195, %v7211
        %v7261 = vcombine.high %v7195, %v7211
        %v7263 = vunpack.c.l.s4 1934713408
        %v7264 = vunpack.c.0.s8 %v7263
        %v7265 = vlaneseq
        %v7266 = vshrl.u32 %v7265, 7
        %v7267 = vsub.s32 %v7264, %v7266
        %v7268 = vrot.slane %v7260, %v7267
        %v7270 = vunpack.c.l.s4 1934713408
        %v7271 = vunpack.c.0.s8 %v7270
        %v7272 = vlaneseq
        %v7273 = vshrl.u32 %v7272, 7
        %v7274 = vsub.s32 %v7271, %v7273
        %v7275 = vrot.slane %v7261, %v7274
        %v7276 = vcombine.low %v7220, %v7236
        %v7277 = vcombine.high %v7220, %v7236
        %v7279 = vunpack.c.l.s4 1934713408
        %v7280 = vunpack.c.0.s8 %v7279
        %v7281 = vlaneseq
        %v7282 = vshrl.u32 %v7281, 7
        %v7283 = vsub.s32 %v7280, %v7282
        %v7284 = vrot.slane %v7276, %v7283
        %v7286 = vunpack.c.l.s4 1934713408
        %v7287 = vunpack.c.0.s8 %v7286
        %v7288 = vlaneseq
        %v7289 = vshrl.u32 %v7288, 7
        %v7290 = vsub.s32 %v7287, %v7289
        %v7291 = vrot.slane %v7277, %v7290
        %v7292 = vcombine.low %v7227, %v7243
        %v7293 = vcombine.high %v7227, %v7243
        %v7295 = vunpack.c.l.s4 1934713408
        %v7296 = vunpack.c.0.s8 %v7295
        %v7297 = vlaneseq
        %v7298 = vshrl.u32 %v7297, 7
        %v7299 = vsub.s32 %v7296, %v7298
        %v7300 = vrot.slane %v7292, %v7299
        %v7302 = vunpack.c.l.s4 1934713408
        %v7303 = vunpack.c.0.s8 %v7302
        %v7304 = vlaneseq
        %v7305 = vshrl.u32 %v7304, 7
        %v7306 = vsub.s32 %v7303, %v7305
        %v7307 = vrot.slane %v7293, %v7306
        %v7308 = vcombine.low %v7252, %v7284
        %v7309 = vcombine.high %v7252, %v7284
        %v7310 = vcombine.low %v7259, %v7291
        %v7311 = vcombine.high %v7259, %v7291
        %v7312 = vcombine.low %v7268, %v7300
        %v7313 = vcombine.high %v7268, %v7300
        %v7314 = vcombine.low %v7275, %v7307
        %v7315 = vcombine.high %v7275, %v7307
        %7317 = vrot.lane.b32.xlu0 %v7309, 8
        %v7318 = vpop.permute.xlu0 %7317
        %7321 = vrot.lane.b32.xlu0 %v7310, 16
        %v7322 = vpop.permute.xlu0 %7321
        %7325 = vrot.lane.b32.xlu0 %v7311, 24
        %v7326 = vpop.permute.xlu0 %7325
        %7329 = vrot.lane.b32.xlu0 %v7312, 32
        %v7330 = vpop.permute.xlu0 %7329
        %7333 = vrot.lane.b32.xlu0 %v7313, 40
        %v7334 = vpop.permute.xlu0 %7333
        %7337 = vrot.lane.b32.xlu0 %v7314, 48
        %v7338 = vpop.permute.xlu0 %7337
        %7341 = vrot.lane.b32.xlu0 %v7315, 56
        %v7342 = vpop.permute.xlu0 %7341
        %v7344 = vsel %vm4567, %v7308, %v7318
        %v7345 = vsel %vm4569, %v7344, %v7322
        %v7346 = vsel %vm4571, %v7345, %v7326
        %v7347 = vsel %vm4573, %v7346, %v7330
        %v7348 = vsel %vm4575, %v7347, %v7334
        %v7349 = vsel %vm4577, %v7348, %v7338
        %v7350 = vsel %vm4579, %v7349, %v7342
        %7351 = vrot.lane.b32.xlu0 %v6969, 126
        %v7352 = vpop.permute.xlu0 %7351
        %7353 = vrot.lane.b32.xlu0 %v6970, 126
        %v7354 = vpop.permute.xlu0 %7353
        %7355 = vrot.lane.b32.xlu0 %v6971, 126
        %v7356 = vpop.permute.xlu0 %7355
        %7357 = vrot.lane.b32.xlu0 %v6972, 126
        %v7358 = vpop.permute.xlu0 %7357
        %7359 = vrot.lane.b32.xlu0 %v6973, 126
        %v7360 = vpop.permute.xlu0 %7359
        %7361 = vrot.lane.b32.xlu0 %v6974, 126
        %v7362 = vpop.permute.xlu0 %7361
        %7363 = vrot.lane.b32.xlu0 %v6975, 126
        %v7364 = vpop.permute.xlu0 %7363
        %7365 = vrot.lane.b32.xlu0 %v6976, 126
        %v7366 = vpop.permute.xlu0 %7365
        %v7375 = vcombine.low %v7352, %v7356
        %v7376 = vcombine.high %v7352, %v7356
        %v7378 = vunpack.c.l.s4 1983009808
        %v7379 = vunpack.c.0.s8 %v7378
        %v7380 = vlaneseq
        %v7381 = vshrl.u32 %v7380, 7
        %v7382 = vsub.s32 %v7379, %v7381
        %v7383 = vrot.slane %v7375, %v7382
        %v7385 = vunpack.c.l.s4 1983009808
        %v7386 = vunpack.c.0.s8 %v7385
        %v7387 = vlaneseq
        %v7388 = vshrl.u32 %v7387, 7
        %v7389 = vsub.s32 %v7386, %v7388
        %v7390 = vrot.slane %v7376, %v7389
        %v7391 = vcombine.low %v7354, %v7358
        %v7392 = vcombine.high %v7354, %v7358
        %v7394 = vunpack.c.l.s4 1983009808
        %v7395 = vunpack.c.0.s8 %v7394
        %v7396 = vlaneseq
        %v7397 = vshrl.u32 %v7396, 7
        %v7398 = vsub.s32 %v7395, %v7397
        %v7399 = vrot.slane %v7391, %v7398
        %v7401 = vunpack.c.l.s4 1983009808
        %v7402 = vunpack.c.0.s8 %v7401
        %v7403 = vlaneseq
        %v7404 = vshrl.u32 %v7403, 7
        %v7405 = vsub.s32 %v7402, %v7404
        %v7406 = vrot.slane %v7392, %v7405
        %v7407 = vcombine.low %v7360, %v7364
        %v7408 = vcombine.high %v7360, %v7364
        %v7410 = vunpack.c.l.s4 1983009808
        %v7411 = vunpack.c.0.s8 %v7410
        %v7412 = vlaneseq
        %v7413 = vshrl.u32 %v7412, 7
        %v7414 = vsub.s32 %v7411, %v7413
        %v7415 = vrot.slane %v7407, %v7414
        %v7417 = vunpack.c.l.s4 1983009808
        %v7418 = vunpack.c.0.s8 %v7417
        %v7419 = vlaneseq
        %v7420 = vshrl.u32 %v7419, 7
        %v7421 = vsub.s32 %v7418, %v7420
        %v7422 = vrot.slane %v7408, %v7421
        %v7423 = vcombine.low %v7362, %v7366
        %v7424 = vcombine.high %v7362, %v7366
        %v7426 = vunpack.c.l.s4 1983009808
        %v7427 = vunpack.c.0.s8 %v7426
        %v7428 = vlaneseq
        %v7429 = vshrl.u32 %v7428, 7
        %v7430 = vsub.s32 %v7427, %v7429
        %v7431 = vrot.slane %v7423, %v7430
        %v7433 = vunpack.c.l.s4 1983009808
        %v7434 = vunpack.c.0.s8 %v7433
        %v7435 = vlaneseq
        %v7436 = vshrl.u32 %v7435, 7
        %v7437 = vsub.s32 %v7434, %v7436
        %v7438 = vrot.slane %v7424, %v7437
        %v7439 = vcombine.low %v7383, %v7399
        %v7440 = vcombine.high %v7383, %v7399
        %v7442 = vunpack.c.l.s4 1934713408
        %v7443 = vunpack.c.0.s8 %v7442
        %v7444 = vlaneseq
        %v7445 = vshrl.u32 %v7444, 7
        %v7446 = vsub.s32 %v7443, %v7445
        %v7447 = vrot.slane %v7439, %v7446
        %v7449 = vunpack.c.l.s4 1934713408
        %v7450 = vunpack.c.0.s8 %v7449
        %v7451 = vlaneseq
        %v7452 = vshrl.u32 %v7451, 7
        %v7453 = vsub.s32 %v7450, %v7452
        %v7454 = vrot.slane %v7440, %v7453
        %v7455 = vcombine.low %v7390, %v7406
        %v7456 = vcombine.high %v7390, %v7406
        %v7458 = vunpack.c.l.s4 1934713408
        %v7459 = vunpack.c.0.s8 %v7458
        %v7460 = vlaneseq
        %v7461 = vshrl.u32 %v7460, 7
        %v7462 = vsub.s32 %v7459, %v7461
        %v7463 = vrot.slane %v7455, %v7462
        %v7465 = vunpack.c.l.s4 1934713408
        %v7466 = vunpack.c.0.s8 %v7465
        %v7467 = vlaneseq
        %v7468 = vshrl.u32 %v7467, 7
        %v7469 = vsub.s32 %v7466, %v7468
        %v7470 = vrot.slane %v7456, %v7469
        %v7471 = vcombine.low %v7415, %v7431
        %v7472 = vcombine.high %v7415, %v7431
        %v7474 = vunpack.c.l.s4 1934713408
        %v7475 = vunpack.c.0.s8 %v7474
        %v7476 = vlaneseq
        %v7477 = vshrl.u32 %v7476, 7
        %v7478 = vsub.s32 %v7475, %v7477
        %v7479 = vrot.slane %v7471, %v7478
        %v7481 = vunpack.c.l.s4 1934713408
        %v7482 = vunpack.c.0.s8 %v7481
        %v7483 = vlaneseq
        %v7484 = vshrl.u32 %v7483, 7
        %v7485 = vsub.s32 %v7482, %v7484
        %v7486 = vrot.slane %v7472, %v7485
        %v7487 = vcombine.low %v7422, %v7438
        %v7488 = vcombine.high %v7422, %v7438
        %v7490 = vunpack.c.l.s4 1934713408
        %v7491 = vunpack.c.0.s8 %v7490
        %v7492 = vlaneseq
        %v7493 = vshrl.u32 %v7492, 7
        %v7494 = vsub.s32 %v7491, %v7493
        %v7495 = vrot.slane %v7487, %v7494
        %v7497 = vunpack.c.l.s4 1934713408
        %v7498 = vunpack.c.0.s8 %v7497
        %v7499 = vlaneseq
        %v7500 = vshrl.u32 %v7499, 7
        %v7501 = vsub.s32 %v7498, %v7500
        %v7502 = vrot.slane %v7488, %v7501
        %v7503 = vcombine.low %v7447, %v7479
        %v7504 = vcombine.high %v7447, %v7479
        %v7505 = vcombine.low %v7454, %v7486
        %v7506 = vcombine.high %v7454, %v7486
        %v7507 = vcombine.low %v7463, %v7495
        %v7508 = vcombine.high %v7463, %v7495
        %v7509 = vcombine.low %v7470, %v7502
        %v7510 = vcombine.high %v7470, %v7502
        %7512 = vrot.lane.b32.xlu0 %v7504, 8
        %v7513 = vpop.permute.xlu0 %7512
        %7516 = vrot.lane.b32.xlu0 %v7505, 16
        %v7517 = vpop.permute.xlu0 %7516
        %7520 = vrot.lane.b32.xlu0 %v7506, 24
        %v7521 = vpop.permute.xlu0 %7520
        %7524 = vrot.lane.b32.xlu0 %v7507, 32
        %v7525 = vpop.permute.xlu0 %7524
        %7528 = vrot.lane.b32.xlu0 %v7508, 40
        %v7529 = vpop.permute.xlu0 %7528
        %7532 = vrot.lane.b32.xlu0 %v7509, 48
        %v7533 = vpop.permute.xlu0 %7532
        %7536 = vrot.lane.b32.xlu0 %v7510, 56
        %v7537 = vpop.permute.xlu0 %7536
        %v7539 = vsel %vm4567, %v7503, %v7513
        %v7540 = vsel %vm4569, %v7539, %v7517
        %v7541 = vsel %vm4571, %v7540, %v7521
        %v7542 = vsel %vm4573, %v7541, %v7525
        %v7543 = vsel %vm4575, %v7542, %v7529
        %v7544 = vsel %vm4577, %v7543, %v7533
        %v7545 = vsel %vm4579, %v7544, %v7537
        %v7546 = vpack.c.bf16 %v6196, %v5993
        %v7547 = vpack.c.bf16 %v6570, %v6391
        %v7548 = vpack.c.bf16 %v6968, %v6773
        %v7549 = vpack.c.bf16 %v7350, %v7147
        %v7550 = vpack.c.bf16 %v7545, %v7545
        %v7551 = vld [vmem:[%s3] sm:$0xf]
        %vm7552 = vcmask 588800
        %v7554 = vsel %vm7552, %v7551, 0
        %v7557 = vsel %vm5509, %v7550, 0
        %7559 = vmatprep.subr.bf16.mxu0 0
        %7560 = vmatpush1.bf16.msra.mxu0 %v7546
        %7561 = vmatprep.subr.bf16.mxu0 0
        %7562 = vmatpush1.bf16.msra.mxu0 %v7547
        %7563 = vmatprep.subr.bf16.mxu0 0
        %7564 = vmatpush1.bf16.msra.mxu0 %v7548
        %7565 = vmatprep.subr.bf16.mxu0 0
        %7566 = vmatpush1.bf16.msra.mxu0 %v7549
        %7567 = vmatprep.subr.bf16.mxu0 0
        %7568 = vmatpush1.bf16.msra.mxu0 %v7557
        %7569 = vmatprep.subr.bf16.mxu0 0
        %7570 = vmatpush1.bf16.msra.mxu0 0
        %7571 = vmatprep.subr.bf16.mxu0 0
        %7572 = vmatpush1.bf16.msra.mxu0 0
        %7573 = vmatprep.subr.bf16.mxu0 0
        %7574 = vmatpush1.bf16.msra.mxu0 0
        %7575 = vmatprep.subr.bf16.mxu0 0
        %7576 = vmatpush1.bf16.msra.mxu0 0
        %7577 = vmatprep.subr.bf16.mxu0 0
        %7578 = vmatpush1.bf16.msra.mxu0 0
        %7579 = vmatprep.subr.bf16.mxu0 0
        %7580 = vmatpush1.bf16.msra.mxu0 0
        %7581 = vmatprep.subr.bf16.mxu0 0
        %7582 = vmatpush1.bf16.msra.mxu0 0
        %7583 = vmatprep.subr.bf16.mxu0 0
        %7584 = vmatpush1.bf16.msra.mxu0 0
        %7585 = vmatprep.subr.bf16.mxu0 0
        %7586 = vmatpush1.bf16.msra.mxu0 0
        %7587 = vmatprep.subr.bf16.mxu0 0
        %7588 = vmatpush1.bf16.msra.mxu0 0
        %7589 = vmatprep.subr.bf16.mxu0 0
        %7590 = vmatpush1.bf16.msra.mxu0 0
        %7591 = vmatprep.mubr.bf16.mxu0 0
        %7592 = vmatmul.mubr.bf16.gmra.mrb[0].mxu0 %v7554
        %v7593 = vpop.f32.mrb[0].mxu0
        %v7594 = vadd.f32 0.0, %v7593
        %v7595 = vpop.f32.mrb[0].mxu0
        %v7596 = vpop.f32.mrb[0].mxu0
        %v7597 = vpop.f32.mrb[0].mxu0
        %7598 = vdwg.mxu0
        %v7599 = vsel %vm5566, %v7594, 0.0
        %7600 = vadd.xlane.f32.xlu0 %v7599
        %v7601 = vpop.xlane.xlu0 %7600
        %v7602 = vrot.slane %v7601, 4
        %v7603 = vadd.f32 %v7601, %v7602
        %v7604 = vrot.slane %v7603, 2
        %v7605 = vadd.f32 %v7603, %v7604
        %v7606 = vrot.slane %v7605, 1
        %v7607 = vadd.f32 %v7605, %v7606
        %s7608 = vtos %v7607
        %v7609 = vstv %s7608
        %v7610 = vmul.f32 %v7594, %v7594
        %v7611 = vsel %vm5566, %v7610, 0.0
        %7612 = vadd.xlane.f32.xlu0 %v7611
        %v7613 = vpop.xlane.xlu0 %7612
        %v7614 = vrot.slane %v7613, 4
        %v7615 = vadd.f32 %v7613, %v7614
        %v7616 = vrot.slane %v7615, 2
        %v7617 = vadd.f32 %v7615, %v7616
        %v7618 = vrot.slane %v7617, 1
        %v7619 = vadd.f32 %v7617, %v7618
        %s7620 = vtos %v7619
        %v7621 = vstv %s7620
        %v7622 = vmul.f32 %v7609, 0.001953125
        %v7623 = vmul.f32 %v7621, 0.001953125
        %v7624 = vmul.f32 %v7622, %v7622
        %v7625 = vsub.f32 %v7623, %v7624
        %v7626 = vsub.f32 %v7594, %v7622
        %v7627 = vadd.f32 %v7625, 1e-05
        %v7628 = vrsqrt.pop %v7627
        %v7629 = vmul.f32 %v7626, %v7628
        %v7630 = vld [vmem:[%s6] sm:$0xff]
        %7632 = vset.pattern.permute.xlu0 0
        %7633 = vperm.xlu0 %7632, %v7630
        %v7634 = vpop.permute.xlu0 %7633
        %v7636 = vmul.f32 %v7629, %v7634
        %v7637 = vld [vmem:[%s7] sm:$0xff]
        %7639 = vset.pattern.permute.xlu0 0
        %7640 = vperm.xlu0 %7639, %v7637
        %v7641 = vpop.permute.xlu0 %7640
        %v7643 = vadd.f32 %v7636, %v7641
        %7645 = vset.pattern.permute.xlu0 0
        %7646 = vperm.xlu0 %7645, %v414
        %v7647 = vpop.permute.xlu0 %7646
        %v7649 = vadd.f32 %v7643, %v7647
        %7650 = vst.msk [vmem:[%s388] sm:$0xff] %vm5566, %v7649
        %s7651 = sand.u32 %s255, 1
        %s7652 = scalar_lea.sflag [#allocation6], %s7651
        %s7653 = sand.u32 %s255, 1
        %s7654 = smul.addr %s7653, 8
        %s7655 = scalar_lea.vmem [#allocation7], %s7654
        // Predicated region
        $region65: #{tpu_custom_call.1} parent=59 // pred_check
          %p7656 = pneg %p265
        $region66: #{tpu_custom_call.1} parent=59 // pred_check_branch
          %7658 = sbr.rel (%p7656) target = $region68
        $region67: #{tpu_custom_call.1} parent=59 // pred_region
          %s7660 = ssub.s32 128, 128
          %7661 = vsyncadd %s7652, %s7660
          %s7662 = smul.addr %s27, 128
          %s7663 = scalar_lea.hbm %s10, %s7662
          %s7665 = sshll.u32 %s7655, 4
          %s7666 = int_to_ptr.vmem [resolvable:$true] %s7665
          %7668 = dma.vmem_to_hbm [thread:$0]  %s7666, 128, %s7663, %s7652
        $region68: #{tpu_custom_call.1} parent=59 // pred_fallthru
          _
      $region60: #{tpu_custom_call.1} parent=5 // pred_fallthru
        _
      %p7669 = scmp.le.s32.totalorder 2, %s22
      // Predicated region
      $region69: #{tpu_custom_call.1} parent=5 // pred_check
        %p7670 = pneg %p7669
      $region70: #{tpu_custom_call.1} parent=5 // pred_check_branch
        %7672 = sbr.rel (%p7670) target = $region72
      $region71: #{tpu_custom_call.1} parent=5 // pred_region
        %s7673 = ssub.s32 %s22, 2
        // Predicated region
        $region73: #{tpu_custom_call.1} parent=71 // pred_check
          %p7674 = pneg %p271
        $region74: #{tpu_custom_call.1} parent=71 // pred_check_branch
          %7676 = sbr.rel (%p7674) target = $region76
        $region75: #{tpu_custom_call.1} parent=71 // pred_region
          %s7677 = sand.u32 %s256, 1
          %s7678 = scalar_lea.sflag [#allocation6], %s7677
          %s7679 = sand.u32 %s256, 1
          %s7680 = smul.addr %s7679, 8
          %s7681 = scalar_lea.vmem [#allocation7], %s7680
          %7682 = dma.done %s7678, 128
        $region76: #{tpu_custom_call.1} parent=71 // pred_fallthru
          _
      $region72: #{tpu_custom_call.1} parent=5 // pred_fallthru
        _
    $region6: #{tpu_custom_call.1} parent=1 // loop_footer
      %s26 = sadd.s32 1, %s22
    $region7: #{tpu_custom_call.1} parent=1 // loop_footer_branch
      %21 = sbr.rel target = $region3
    $region8: #{tpu_custom_call.1} parent=1 // loop_exit
      _
    %7683 = vsyncpa [#allocation5], 1
    %s7684 = scalar_lea.sflag [#allocation5], 1
    %7685 = vsyncpa %s7684, 1
    %7686 = vsyncpa [#allocation6], 1
    %s7687 = scalar_lea.sflag [#allocation6], 1
    %7688 = vsyncpa %s7687, 1

</llo_original>
